<compile_context>
chip_gen: v6e
topology: v6e:2x2x1
jax: 0.10.0
libtpu: 0.0.40
codegen_flags: <defaults>
</compile_context>

<pallas_src>
import jax
import jax.numpy as jnp
from jax import lax
from jax.experimental import pallas as pl
from jax.experimental.pallas import tpu as pltpu

KERNEL_SIZES = (7, 5, 3)   # temporal conv kernel sizes, applied sequentially
BN_EPS = 1e-5


def _basic_cnn_kernel(x_ref, wproj_ref, bproj_ref,
                      w7_ref, b7_ref, w5_ref, b5_ref, w3_ref, b3_ref,
                      pool_ref, w1_ref, b1_ref, w2_ref, b2_ref,
                      out_ref, tap_ref):
    """Fused BasicCNN forward for one batch tile (activations never leave VMEM/vregs).

    x_ref   : (C_in, bt*T) bf16   input tile, sequences contiguous along the lane axis
    wproj   : (S, C_in)    bf16   Linear(C_in->S) with bn_spatial scale folded in
    bproj   : (S, 1)       f32    proj bias + bn_spatial folded bias
    w{k}    : (S, k*S)     bf16   Conv1d(S,S,k) tap-major reshape, BN scale folded in
    b{k}    : (S, 1)       f32    conv bias + BN folded bias
    pool    : (bt*T, bt)   bf16   block-diagonal 1/T pooling matrix
    w1/b1   : (H, S) bf16 / (H, 1) f32
    w2/b2   : (NC, H) bf16 / (NC, 1) f32
    out_ref : (1, NC, bt)  f32    logits for the whole tile
    tap_ref : (7*S, bt*T)  bf16   scratch holding the stacked conv taps
    """
    S = wproj_ref.shape[0]
    n = x_ref.shape[1]
    bt = out_ref.shape[2]
    t_len = n // bt

    # Channel projection (+ folded bn_spatial): one matmul for the whole tile.
    y = jnp.dot(wproj_ref[...], x_ref[...],
                preferred_element_type=jnp.float32) + bproj_ref[...]       # (S, bt*T) f32

    # Per-lane time index within each sequence, for the conv zero-padding masks.
    t_idx = lax.broadcasted_iota(jnp.int32, (1, n), 1) % t_len

    for w_ref, b_ref, k in ((w7_ref, b7_ref, 7), (w5_ref, b5_ref, 5), (w3_ref, b3_ref, 3)):
        p = k // 2
        # Build the k shifted taps with XLU rolls; lanes whose window would cross a
        # sequence boundary (or the array edge, via the circular wrap) are masked to zero,
        # which is exactly Conv1d's zero padding.  Taps are stored tap-major in bf16.
        for j in range(k):
            tap = y if j == p else pltpu.roll(y, shift=(p - j) % n, axis=1)
            if j != p:
                valid = (t_idx >= (p - j)) & (t_idx < t_len + (p - j))
                tap = jnp.where(valid, tap, 0.0)
            tap_ref[j * S:(j + 1) * S, :] = tap.astype(jnp.bfloat16)
        # Conv1d(k) + folded BN + ReLU as one wide matmul over the whole tile.
        y = jnp.dot(w_ref[...], tap_ref[0:k * S, :],
                    preferred_element_type=jnp.float32) + b_ref[...]
        y = jnp.maximum(y, 0.0)

    # Classifier (batched over the tile): AdaptiveAvgPool1d(1) as a matmul, then
    # Linear -> ReLU -> Linear.  Dropouts are identity in eval mode.
    pooled = jnp.dot(y.astype(jnp.bfloat16), pool_ref[...],
                     preferred_element_type=jnp.float32)                    # (S, bt)
    h = jnp.dot(w1_ref[...], pooled.astype(jnp.bfloat16),
                preferred_element_type=jnp.float32) + b1_ref[...]           # (H, bt)
    h = jnp.maximum(h, 0.0)
    logits = jnp.dot(w2_ref[...], h.astype(jnp.bfloat16),
                     preferred_element_type=jnp.float32) + b2_ref[...]      # (NC, bt)
    out_ref[0] = logits.astype(out_ref.dtype)


def basic_cnn_forward(x, params, *, batch_tile=8):
    """x: (B, C_in, T) f32.  params: dict from prepare_params().  Returns (B, n_classes) f32."""
    B, C_in, T = x.shape
    assert B % batch_tile == 0
    assert T % 128 == 0, "keep the time axis lane-dense"
    S = params["wproj"].shape[0]
    H = params["w1"].shape[0]
    NC = params["w2"].shape[0]
    bt = batch_tile
    n = bt * T
    G = B // bt

    # Lane-dense bf16 (channels, batch*time) layout: halves the input DMA and feeds the
    # projection matmul directly.  Pure layout plumbing, done once outside the kernel.
    x_flat = jnp.transpose(x, (1, 0, 2)).reshape(C_in, B * T).astype(jnp.bfloat16)

    # Global-average-pool as a matmul: (S, bt*T) @ (bt*T, bt) -> (S, bt).
    pool = (jax.nn.one_hot(jnp.arange(n) // T, bt, dtype=jnp.float32) / T).astype(jnp.bfloat16)

    def const(shape):
        # Constant index_map: these blocks are DMA'd once and reused across grid steps.
        return pl.BlockSpec(shape, lambda b: (0,) * len(shape))

    out = pl.pallas_call(
        _basic_cnn_kernel,
        out_shape=jax.ShapeDtypeStruct((G, NC, bt), jnp.float32),
        grid_spec=pltpu.PrefetchScalarGridSpec(
            num_scalar_prefetch=0,
            grid=(G,),
            in_specs=[
                pl.BlockSpec((C_in, n), lambda b: (0, b)),
                const((S, C_in)), const((S, 1)),
                const((S, 7 * S)), const((S, 1)),
                const((S, 5 * S)), const((S, 1)),
                const((S, 3 * S)), const((S, 1)),
                const((n, bt)),
                const((H, S)), const((H, 1)),
                const((NC, H)), const((NC, 1)),
            ],
            out_specs=pl.BlockSpec((1, NC, bt), lambda b: (b, 0, 0)),
            scratch_shapes=[pltpu.VMEM((7 * S, n), jnp.bfloat16)],
        ),
        compiler_params=pltpu.CompilerParams(dimension_semantics=("parallel",)),
    )(x_flat, params["wproj"], params["bproj"],
      params["w7"], params["b7"], params["w5"], params["b5"],
      params["w3"], params["b3"], pool,
      params["w1"], params["b1"], params["w2"], params["b2"])
    # (G, NC, bt) -> (B, NC)
    return out.transpose(0, 2, 1).reshape(B, NC)


def init_raw_params(key, c_in, s, h, nc):
    """Deterministic PyTorch-equivalent (eval-mode) parameters for BasicCNN."""
    keys = iter(jax.random.split(key, 40))
    nrm = lambda shape, scale: scale * jax.random.normal(next(keys), shape, jnp.float32)
    raw = {
        "wp": nrm((s, c_in), c_in ** -0.5), "bp": nrm((s,), 0.1),
        "g0": 1.0 + nrm((s,), 0.1), "be0": nrm((s,), 0.1),
        "m0": nrm((s,), 0.1), "v0": 1.0 + jnp.abs(nrm((s,), 0.2)),
    }
    for k in KERNEL_SIZES:
        raw[f"wc{k}"] = nrm((s, s, k), (s * k) ** -0.5)
        raw[f"bc{k}"] = nrm((s,), 0.1)
        raw[f"g{k}"] = 1.0 + nrm((s,), 0.1)
        raw[f"be{k}"] = nrm((s,), 0.1)
        raw[f"m{k}"] = nrm((s,), 0.1)
        raw[f"v{k}"] = 1.0 + jnp.abs(nrm((s,), 0.2))
    raw["w1"] = nrm((h, s), s ** -0.5)
    raw["b1"] = nrm((h,), 0.1)
    raw["w2"] = nrm((nc, h), h ** -0.5)
    raw["b2"] = nrm((nc,), 0.1)
    return raw


def prepare_params(raw):
    """Fold eval-mode BatchNorms + biases into the matmul weights/biases; cast MXU weights to bf16."""
    def fold(gamma, beta, mean, var, lin_bias):
        scale = gamma / jnp.sqrt(var + BN_EPS)
        return scale, beta + (lin_bias - mean) * scale

    p = {}
    s0, bias0 = fold(raw["g0"], raw["be0"], raw["m0"], raw["v0"], raw["bp"])
    p["wproj"] = (raw["wp"] * s0[:, None]).astype(jnp.bfloat16)
    p["bproj"] = bias0[:, None]
    for k in KERNEL_SIZES:
        sc, bias = fold(raw[f"g{k}"], raw[f"be{k}"], raw[f"m{k}"], raw[f"v{k}"], raw[f"bc{k}"])
        s_out, s_in, _ = raw[f"wc{k}"].shape
        # (S_out, S_in, k) -> tap-major (S_out, k*S_in), matching the stacked-taps layout.
        w2d = jnp.transpose(raw[f"wc{k}"], (0, 2, 1)).reshape(s_out, k * s_in)
        p[f"w{k}"] = (w2d * sc[:, None]).astype(jnp.bfloat16)
        p[f"b{k}"] = bias[:, None]
    p["w1"], p["b1"] = raw["w1"].astype(jnp.bfloat16), raw["b1"][:, None]
    p["w2"], p["b2"] = raw["w2"].astype(jnp.bfloat16), raw["b2"][:, None]
    return p


def reference(x, raw):
    """Pure-JAX f32 reference implementing BasicCNN's eval-mode forward pass."""
    hp = lax.Precision.HIGHEST
    y = jnp.einsum("sc,bct->bst", raw["wp"], x, precision=hp) + raw["bp"][None, :, None]
    sc0 = raw["g0"] / jnp.sqrt(raw["v0"] + BN_EPS)
    y = (y - raw["m0"][None, :, None]) * sc0[None, :, None] + raw["be0"][None, :, None]
    for k in KERNEL_SIZES:
        y = lax.conv_general_dilated(
            y, raw[f"wc{k}"], window_strides=(1,), padding=[(k // 2, k // 2)],
            dimension_numbers=("NCH", "OIH", "NCH"), precision=hp)
        y = y + raw[f"bc{k}"][None, :, None]
        sck = raw[f"g{k}"] / jnp.sqrt(raw[f"v{k}"] + BN_EPS)
        y = (y - raw[f"m{k}"][None, :, None]) * sck[None, :, None] + raw[f"be{k}"][None, :, None]
        y = jnp.maximum(y, 0.0)
    pooled = jnp.mean(y, axis=2)                                  # (B, S)
    h = jnp.maximum(pooled @ raw["w1"].T + raw["b1"], 0.0)
    return h @ raw["w2"].T + raw["b2"]


if __name__ == "__main__":
    # TODO(synk): BatchNorm uses folded eval-mode running statistics and Dropout is
    # inference-mode identity (training-mode batch stats / RNG masking are not implemented).
    B, C_IN, T = 64, 16, 128       # batch, MEG channels, time steps (T kept lane-dense)
    S, H, NC = 32, 64, 5           # n_sources, hidden_size, n_classes (module defaults)

    key = jax.random.PRNGKey(0)
    kx, kp = jax.random.split(key)
    x = jax.random.normal(kx, (B, C_IN, T), jnp.float32)
    raw = init_raw_params(kp, C_IN, S, H, NC)
    params = prepare_params(raw)

    out = basic_cnn_forward(x, params, batch_tile=8)
    out = jax.block_until_ready(out)

    ref = reference(x, raw)
    assert out.shape == (B, NC)
    # bf16 MXU operands / bf16 input with f32 accumulation -> compare loosely vs. f32 reference.
    assert jnp.allclose(out, ref, atol=5e-2, rtol=5e-2), "mismatch vs reference"
    print("KERNEL_OK")
</pallas_src>

<mosaic_0001>
module attributes {stable_mosaic.version = 11 : i64} {
  func.func @_basic_cnn_kernel(%arg0: i32, %arg1: memref<16x1024xbf16, #tpu.memory_space<vmem>>, %arg2: memref<32x16xbf16, #tpu.memory_space<vmem>>, %arg3: memref<32x1xf32, #tpu.memory_space<vmem>>, %arg4: memref<32x224xbf16, #tpu.memory_space<vmem>>, %arg5: memref<32x1xf32, #tpu.memory_space<vmem>>, %arg6: memref<32x160xbf16, #tpu.memory_space<vmem>>, %arg7: memref<32x1xf32, #tpu.memory_space<vmem>>, %arg8: memref<32x96xbf16, #tpu.memory_space<vmem>>, %arg9: memref<32x1xf32, #tpu.memory_space<vmem>>, %arg10: memref<1024x8xbf16, #tpu.memory_space<vmem>>, %arg11: memref<64x32xbf16, #tpu.memory_space<vmem>>, %arg12: memref<64x1xf32, #tpu.memory_space<vmem>>, %arg13: memref<5x64xbf16, #tpu.memory_space<vmem>>, %arg14: memref<5x1xf32, #tpu.memory_space<vmem>>, %arg15: memref<1x5x8xf32, #tpu.memory_space<vmem>>, %arg16: memref<224x1024xbf16, #tpu.memory_space<vmem>>) attributes {dimension_semantics = [#tpu.dimension_semantics<parallel>], iteration_bounds = array<i64: 8>, scalar_prefetch = 0 : i64, scratch_operands = 1 : i64, tpu.core_type = #tpu.core_type<tc>, window_params = [{transform_indices = @transform_0, window_bounds = array<i64: 16, 1024>}, {pipeline_mode = #tpu.pipeline_mode<synchronous>, transform_indices = @transform_1, window_bounds = array<i64: 32, 16>}, {pipeline_mode = #tpu.pipeline_mode<synchronous>, transform_indices = @transform_2, window_bounds = array<i64: 32, 1>}, {pipeline_mode = #tpu.pipeline_mode<synchronous>, transform_indices = @transform_3, window_bounds = array<i64: 32, 224>}, {pipeline_mode = #tpu.pipeline_mode<synchronous>, transform_indices = @transform_4, window_bounds = array<i64: 32, 1>}, {pipeline_mode = #tpu.pipeline_mode<synchronous>, transform_indices = @transform_5, window_bounds = array<i64: 32, 160>}, {pipeline_mode = #tpu.pipeline_mode<synchronous>, transform_indices = @transform_6, window_bounds = array<i64: 32, 1>}, {pipeline_mode = #tpu.pipeline_mode<synchronous>, transform_indices = @transform_7, window_bounds = array<i64: 32, 96>}, {pipeline_mode = #tpu.pipeline_mode<synchronous>, transform_indices = @transform_8, window_bounds = array<i64: 32, 1>}, {pipeline_mode = #tpu.pipeline_mode<synchronous>, transform_indices = @transform_9, window_bounds = array<i64: 1024, 8>}, {pipeline_mode = #tpu.pipeline_mode<synchronous>, transform_indices = @transform_10, window_bounds = array<i64: 64, 32>}, {pipeline_mode = #tpu.pipeline_mode<synchronous>, transform_indices = @transform_11, window_bounds = array<i64: 64, 1>}, {pipeline_mode = #tpu.pipeline_mode<synchronous>, transform_indices = @transform_12, window_bounds = array<i64: 5, 64>}, {pipeline_mode = #tpu.pipeline_mode<synchronous>, transform_indices = @transform_13, window_bounds = array<i64: 5, 1>}, {transform_indices = @transform_14, window_bounds = array<i64: 1, 5, 8>}]} {
    %c0 = arith.constant 0 : index
    %c0_0 = arith.constant 0 : index
    %0 = vector.load %arg2[%c0, %c0_0] : memref<32x16xbf16, #tpu.memory_space<vmem>>, vector<32x16xbf16>
    %c0_1 = arith.constant 0 : index
    %c0_2 = arith.constant 0 : index
    %1 = vector.load %arg1[%c0_1, %c0_2] : memref<16x1024xbf16, #tpu.memory_space<vmem>>, vector<16x1024xbf16>
    %cst = arith.constant dense<0.000000e+00> : vector<32x1024xf32>
    %2 = tpu.matmul %0, %1, %cst {dimension_numbers = #tpu.dot_dimension_numbers<[1], [0], [0], [1], [0, 0, 1, 1], [], []>} : vector<32x16xbf16>, vector<16x1024xbf16>, vector<32x1024xf32> -> vector<32x1024xf32>
    %c0_3 = arith.constant 0 : index
    %c0_4 = arith.constant 0 : index
    %3 = vector.load %arg3[%c0_3, %c0_4] : memref<32x1xf32, #tpu.memory_space<vmem>>, vector<32x1xf32>
    %4 = vector.broadcast %3 : vector<32x1xf32> to vector<32x1024xf32>
    %5 = arith.addf %2, %4 : vector<32x1024xf32>
    %6 = tpu.iota {dimensions = array<i32: 1>} : vector<1x1024xi32>
    %c128_i32 = arith.constant 128 : i32
    %c0_i32 = arith.constant 0 : i32
    %7 = arith.cmpi eq, %c128_i32, %c0_i32 : i32
    %c1_i32 = arith.constant 1 : i32
    %8 = arith.select %7, %c1_i32, %c128_i32 : i32
    %9 = vector.broadcast %8 : i32 to vector<1x1024xi32>
    %10 = arith.remsi %6, %9 : vector<1x1024xi32>
    %c0_i32_5 = arith.constant 0 : i32
    %11 = vector.broadcast %c0_i32_5 : i32 to vector<1x1024xi32>
    %12 = arith.cmpi ne, %10, %11 : vector<1x1024xi32>
    %c0_i32_6 = arith.constant 0 : i32
    %13 = vector.broadcast %c0_i32_6 : i32 to vector<1x1024xi32>
    %14 = arith.cmpi slt, %10, %13 : vector<1x1024xi32>
    %c0_i32_7 = arith.constant 0 : i32
    %15 = arith.cmpi slt, %8, %c0_i32_7 : i32
    %16 = vector.broadcast %15 : i1 to vector<1x1024xi1>
    %17 = vector.broadcast %16 : vector<1x1024xi1> to vector<1x1024xi1>
    %18 = arith.xori %14, %17 : vector<1x1024xi1>
    %19 = arith.andi %18, %12 : vector<1x1024xi1>
    %20 = vector.broadcast %8 : i32 to vector<1x1024xi32>
    %21 = arith.addi %10, %20 : vector<1x1024xi32>
    %22 = arith.select %19, %21, %10 : vector<1x1024xi1>, vector<1x1024xi32>
    %c3_i32 = arith.constant 3 : i32
    %23 = tpu.dynamic_rotate %5 by %c3_i32 dim 1 : vector<32x1024xf32>, i32 -> vector<32x1024xf32>
    %c3_i32_8 = arith.constant 3 : i32
    %24 = vector.broadcast %c3_i32_8 : i32 to vector<1x1024xi32>
    %25 = arith.cmpi sge, %22, %24 : vector<1x1024xi32>
    %c131_i32 = arith.constant 131 : i32
    %26 = vector.broadcast %c131_i32 : i32 to vector<1x1024xi32>
    %27 = arith.cmpi slt, %22, %26 : vector<1x1024xi32>
    %28 = arith.andi %25, %27 : vector<1x1024xi1>
    %cst_9 = arith.constant 0.000000e+00 : f32
    %29 = vector.shape_cast %28 : vector<1x1024xi1> to vector<1x1024xi1>
    %30 = vector.broadcast %29 : vector<1x1024xi1> to vector<32x1024xi1>
    %31 = vector.broadcast %cst_9 : f32 to vector<32x1024xf32>
    %32 = arith.select %30, %23, %31 : vector<32x1024xi1>, vector<32x1024xf32>
    %33 = arith.truncf %32 : vector<32x1024xf32> to vector<32x1024xbf16>
    %c0_10 = arith.constant 0 : index
    %c0_11 = arith.constant 0 : index
    %34 = vector.load %arg16[%c0_10, %c0_11] : memref<224x1024xbf16, #tpu.memory_space<vmem>>, vector<32x1024xbf16>
    tpu.vector_store %arg16[%c0_10, %c0_11], %33 {strides = array<i32>} : memref<224x1024xbf16, #tpu.memory_space<vmem>>, vector<32x1024xbf16>,
    %c2_i32 = arith.constant 2 : i32
    %35 = tpu.dynamic_rotate %5 by %c2_i32 dim 1 : vector<32x1024xf32>, i32 -> vector<32x1024xf32>
    %c2_i32_12 = arith.constant 2 : i32
    %36 = vector.broadcast %c2_i32_12 : i32 to vector<1x1024xi32>
    %37 = arith.cmpi sge, %22, %36 : vector<1x1024xi32>
    %c130_i32 = arith.constant 130 : i32
    %38 = vector.broadcast %c130_i32 : i32 to vector<1x1024xi32>
    %39 = arith.cmpi slt, %22, %38 : vector<1x1024xi32>
    %40 = arith.andi %37, %39 : vector<1x1024xi1>
    %cst_13 = arith.constant 0.000000e+00 : f32
    %41 = vector.shape_cast %40 : vector<1x1024xi1> to vector<1x1024xi1>
    %42 = vector.broadcast %41 : vector<1x1024xi1> to vector<32x1024xi1>
    %43 = vector.broadcast %cst_13 : f32 to vector<32x1024xf32>
    %44 = arith.select %42, %35, %43 : vector<32x1024xi1>, vector<32x1024xf32>
    %45 = arith.truncf %44 : vector<32x1024xf32> to vector<32x1024xbf16>
    %c32 = arith.constant 32 : index
    %c0_14 = arith.constant 0 : index
    %46 = vector.load %arg16[%c32, %c0_14] : memref<224x1024xbf16, #tpu.memory_space<vmem>>, vector<32x1024xbf16>
    tpu.vector_store %arg16[%c32, %c0_14], %45 {strides = array<i32>} : memref<224x1024xbf16, #tpu.memory_space<vmem>>, vector<32x1024xbf16>,
    %c1_i32_15 = arith.constant 1 : i32
    %47 = tpu.dynamic_rotate %5 by %c1_i32_15 dim 1 : vector<32x1024xf32>, i32 -> vector<32x1024xf32>
    %c1_i32_16 = arith.constant 1 : i32
    %48 = vector.broadcast %c1_i32_16 : i32 to vector<1x1024xi32>
    %49 = arith.cmpi sge, %22, %48 : vector<1x1024xi32>
    %c129_i32 = arith.constant 129 : i32
    %50 = vector.broadcast %c129_i32 : i32 to vector<1x1024xi32>
    %51 = arith.cmpi slt, %22, %50 : vector<1x1024xi32>
    %52 = arith.andi %49, %51 : vector<1x1024xi1>
    %cst_17 = arith.constant 0.000000e+00 : f32
    %53 = vector.shape_cast %52 : vector<1x1024xi1> to vector<1x1024xi1>
    %54 = vector.broadcast %53 : vector<1x1024xi1> to vector<32x1024xi1>
    %55 = vector.broadcast %cst_17 : f32 to vector<32x1024xf32>
    %56 = arith.select %54, %47, %55 : vector<32x1024xi1>, vector<32x1024xf32>
    %57 = arith.truncf %56 : vector<32x1024xf32> to vector<32x1024xbf16>
    %c64 = arith.constant 64 : index
    %c0_18 = arith.constant 0 : index
    %58 = vector.load %arg16[%c64, %c0_18] : memref<224x1024xbf16, #tpu.memory_space<vmem>>, vector<32x1024xbf16>
    tpu.vector_store %arg16[%c64, %c0_18], %57 {strides = array<i32>} : memref<224x1024xbf16, #tpu.memory_space<vmem>>, vector<32x1024xbf16>,
    %59 = arith.truncf %5 : vector<32x1024xf32> to vector<32x1024xbf16>
    %c96 = arith.constant 96 : index
    %c0_19 = arith.constant 0 : index
    %60 = vector.load %arg16[%c96, %c0_19] : memref<224x1024xbf16, #tpu.memory_space<vmem>>, vector<32x1024xbf16>
    tpu.vector_store %arg16[%c96, %c0_19], %59 {strides = array<i32>} : memref<224x1024xbf16, #tpu.memory_space<vmem>>, vector<32x1024xbf16>,
    %c1023_i32 = arith.constant 1023 : i32
    %61 = tpu.dynamic_rotate %5 by %c1023_i32 dim 1 : vector<32x1024xf32>, i32 -> vector<32x1024xf32>
    %c-1_i32 = arith.constant -1 : i32
    %62 = vector.broadcast %c-1_i32 : i32 to vector<1x1024xi32>
    %63 = arith.cmpi sge, %22, %62 : vector<1x1024xi32>
    %c127_i32 = arith.constant 127 : i32
    %64 = vector.broadcast %c127_i32 : i32 to vector<1x1024xi32>
    %65 = arith.cmpi slt, %22, %64 : vector<1x1024xi32>
    %66 = arith.andi %63, %65 : vector<1x1024xi1>
    %cst_20 = arith.constant 0.000000e+00 : f32
    %67 = vector.shape_cast %66 : vector<1x1024xi1> to vector<1x1024xi1>
    %68 = vector.broadcast %67 : vector<1x1024xi1> to vector<32x1024xi1>
    %69 = vector.broadcast %cst_20 : f32 to vector<32x1024xf32>
    %70 = arith.select %68, %61, %69 : vector<32x1024xi1>, vector<32x1024xf32>
    %71 = arith.truncf %70 : vector<32x1024xf32> to vector<32x1024xbf16>
    %c128 = arith.constant 128 : index
    %c0_21 = arith.constant 0 : index
    %72 = vector.load %arg16[%c128, %c0_21] : memref<224x1024xbf16, #tpu.memory_space<vmem>>, vector<32x1024xbf16>
    tpu.vector_store %arg16[%c128, %c0_21], %71 {strides = array<i32>} : memref<224x1024xbf16, #tpu.memory_space<vmem>>, vector<32x1024xbf16>,
    %c1022_i32 = arith.constant 1022 : i32
    %73 = tpu.dynamic_rotate %5 by %c1022_i32 dim 1 : vector<32x1024xf32>, i32 -> vector<32x1024xf32>
    %c-2_i32 = arith.constant -2 : i32
    %74 = vector.broadcast %c-2_i32 : i32 to vector<1x1024xi32>
    %75 = arith.cmpi sge, %22, %74 : vector<1x1024xi32>
    %c126_i32 = arith.constant 126 : i32
    %76 = vector.broadcast %c126_i32 : i32 to vector<1x1024xi32>
    %77 = arith.cmpi slt, %22, %76 : vector<1x1024xi32>
    %78 = arith.andi %75, %77 : vector<1x1024xi1>
    %cst_22 = arith.constant 0.000000e+00 : f32
    %79 = vector.shape_cast %78 : vector<1x1024xi1> to vector<1x1024xi1>
    %80 = vector.broadcast %79 : vector<1x1024xi1> to vector<32x1024xi1>
    %81 = vector.broadcast %cst_22 : f32 to vector<32x1024xf32>
    %82 = arith.select %80, %73, %81 : vector<32x1024xi1>, vector<32x1024xf32>
    %83 = arith.truncf %82 : vector<32x1024xf32> to vector<32x1024xbf16>
    %c160 = arith.constant 160 : index
    %c0_23 = arith.constant 0 : index
    %84 = vector.load %arg16[%c160, %c0_23] : memref<224x1024xbf16, #tpu.memory_space<vmem>>, vector<32x1024xbf16>
    tpu.vector_store %arg16[%c160, %c0_23], %83 {strides = array<i32>} : memref<224x1024xbf16, #tpu.memory_space<vmem>>, vector<32x1024xbf16>,
    %c1021_i32 = arith.constant 1021 : i32
    %85 = tpu.dynamic_rotate %5 by %c1021_i32 dim 1 : vector<32x1024xf32>, i32 -> vector<32x1024xf32>
    %c-3_i32 = arith.constant -3 : i32
    %86 = vector.broadcast %c-3_i32 : i32 to vector<1x1024xi32>
    %87 = arith.cmpi sge, %22, %86 : vector<1x1024xi32>
    %c125_i32 = arith.constant 125 : i32
    %88 = vector.broadcast %c125_i32 : i32 to vector<1x1024xi32>
    %89 = arith.cmpi slt, %22, %88 : vector<1x1024xi32>
    %90 = arith.andi %87, %89 : vector<1x1024xi1>
    %cst_24 = arith.constant 0.000000e+00 : f32
    %91 = vector.shape_cast %90 : vector<1x1024xi1> to vector<1x1024xi1>
    %92 = vector.broadcast %91 : vector<1x1024xi1> to vector<32x1024xi1>
    %93 = vector.broadcast %cst_24 : f32 to vector<32x1024xf32>
    %94 = arith.select %92, %85, %93 : vector<32x1024xi1>, vector<32x1024xf32>
    %95 = arith.truncf %94 : vector<32x1024xf32> to vector<32x1024xbf16>
    %c192 = arith.constant 192 : index
    %c0_25 = arith.constant 0 : index
    %96 = vector.load %arg16[%c192, %c0_25] : memref<224x1024xbf16, #tpu.memory_space<vmem>>, vector<32x1024xbf16>
    tpu.vector_store %arg16[%c192, %c0_25], %95 {strides = array<i32>} : memref<224x1024xbf16, #tpu.memory_space<vmem>>, vector<32x1024xbf16>,
    %c0_26 = arith.constant 0 : index
    %c0_27 = arith.constant 0 : index
    %97 = vector.load %arg4[%c0_26, %c0_27] : memref<32x224xbf16, #tpu.memory_space<vmem>>, vector<32x224xbf16>
    %c0_28 = arith.constant 0 : index
    %c0_29 = arith.constant 0 : index
    %98 = vector.load %arg16[%c0_28, %c0_29] : memref<224x1024xbf16, #tpu.memory_space<vmem>>, vector<224x1024xbf16>
    %cst_30 = arith.constant dense<0.000000e+00> : vector<32x1024xf32>
    %99 = tpu.matmul %97, %98, %cst_30 {dimension_numbers = #tpu.dot_dimension_numbers<[1], [0], [0], [1], [0, 0, 1, 1], [], []>} : vector<32x224xbf16>, vector<224x1024xbf16>, vector<32x1024xf32> -> vector<32x1024xf32>
    %c0_31 = arith.constant 0 : index
    %c0_32 = arith.constant 0 : index
    %100 = vector.load %arg5[%c0_31, %c0_32] : memref<32x1xf32, #tpu.memory_space<vmem>>, vector<32x1xf32>
    %101 = vector.broadcast %100 : vector<32x1xf32> to vector<32x1024xf32>
    %102 = arith.addf %99, %101 : vector<32x1024xf32>
    %cst_33 = arith.constant 0.000000e+00 : f32
    %103 = vector.broadcast %cst_33 : f32 to vector<32x1024xf32>
    %104 = arith.maximumf %102, %103 : vector<32x1024xf32>
    %c2_i32_34 = arith.constant 2 : i32
    %105 = tpu.dynamic_rotate %104 by %c2_i32_34 dim 1 : vector<32x1024xf32>, i32 -> vector<32x1024xf32>
    %c2_i32_35 = arith.constant 2 : i32
    %106 = vector.broadcast %c2_i32_35 : i32 to vector<1x1024xi32>
    %107 = arith.cmpi sge, %22, %106 : vector<1x1024xi32>
    %c130_i32_36 = arith.constant 130 : i32
    %108 = vector.broadcast %c130_i32_36 : i32 to vector<1x1024xi32>
    %109 = arith.cmpi slt, %22, %108 : vector<1x1024xi32>
    %110 = arith.andi %107, %109 : vector<1x1024xi1>
    %cst_37 = arith.constant 0.000000e+00 : f32
    %111 = vector.shape_cast %110 : vector<1x1024xi1> to vector<1x1024xi1>
    %112 = vector.broadcast %111 : vector<1x1024xi1> to vector<32x1024xi1>
    %113 = vector.broadcast %cst_37 : f32 to vector<32x1024xf32>
    %114 = arith.select %112, %105, %113 : vector<32x1024xi1>, vector<32x1024xf32>
    %115 = arith.truncf %114 : vector<32x1024xf32> to vector<32x1024xbf16>
    %c0_38 = arith.constant 0 : index
    %c0_39 = arith.constant 0 : index
    %116 = vector.load %arg16[%c0_38, %c0_39] : memref<224x1024xbf16, #tpu.memory_space<vmem>>, vector<32x1024xbf16>
    tpu.vector_store %arg16[%c0_38, %c0_39], %115 {strides = array<i32>} : memref<224x1024xbf16, #tpu.memory_space<vmem>>, vector<32x1024xbf16>,
    %c1_i32_40 = arith.constant 1 : i32
    %117 = tpu.dynamic_rotate %104 by %c1_i32_40 dim 1 : vector<32x1024xf32>, i32 -> vector<32x1024xf32>
    %c1_i32_41 = arith.constant 1 : i32
    %118 = vector.broadcast %c1_i32_41 : i32 to vector<1x1024xi32>
    %119 = arith.cmpi sge, %22, %118 : vector<1x1024xi32>
    %c129_i32_42 = arith.constant 129 : i32
    %120 = vector.broadcast %c129_i32_42 : i32 to vector<1x1024xi32>
    %121 = arith.cmpi slt, %22, %120 : vector<1x1024xi32>
    %122 = arith.andi %119, %121 : vector<1x1024xi1>
    %cst_43 = arith.constant 0.000000e+00 : f32
    %123 = vector.shape_cast %122 : vector<1x1024xi1> to vector<1x1024xi1>
    %124 = vector.broadcast %123 : vector<1x1024xi1> to vector<32x1024xi1>
    %125 = vector.broadcast %cst_43 : f32 to vector<32x1024xf32>
    %126 = arith.select %124, %117, %125 : vector<32x1024xi1>, vector<32x1024xf32>
    %127 = arith.truncf %126 : vector<32x1024xf32> to vector<32x1024xbf16>
    %c32_44 = arith.constant 32 : index
    %c0_45 = arith.constant 0 : index
    %128 = vector.load %arg16[%c32_44, %c0_45] : memref<224x1024xbf16, #tpu.memory_space<vmem>>, vector<32x1024xbf16>
    tpu.vector_store %arg16[%c32_44, %c0_45], %127 {strides = array<i32>} : memref<224x1024xbf16, #tpu.memory_space<vmem>>, vector<32x1024xbf16>,
    %129 = arith.truncf %104 : vector<32x1024xf32> to vector<32x1024xbf16>
    %c64_46 = arith.constant 64 : index
    %c0_47 = arith.constant 0 : index
    %130 = vector.load %arg16[%c64_46, %c0_47] : memref<224x1024xbf16, #tpu.memory_space<vmem>>, vector<32x1024xbf16>
    tpu.vector_store %arg16[%c64_46, %c0_47], %129 {strides = array<i32>} : memref<224x1024xbf16, #tpu.memory_space<vmem>>, vector<32x1024xbf16>,
    %c1023_i32_48 = arith.constant 1023 : i32
    %131 = tpu.dynamic_rotate %104 by %c1023_i32_48 dim 1 : vector<32x1024xf32>, i32 -> vector<32x1024xf32>
    %c-1_i32_49 = arith.constant -1 : i32
    %132 = vector.broadcast %c-1_i32_49 : i32 to vector<1x1024xi32>
    %133 = arith.cmpi sge, %22, %132 : vector<1x1024xi32>
    %c127_i32_50 = arith.constant 127 : i32
    %134 = vector.broadcast %c127_i32_50 : i32 to vector<1x1024xi32>
    %135 = arith.cmpi slt, %22, %134 : vector<1x1024xi32>
    %136 = arith.andi %133, %135 : vector<1x1024xi1>
    %cst_51 = arith.constant 0.000000e+00 : f32
    %137 = vector.shape_cast %136 : vector<1x1024xi1> to vector<1x1024xi1>
    %138 = vector.broadcast %137 : vector<1x1024xi1> to vector<32x1024xi1>
    %139 = vector.broadcast %cst_51 : f32 to vector<32x1024xf32>
    %140 = arith.select %138, %131, %139 : vector<32x1024xi1>, vector<32x1024xf32>
    %141 = arith.truncf %140 : vector<32x1024xf32> to vector<32x1024xbf16>
    %c96_52 = arith.constant 96 : index
    %c0_53 = arith.constant 0 : index
    %142 = vector.load %arg16[%c96_52, %c0_53] : memref<224x1024xbf16, #tpu.memory_space<vmem>>, vector<32x1024xbf16>
    tpu.vector_store %arg16[%c96_52, %c0_53], %141 {strides = array<i32>} : memref<224x1024xbf16, #tpu.memory_space<vmem>>, vector<32x1024xbf16>,
    %c1022_i32_54 = arith.constant 1022 : i32
    %143 = tpu.dynamic_rotate %104 by %c1022_i32_54 dim 1 : vector<32x1024xf32>, i32 -> vector<32x1024xf32>
    %c-2_i32_55 = arith.constant -2 : i32
    %144 = vector.broadcast %c-2_i32_55 : i32 to vector<1x1024xi32>
    %145 = arith.cmpi sge, %22, %144 : vector<1x1024xi32>
    %c126_i32_56 = arith.constant 126 : i32
    %146 = vector.broadcast %c126_i32_56 : i32 to vector<1x1024xi32>
    %147 = arith.cmpi slt, %22, %146 : vector<1x1024xi32>
    %148 = arith.andi %145, %147 : vector<1x1024xi1>
    %cst_57 = arith.constant 0.000000e+00 : f32
    %149 = vector.shape_cast %148 : vector<1x1024xi1> to vector<1x1024xi1>
    %150 = vector.broadcast %149 : vector<1x1024xi1> to vector<32x1024xi1>
    %151 = vector.broadcast %cst_57 : f32 to vector<32x1024xf32>
    %152 = arith.select %150, %143, %151 : vector<32x1024xi1>, vector<32x1024xf32>
    %153 = arith.truncf %152 : vector<32x1024xf32> to vector<32x1024xbf16>
    %c128_58 = arith.constant 128 : index
    %c0_59 = arith.constant 0 : index
    %154 = vector.load %arg16[%c128_58, %c0_59] : memref<224x1024xbf16, #tpu.memory_space<vmem>>, vector<32x1024xbf16>
    tpu.vector_store %arg16[%c128_58, %c0_59], %153 {strides = array<i32>} : memref<224x1024xbf16, #tpu.memory_space<vmem>>, vector<32x1024xbf16>,
    %c0_60 = arith.constant 0 : index
    %c0_61 = arith.constant 0 : index
    %155 = vector.load %arg6[%c0_60, %c0_61] : memref<32x160xbf16, #tpu.memory_space<vmem>>, vector<32x160xbf16>
    %c0_62 = arith.constant 0 : index
    %c0_63 = arith.constant 0 : index
    %156 = vector.load %arg16[%c0_62, %c0_63] : memref<224x1024xbf16, #tpu.memory_space<vmem>>, vector<160x1024xbf16>
    %cst_64 = arith.constant dense<0.000000e+00> : vector<32x1024xf32>
    %157 = tpu.matmul %155, %156, %cst_64 {dimension_numbers = #tpu.dot_dimension_numbers<[1], [0], [0], [1], [0, 0, 1, 1], [], []>} : vector<32x160xbf16>, vector<160x1024xbf16>, vector<32x1024xf32> -> vector<32x1024xf32>
    %c0_65 = arith.constant 0 : index
    %c0_66 = arith.constant 0 : index
    %158 = vector.load %arg7[%c0_65, %c0_66] : memref<32x1xf32, #tpu.memory_space<vmem>>, vector<32x1xf32>
    %159 = vector.broadcast %158 : vector<32x1xf32> to vector<32x1024xf32>
    %160 = arith.addf %157, %159 : vector<32x1024xf32>
    %cst_67 = arith.constant 0.000000e+00 : f32
    %161 = vector.broadcast %cst_67 : f32 to vector<32x1024xf32>
    %162 = arith.maximumf %160, %161 : vector<32x1024xf32>
    %c1_i32_68 = arith.constant 1 : i32
    %163 = tpu.dynamic_rotate %162 by %c1_i32_68 dim 1 : vector<32x1024xf32>, i32 -> vector<32x1024xf32>
    %c1_i32_69 = arith.constant 1 : i32
    %164 = vector.broadcast %c1_i32_69 : i32 to vector<1x1024xi32>
    %165 = arith.cmpi sge, %22, %164 : vector<1x1024xi32>
    %c129_i32_70 = arith.constant 129 : i32
    %166 = vector.broadcast %c129_i32_70 : i32 to vector<1x1024xi32>
    %167 = arith.cmpi slt, %22, %166 : vector<1x1024xi32>
    %168 = arith.andi %165, %167 : vector<1x1024xi1>
    %cst_71 = arith.constant 0.000000e+00 : f32
    %169 = vector.shape_cast %168 : vector<1x1024xi1> to vector<1x1024xi1>
    %170 = vector.broadcast %169 : vector<1x1024xi1> to vector<32x1024xi1>
    %171 = vector.broadcast %cst_71 : f32 to vector<32x1024xf32>
    %172 = arith.select %170, %163, %171 : vector<32x1024xi1>, vector<32x1024xf32>
    %173 = arith.truncf %172 : vector<32x1024xf32> to vector<32x1024xbf16>
    %c0_72 = arith.constant 0 : index
    %c0_73 = arith.constant 0 : index
    %174 = vector.load %arg16[%c0_72, %c0_73] : memref<224x1024xbf16, #tpu.memory_space<vmem>>, vector<32x1024xbf16>
    tpu.vector_store %arg16[%c0_72, %c0_73], %173 {strides = array<i32>} : memref<224x1024xbf16, #tpu.memory_space<vmem>>, vector<32x1024xbf16>,
    %175 = arith.truncf %162 : vector<32x1024xf32> to vector<32x1024xbf16>
    %c32_74 = arith.constant 32 : index
    %c0_75 = arith.constant 0 : index
    %176 = vector.load %arg16[%c32_74, %c0_75] : memref<224x1024xbf16, #tpu.memory_space<vmem>>, vector<32x1024xbf16>
    tpu.vector_store %arg16[%c32_74, %c0_75], %175 {strides = array<i32>} : memref<224x1024xbf16, #tpu.memory_space<vmem>>, vector<32x1024xbf16>,
    %c1023_i32_76 = arith.constant 1023 : i32
    %177 = tpu.dynamic_rotate %162 by %c1023_i32_76 dim 1 : vector<32x1024xf32>, i32 -> vector<32x1024xf32>
    %c-1_i32_77 = arith.constant -1 : i32
    %178 = vector.broadcast %c-1_i32_77 : i32 to vector<1x1024xi32>
    %179 = arith.cmpi sge, %22, %178 : vector<1x1024xi32>
    %c127_i32_78 = arith.constant 127 : i32
    %180 = vector.broadcast %c127_i32_78 : i32 to vector<1x1024xi32>
    %181 = arith.cmpi slt, %22, %180 : vector<1x1024xi32>
    %182 = arith.andi %179, %181 : vector<1x1024xi1>
    %cst_79 = arith.constant 0.000000e+00 : f32
    %183 = vector.shape_cast %182 : vector<1x1024xi1> to vector<1x1024xi1>
    %184 = vector.broadcast %183 : vector<1x1024xi1> to vector<32x1024xi1>
    %185 = vector.broadcast %cst_79 : f32 to vector<32x1024xf32>
    %186 = arith.select %184, %177, %185 : vector<32x1024xi1>, vector<32x1024xf32>
    %187 = arith.truncf %186 : vector<32x1024xf32> to vector<32x1024xbf16>
    %c64_80 = arith.constant 64 : index
    %c0_81 = arith.constant 0 : index
    %188 = vector.load %arg16[%c64_80, %c0_81] : memref<224x1024xbf16, #tpu.memory_space<vmem>>, vector<32x1024xbf16>
    tpu.vector_store %arg16[%c64_80, %c0_81], %187 {strides = array<i32>} : memref<224x1024xbf16, #tpu.memory_space<vmem>>, vector<32x1024xbf16>,
    %c0_82 = arith.constant 0 : index
    %c0_83 = arith.constant 0 : index
    %189 = vector.load %arg8[%c0_82, %c0_83] : memref<32x96xbf16, #tpu.memory_space<vmem>>, vector<32x96xbf16>
    %c0_84 = arith.constant 0 : index
    %c0_85 = arith.constant 0 : index
    %190 = vector.load %arg16[%c0_84, %c0_85] : memref<224x1024xbf16, #tpu.memory_space<vmem>>, vector<96x1024xbf16>
    %cst_86 = arith.constant dense<0.000000e+00> : vector<32x1024xf32>
    %191 = tpu.matmul %189, %190, %cst_86 {dimension_numbers = #tpu.dot_dimension_numbers<[1], [0], [0], [1], [0, 0, 1, 1], [], []>} : vector<32x96xbf16>, vector<96x1024xbf16>, vector<32x1024xf32> -> vector<32x1024xf32>
    %c0_87 = arith.constant 0 : index
    %c0_88 = arith.constant 0 : index
    %192 = vector.load %arg9[%c0_87, %c0_88] : memref<32x1xf32, #tpu.memory_space<vmem>>, vector<32x1xf32>
    %193 = vector.broadcast %192 : vector<32x1xf32> to vector<32x1024xf32>
    %194 = arith.addf %191, %193 : vector<32x1024xf32>
    %cst_89 = arith.constant 0.000000e+00 : f32
    %195 = vector.broadcast %cst_89 : f32 to vector<32x1024xf32>
    %196 = arith.maximumf %194, %195 : vector<32x1024xf32>
    %197 = arith.truncf %196 : vector<32x1024xf32> to vector<32x1024xbf16>
    %c0_90 = arith.constant 0 : index
    %c0_91 = arith.constant 0 : index
    %198 = vector.load %arg10[%c0_90, %c0_91] : memref<1024x8xbf16, #tpu.memory_space<vmem>>, vector<1024x8xbf16>
    %cst_92 = arith.constant dense<0.000000e+00> : vector<32x8xf32>
    %199 = tpu.matmul %197, %198, %cst_92 {dimension_numbers = #tpu.dot_dimension_numbers<[1], [0], [0], [1], [0, 0, 1, 1], [], []>} : vector<32x1024xbf16>, vector<1024x8xbf16>, vector<32x8xf32> -> vector<32x8xf32>
    %c0_93 = arith.constant 0 : index
    %c0_94 = arith.constant 0 : index
    %200 = vector.load %arg11[%c0_93, %c0_94] : memref<64x32xbf16, #tpu.memory_space<vmem>>, vector<64x32xbf16>
    %201 = arith.truncf %199 : vector<32x8xf32> to vector<32x8xbf16>
    %cst_95 = arith.constant dense<0.000000e+00> : vector<64x8xf32>
    %202 = tpu.matmul %200, %201, %cst_95 {dimension_numbers = #tpu.dot_dimension_numbers<[1], [0], [0], [1], [0, 0, 1, 1], [], []>} : vector<64x32xbf16>, vector<32x8xbf16>, vector<64x8xf32> -> vector<64x8xf32>
    %c0_96 = arith.constant 0 : index
    %c0_97 = arith.constant 0 : index
    %203 = vector.load %arg12[%c0_96, %c0_97] : memref<64x1xf32, #tpu.memory_space<vmem>>, vector<64x1xf32>
    %204 = vector.broadcast %203 : vector<64x1xf32> to vector<64x8xf32>
    %205 = arith.addf %202, %204 : vector<64x8xf32>
    %cst_98 = arith.constant 0.000000e+00 : f32
    %206 = vector.broadcast %cst_98 : f32 to vector<64x8xf32>
    %207 = arith.maximumf %205, %206 : vector<64x8xf32>
    %c0_99 = arith.constant 0 : index
    %c0_100 = arith.constant 0 : index
    %208 = vector.load %arg13[%c0_99, %c0_100] : memref<5x64xbf16, #tpu.memory_space<vmem>>, vector<5x64xbf16>
    %209 = arith.truncf %207 : vector<64x8xf32> to vector<64x8xbf16>
    %cst_101 = arith.constant dense<0.000000e+00> : vector<5x8xf32>
    %210 = tpu.matmul %208, %209, %cst_101 {dimension_numbers = #tpu.dot_dimension_numbers<[1], [0], [0], [1], [0, 0, 1, 1], [], []>} : vector<5x64xbf16>, vector<64x8xbf16>, vector<5x8xf32> -> vector<5x8xf32>
    %c0_102 = arith.constant 0 : index
    %c0_103 = arith.constant 0 : index
    %211 = vector.load %arg14[%c0_102, %c0_103] : memref<5x1xf32, #tpu.memory_space<vmem>>, vector<5x1xf32>
    %212 = vector.broadcast %211 : vector<5x1xf32> to vector<5x8xf32>
    %213 = arith.addf %210, %212 : vector<5x8xf32>
    %c0_104 = arith.constant 0 : index
    %c0_105 = arith.constant 0 : index
    %c0_106 = arith.constant 0 : index
    %214 = vector.load %arg15[%c0_104, %c0_105, %c0_106] : memref<1x5x8xf32, #tpu.memory_space<vmem>>, vector<1x5x8xf32>
    %215 = vector.shape_cast %214 : vector<1x5x8xf32> to vector<5x8xf32>
    %216 = vector.shape_cast %213 : vector<5x8xf32> to vector<1x5x8xf32>
    tpu.vector_store %arg15[%c0_104, %c0_105, %c0_106], %216 {strides = array<i32>} : memref<1x5x8xf32, #tpu.memory_space<vmem>>, vector<1x5x8xf32>,
    return
  }
  func.func @transform_0(%arg0: i32) -> (i32, i32) {
    %c0_i32 = arith.constant 0 : i32
    %c0_i32_0 = arith.constant 0 : i32
    return %c0_i32, %arg0 : i32, i32
  }
  func.func @transform_1(%arg0: i32) -> (i32, i32) {
    %c0_i32 = arith.constant 0 : i32
    %c0_i32_0 = arith.constant 0 : i32
    %c0_i32_1 = arith.constant 0 : i32
    return %c0_i32, %c0_i32_0 : i32, i32
  }
  func.func @transform_2(%arg0: i32) -> (i32, i32) {
    %c0_i32 = arith.constant 0 : i32
    %c0_i32_0 = arith.constant 0 : i32
    %c0_i32_1 = arith.constant 0 : i32
    return %c0_i32, %c0_i32_0 : i32, i32
  }
  func.func @transform_3(%arg0: i32) -> (i32, i32) {
    %c0_i32 = arith.constant 0 : i32
    %c0_i32_0 = arith.constant 0 : i32
    %c0_i32_1 = arith.constant 0 : i32
    return %c0_i32, %c0_i32_0 : i32, i32
  }
  func.func @transform_4(%arg0: i32) -> (i32, i32) {
    %c0_i32 = arith.constant 0 : i32
    %c0_i32_0 = arith.constant 0 : i32
    %c0_i32_1 = arith.constant 0 : i32
    return %c0_i32, %c0_i32_0 : i32, i32
  }
  func.func @transform_5(%arg0: i32) -> (i32, i32) {
    %c0_i32 = arith.constant 0 : i32
    %c0_i32_0 = arith.constant 0 : i32
    %c0_i32_1 = arith.constant 0 : i32
    return %c0_i32, %c0_i32_0 : i32, i32
  }
  func.func @transform_6(%arg0: i32) -> (i32, i32) {
    %c0_i32 = arith.constant 0 : i32
    %c0_i32_0 = arith.constant 0 : i32
    %c0_i32_1 = arith.constant 0 : i32
    return %c0_i32, %c0_i32_0 : i32, i32
  }
  func.func @transform_7(%arg0: i32) -> (i32, i32) {
    %c0_i32 = arith.constant 0 : i32
    %c0_i32_0 = arith.constant 0 : i32
    %c0_i32_1 = arith.constant 0 : i32
    return %c0_i32, %c0_i32_0 : i32, i32
  }
  func.func @transform_8(%arg0: i32) -> (i32, i32) {
    %c0_i32 = arith.constant 0 : i32
    %c0_i32_0 = arith.constant 0 : i32
    %c0_i32_1 = arith.constant 0 : i32
    return %c0_i32, %c0_i32_0 : i32, i32
  }
  func.func @transform_9(%arg0: i32) -> (i32, i32) {
    %c0_i32 = arith.constant 0 : i32
    %c0_i32_0 = arith.constant 0 : i32
    %c0_i32_1 = arith.constant 0 : i32
    return %c0_i32, %c0_i32_0 : i32, i32
  }
  func.func @transform_10(%arg0: i32) -> (i32, i32) {
    %c0_i32 = arith.constant 0 : i32
    %c0_i32_0 = arith.constant 0 : i32
    %c0_i32_1 = arith.constant 0 : i32
    return %c0_i32, %c0_i32_0 : i32, i32
  }
  func.func @transform_11(%arg0: i32) -> (i32, i32) {
    %c0_i32 = arith.constant 0 : i32
    %c0_i32_0 = arith.constant 0 : i32
    %c0_i32_1 = arith.constant 0 : i32
    return %c0_i32, %c0_i32_0 : i32, i32
  }
  func.func @transform_12(%arg0: i32) -> (i32, i32) {
    %c0_i32 = arith.constant 0 : i32
    %c0_i32_0 = arith.constant 0 : i32
    %c0_i32_1 = arith.constant 0 : i32
    return %c0_i32, %c0_i32_0 : i32, i32
  }
  func.func @transform_13(%arg0: i32) -> (i32, i32) {
    %c0_i32 = arith.constant 0 : i32
    %c0_i32_0 = arith.constant 0 : i32
    %c0_i32_1 = arith.constant 0 : i32
    return %c0_i32, %c0_i32_0 : i32, i32
  }
  func.func @transform_14(%arg0: i32) -> (i32, i32, i32) {
    %c0_i32 = arith.constant 0 : i32
    %c0_i32_0 = arith.constant 0 : i32
    %c0_i32_1 = arith.constant 0 : i32
    return %arg0, %c0_i32, %c0_i32_0 : i32, i32, i32
  }
}

</mosaic_0001>

<llo_original>
// kernel: tpu_custom_call.1
$region0: #{tpu_custom_call.1}
  #allocation0 [shape = 'u32[]', space=smem, size = 0x4, offset = 0x4, fixed_abs, tag = 'smem constant byte address 0x4 - core index']
  #allocation1 [shape = 'u32[144,128]{1,0:T(1,128)}', space=vmem, size = 0x12000, scoped, tag = 'internal scratch']
  #allocation2 [shape = 'bf16[224,1024]{1,0:T(8,128)(2,1)}', space=vmem, size = 0x70000, scoped, tag = 'scratch operand']
  %s0 = inlined_call_operand.vmem [shape: bf16[16,8192], index: 0, kind: input, shape index: {}]
  %s1 = inlined_call_operand.vmem [shape: bf16[32,16], index: 1, kind: input, shape index: {}]
  %s2 = inlined_call_operand.vmem [shape: f32[32,1], index: 2, kind: input, shape index: {}]
  %s3 = inlined_call_operand.vmem [shape: bf16[32,224], index: 3, kind: input, shape index: {}]
  %s4 = inlined_call_operand.vmem [shape: f32[32,1], index: 4, kind: input, shape index: {}]
  %s5 = inlined_call_operand.vmem [shape: bf16[32,160], index: 5, kind: input, shape index: {}]
  %s6 = inlined_call_operand.vmem [shape: f32[32,1], index: 6, kind: input, shape index: {}]
  %s7 = inlined_call_operand.vmem [shape: bf16[32,96], index: 7, kind: input, shape index: {}]
  %s8 = inlined_call_operand.vmem [shape: f32[32,1], index: 8, kind: input, shape index: {}]
  %s9 = inlined_call_operand.vmem [shape: bf16[1024,8], index: 9, kind: input, shape index: {}]
  %s10 = inlined_call_operand.vmem [shape: bf16[64,32], index: 10, kind: input, shape index: {}]
  %s11 = inlined_call_operand.vmem [shape: f32[64,1], index: 11, kind: input, shape index: {}]
  %s12 = inlined_call_operand.vmem [shape: bf16[5,64], index: 12, kind: input, shape index: {}]
  %s13 = inlined_call_operand.vmem [shape: f32[5,1], index: 13, kind: input, shape index: {}]
  %s14 = inlined_call_operand.vmem [shape: f32[8,5,8], index: 14, kind: output, shape index: {}]
  %s15 = sld [smem:[#allocation0]]
  $region112: #{tpu_custom_call.1} parent=0
    _
  %s17 = ssub.s32 1, %s15
  %s18 = scalar_select 0, %s17, %s15
  $region1: #{tpu_custom_call.1} parent=0
    #allocation3 [shape = 'u8[65536]{0}', space=vmem, size = 0x10000, scoped, tag = 'input window, operand 0']
    loop: start=0, step=1, limit=10
    $region2: #{tpu_custom_call.1} parent=1 // loop_pre_header
      _
    $region3: #{tpu_custom_call.1} parent=1 // loop_header
      %s20 = sphi 0, %s24
      %p21 = scmp.ge.s32.totalorder %s20, 10
      %s30 = sphi 0, %s32
      %s33 = sphi 0, %s30
      %s34 = sphi 0, %s33
      %s50 = sphi 0, %s34
      %s54 = sphi 0, %s54
      %s56 = sphi 0, %s54
      %s57 = sphi 0, %s56
      %s71 = sphi 0, %s57
      %s75 = sphi 0, %s75
      %s77 = sphi 0, %s75
      %s78 = sphi 0, %s77
      %s92 = sphi 0, %s78
      %s96 = sphi 0, %s96
      %s98 = sphi 0, %s96
      %s99 = sphi 0, %s98
      %s113 = sphi 0, %s99
      %s117 = sphi 0, %s117
      %s119 = sphi 0, %s117
      %s120 = sphi 0, %s119
      %s134 = sphi 0, %s120
      %s138 = sphi 0, %s138
      %s140 = sphi 0, %s138
      %s141 = sphi 0, %s140
      %s155 = sphi 0, %s141
      %s159 = sphi 0, %s159
      %s161 = sphi 0, %s159
      %s162 = sphi 0, %s161
      %s176 = sphi 0, %s162
      %s180 = sphi 0, %s180
      %s182 = sphi 0, %s180
      %s183 = sphi 0, %s182
      %s197 = sphi 0, %s183
      %s201 = sphi 0, %s201
      %s203 = sphi 0, %s201
      %s204 = sphi 0, %s203
      %s218 = sphi 0, %s204
      %s222 = sphi 0, %s222
      %s224 = sphi 0, %s222
      %s225 = sphi 0, %s224
      %s239 = sphi 0, %s225
      %s243 = sphi 0, %s243
      %s245 = sphi 0, %s243
      %s246 = sphi 0, %s245
      %s260 = sphi 0, %s246
      %s264 = sphi 0, %s264
      %s266 = sphi 0, %s264
      %s267 = sphi 0, %s266
      %s281 = sphi 0, %s267
      %s285 = sphi 0, %s285
      %s287 = sphi 0, %s285
      %s288 = sphi 0, %s287
      %s302 = sphi 0, %s288
      %s306 = sphi 0, %s306
      %s308 = sphi 0, %s306
      %s309 = sphi 0, %s308
      %s323 = sphi 0, %s309
      %s329 = sphi 0, %s331
      %s332 = sphi 0, %s329
      %s333 = sphi 0, %s332
      %s349 = sphi 0, %s333
    $region4: #{tpu_custom_call.1} parent=1 // loop_header_branch
      %23 = sbr.rel (%p21) target = $region8
    $region5: #{tpu_custom_call.1} parent=1 // loop_body
      %s25 = ssub.s32 %s20, 1
      %s26 = ssub.s32 %s20, 2
      %s27 = sadd.s32 %s20, 1
      %s28 = ssub.s32 %s20, %s27
      %p29 = scmp.eq.s32.totalorder %s28, 0
      %s31 = sadd.s32 %s30, 1
      %s32 = scalar_select %p29, %s30, %s31
      %p35 = pneg %p29
      %p36 = scmp.eq.s32.totalorder %s20, 7
      %p37 = por %p35, %p36
      %p38 = scmp.ne.s32.totalorder %s30, %s33
      %p39 = scmp.eq.s32.totalorder %s20, 0
      %p40 = por %p38, %p39
      %p41 = scmp.ne.s32.totalorder %s30, %s33
      %p42 = scmp.eq.s32.totalorder %s25, 7
      %p43 = por %p41, %p42
      %p44 = scmp.ne.s32.totalorder %s33, %s34
      %p45 = scmp.eq.s32.totalorder %s25, 0
      %p46 = por %p44, %p45
      %p47 = scmp.ne.s32.totalorder %s33, %s34
      %p48 = scmp.eq.s32.totalorder %s26, 7
      %p49 = por %p47, %p48
      %p51 = scmp.ne.s32.totalorder %s34, %s50
      %p52 = scmp.eq.s32.totalorder %s26, 0
      %p53 = por %p51, %p52
      %s55 = sadd.s32 %s54, 1
      %p58 = scmp.eq.s32.totalorder %s20, 7
      %p59 = scmp.ne.s32.totalorder %s54, %s56
      %p60 = scmp.eq.s32.totalorder %s20, 0
      %p61 = por %p59, %p60
      %p62 = scmp.ne.s32.totalorder %s54, %s56
      %p63 = scmp.eq.s32.totalorder %s25, 7
      %p64 = por %p62, %p63
      %p65 = scmp.ne.s32.totalorder %s56, %s57
      %p66 = scmp.eq.s32.totalorder %s25, 0
      %p67 = por %p65, %p66
      %p68 = scmp.ne.s32.totalorder %s56, %s57
      %p69 = scmp.eq.s32.totalorder %s26, 7
      %p70 = por %p68, %p69
      %p72 = scmp.ne.s32.totalorder %s57, %s71
      %p73 = scmp.eq.s32.totalorder %s26, 0
      %p74 = por %p72, %p73
      %s76 = sadd.s32 %s75, 1
      %p79 = scmp.eq.s32.totalorder %s20, 7
      %p80 = scmp.ne.s32.totalorder %s75, %s77
      %p81 = scmp.eq.s32.totalorder %s20, 0
      %p82 = por %p80, %p81
      %p83 = scmp.ne.s32.totalorder %s75, %s77
      %p84 = scmp.eq.s32.totalorder %s25, 7
      %p85 = por %p83, %p84
      %p86 = scmp.ne.s32.totalorder %s77, %s78
      %p87 = scmp.eq.s32.totalorder %s25, 0
      %p88 = por %p86, %p87
      %p89 = scmp.ne.s32.totalorder %s77, %s78
      %p90 = scmp.eq.s32.totalorder %s26, 7
      %p91 = por %p89, %p90
      %p93 = scmp.ne.s32.totalorder %s78, %s92
      %p94 = scmp.eq.s32.totalorder %s26, 0
      %p95 = por %p93, %p94
      %s97 = sadd.s32 %s96, 1
      %p100 = scmp.eq.s32.totalorder %s20, 7
      %p101 = scmp.ne.s32.totalorder %s96, %s98
      %p102 = scmp.eq.s32.totalorder %s20, 0
      %p103 = por %p101, %p102
      %p104 = scmp.ne.s32.totalorder %s96, %s98
      %p105 = scmp.eq.s32.totalorder %s25, 7
      %p106 = por %p104, %p105
      %p107 = scmp.ne.s32.totalorder %s98, %s99
      %p108 = scmp.eq.s32.totalorder %s25, 0
      %p109 = por %p107, %p108
      %p110 = scmp.ne.s32.totalorder %s98, %s99
      %p111 = scmp.eq.s32.totalorder %s26, 7
      %p112 = por %p110, %p111
      %p114 = scmp.ne.s32.totalorder %s99, %s113
      %p115 = scmp.eq.s32.totalorder %s26, 0
      %p116 = por %p114, %p115
      %s118 = sadd.s32 %s117, 1
      %p121 = scmp.eq.s32.totalorder %s20, 7
      %p122 = scmp.ne.s32.totalorder %s117, %s119
      %p123 = scmp.eq.s32.totalorder %s20, 0
      %p124 = por %p122, %p123
      %p125 = scmp.ne.s32.totalorder %s117, %s119
      %p126 = scmp.eq.s32.totalorder %s25, 7
      %p127 = por %p125, %p126
      %p128 = scmp.ne.s32.totalorder %s119, %s120
      %p129 = scmp.eq.s32.totalorder %s25, 0
      %p130 = por %p128, %p129
      %p131 = scmp.ne.s32.totalorder %s119, %s120
      %p132 = scmp.eq.s32.totalorder %s26, 7
      %p133 = por %p131, %p132
      %p135 = scmp.ne.s32.totalorder %s120, %s134
      %p136 = scmp.eq.s32.totalorder %s26, 0
      %p137 = por %p135, %p136
      %s139 = sadd.s32 %s138, 1
      %p142 = scmp.eq.s32.totalorder %s20, 7
      %p143 = scmp.ne.s32.totalorder %s138, %s140
      %p144 = scmp.eq.s32.totalorder %s20, 0
      %p145 = por %p143, %p144
      %p146 = scmp.ne.s32.totalorder %s138, %s140
      %p147 = scmp.eq.s32.totalorder %s25, 7
      %p148 = por %p146, %p147
      %p149 = scmp.ne.s32.totalorder %s140, %s141
      %p150 = scmp.eq.s32.totalorder %s25, 0
      %p151 = por %p149, %p150
      %p152 = scmp.ne.s32.totalorder %s140, %s141
      %p153 = scmp.eq.s32.totalorder %s26, 7
      %p154 = por %p152, %p153
      %p156 = scmp.ne.s32.totalorder %s141, %s155
      %p157 = scmp.eq.s32.totalorder %s26, 0
      %p158 = por %p156, %p157
      %s160 = sadd.s32 %s159, 1
      %p163 = scmp.eq.s32.totalorder %s20, 7
      %p164 = scmp.ne.s32.totalorder %s159, %s161
      %p165 = scmp.eq.s32.totalorder %s20, 0
      %p166 = por %p164, %p165
      %p167 = scmp.ne.s32.totalorder %s159, %s161
      %p168 = scmp.eq.s32.totalorder %s25, 7
      %p169 = por %p167, %p168
      %p170 = scmp.ne.s32.totalorder %s161, %s162
      %p171 = scmp.eq.s32.totalorder %s25, 0
      %p172 = por %p170, %p171
      %p173 = scmp.ne.s32.totalorder %s161, %s162
      %p174 = scmp.eq.s32.totalorder %s26, 7
      %p175 = por %p173, %p174
      %p177 = scmp.ne.s32.totalorder %s162, %s176
      %p178 = scmp.eq.s32.totalorder %s26, 0
      %p179 = por %p177, %p178
      %s181 = sadd.s32 %s180, 1
      %p184 = scmp.eq.s32.totalorder %s20, 7
      %p185 = scmp.ne.s32.totalorder %s180, %s182
      %p186 = scmp.eq.s32.totalorder %s20, 0
      %p187 = por %p185, %p186
      %p188 = scmp.ne.s32.totalorder %s180, %s182
      %p189 = scmp.eq.s32.totalorder %s25, 7
      %p190 = por %p188, %p189
      %p191 = scmp.ne.s32.totalorder %s182, %s183
      %p192 = scmp.eq.s32.totalorder %s25, 0
      %p193 = por %p191, %p192
      %p194 = scmp.ne.s32.totalorder %s182, %s183
      %p195 = scmp.eq.s32.totalorder %s26, 7
      %p196 = por %p194, %p195
      %p198 = scmp.ne.s32.totalorder %s183, %s197
      %p199 = scmp.eq.s32.totalorder %s26, 0
      %p200 = por %p198, %p199
      %s202 = sadd.s32 %s201, 1
      %p205 = scmp.eq.s32.totalorder %s20, 7
      %p206 = scmp.ne.s32.totalorder %s201, %s203
      %p207 = scmp.eq.s32.totalorder %s20, 0
      %p208 = por %p206, %p207
      %p209 = scmp.ne.s32.totalorder %s201, %s203
      %p210 = scmp.eq.s32.totalorder %s25, 7
      %p211 = por %p209, %p210
      %p212 = scmp.ne.s32.totalorder %s203, %s204
      %p213 = scmp.eq.s32.totalorder %s25, 0
      %p214 = por %p212, %p213
      %p215 = scmp.ne.s32.totalorder %s203, %s204
      %p216 = scmp.eq.s32.totalorder %s26, 7
      %p217 = por %p215, %p216
      %p219 = scmp.ne.s32.totalorder %s204, %s218
      %p220 = scmp.eq.s32.totalorder %s26, 0
      %p221 = por %p219, %p220
      %s223 = sadd.s32 %s222, 1
      %p226 = scmp.eq.s32.totalorder %s20, 7
      %p227 = scmp.ne.s32.totalorder %s222, %s224
      %p228 = scmp.eq.s32.totalorder %s20, 0
      %p229 = por %p227, %p228
      %p230 = scmp.ne.s32.totalorder %s222, %s224
      %p231 = scmp.eq.s32.totalorder %s25, 7
      %p232 = por %p230, %p231
      %p233 = scmp.ne.s32.totalorder %s224, %s225
      %p234 = scmp.eq.s32.totalorder %s25, 0
      %p235 = por %p233, %p234
      %p236 = scmp.ne.s32.totalorder %s224, %s225
      %p237 = scmp.eq.s32.totalorder %s26, 7
      %p238 = por %p236, %p237
      %p240 = scmp.ne.s32.totalorder %s225, %s239
      %p241 = scmp.eq.s32.totalorder %s26, 0
      %p242 = por %p240, %p241
      %s244 = sadd.s32 %s243, 1
      %p247 = scmp.eq.s32.totalorder %s20, 7
      %p248 = scmp.ne.s32.totalorder %s243, %s245
      %p249 = scmp.eq.s32.totalorder %s20, 0
      %p250 = por %p248, %p249
      %p251 = scmp.ne.s32.totalorder %s243, %s245
      %p252 = scmp.eq.s32.totalorder %s25, 7
      %p253 = por %p251, %p252
      %p254 = scmp.ne.s32.totalorder %s245, %s246
      %p255 = scmp.eq.s32.totalorder %s25, 0
      %p256 = por %p254, %p255
      %p257 = scmp.ne.s32.totalorder %s245, %s246
      %p258 = scmp.eq.s32.totalorder %s26, 7
      %p259 = por %p257, %p258
      %p261 = scmp.ne.s32.totalorder %s246, %s260
      %p262 = scmp.eq.s32.totalorder %s26, 0
      %p263 = por %p261, %p262
      %s265 = sadd.s32 %s264, 1
      %p268 = scmp.eq.s32.totalorder %s20, 7
      %p269 = scmp.ne.s32.totalorder %s264, %s266
      %p270 = scmp.eq.s32.totalorder %s20, 0
      %p271 = por %p269, %p270
      %p272 = scmp.ne.s32.totalorder %s264, %s266
      %p273 = scmp.eq.s32.totalorder %s25, 7
      %p274 = por %p272, %p273
      %p275 = scmp.ne.s32.totalorder %s266, %s267
      %p276 = scmp.eq.s32.totalorder %s25, 0
      %p277 = por %p275, %p276
      %p278 = scmp.ne.s32.totalorder %s266, %s267
      %p279 = scmp.eq.s32.totalorder %s26, 7
      %p280 = por %p278, %p279
      %p282 = scmp.ne.s32.totalorder %s267, %s281
      %p283 = scmp.eq.s32.totalorder %s26, 0
      %p284 = por %p282, %p283
      %s286 = sadd.s32 %s285, 1
      %p289 = scmp.eq.s32.totalorder %s20, 7
      %p290 = scmp.ne.s32.totalorder %s285, %s287
      %p291 = scmp.eq.s32.totalorder %s20, 0
      %p292 = por %p290, %p291
      %p293 = scmp.ne.s32.totalorder %s285, %s287
      %p294 = scmp.eq.s32.totalorder %s25, 7
      %p295 = por %p293, %p294
      %p296 = scmp.ne.s32.totalorder %s287, %s288
      %p297 = scmp.eq.s32.totalorder %s25, 0
      %p298 = por %p296, %p297
      %p299 = scmp.ne.s32.totalorder %s287, %s288
      %p300 = scmp.eq.s32.totalorder %s26, 7
      %p301 = por %p299, %p300
      %p303 = scmp.ne.s32.totalorder %s288, %s302
      %p304 = scmp.eq.s32.totalorder %s26, 0
      %p305 = por %p303, %p304
      %s307 = sadd.s32 %s306, 1
      %p310 = scmp.eq.s32.totalorder %s20, 7
      %p311 = scmp.ne.s32.totalorder %s306, %s308
      %p312 = scmp.eq.s32.totalorder %s20, 0
      %p313 = por %p311, %p312
      %p314 = scmp.ne.s32.totalorder %s306, %s308
      %p315 = scmp.eq.s32.totalorder %s25, 7
      %p316 = por %p314, %p315
      %p317 = scmp.ne.s32.totalorder %s308, %s309
      %p318 = scmp.eq.s32.totalorder %s25, 0
      %p319 = por %p317, %p318
      %p320 = scmp.ne.s32.totalorder %s308, %s309
      %p321 = scmp.eq.s32.totalorder %s26, 7
      %p322 = por %p320, %p321
      %p324 = scmp.ne.s32.totalorder %s309, %s323
      %p325 = scmp.eq.s32.totalorder %s26, 0
      %p326 = por %p324, %p325
      %s327 = ssub.s32 %s20, %s27
      %p328 = scmp.eq.s32.totalorder %s327, 0
      %s330 = sadd.s32 %s329, 1
      %s331 = scalar_select %p328, %s329, %s330
      %p334 = pneg %p328
      %p335 = scmp.eq.s32.totalorder %s20, 7
      %p336 = por %p334, %p335
      %p337 = scmp.ne.s32.totalorder %s329, %s332
      %p338 = scmp.eq.s32.totalorder %s20, 0
      %p339 = por %p337, %p338
      %p340 = scmp.ne.s32.totalorder %s329, %s332
      %p341 = scmp.eq.s32.totalorder %s25, 7
      %p342 = por %p340, %p341
      %p343 = scmp.ne.s32.totalorder %s332, %s333
      %p344 = scmp.eq.s32.totalorder %s25, 0
      %p345 = por %p343, %p344
      %p346 = scmp.ne.s32.totalorder %s332, %s333
      %p347 = scmp.eq.s32.totalorder %s26, 7
      %p348 = por %p346, %p347
      %p350 = scmp.ne.s32.totalorder %s333, %s349
      %p351 = scmp.eq.s32.totalorder %s26, 0
      %p352 = por %p350, %p351
      %p353 = scmp.le.s32.totalorder 1, %s20
      %p354 = scmp.lt.s32.totalorder %s20, 9
      %p355 = pnand %p353, %p354
      %p356 = pneg %p355
      // Predicated region
      $region9: #{tpu_custom_call.1} parent=5 // pred_check
        _
      $region10: #{tpu_custom_call.1} parent=5 // pred_check_branch
        %358 = sbr.rel (%p355) target = $region12
      $region11: #{tpu_custom_call.1} parent=5 // pred_region
        %s359 = ssub.s32 %s20, 1
        // Predicated region
        $region13: #{tpu_custom_call.1} parent=11 // pred_check
          %p360 = pneg %p67
        $region14: #{tpu_custom_call.1} parent=11 // pred_check_branch
          %362 = sbr.rel (%p360) target = $region16
        $region15: #{tpu_custom_call.1} parent=11 // pred_region
          _
        $region16: #{tpu_custom_call.1} parent=11 // pred_fallthru
          _
        // Predicated region
        $region17: #{tpu_custom_call.1} parent=11 // pred_check
          %p363 = pneg %p88
        $region18: #{tpu_custom_call.1} parent=11 // pred_check_branch
          %365 = sbr.rel (%p363) target = $region20
        $region19: #{tpu_custom_call.1} parent=11 // pred_region
          _
        $region20: #{tpu_custom_call.1} parent=11 // pred_fallthru
          _
        // Predicated region
        $region21: #{tpu_custom_call.1} parent=11 // pred_check
          %p366 = pneg %p109
        $region22: #{tpu_custom_call.1} parent=11 // pred_check_branch
          %368 = sbr.rel (%p366) target = $region24
        $region23: #{tpu_custom_call.1} parent=11 // pred_region
          _
        $region24: #{tpu_custom_call.1} parent=11 // pred_fallthru
          _
        // Predicated region
        $region25: #{tpu_custom_call.1} parent=11 // pred_check
          %p369 = pneg %p130
        $region26: #{tpu_custom_call.1} parent=11 // pred_check_branch
          %371 = sbr.rel (%p369) target = $region28
        $region27: #{tpu_custom_call.1} parent=11 // pred_region
          _
        $region28: #{tpu_custom_call.1} parent=11 // pred_fallthru
          _
        // Predicated region
        $region29: #{tpu_custom_call.1} parent=11 // pred_check
          %p372 = pneg %p151
        $region30: #{tpu_custom_call.1} parent=11 // pred_check_branch
          %374 = sbr.rel (%p372) target = $region32
        $region31: #{tpu_custom_call.1} parent=11 // pred_region
          _
        $region32: #{tpu_custom_call.1} parent=11 // pred_fallthru
          _
        // Predicated region
        $region33: #{tpu_custom_call.1} parent=11 // pred_check
          %p375 = pneg %p172
        $region34: #{tpu_custom_call.1} parent=11 // pred_check_branch
          %377 = sbr.rel (%p375) target = $region36
        $region35: #{tpu_custom_call.1} parent=11 // pred_region
          _
        $region36: #{tpu_custom_call.1} parent=11 // pred_fallthru
          _
        // Predicated region
        $region37: #{tpu_custom_call.1} parent=11 // pred_check
          %p378 = pneg %p193
        $region38: #{tpu_custom_call.1} parent=11 // pred_check_branch
          %380 = sbr.rel (%p378) target = $region40
        $region39: #{tpu_custom_call.1} parent=11 // pred_region
          _
        $region40: #{tpu_custom_call.1} parent=11 // pred_fallthru
          _
        // Predicated region
        $region41: #{tpu_custom_call.1} parent=11 // pred_check
          %p381 = pneg %p214
        $region42: #{tpu_custom_call.1} parent=11 // pred_check_branch
          %383 = sbr.rel (%p381) target = $region44
        $region43: #{tpu_custom_call.1} parent=11 // pred_region
          _
        $region44: #{tpu_custom_call.1} parent=11 // pred_fallthru
          _
        // Predicated region
        $region45: #{tpu_custom_call.1} parent=11 // pred_check
          %p384 = pneg %p235
        $region46: #{tpu_custom_call.1} parent=11 // pred_check_branch
          %386 = sbr.rel (%p384) target = $region48
        $region47: #{tpu_custom_call.1} parent=11 // pred_region
          _
        $region48: #{tpu_custom_call.1} parent=11 // pred_fallthru
          _
        // Predicated region
        $region49: #{tpu_custom_call.1} parent=11 // pred_check
          %p387 = pneg %p256
        $region50: #{tpu_custom_call.1} parent=11 // pred_check_branch
          %389 = sbr.rel (%p387) target = $region52
        $region51: #{tpu_custom_call.1} parent=11 // pred_region
          _
        $region52: #{tpu_custom_call.1} parent=11 // pred_fallthru
          _
        // Predicated region
        $region53: #{tpu_custom_call.1} parent=11 // pred_check
          %p390 = pneg %p277
        $region54: #{tpu_custom_call.1} parent=11 // pred_check_branch
          %392 = sbr.rel (%p390) target = $region56
        $region55: #{tpu_custom_call.1} parent=11 // pred_region
          _
        $region56: #{tpu_custom_call.1} parent=11 // pred_fallthru
          _
        // Predicated region
        $region57: #{tpu_custom_call.1} parent=11 // pred_check
          %p393 = pneg %p298
        $region58: #{tpu_custom_call.1} parent=11 // pred_check_branch
          %395 = sbr.rel (%p393) target = $region60
        $region59: #{tpu_custom_call.1} parent=11 // pred_region
          _
        $region60: #{tpu_custom_call.1} parent=11 // pred_fallthru
          _
        // Predicated region
        $region61: #{tpu_custom_call.1} parent=11 // pred_check
          %p396 = pneg %p319
        $region62: #{tpu_custom_call.1} parent=11 // pred_check_branch
          %398 = sbr.rel (%p396) target = $region64
        $region63: #{tpu_custom_call.1} parent=11 // pred_region
          _
        $region64: #{tpu_custom_call.1} parent=11 // pred_fallthru
          _
      $region12: #{tpu_custom_call.1} parent=5 // pred_fallthru
        _
      %p399 = scmp.lt.s32.totalorder %s20, 8
      // Predicated region
      $region65: #{tpu_custom_call.1} parent=5 // pred_check
        %p400 = pneg %p399
      $region66: #{tpu_custom_call.1} parent=5 // pred_check_branch
        %402 = sbr.rel (%p400) target = $region68
      $region67: #{tpu_custom_call.1} parent=5 // pred_region
        // Predicated region
        $region69: #{tpu_custom_call.1} parent=67 // pred_check
          %p403 = pneg %p40
        $region70: #{tpu_custom_call.1} parent=67 // pred_check_branch
          %405 = sbr.rel (%p403) target = $region72
        $region71: #{tpu_custom_call.1} parent=67 // pred_region
          %s406 = sand.u32 %s30, 1
          %s407 = sand.u32 %s30, 1
          %s408 = smul.addr %s407, 64
          %s409 = scalar_lea.vmem [#allocation3], %s408
          %s410 = smul.u32 8, %s20
          %s411 = smul.addr %s410, 4
          %s412 = scalar_lea.vmem %s0, %s411
          // Predicated region
          $region73: #{tpu_custom_call.1} parent=71 // pred_check
            _
          $region74: #{tpu_custom_call.1} parent=71 // pred_check_branch
            %414 = sbr.rel (0) target = $region76
          $region75: #{tpu_custom_call.1} parent=71 // pred_region
            // Predicated region
            $region77: #{tpu_custom_call.1} parent=75 // pred_check
              _
            $region78: #{tpu_custom_call.1} parent=75 // pred_check_branch
              %416 = sbr.rel (0) target = $region80
            $region79: #{tpu_custom_call.1} parent=75 // pred_region
              loop: start=0, step=1, limit=1
              $region81: #{tpu_custom_call.1} parent=79 // loop_pre_header
                _
              $region82: #{tpu_custom_call.1} parent=79 // loop_header
                %s418 = sphi 0, %s422
                %p419 = scmp.ge.s32.totalorder %s418, 1
                %s423 = sphi %s412, %s412
                %s424 = sphi %s409, %s409
              $region83: #{tpu_custom_call.1} parent=79 // loop_header_branch
                %421 = sbr.rel (%p419) target = $region87
              $region84: #{tpu_custom_call.1} parent=79 // loop_body
                %v425 = vld [vmem:[%s423] sm:$0xff]
                %426 = vst [vmem:[%s424] sm:$0xff] %v425
                %v427 = vld [vmem:[%s423 + $0x8] sm:$0xff]
                %428 = vst [vmem:[%s424 + $0x8] sm:$0xff] %v427
                %v429 = vld [vmem:[%s423 + $0x10] sm:$0xff]
                %430 = vst [vmem:[%s424 + $0x10] sm:$0xff] %v429
                %v431 = vld [vmem:[%s423 + $0x18] sm:$0xff]
                %432 = vst [vmem:[%s424 + $0x18] sm:$0xff] %v431
                %v433 = vld [vmem:[%s423 + $0x100] sm:$0xff]
                %434 = vst [vmem:[%s424 + $0x20] sm:$0xff] %v433
                %v435 = vld [vmem:[%s423 + $0x108] sm:$0xff]
                %436 = vst [vmem:[%s424 + $0x28] sm:$0xff] %v435
                %v437 = vld [vmem:[%s423 + $0x110] sm:$0xff]
                %438 = vst [vmem:[%s424 + $0x30] sm:$0xff] %v437
                %v439 = vld [vmem:[%s423 + $0x118] sm:$0xff]
                %440 = vst [vmem:[%s424 + $0x38] sm:$0xff] %v439
              $region85: #{tpu_custom_call.1} parent=79 // loop_footer
                %s422 = sadd.s32 1, %s418
              $region86: #{tpu_custom_call.1} parent=79 // loop_footer_branch
                %417 = sbr.rel target = $region82
              $region87: #{tpu_custom_call.1} parent=79 // loop_exit
                _
            $region80: #{tpu_custom_call.1} parent=75 // pred_fallthru
              _
            // Predicated region
            $region88: #{tpu_custom_call.1} parent=75 // pred_check
              _
            $region89: #{tpu_custom_call.1} parent=75 // pred_check_branch
              %442 = sbr.rel target = $region91
            $region90: #{tpu_custom_call.1} parent=75 // pred_region
              _
            $region91: #{tpu_custom_call.1} parent=75 // pred_fallthru
              _
          $region76: #{tpu_custom_call.1} parent=71 // pred_fallthru
            _
          %443 = vnop
        $region72: #{tpu_custom_call.1} parent=67 // pred_fallthru
          _
      $region68: #{tpu_custom_call.1} parent=5 // pred_fallthru
        _
      %p444 = scmp.le.s32.totalorder 1, %s20
      %p445 = scmp.lt.s32.totalorder %s20, 9
      %p446 = pnand %p444, %p445
      %p447 = pneg %p446
      // Predicated region
      $region92: #{tpu_custom_call.1} parent=5 // pred_check
        _
      $region93: #{tpu_custom_call.1} parent=5 // pred_check_branch
        %449 = sbr.rel (%p446) target = $region95
      $region94: #{tpu_custom_call.1} parent=5 // pred_region
        %s450 = ssub.s32 %s20, 1
        %s451 = sand.u32 %s33, 1
        %s452 = sand.u32 %s33, 1
        %s453 = smul.addr %s452, 64
        %s454 = scalar_lea.vmem [#allocation3], %s453
        // Predicated region
        $region96: #{tpu_custom_call.1} parent=94 // pred_check
          %p455 = pneg %p46
        $region97: #{tpu_custom_call.1} parent=94 // pred_check_branch
          %457 = sbr.rel (%p455) target = $region99
        $region98: #{tpu_custom_call.1} parent=94 // pred_region
          _
        $region99: #{tpu_custom_call.1} parent=94 // pred_fallthru
          _
        %s458 = sand.u32 %s33, 1
        %s459 = sand.u32 %s33, 1
        %s460 = smul.addr %s459, 64
        %s461 = scalar_lea.vmem [#allocation3], %s460
        %p462 = pneg %p46
        %p463 = pneg %p43
        %p464 = pneg %p67
        %p465 = pneg %p64
        %p466 = pneg %p88
        %p467 = pneg %p85
        %p468 = pneg %p109
        %p469 = pneg %p106
        %p470 = pneg %p130
        %p471 = pneg %p127
        %p472 = pneg %p151
        %p473 = pneg %p148
        %p474 = pneg %p172
        %p475 = pneg %p169
        %p476 = pneg %p193
        %p477 = pneg %p190
        %p478 = pneg %p214
        %p479 = pneg %p211
        %p480 = pneg %p235
        %p481 = pneg %p232
        %p482 = pneg %p256
        %p483 = pneg %p253
        %p484 = pneg %p277
        %p485 = pneg %p274
        %p486 = pneg %p298
        %p487 = pneg %p295
        %p488 = pneg %p319
        %p489 = pneg %p316
        %p490 = pneg %p345
        %p491 = pneg %p342
        %p492 = scmp.lt.s32.totalorder %s25, 7
        %s493 = scalar_select %p492, %s25, 7
        %s494 = smul.addr %s493, 8
        %s495 = scalar_lea.vmem %s14, %s494
        %s496 = smul.u32 8, %s25
        %p497 = scmp.lt.s32.totalorder %s25, 7
        %s498 = scalar_select %p497, %s25, 7
        %s499 = smul.addr %s498, 8
        %s500 = scalar_lea.vmem %s14, %s499
        %v502 = vld [vmem:[%s1] sm:$0xf]
        %v503 = vld [vmem:[%s1 + $0x4] sm:$0xf]
        %v504 = vld [vmem:[%s1 + $0x8] sm:$0xf]
        %v505 = vld [vmem:[%s1 + $0xc] sm:$0xf]
        %v506 = vld [vmem:[%s454] sm:$0xff]
        %v507 = vld [vmem:[%s454 + $0x8] sm:$0xff]
        %v508 = vld [vmem:[%s454 + $0x10] sm:$0xff]
        %v509 = vld [vmem:[%s454 + $0x18] sm:$0xff]
        %v510 = vld [vmem:[%s454 + $0x20] sm:$0xff]
        %v511 = vld [vmem:[%s454 + $0x28] sm:$0xff]
        %v512 = vld [vmem:[%s454 + $0x30] sm:$0xff]
        %v513 = vld [vmem:[%s454 + $0x38] sm:$0xff]
        %v514 = vld [vmem:[%s2] sm:$0xff]
        %v515 = vld [vmem:[%s2 + $0x8] sm:$0xff]
        %v516 = vld [vmem:[%s2 + $0x10] sm:$0xff]
        %v517 = vld [vmem:[%s2 + $0x18] sm:$0xff]
        %519 = vset.pattern.permute.xlu0 0
        %520 = vperm.xlu0 %519, %v514
        %v521 = vpop.permute.xlu0 %520
        %524 = vset.pattern.permute.xlu0 0
        %525 = vperm.xlu0 %524, %v515
        %v526 = vpop.permute.xlu0 %525
        %529 = vset.pattern.permute.xlu0 0
        %530 = vperm.xlu0 %529, %v516
        %v531 = vpop.permute.xlu0 %530
        %534 = vset.pattern.permute.xlu0 0
        %535 = vperm.xlu0 %534, %v517
        %v536 = vpop.permute.xlu0 %535
        %v542 = vunpack.c.l.b16 %v502
        %v543 = vunpack.c.l.b16 %v503
        %v544 = vunpack.c.l.b16 %v504
        %v545 = vunpack.c.l.b16 %v505
        %v546 = vpack.c.b16 %v543, %v542
        %v547 = vpack.c.b16 %v545, %v544
        %v556 = vunpack.c.l.b16 %v506
        %v557 = vunpack.c.h.b16 %v506
        %v558 = vunpack.c.l.b16 %v507
        %v559 = vunpack.c.h.b16 %v507
        %v560 = vunpack.c.l.b16 %v508
        %v561 = vunpack.c.h.b16 %v508
        %v562 = vunpack.c.l.b16 %v509
        %v563 = vunpack.c.h.b16 %v509
        %v564 = vunpack.c.l.b16 %v510
        %v565 = vunpack.c.h.b16 %v510
        %v566 = vunpack.c.l.b16 %v511
        %v567 = vunpack.c.h.b16 %v511
        %v568 = vunpack.c.l.b16 %v512
        %v569 = vunpack.c.h.b16 %v512
        %v570 = vunpack.c.l.b16 %v513
        %v571 = vunpack.c.h.b16 %v513
        %v572 = vpack.c.b16 %v564, %v556
        %v573 = vpack.c.b16 %v565, %v557
        %v574 = vpack.c.b16 %v566, %v558
        %v575 = vpack.c.b16 %v567, %v559
        %v576 = vpack.c.b16 %v568, %v560
        %v577 = vpack.c.b16 %v569, %v561
        %v578 = vpack.c.b16 %v570, %v562
        %v579 = vpack.c.b16 %v571, %v563
        %vm588 = vcmask 130048
        %v590 = vsel %vm588, %v546, 0
        %v593 = vsel %vm588, %v547, 0
        %595 = vmatprep.subr.bf16.mxu0 0
        %596 = vmatpush1.bf16.msra.mxu0 0
        %597 = vmatprep.subr.bf16.mxu0 0
        %598 = vmatpush1.bf16.msra.mxu0 0
        %599 = vmatprep.subr.bf16.mxu0 0
        %600 = vmatpush1.bf16.msra.mxu0 0
        %601 = vmatprep.subr.bf16.mxu0 0
        %602 = vmatpush1.bf16.msra.mxu0 0
        %603 = vmatprep.subr.bf16.mxu0 0
        %604 = vmatpush1.bf16.msra.mxu0 0
        %605 = vmatprep.subr.bf16.mxu0 0
        %606 = vmatpush1.bf16.msra.mxu0 0
        %607 = vmatprep.subr.bf16.mxu0 0
        %608 = vmatpush1.bf16.msra.mxu0 0
        %609 = vmatprep.subr.bf16.mxu0 %v573
        %610 = vmatpush1.bf16.msra.mxu0 %v572
        %611 = vmatprep.subr.bf16.mxu0 0
        %612 = vmatpush2.bf16.msra.mxu0 0
        %613 = vmatprep.subr.bf16.mxu0 0
        %614 = vmatpush2.bf16.msra.mxu0 0
        %615 = vmatprep.subr.bf16.mxu0 0
        %616 = vmatpush2.bf16.msra.mxu0 0
        %617 = vmatprep.subr.bf16.mxu0 0
        %618 = vmatpush2.bf16.msra.mxu0 0
        %619 = vmatprep.subr.bf16.mxu0 0
        %620 = vmatpush2.bf16.msra.mxu0 0
        %621 = vmatprep.subr.bf16.mxu0 0
        %622 = vmatpush2.bf16.msra.mxu0 0
        %623 = vmatprep.subr.bf16.mxu0 0
        %624 = vmatpush2.bf16.msra.mxu0 0
        %625 = vmatprep.subr.bf16.mxu0 0
        %626 = vmatpush2.bf16.msra.mxu0 0
        %627 = vmatprep.mubr.bf16.mxu0 0
        %628 = vmatmul.mubr.bf16.gmra.mxu0 %v590
        %v629 = vpop.f32.mrf.mxu0
        %v630 = vadd.f32 %v521, %v629
        %v631 = vpop.f32.mrf.mxu0
        %v632 = vadd.f32 %v521, %v631
        %v633 = vpop.f32.mrf.mxu0
        %v634 = vadd.f32 %v526, %v633
        %v635 = vpop.f32.mrf.mxu0
        %v636 = vadd.f32 %v526, %v635
        %637 = vmatprep.mubr.bf16.mxu0 0
        %638 = vmatmul.mubr.bf16.gmra.mxu0 %v593
        %v639 = vpop.f32.mrf.mxu0
        %v640 = vadd.f32 %v531, %v639
        %v641 = vpop.f32.mrf.mxu0
        %v642 = vadd.f32 %v531, %v641
        %v643 = vpop.f32.mrf.mxu0
        %v644 = vadd.f32 %v536, %v643
        %v645 = vpop.f32.mrf.mxu0
        %v646 = vadd.f32 %v536, %v645
        %647 = vdwg.mxu0
        %648 = vmatprep.subr.bf16.mxu0 0
        %649 = vmatpush1.bf16.msra.mxu0 0
        %650 = vmatprep.subr.bf16.mxu0 0
        %651 = vmatpush1.bf16.msra.mxu0 0
        %652 = vmatprep.subr.bf16.mxu0 0
        %653 = vmatpush1.bf16.msra.mxu0 0
        %654 = vmatprep.subr.bf16.mxu0 0
        %655 = vmatpush1.bf16.msra.mxu0 0
        %656 = vmatprep.subr.bf16.mxu0 0
        %657 = vmatpush1.bf16.msra.mxu0 0
        %658 = vmatprep.subr.bf16.mxu0 0
        %659 = vmatpush1.bf16.msra.mxu0 0
        %660 = vmatprep.subr.bf16.mxu0 0
        %661 = vmatpush1.bf16.msra.mxu0 0
        %662 = vmatprep.subr.bf16.mxu0 %v575
        %663 = vmatpush1.bf16.msra.mxu0 %v574
        %664 = vmatprep.subr.bf16.mxu0 0
        %665 = vmatpush2.bf16.msra.mxu0 0
        %666 = vmatprep.subr.bf16.mxu0 0
        %667 = vmatpush2.bf16.msra.mxu0 0
        %668 = vmatprep.subr.bf16.mxu0 0
        %669 = vmatpush2.bf16.msra.mxu0 0
        %670 = vmatprep.subr.bf16.mxu0 0
        %671 = vmatpush2.bf16.msra.mxu0 0
        %672 = vmatprep.subr.bf16.mxu0 0
        %673 = vmatpush2.bf16.msra.mxu0 0
        %674 = vmatprep.subr.bf16.mxu0 0
        %675 = vmatpush2.bf16.msra.mxu0 0
        %676 = vmatprep.subr.bf16.mxu0 0
        %677 = vmatpush2.bf16.msra.mxu0 0
        %678 = vmatprep.subr.bf16.mxu0 0
        %679 = vmatpush2.bf16.msra.mxu0 0
        %680 = vmatprep.mubr.bf16.mxu0 0
        %681 = vmatmul.mubr.bf16.gmra.mxu0 %v590
        %v682 = vpop.f32.mrf.mxu0
        %v683 = vadd.f32 %v521, %v682
        %v684 = vpop.f32.mrf.mxu0
        %v685 = vadd.f32 %v521, %v684
        %v686 = vpop.f32.mrf.mxu0
        %v687 = vadd.f32 %v526, %v686
        %v688 = vpop.f32.mrf.mxu0
        %v689 = vadd.f32 %v526, %v688
        %690 = vmatprep.mubr.bf16.mxu0 0
        %691 = vmatmul.mubr.bf16.gmra.mxu0 %v593
        %v692 = vpop.f32.mrf.mxu0
        %v693 = vadd.f32 %v531, %v692
        %v694 = vpop.f32.mrf.mxu0
        %v695 = vadd.f32 %v531, %v694
        %v696 = vpop.f32.mrf.mxu0
        %v697 = vadd.f32 %v536, %v696
        %v698 = vpop.f32.mrf.mxu0
        %v699 = vadd.f32 %v536, %v698
        %700 = vdwg.mxu0
        %701 = vmatprep.subr.bf16.mxu0 0
        %702 = vmatpush1.bf16.msra.mxu0 0
        %703 = vmatprep.subr.bf16.mxu0 0
        %704 = vmatpush1.bf16.msra.mxu0 0
        %705 = vmatprep.subr.bf16.mxu0 0
        %706 = vmatpush1.bf16.msra.mxu0 0
        %707 = vmatprep.subr.bf16.mxu0 0
        %708 = vmatpush1.bf16.msra.mxu0 0
        %709 = vmatprep.subr.bf16.mxu0 0
        %710 = vmatpush1.bf16.msra.mxu0 0
        %711 = vmatprep.subr.bf16.mxu0 0
        %712 = vmatpush1.bf16.msra.mxu0 0
        %713 = vmatprep.subr.bf16.mxu0 0
        %714 = vmatpush1.bf16.msra.mxu0 0
        %715 = vmatprep.subr.bf16.mxu0 %v577
        %716 = vmatpush1.bf16.msra.mxu0 %v576
        %717 = vmatprep.subr.bf16.mxu0 0
        %718 = vmatpush2.bf16.msra.mxu0 0
        %719 = vmatprep.subr.bf16.mxu0 0
        %720 = vmatpush2.bf16.msra.mxu0 0
        %721 = vmatprep.subr.bf16.mxu0 0
        %722 = vmatpush2.bf16.msra.mxu0 0
        %723 = vmatprep.subr.bf16.mxu0 0
        %724 = vmatpush2.bf16.msra.mxu0 0
        %725 = vmatprep.subr.bf16.mxu0 0
        %726 = vmatpush2.bf16.msra.mxu0 0
        %727 = vmatprep.subr.bf16.mxu0 0
        %728 = vmatpush2.bf16.msra.mxu0 0
        %729 = vmatprep.subr.bf16.mxu0 0
        %730 = vmatpush2.bf16.msra.mxu0 0
        %731 = vmatprep.subr.bf16.mxu0 0
        %732 = vmatpush2.bf16.msra.mxu0 0
        %733 = vmatprep.mubr.bf16.mxu0 0
        %734 = vmatmul.mubr.bf16.gmra.mxu0 %v590
        %v735 = vpop.f32.mrf.mxu0
        %v736 = vadd.f32 %v521, %v735
        %v737 = vpop.f32.mrf.mxu0
        %v738 = vadd.f32 %v521, %v737
        %v739 = vpop.f32.mrf.mxu0
        %v740 = vadd.f32 %v526, %v739
        %v741 = vpop.f32.mrf.mxu0
        %v742 = vadd.f32 %v526, %v741
        %743 = vmatprep.mubr.bf16.mxu0 0
        %744 = vmatmul.mubr.bf16.gmra.mxu0 %v593
        %v745 = vpop.f32.mrf.mxu0
        %v746 = vadd.f32 %v531, %v745
        %v747 = vpop.f32.mrf.mxu0
        %v748 = vadd.f32 %v531, %v747
        %v749 = vpop.f32.mrf.mxu0
        %v750 = vadd.f32 %v536, %v749
        %v751 = vpop.f32.mrf.mxu0
        %v752 = vadd.f32 %v536, %v751
        %753 = vdwg.mxu0
        %754 = vmatprep.subr.bf16.mxu0 0
        %755 = vmatpush1.bf16.msra.mxu0 0
        %756 = vmatprep.subr.bf16.mxu0 0
        %757 = vmatpush1.bf16.msra.mxu0 0
        %758 = vmatprep.subr.bf16.mxu0 0
        %759 = vmatpush1.bf16.msra.mxu0 0
        %760 = vmatprep.subr.bf16.mxu0 0
        %761 = vmatpush1.bf16.msra.mxu0 0
        %762 = vmatprep.subr.bf16.mxu0 0
        %763 = vmatpush1.bf16.msra.mxu0 0
        %764 = vmatprep.subr.bf16.mxu0 0
        %765 = vmatpush1.bf16.msra.mxu0 0
        %766 = vmatprep.subr.bf16.mxu0 0
        %767 = vmatpush1.bf16.msra.mxu0 0
        %768 = vmatprep.subr.bf16.mxu0 %v579
        %769 = vmatpush1.bf16.msra.mxu0 %v578
        %770 = vmatprep.subr.bf16.mxu0 0
        %771 = vmatpush2.bf16.msra.mxu0 0
        %772 = vmatprep.subr.bf16.mxu0 0
        %773 = vmatpush2.bf16.msra.mxu0 0
        %774 = vmatprep.subr.bf16.mxu0 0
        %775 = vmatpush2.bf16.msra.mxu0 0
        %776 = vmatprep.subr.bf16.mxu0 0
        %777 = vmatpush2.bf16.msra.mxu0 0
        %778 = vmatprep.subr.bf16.mxu0 0
        %779 = vmatpush2.bf16.msra.mxu0 0
        %780 = vmatprep.subr.bf16.mxu0 0
        %781 = vmatpush2.bf16.msra.mxu0 0
        %782 = vmatprep.subr.bf16.mxu0 0
        %783 = vmatpush2.bf16.msra.mxu0 0
        %784 = vmatprep.subr.bf16.mxu0 0
        %785 = vmatpush2.bf16.msra.mxu0 0
        %786 = vmatprep.mubr.bf16.mxu0 0
        %787 = vmatmul.mubr.bf16.gmra.mxu0 %v590
        %v788 = vpop.f32.mrf.mxu0
        %v789 = vadd.f32 %v521, %v788
        %v790 = vpop.f32.mrf.mxu0
        %v791 = vadd.f32 %v521, %v790
        %v792 = vpop.f32.mrf.mxu0
        %v793 = vadd.f32 %v526, %v792
        %v794 = vpop.f32.mrf.mxu0
        %v795 = vadd.f32 %v526, %v794
        %796 = vmatprep.mubr.bf16.mxu0 0
        %797 = vmatmul.mubr.bf16.gmra.mxu0 %v593
        %v798 = vpop.f32.mrf.mxu0
        %v799 = vadd.f32 %v531, %v798
        %v800 = vpop.f32.mrf.mxu0
        %v801 = vadd.f32 %v531, %v800
        %v802 = vpop.f32.mrf.mxu0
        %v803 = vadd.f32 %v536, %v802
        %v804 = vpop.f32.mrf.mxu0
        %v805 = vadd.f32 %v536, %v804
        %806 = vdwg.mxu0
        %v807 = vlaneseq
        %v808 = vand.u32 %v807, 127
        %v809 = vadd.s32 %v808, 128
        %v810 = vadd.s32 %v808, 256
        %v811 = vadd.s32 %v808, 384
        %v812 = vadd.s32 %v808, 512
        %v813 = vadd.s32 %v808, 640
        %v814 = vadd.s32 %v808, 768
        %v815 = vadd.s32 %v808, 896
        %vm816 = vcmp.lt.s32.totalorder %v808, 0
        %v817 = vsub.s32 0, %v808
        %v818 = vsel %vm816, %v817, %v808
        %v819 = vshrl.u32 %v818, 7
        %v820 = vand.u32 %v818, 127
        %v821 = vsub.s32 0, %v820
        %v822 = vsel %vm816, %v821, %v820
        %vm823 = vcmp.lt.s32.totalorder %v809, 0
        %v824 = vsub.s32 0, %v809
        %v825 = vsel %vm823, %v824, %v809
        %v826 = vshrl.u32 %v825, 7
        %v827 = vand.u32 %v825, 127
        %v828 = vsub.s32 0, %v827
        %v829 = vsel %vm823, %v828, %v827
        %vm830 = vcmp.lt.s32.totalorder %v810, 0
        %v831 = vsub.s32 0, %v810
        %v832 = vsel %vm830, %v831, %v810
        %v833 = vshrl.u32 %v832, 7
        %v834 = vand.u32 %v832, 127
        %v835 = vsub.s32 0, %v834
        %v836 = vsel %vm830, %v835, %v834
        %vm837 = vcmp.lt.s32.totalorder %v811, 0
        %v838 = vsub.s32 0, %v811
        %v839 = vsel %vm837, %v838, %v811
        %v840 = vshrl.u32 %v839, 7
        %v841 = vand.u32 %v839, 127
        %v842 = vsub.s32 0, %v841
        %v843 = vsel %vm837, %v842, %v841
        %vm844 = vcmp.lt.s32.totalorder %v812, 0
        %v845 = vsub.s32 0, %v812
        %v846 = vsel %vm844, %v845, %v812
        %v847 = vshrl.u32 %v846, 7
        %v848 = vand.u32 %v846, 127
        %v849 = vsub.s32 0, %v848
        %v850 = vsel %vm844, %v849, %v848
        %vm851 = vcmp.lt.s32.totalorder %v813, 0
        %v852 = vsub.s32 0, %v813
        %v853 = vsel %vm851, %v852, %v813
        %v854 = vshrl.u32 %v853, 7
        %v855 = vand.u32 %v853, 127
        %v856 = vsub.s32 0, %v855
        %v857 = vsel %vm851, %v856, %v855
        %vm858 = vcmp.lt.s32.totalorder %v814, 0
        %v859 = vsub.s32 0, %v814
        %v860 = vsel %vm858, %v859, %v814
        %v861 = vshrl.u32 %v860, 7
        %v862 = vand.u32 %v860, 127
        %v863 = vsub.s32 0, %v862
        %v864 = vsel %vm858, %v863, %v862
        %vm865 = vcmp.lt.s32.totalorder %v815, 0
        %v866 = vsub.s32 0, %v815
        %v867 = vsel %vm865, %v866, %v815
        %v868 = vshrl.u32 %v867, 7
        %v869 = vand.u32 %v867, 127
        %v870 = vsub.s32 0, %v869
        %v871 = vsel %vm865, %v870, %v869
        %vm872 = vcmp.ne.s32.totalorder %v822, 0
        %vm873 = vcmp.ne.s32.totalorder %v829, 0
        %vm874 = vcmp.ne.s32.totalorder %v836, 0
        %vm875 = vcmp.ne.s32.totalorder %v843, 0
        %vm876 = vcmp.ne.s32.totalorder %v850, 0
        %vm877 = vcmp.ne.s32.totalorder %v857, 0
        %vm878 = vcmp.ne.s32.totalorder %v864, 0
        %vm879 = vcmp.ne.s32.totalorder %v871, 0
        %vm880 = vcmp.lt.s32.totalorder %v822, 0
        %vm881 = vcmp.lt.s32.totalorder %v829, 0
        %vm882 = vcmp.lt.s32.totalorder %v836, 0
        %vm883 = vcmp.lt.s32.totalorder %v843, 0
        %vm884 = vcmp.lt.s32.totalorder %v850, 0
        %vm885 = vcmp.lt.s32.totalorder %v857, 0
        %vm886 = vcmp.lt.s32.totalorder %v864, 0
        %vm887 = vcmp.lt.s32.totalorder %v871, 0
        %vm888 = vmand %vm880, %vm872
        %vm889 = vmand %vm881, %vm873
        %vm890 = vmand %vm882, %vm874
        %vm891 = vmand %vm883, %vm875
        %vm892 = vmand %vm884, %vm876
        %vm893 = vmand %vm885, %vm877
        %vm894 = vmand %vm886, %vm878
        %vm895 = vmand %vm887, %vm879
        %v896 = vadd.s32 %v822, 128
        %v897 = vadd.s32 %v829, 128
        %v898 = vadd.s32 %v836, 128
        %v899 = vadd.s32 %v843, 128
        %v900 = vadd.s32 %v850, 128
        %v901 = vadd.s32 %v857, 128
        %v902 = vadd.s32 %v864, 128
        %v903 = vadd.s32 %v871, 128
        %v904 = vsel %vm888, %v896, %v822
        %v905 = vsel %vm889, %v897, %v829
        %v906 = vsel %vm890, %v898, %v836
        %v907 = vsel %vm891, %v899, %v843
        %v908 = vsel %vm892, %v900, %v850
        %v909 = vsel %vm893, %v901, %v857
        %v910 = vsel %vm894, %v902, %v864
        %v911 = vsel %vm895, %v903, %v871
        %912 = vrot.lane.b32.xlu0 %v630, 3
        %v913 = vpop.permute.xlu0 %912
        %914 = vrot.lane.b32.xlu0 %v634, 3
        %v915 = vpop.permute.xlu0 %914
        %916 = vrot.lane.b32.xlu0 %v640, 3
        %v917 = vpop.permute.xlu0 %916
        %918 = vrot.lane.b32.xlu0 %v644, 3
        %v919 = vpop.permute.xlu0 %918
        %920 = vrot.lane.b32.xlu0 %v632, 3
        %v921 = vpop.permute.xlu0 %920
        %922 = vrot.lane.b32.xlu0 %v636, 3
        %v923 = vpop.permute.xlu0 %922
        %924 = vrot.lane.b32.xlu0 %v642, 3
        %v925 = vpop.permute.xlu0 %924
        %926 = vrot.lane.b32.xlu0 %v646, 3
        %v927 = vpop.permute.xlu0 %926
        %928 = vrot.lane.b32.xlu0 %v683, 3
        %v929 = vpop.permute.xlu0 %928
        %930 = vrot.lane.b32.xlu0 %v687, 3
        %v931 = vpop.permute.xlu0 %930
        %932 = vrot.lane.b32.xlu0 %v693, 3
        %v933 = vpop.permute.xlu0 %932
        %934 = vrot.lane.b32.xlu0 %v697, 3
        %v935 = vpop.permute.xlu0 %934
        %936 = vrot.lane.b32.xlu0 %v685, 3
        %v937 = vpop.permute.xlu0 %936
        %938 = vrot.lane.b32.xlu0 %v689, 3
        %v939 = vpop.permute.xlu0 %938
        %940 = vrot.lane.b32.xlu0 %v695, 3
        %v941 = vpop.permute.xlu0 %940
        %942 = vrot.lane.b32.xlu0 %v699, 3
        %v943 = vpop.permute.xlu0 %942
        %944 = vrot.lane.b32.xlu0 %v736, 3
        %v945 = vpop.permute.xlu0 %944
        %946 = vrot.lane.b32.xlu0 %v740, 3
        %v947 = vpop.permute.xlu0 %946
        %948 = vrot.lane.b32.xlu0 %v746, 3
        %v949 = vpop.permute.xlu0 %948
        %950 = vrot.lane.b32.xlu0 %v750, 3
        %v951 = vpop.permute.xlu0 %950
        %952 = vrot.lane.b32.xlu0 %v738, 3
        %v953 = vpop.permute.xlu0 %952
        %954 = vrot.lane.b32.xlu0 %v742, 3
        %v955 = vpop.permute.xlu0 %954
        %956 = vrot.lane.b32.xlu0 %v748, 3
        %v957 = vpop.permute.xlu0 %956
        %958 = vrot.lane.b32.xlu0 %v752, 3
        %v959 = vpop.permute.xlu0 %958
        %960 = vrot.lane.b32.xlu0 %v789, 3
        %v961 = vpop.permute.xlu0 %960
        %962 = vrot.lane.b32.xlu0 %v793, 3
        %v963 = vpop.permute.xlu0 %962
        %964 = vrot.lane.b32.xlu0 %v799, 3
        %v965 = vpop.permute.xlu0 %964
        %966 = vrot.lane.b32.xlu0 %v803, 3
        %v967 = vpop.permute.xlu0 %966
        %968 = vrot.lane.b32.xlu0 %v791, 3
        %v969 = vpop.permute.xlu0 %968
        %970 = vrot.lane.b32.xlu0 %v795, 3
        %v971 = vpop.permute.xlu0 %970
        %972 = vrot.lane.b32.xlu0 %v801, 3
        %v973 = vpop.permute.xlu0 %972
        %974 = vrot.lane.b32.xlu0 %v805, 3
        %v975 = vpop.permute.xlu0 %974
        %vm976 = vcmp.lt.s32.totalorder %v808, 3
        %v977 = vsel %vm976, %v961, %v969
        %v978 = vsel %vm976, %v963, %v971
        %v979 = vsel %vm976, %v965, %v973
        %v980 = vsel %vm976, %v967, %v975
        %v981 = vsel %vm976, %v953, %v961
        %v982 = vsel %vm976, %v955, %v963
        %v983 = vsel %vm976, %v957, %v965
        %v984 = vsel %vm976, %v959, %v967
        %v985 = vsel %vm976, %v945, %v953
        %v986 = vsel %vm976, %v947, %v955
        %v987 = vsel %vm976, %v949, %v957
        %v988 = vsel %vm976, %v951, %v959
        %v989 = vsel %vm976, %v937, %v945
        %v990 = vsel %vm976, %v939, %v947
        %v991 = vsel %vm976, %v941, %v949
        %v992 = vsel %vm976, %v943, %v951
        %v993 = vsel %vm976, %v929, %v937
        %v994 = vsel %vm976, %v931, %v939
        %v995 = vsel %vm976, %v933, %v941
        %v996 = vsel %vm976, %v935, %v943
        %v997 = vsel %vm976, %v921, %v929
        %v998 = vsel %vm976, %v923, %v931
        %v999 = vsel %vm976, %v925, %v933
        %v1000 = vsel %vm976, %v927, %v935
        %v1001 = vsel %vm976, %v913, %v921
        %v1002 = vsel %vm976, %v915, %v923
        %v1003 = vsel %vm976, %v917, %v925
        %v1004 = vsel %vm976, %v919, %v927
        %v1005 = vsel %vm976, %v969, %v913
        %v1006 = vsel %vm976, %v971, %v915
        %v1007 = vsel %vm976, %v973, %v917
        %v1008 = vsel %vm976, %v975, %v919
        %vm1009 = vcmp.ge.s32.totalorder %v904, 3
        %vm1010 = vcmp.ge.s32.totalorder %v905, 3
        %vm1011 = vcmp.ge.s32.totalorder %v906, 3
        %vm1012 = vcmp.ge.s32.totalorder %v907, 3
        %vm1013 = vcmp.ge.s32.totalorder %v908, 3
        %vm1014 = vcmp.ge.s32.totalorder %v909, 3
        %vm1015 = vcmp.ge.s32.totalorder %v910, 3
        %vm1016 = vcmp.ge.s32.totalorder %v911, 3
        %vm1017 = vcmp.lt.s32.totalorder %v904, 131
        %vm1018 = vcmp.lt.s32.totalorder %v905, 131
        %vm1019 = vcmp.lt.s32.totalorder %v906, 131
        %vm1020 = vcmp.lt.s32.totalorder %v907, 131
        %vm1021 = vcmp.lt.s32.totalorder %v908, 131
        %vm1022 = vcmp.lt.s32.totalorder %v909, 131
        %vm1023 = vcmp.lt.s32.totalorder %v910, 131
        %vm1024 = vcmp.lt.s32.totalorder %v911, 131
        %vm1025 = vmand %vm1009, %vm1017
        %vm1026 = vmand %vm1010, %vm1018
        %vm1027 = vmand %vm1011, %vm1019
        %vm1028 = vmand %vm1012, %vm1020
        %vm1029 = vmand %vm1013, %vm1021
        %vm1030 = vmand %vm1014, %vm1022
        %vm1031 = vmand %vm1015, %vm1023
        %vm1032 = vmand %vm1016, %vm1024
        %v1033 = vsel %vm1025, 1, 0
        %v1034 = vsel %vm1026, 1, 0
        %v1035 = vsel %vm1027, 1, 0
        %v1036 = vsel %vm1028, 1, 0
        %v1037 = vsel %vm1029, 1, 0
        %v1038 = vsel %vm1030, 1, 0
        %v1039 = vsel %vm1031, 1, 0
        %v1040 = vsel %vm1032, 1, 0
        %vm1041 = vcmp.eq.s32.totalorder %v1033, 1
        %vm1042 = vcmp.eq.s32.totalorder %v1034, 1
        %vm1043 = vcmp.eq.s32.totalorder %v1035, 1
        %vm1044 = vcmp.eq.s32.totalorder %v1036, 1
        %vm1045 = vcmp.eq.s32.totalorder %v1037, 1
        %vm1046 = vcmp.eq.s32.totalorder %v1038, 1
        %vm1047 = vcmp.eq.s32.totalorder %v1039, 1
        %vm1048 = vcmp.eq.s32.totalorder %v1040, 1
        %v1049 = vsel %vm1041, %v1005, 0.0
        %v1050 = vsel %vm1042, %v1001, 0.0
        %v1051 = vsel %vm1043, %v997, 0.0
        %v1052 = vsel %vm1044, %v993, 0.0
        %v1053 = vsel %vm1045, %v989, 0.0
        %v1054 = vsel %vm1046, %v985, 0.0
        %v1055 = vsel %vm1047, %v981, 0.0
        %v1056 = vsel %vm1048, %v977, 0.0
        %v1057 = vsel %vm1041, %v1006, 0.0
        %v1058 = vsel %vm1042, %v1002, 0.0
        %v1059 = vsel %vm1043, %v998, 0.0
        %v1060 = vsel %vm1044, %v994, 0.0
        %v1061 = vsel %vm1045, %v990, 0.0
        %v1062 = vsel %vm1046, %v986, 0.0
        %v1063 = vsel %vm1047, %v982, 0.0
        %v1064 = vsel %vm1048, %v978, 0.0
        %v1065 = vsel %vm1041, %v1007, 0.0
        %v1066 = vsel %vm1042, %v1003, 0.0
        %v1067 = vsel %vm1043, %v999, 0.0
        %v1068 = vsel %vm1044, %v995, 0.0
        %v1069 = vsel %vm1045, %v991, 0.0
        %v1070 = vsel %vm1046, %v987, 0.0
        %v1071 = vsel %vm1047, %v983, 0.0
        %v1072 = vsel %vm1048, %v979, 0.0
        %v1073 = vsel %vm1041, %v1008, 0.0
        %v1074 = vsel %vm1042, %v1004, 0.0
        %v1075 = vsel %vm1043, %v1000, 0.0
        %v1076 = vsel %vm1044, %v996, 0.0
        %v1077 = vsel %vm1045, %v992, 0.0
        %v1078 = vsel %vm1046, %v988, 0.0
        %v1079 = vsel %vm1047, %v984, 0.0
        %v1080 = vsel %vm1048, %v980, 0.0
        %v1081 = vpack.c.bf16 %v1057, %v1049
        %v1082 = vpack.c.bf16 %v1058, %v1050
        %v1083 = vpack.c.bf16 %v1059, %v1051
        %v1084 = vpack.c.bf16 %v1060, %v1052
        %v1085 = vpack.c.bf16 %v1061, %v1053
        %v1086 = vpack.c.bf16 %v1062, %v1054
        %v1087 = vpack.c.bf16 %v1063, %v1055
        %v1088 = vpack.c.bf16 %v1064, %v1056
        %v1089 = vpack.c.bf16 %v1073, %v1065
        %v1090 = vpack.c.bf16 %v1074, %v1066
        %v1091 = vpack.c.bf16 %v1075, %v1067
        %v1092 = vpack.c.bf16 %v1076, %v1068
        %v1093 = vpack.c.bf16 %v1077, %v1069
        %v1094 = vpack.c.bf16 %v1078, %v1070
        %v1095 = vpack.c.bf16 %v1079, %v1071
        %v1096 = vpack.c.bf16 %v1080, %v1072
        %v1113 = vunpack.c.l.b16 %v1081
        %v1114 = vunpack.c.l.b16 %v1082
        %v1115 = vunpack.c.l.b16 %v1083
        %v1116 = vunpack.c.l.b16 %v1084
        %v1117 = vunpack.c.l.b16 %v1085
        %v1118 = vunpack.c.l.b16 %v1086
        %v1119 = vunpack.c.l.b16 %v1087
        %v1120 = vunpack.c.l.b16 %v1088
        %v1121 = vunpack.c.h.b16 %v1081
        %v1122 = vunpack.c.h.b16 %v1082
        %v1123 = vunpack.c.h.b16 %v1083
        %v1124 = vunpack.c.h.b16 %v1084
        %v1125 = vunpack.c.h.b16 %v1085
        %v1126 = vunpack.c.h.b16 %v1086
        %v1127 = vunpack.c.h.b16 %v1087
        %v1128 = vunpack.c.h.b16 %v1088
        %v1129 = vunpack.c.l.b16 %v1089
        %v1130 = vunpack.c.l.b16 %v1090
        %v1131 = vunpack.c.l.b16 %v1091
        %v1132 = vunpack.c.l.b16 %v1092
        %v1133 = vunpack.c.l.b16 %v1093
        %v1134 = vunpack.c.l.b16 %v1094
        %v1135 = vunpack.c.l.b16 %v1095
        %v1136 = vunpack.c.l.b16 %v1096
        %v1137 = vunpack.c.h.b16 %v1089
        %v1138 = vunpack.c.h.b16 %v1090
        %v1139 = vunpack.c.h.b16 %v1091
        %v1140 = vunpack.c.h.b16 %v1092
        %v1141 = vunpack.c.h.b16 %v1093
        %v1142 = vunpack.c.h.b16 %v1094
        %v1143 = vunpack.c.h.b16 %v1095
        %v1144 = vunpack.c.h.b16 %v1096
        %v1145 = vpack.c.b16 %v1114, %v1113
        %v1146 = vpack.c.b16 %v1116, %v1115
        %v1147 = vpack.c.b16 %v1118, %v1117
        %v1148 = vpack.c.b16 %v1120, %v1119
        %v1149 = vpack.c.b16 %v1122, %v1121
        %v1150 = vpack.c.b16 %v1124, %v1123
        %v1151 = vpack.c.b16 %v1126, %v1125
        %v1152 = vpack.c.b16 %v1128, %v1127
        %v1153 = vpack.c.b16 %v1130, %v1129
        %v1154 = vpack.c.b16 %v1132, %v1131
        %v1155 = vpack.c.b16 %v1134, %v1133
        %v1156 = vpack.c.b16 %v1136, %v1135
        %v1157 = vpack.c.b16 %v1138, %v1137
        %v1158 = vpack.c.b16 %v1140, %v1139
        %v1159 = vpack.c.b16 %v1142, %v1141
        %v1160 = vpack.c.b16 %v1144, %v1143
        %1177 = vst [vmem:[#allocation2] sm:$0xff] %v1145
        %1178 = vst [vmem:[#allocation2 + $0x8] sm:$0xff] %v1146
        %1179 = vst [vmem:[#allocation2 + $0x10] sm:$0xff] %v1147
        %1180 = vst [vmem:[#allocation2 + $0x18] sm:$0xff] %v1148
        %1181 = vst [vmem:[#allocation2 + $0x20] sm:$0xff] %v1149
        %1182 = vst [vmem:[#allocation2 + $0x28] sm:$0xff] %v1150
        %1183 = vst [vmem:[#allocation2 + $0x30] sm:$0xff] %v1151
        %1184 = vst [vmem:[#allocation2 + $0x38] sm:$0xff] %v1152
        %1185 = vst [vmem:[#allocation2 + $0x40] sm:$0xff] %v1153
        %1186 = vst [vmem:[#allocation2 + $0x48] sm:$0xff] %v1154
        %1187 = vst [vmem:[#allocation2 + $0x50] sm:$0xff] %v1155
        %1188 = vst [vmem:[#allocation2 + $0x58] sm:$0xff] %v1156
        %1189 = vst [vmem:[#allocation2 + $0x60] sm:$0xff] %v1157
        %1190 = vst [vmem:[#allocation2 + $0x68] sm:$0xff] %v1158
        %1191 = vst [vmem:[#allocation2 + $0x70] sm:$0xff] %v1159
        %1192 = vst [vmem:[#allocation2 + $0x78] sm:$0xff] %v1160
        %1193 = vrot.lane.b32.xlu0 %v630, 2
        %v1194 = vpop.permute.xlu0 %1193
        %1195 = vrot.lane.b32.xlu0 %v634, 2
        %v1196 = vpop.permute.xlu0 %1195
        %1197 = vrot.lane.b32.xlu0 %v640, 2
        %v1198 = vpop.permute.xlu0 %1197
        %1199 = vrot.lane.b32.xlu0 %v644, 2
        %v1200 = vpop.permute.xlu0 %1199
        %1201 = vrot.lane.b32.xlu0 %v632, 2
        %v1202 = vpop.permute.xlu0 %1201
        %1203 = vrot.lane.b32.xlu0 %v636, 2
        %v1204 = vpop.permute.xlu0 %1203
        %1205 = vrot.lane.b32.xlu0 %v642, 2
        %v1206 = vpop.permute.xlu0 %1205
        %1207 = vrot.lane.b32.xlu0 %v646, 2
        %v1208 = vpop.permute.xlu0 %1207
        %1209 = vrot.lane.b32.xlu0 %v683, 2
        %v1210 = vpop.permute.xlu0 %1209
        %1211 = vrot.lane.b32.xlu0 %v687, 2
        %v1212 = vpop.permute.xlu0 %1211
        %1213 = vrot.lane.b32.xlu0 %v693, 2
        %v1214 = vpop.permute.xlu0 %1213
        %1215 = vrot.lane.b32.xlu0 %v697, 2
        %v1216 = vpop.permute.xlu0 %1215
        %1217 = vrot.lane.b32.xlu0 %v685, 2
        %v1218 = vpop.permute.xlu0 %1217
        %1219 = vrot.lane.b32.xlu0 %v689, 2
        %v1220 = vpop.permute.xlu0 %1219
        %1221 = vrot.lane.b32.xlu0 %v695, 2
        %v1222 = vpop.permute.xlu0 %1221
        %1223 = vrot.lane.b32.xlu0 %v699, 2
        %v1224 = vpop.permute.xlu0 %1223
        %1225 = vrot.lane.b32.xlu0 %v736, 2
        %v1226 = vpop.permute.xlu0 %1225
        %1227 = vrot.lane.b32.xlu0 %v740, 2
        %v1228 = vpop.permute.xlu0 %1227
        %1229 = vrot.lane.b32.xlu0 %v746, 2
        %v1230 = vpop.permute.xlu0 %1229
        %1231 = vrot.lane.b32.xlu0 %v750, 2
        %v1232 = vpop.permute.xlu0 %1231
        %1233 = vrot.lane.b32.xlu0 %v738, 2
        %v1234 = vpop.permute.xlu0 %1233
        %1235 = vrot.lane.b32.xlu0 %v742, 2
        %v1236 = vpop.permute.xlu0 %1235
        %1237 = vrot.lane.b32.xlu0 %v748, 2
        %v1238 = vpop.permute.xlu0 %1237
        %1239 = vrot.lane.b32.xlu0 %v752, 2
        %v1240 = vpop.permute.xlu0 %1239
        %1241 = vrot.lane.b32.xlu0 %v789, 2
        %v1242 = vpop.permute.xlu0 %1241
        %1243 = vrot.lane.b32.xlu0 %v793, 2
        %v1244 = vpop.permute.xlu0 %1243
        %1245 = vrot.lane.b32.xlu0 %v799, 2
        %v1246 = vpop.permute.xlu0 %1245
        %1247 = vrot.lane.b32.xlu0 %v803, 2
        %v1248 = vpop.permute.xlu0 %1247
        %1249 = vrot.lane.b32.xlu0 %v791, 2
        %v1250 = vpop.permute.xlu0 %1249
        %1251 = vrot.lane.b32.xlu0 %v795, 2
        %v1252 = vpop.permute.xlu0 %1251
        %1253 = vrot.lane.b32.xlu0 %v801, 2
        %v1254 = vpop.permute.xlu0 %1253
        %1255 = vrot.lane.b32.xlu0 %v805, 2
        %v1256 = vpop.permute.xlu0 %1255
        %vm1257 = vcmp.lt.s32.totalorder %v808, 2
        %v1258 = vsel %vm1257, %v1242, %v1250
        %v1259 = vsel %vm1257, %v1244, %v1252
        %v1260 = vsel %vm1257, %v1246, %v1254
        %v1261 = vsel %vm1257, %v1248, %v1256
        %v1262 = vsel %vm1257, %v1234, %v1242
        %v1263 = vsel %vm1257, %v1236, %v1244
        %v1264 = vsel %vm1257, %v1238, %v1246
        %v1265 = vsel %vm1257, %v1240, %v1248
        %v1266 = vsel %vm1257, %v1226, %v1234
        %v1267 = vsel %vm1257, %v1228, %v1236
        %v1268 = vsel %vm1257, %v1230, %v1238
        %v1269 = vsel %vm1257, %v1232, %v1240
        %v1270 = vsel %vm1257, %v1218, %v1226
        %v1271 = vsel %vm1257, %v1220, %v1228
        %v1272 = vsel %vm1257, %v1222, %v1230
        %v1273 = vsel %vm1257, %v1224, %v1232
        %v1274 = vsel %vm1257, %v1210, %v1218
        %v1275 = vsel %vm1257, %v1212, %v1220
        %v1276 = vsel %vm1257, %v1214, %v1222
        %v1277 = vsel %vm1257, %v1216, %v1224
        %v1278 = vsel %vm1257, %v1202, %v1210
        %v1279 = vsel %vm1257, %v1204, %v1212
        %v1280 = vsel %vm1257, %v1206, %v1214
        %v1281 = vsel %vm1257, %v1208, %v1216
        %v1282 = vsel %vm1257, %v1194, %v1202
        %v1283 = vsel %vm1257, %v1196, %v1204
        %v1284 = vsel %vm1257, %v1198, %v1206
        %v1285 = vsel %vm1257, %v1200, %v1208
        %v1286 = vsel %vm1257, %v1250, %v1194
        %v1287 = vsel %vm1257, %v1252, %v1196
        %v1288 = vsel %vm1257, %v1254, %v1198
        %v1289 = vsel %vm1257, %v1256, %v1200
        %vm1290 = vcmp.ge.s32.totalorder %v904, 2
        %vm1291 = vcmp.ge.s32.totalorder %v905, 2
        %vm1292 = vcmp.ge.s32.totalorder %v906, 2
        %vm1293 = vcmp.ge.s32.totalorder %v907, 2
        %vm1294 = vcmp.ge.s32.totalorder %v908, 2
        %vm1295 = vcmp.ge.s32.totalorder %v909, 2
        %vm1296 = vcmp.ge.s32.totalorder %v910, 2
        %vm1297 = vcmp.ge.s32.totalorder %v911, 2
        %vm1298 = vcmp.lt.s32.totalorder %v904, 130
        %vm1299 = vcmp.lt.s32.totalorder %v905, 130
        %vm1300 = vcmp.lt.s32.totalorder %v906, 130
        %vm1301 = vcmp.lt.s32.totalorder %v907, 130
        %vm1302 = vcmp.lt.s32.totalorder %v908, 130
        %vm1303 = vcmp.lt.s32.totalorder %v909, 130
        %vm1304 = vcmp.lt.s32.totalorder %v910, 130
        %vm1305 = vcmp.lt.s32.totalorder %v911, 130
        %vm1306 = vmand %vm1290, %vm1298
        %vm1307 = vmand %vm1291, %vm1299
        %vm1308 = vmand %vm1292, %vm1300
        %vm1309 = vmand %vm1293, %vm1301
        %vm1310 = vmand %vm1294, %vm1302
        %vm1311 = vmand %vm1295, %vm1303
        %vm1312 = vmand %vm1296, %vm1304
        %vm1313 = vmand %vm1297, %vm1305
        %v1314 = vsel %vm1306, 1, 0
        %v1315 = vsel %vm1307, 1, 0
        %v1316 = vsel %vm1308, 1, 0
        %v1317 = vsel %vm1309, 1, 0
        %v1318 = vsel %vm1310, 1, 0
        %v1319 = vsel %vm1311, 1, 0
        %v1320 = vsel %vm1312, 1, 0
        %v1321 = vsel %vm1313, 1, 0
        %vm1322 = vcmp.eq.s32.totalorder %v1314, 1
        %vm1323 = vcmp.eq.s32.totalorder %v1315, 1
        %vm1324 = vcmp.eq.s32.totalorder %v1316, 1
        %vm1325 = vcmp.eq.s32.totalorder %v1317, 1
        %vm1326 = vcmp.eq.s32.totalorder %v1318, 1
        %vm1327 = vcmp.eq.s32.totalorder %v1319, 1
        %vm1328 = vcmp.eq.s32.totalorder %v1320, 1
        %vm1329 = vcmp.eq.s32.totalorder %v1321, 1
        %v1330 = vsel %vm1322, %v1286, 0.0
        %v1331 = vsel %vm1323, %v1282, 0.0
        %v1332 = vsel %vm1324, %v1278, 0.0
        %v1333 = vsel %vm1325, %v1274, 0.0
        %v1334 = vsel %vm1326, %v1270, 0.0
        %v1335 = vsel %vm1327, %v1266, 0.0
        %v1336 = vsel %vm1328, %v1262, 0.0
        %v1337 = vsel %vm1329, %v1258, 0.0
        %v1338 = vsel %vm1322, %v1287, 0.0
        %v1339 = vsel %vm1323, %v1283, 0.0
        %v1340 = vsel %vm1324, %v1279, 0.0
        %v1341 = vsel %vm1325, %v1275, 0.0
        %v1342 = vsel %vm1326, %v1271, 0.0
        %v1343 = vsel %vm1327, %v1267, 0.0
        %v1344 = vsel %vm1328, %v1263, 0.0
        %v1345 = vsel %vm1329, %v1259, 0.0
        %v1346 = vsel %vm1322, %v1288, 0.0
        %v1347 = vsel %vm1323, %v1284, 0.0
        %v1348 = vsel %vm1324, %v1280, 0.0
        %v1349 = vsel %vm1325, %v1276, 0.0
        %v1350 = vsel %vm1326, %v1272, 0.0
        %v1351 = vsel %vm1327, %v1268, 0.0
        %v1352 = vsel %vm1328, %v1264, 0.0
        %v1353 = vsel %vm1329, %v1260, 0.0
        %v1354 = vsel %vm1322, %v1289, 0.0
        %v1355 = vsel %vm1323, %v1285, 0.0
        %v1356 = vsel %vm1324, %v1281, 0.0
        %v1357 = vsel %vm1325, %v1277, 0.0
        %v1358 = vsel %vm1326, %v1273, 0.0
        %v1359 = vsel %vm1327, %v1269, 0.0
        %v1360 = vsel %vm1328, %v1265, 0.0
        %v1361 = vsel %vm1329, %v1261, 0.0
        %v1362 = vpack.c.bf16 %v1338, %v1330
        %v1363 = vpack.c.bf16 %v1339, %v1331
        %v1364 = vpack.c.bf16 %v1340, %v1332
        %v1365 = vpack.c.bf16 %v1341, %v1333
        %v1366 = vpack.c.bf16 %v1342, %v1334
        %v1367 = vpack.c.bf16 %v1343, %v1335
        %v1368 = vpack.c.bf16 %v1344, %v1336
        %v1369 = vpack.c.bf16 %v1345, %v1337
        %v1370 = vpack.c.bf16 %v1354, %v1346
        %v1371 = vpack.c.bf16 %v1355, %v1347
        %v1372 = vpack.c.bf16 %v1356, %v1348
        %v1373 = vpack.c.bf16 %v1357, %v1349
        %v1374 = vpack.c.bf16 %v1358, %v1350
        %v1375 = vpack.c.bf16 %v1359, %v1351
        %v1376 = vpack.c.bf16 %v1360, %v1352
        %v1377 = vpack.c.bf16 %v1361, %v1353
        %v1394 = vunpack.c.l.b16 %v1362
        %v1395 = vunpack.c.l.b16 %v1363
        %v1396 = vunpack.c.l.b16 %v1364
        %v1397 = vunpack.c.l.b16 %v1365
        %v1398 = vunpack.c.l.b16 %v1366
        %v1399 = vunpack.c.l.b16 %v1367
        %v1400 = vunpack.c.l.b16 %v1368
        %v1401 = vunpack.c.l.b16 %v1369
        %v1402 = vunpack.c.h.b16 %v1362
        %v1403 = vunpack.c.h.b16 %v1363
        %v1404 = vunpack.c.h.b16 %v1364
        %v1405 = vunpack.c.h.b16 %v1365
        %v1406 = vunpack.c.h.b16 %v1366
        %v1407 = vunpack.c.h.b16 %v1367
        %v1408 = vunpack.c.h.b16 %v1368
        %v1409 = vunpack.c.h.b16 %v1369
        %v1410 = vunpack.c.l.b16 %v1370
        %v1411 = vunpack.c.l.b16 %v1371
        %v1412 = vunpack.c.l.b16 %v1372
        %v1413 = vunpack.c.l.b16 %v1373
        %v1414 = vunpack.c.l.b16 %v1374
        %v1415 = vunpack.c.l.b16 %v1375
        %v1416 = vunpack.c.l.b16 %v1376
        %v1417 = vunpack.c.l.b16 %v1377
        %v1418 = vunpack.c.h.b16 %v1370
        %v1419 = vunpack.c.h.b16 %v1371
        %v1420 = vunpack.c.h.b16 %v1372
        %v1421 = vunpack.c.h.b16 %v1373
        %v1422 = vunpack.c.h.b16 %v1374
        %v1423 = vunpack.c.h.b16 %v1375
        %v1424 = vunpack.c.h.b16 %v1376
        %v1425 = vunpack.c.h.b16 %v1377
        %v1426 = vpack.c.b16 %v1395, %v1394
        %v1427 = vpack.c.b16 %v1397, %v1396
        %v1428 = vpack.c.b16 %v1399, %v1398
        %v1429 = vpack.c.b16 %v1401, %v1400
        %v1430 = vpack.c.b16 %v1403, %v1402
        %v1431 = vpack.c.b16 %v1405, %v1404
        %v1432 = vpack.c.b16 %v1407, %v1406
        %v1433 = vpack.c.b16 %v1409, %v1408
        %v1434 = vpack.c.b16 %v1411, %v1410
        %v1435 = vpack.c.b16 %v1413, %v1412
        %v1436 = vpack.c.b16 %v1415, %v1414
        %v1437 = vpack.c.b16 %v1417, %v1416
        %v1438 = vpack.c.b16 %v1419, %v1418
        %v1439 = vpack.c.b16 %v1421, %v1420
        %v1440 = vpack.c.b16 %v1423, %v1422
        %v1441 = vpack.c.b16 %v1425, %v1424
        %1458 = vst [vmem:[#allocation2 + $0x80] sm:$0xff] %v1426
        %1459 = vst [vmem:[#allocation2 + $0x88] sm:$0xff] %v1427
        %1460 = vst [vmem:[#allocation2 + $0x90] sm:$0xff] %v1428
        %1461 = vst [vmem:[#allocation2 + $0x98] sm:$0xff] %v1429
        %1462 = vst [vmem:[#allocation2 + $0xa0] sm:$0xff] %v1430
        %1463 = vst [vmem:[#allocation2 + $0xa8] sm:$0xff] %v1431
        %1464 = vst [vmem:[#allocation2 + $0xb0] sm:$0xff] %v1432
        %1465 = vst [vmem:[#allocation2 + $0xb8] sm:$0xff] %v1433
        %1466 = vst [vmem:[#allocation2 + $0xc0] sm:$0xff] %v1434
        %1467 = vst [vmem:[#allocation2 + $0xc8] sm:$0xff] %v1435
        %1468 = vst [vmem:[#allocation2 + $0xd0] sm:$0xff] %v1436
        %1469 = vst [vmem:[#allocation2 + $0xd8] sm:$0xff] %v1437
        %1470 = vst [vmem:[#allocation2 + $0xe0] sm:$0xff] %v1438
        %1471 = vst [vmem:[#allocation2 + $0xe8] sm:$0xff] %v1439
        %1472 = vst [vmem:[#allocation2 + $0xf0] sm:$0xff] %v1440
        %1473 = vst [vmem:[#allocation2 + $0xf8] sm:$0xff] %v1441
        %1474 = vrot.lane.b32.xlu0 %v630, 1
        %v1475 = vpop.permute.xlu0 %1474
        %1476 = vrot.lane.b32.xlu0 %v634, 1
        %v1477 = vpop.permute.xlu0 %1476
        %1478 = vrot.lane.b32.xlu0 %v640, 1
        %v1479 = vpop.permute.xlu0 %1478
        %1480 = vrot.lane.b32.xlu0 %v644, 1
        %v1481 = vpop.permute.xlu0 %1480
        %1482 = vrot.lane.b32.xlu0 %v632, 1
        %v1483 = vpop.permute.xlu0 %1482
        %1484 = vrot.lane.b32.xlu0 %v636, 1
        %v1485 = vpop.permute.xlu0 %1484
        %1486 = vrot.lane.b32.xlu0 %v642, 1
        %v1487 = vpop.permute.xlu0 %1486
        %1488 = vrot.lane.b32.xlu0 %v646, 1
        %v1489 = vpop.permute.xlu0 %1488
        %1490 = vrot.lane.b32.xlu0 %v683, 1
        %v1491 = vpop.permute.xlu0 %1490
        %1492 = vrot.lane.b32.xlu0 %v687, 1
        %v1493 = vpop.permute.xlu0 %1492
        %1494 = vrot.lane.b32.xlu0 %v693, 1
        %v1495 = vpop.permute.xlu0 %1494
        %1496 = vrot.lane.b32.xlu0 %v697, 1
        %v1497 = vpop.permute.xlu0 %1496
        %1498 = vrot.lane.b32.xlu0 %v685, 1
        %v1499 = vpop.permute.xlu0 %1498
        %1500 = vrot.lane.b32.xlu0 %v689, 1
        %v1501 = vpop.permute.xlu0 %1500
        %1502 = vrot.lane.b32.xlu0 %v695, 1
        %v1503 = vpop.permute.xlu0 %1502
        %1504 = vrot.lane.b32.xlu0 %v699, 1
        %v1505 = vpop.permute.xlu0 %1504
        %1506 = vrot.lane.b32.xlu0 %v736, 1
        %v1507 = vpop.permute.xlu0 %1506
        %1508 = vrot.lane.b32.xlu0 %v740, 1
        %v1509 = vpop.permute.xlu0 %1508
        %1510 = vrot.lane.b32.xlu0 %v746, 1
        %v1511 = vpop.permute.xlu0 %1510
        %1512 = vrot.lane.b32.xlu0 %v750, 1
        %v1513 = vpop.permute.xlu0 %1512
        %1514 = vrot.lane.b32.xlu0 %v738, 1
        %v1515 = vpop.permute.xlu0 %1514
        %1516 = vrot.lane.b32.xlu0 %v742, 1
        %v1517 = vpop.permute.xlu0 %1516
        %1518 = vrot.lane.b32.xlu0 %v748, 1
        %v1519 = vpop.permute.xlu0 %1518
        %1520 = vrot.lane.b32.xlu0 %v752, 1
        %v1521 = vpop.permute.xlu0 %1520
        %1522 = vrot.lane.b32.xlu0 %v789, 1
        %v1523 = vpop.permute.xlu0 %1522
        %1524 = vrot.lane.b32.xlu0 %v793, 1
        %v1525 = vpop.permute.xlu0 %1524
        %1526 = vrot.lane.b32.xlu0 %v799, 1
        %v1527 = vpop.permute.xlu0 %1526
        %1528 = vrot.lane.b32.xlu0 %v803, 1
        %v1529 = vpop.permute.xlu0 %1528
        %1530 = vrot.lane.b32.xlu0 %v791, 1
        %v1531 = vpop.permute.xlu0 %1530
        %1532 = vrot.lane.b32.xlu0 %v795, 1
        %v1533 = vpop.permute.xlu0 %1532
        %1534 = vrot.lane.b32.xlu0 %v801, 1
        %v1535 = vpop.permute.xlu0 %1534
        %1536 = vrot.lane.b32.xlu0 %v805, 1
        %v1537 = vpop.permute.xlu0 %1536
        %vm1538 = vcmp.lt.s32.totalorder %v808, 1
        %v1539 = vsel %vm1538, %v1523, %v1531
        %v1540 = vsel %vm1538, %v1525, %v1533
        %v1541 = vsel %vm1538, %v1527, %v1535
        %v1542 = vsel %vm1538, %v1529, %v1537
        %v1543 = vsel %vm1538, %v1515, %v1523
        %v1544 = vsel %vm1538, %v1517, %v1525
        %v1545 = vsel %vm1538, %v1519, %v1527
        %v1546 = vsel %vm1538, %v1521, %v1529
        %v1547 = vsel %vm1538, %v1507, %v1515
        %v1548 = vsel %vm1538, %v1509, %v1517
        %v1549 = vsel %vm1538, %v1511, %v1519
        %v1550 = vsel %vm1538, %v1513, %v1521
        %v1551 = vsel %vm1538, %v1499, %v1507
        %v1552 = vsel %vm1538, %v1501, %v1509
        %v1553 = vsel %vm1538, %v1503, %v1511
        %v1554 = vsel %vm1538, %v1505, %v1513
        %v1555 = vsel %vm1538, %v1491, %v1499
        %v1556 = vsel %vm1538, %v1493, %v1501
        %v1557 = vsel %vm1538, %v1495, %v1503
        %v1558 = vsel %vm1538, %v1497, %v1505
        %v1559 = vsel %vm1538, %v1483, %v1491
        %v1560 = vsel %vm1538, %v1485, %v1493
        %v1561 = vsel %vm1538, %v1487, %v1495
        %v1562 = vsel %vm1538, %v1489, %v1497
        %v1563 = vsel %vm1538, %v1475, %v1483
        %v1564 = vsel %vm1538, %v1477, %v1485
        %v1565 = vsel %vm1538, %v1479, %v1487
        %v1566 = vsel %vm1538, %v1481, %v1489
        %v1567 = vsel %vm1538, %v1531, %v1475
        %v1568 = vsel %vm1538, %v1533, %v1477
        %v1569 = vsel %vm1538, %v1535, %v1479
        %v1570 = vsel %vm1538, %v1537, %v1481
        %vm1571 = vcmp.ge.s32.totalorder %v904, 1
        %vm1572 = vcmp.ge.s32.totalorder %v905, 1
        %vm1573 = vcmp.ge.s32.totalorder %v906, 1
        %vm1574 = vcmp.ge.s32.totalorder %v907, 1
        %vm1575 = vcmp.ge.s32.totalorder %v908, 1
        %vm1576 = vcmp.ge.s32.totalorder %v909, 1
        %vm1577 = vcmp.ge.s32.totalorder %v910, 1
        %vm1578 = vcmp.ge.s32.totalorder %v911, 1
        %vm1579 = vcmp.lt.s32.totalorder %v904, 129
        %vm1580 = vcmp.lt.s32.totalorder %v905, 129
        %vm1581 = vcmp.lt.s32.totalorder %v906, 129
        %vm1582 = vcmp.lt.s32.totalorder %v907, 129
        %vm1583 = vcmp.lt.s32.totalorder %v908, 129
        %vm1584 = vcmp.lt.s32.totalorder %v909, 129
        %vm1585 = vcmp.lt.s32.totalorder %v910, 129
        %vm1586 = vcmp.lt.s32.totalorder %v911, 129
        %vm1587 = vmand %vm1571, %vm1579
        %vm1588 = vmand %vm1572, %vm1580
        %vm1589 = vmand %vm1573, %vm1581
        %vm1590 = vmand %vm1574, %vm1582
        %vm1591 = vmand %vm1575, %vm1583
        %vm1592 = vmand %vm1576, %vm1584
        %vm1593 = vmand %vm1577, %vm1585
        %vm1594 = vmand %vm1578, %vm1586
        %v1595 = vsel %vm1587, 1, 0
        %v1596 = vsel %vm1588, 1, 0
        %v1597 = vsel %vm1589, 1, 0
        %v1598 = vsel %vm1590, 1, 0
        %v1599 = vsel %vm1591, 1, 0
        %v1600 = vsel %vm1592, 1, 0
        %v1601 = vsel %vm1593, 1, 0
        %v1602 = vsel %vm1594, 1, 0
        %vm1603 = vcmp.eq.s32.totalorder %v1595, 1
        %vm1604 = vcmp.eq.s32.totalorder %v1596, 1
        %vm1605 = vcmp.eq.s32.totalorder %v1597, 1
        %vm1606 = vcmp.eq.s32.totalorder %v1598, 1
        %vm1607 = vcmp.eq.s32.totalorder %v1599, 1
        %vm1608 = vcmp.eq.s32.totalorder %v1600, 1
        %vm1609 = vcmp.eq.s32.totalorder %v1601, 1
        %vm1610 = vcmp.eq.s32.totalorder %v1602, 1
        %v1611 = vsel %vm1603, %v1567, 0.0
        %v1612 = vsel %vm1604, %v1563, 0.0
        %v1613 = vsel %vm1605, %v1559, 0.0
        %v1614 = vsel %vm1606, %v1555, 0.0
        %v1615 = vsel %vm1607, %v1551, 0.0
        %v1616 = vsel %vm1608, %v1547, 0.0
        %v1617 = vsel %vm1609, %v1543, 0.0
        %v1618 = vsel %vm1610, %v1539, 0.0
        %v1619 = vsel %vm1603, %v1568, 0.0
        %v1620 = vsel %vm1604, %v1564, 0.0
        %v1621 = vsel %vm1605, %v1560, 0.0
        %v1622 = vsel %vm1606, %v1556, 0.0
        %v1623 = vsel %vm1607, %v1552, 0.0
        %v1624 = vsel %vm1608, %v1548, 0.0
        %v1625 = vsel %vm1609, %v1544, 0.0
        %v1626 = vsel %vm1610, %v1540, 0.0
        %v1627 = vsel %vm1603, %v1569, 0.0
        %v1628 = vsel %vm1604, %v1565, 0.0
        %v1629 = vsel %vm1605, %v1561, 0.0
        %v1630 = vsel %vm1606, %v1557, 0.0
        %v1631 = vsel %vm1607, %v1553, 0.0
        %v1632 = vsel %vm1608, %v1549, 0.0
        %v1633 = vsel %vm1609, %v1545, 0.0
        %v1634 = vsel %vm1610, %v1541, 0.0
        %v1635 = vsel %vm1603, %v1570, 0.0
        %v1636 = vsel %vm1604, %v1566, 0.0
        %v1637 = vsel %vm1605, %v1562, 0.0
        %v1638 = vsel %vm1606, %v1558, 0.0
        %v1639 = vsel %vm1607, %v1554, 0.0
        %v1640 = vsel %vm1608, %v1550, 0.0
        %v1641 = vsel %vm1609, %v1546, 0.0
        %v1642 = vsel %vm1610, %v1542, 0.0
        %v1643 = vpack.c.bf16 %v1619, %v1611
        %v1644 = vpack.c.bf16 %v1620, %v1612
        %v1645 = vpack.c.bf16 %v1621, %v1613
        %v1646 = vpack.c.bf16 %v1622, %v1614
        %v1647 = vpack.c.bf16 %v1623, %v1615
        %v1648 = vpack.c.bf16 %v1624, %v1616
        %v1649 = vpack.c.bf16 %v1625, %v1617
        %v1650 = vpack.c.bf16 %v1626, %v1618
        %v1651 = vpack.c.bf16 %v1635, %v1627
        %v1652 = vpack.c.bf16 %v1636, %v1628
        %v1653 = vpack.c.bf16 %v1637, %v1629
        %v1654 = vpack.c.bf16 %v1638, %v1630
        %v1655 = vpack.c.bf16 %v1639, %v1631
        %v1656 = vpack.c.bf16 %v1640, %v1632
        %v1657 = vpack.c.bf16 %v1641, %v1633
        %v1658 = vpack.c.bf16 %v1642, %v1634
        %v1675 = vunpack.c.l.b16 %v1643
        %v1676 = vunpack.c.l.b16 %v1644
        %v1677 = vunpack.c.l.b16 %v1645
        %v1678 = vunpack.c.l.b16 %v1646
        %v1679 = vunpack.c.l.b16 %v1647
        %v1680 = vunpack.c.l.b16 %v1648
        %v1681 = vunpack.c.l.b16 %v1649
        %v1682 = vunpack.c.l.b16 %v1650
        %v1683 = vunpack.c.h.b16 %v1643
        %v1684 = vunpack.c.h.b16 %v1644
        %v1685 = vunpack.c.h.b16 %v1645
        %v1686 = vunpack.c.h.b16 %v1646
        %v1687 = vunpack.c.h.b16 %v1647
        %v1688 = vunpack.c.h.b16 %v1648
        %v1689 = vunpack.c.h.b16 %v1649
        %v1690 = vunpack.c.h.b16 %v1650
        %v1691 = vunpack.c.l.b16 %v1651
        %v1692 = vunpack.c.l.b16 %v1652
        %v1693 = vunpack.c.l.b16 %v1653
        %v1694 = vunpack.c.l.b16 %v1654
        %v1695 = vunpack.c.l.b16 %v1655
        %v1696 = vunpack.c.l.b16 %v1656
        %v1697 = vunpack.c.l.b16 %v1657
        %v1698 = vunpack.c.l.b16 %v1658
        %v1699 = vunpack.c.h.b16 %v1651
        %v1700 = vunpack.c.h.b16 %v1652
        %v1701 = vunpack.c.h.b16 %v1653
        %v1702 = vunpack.c.h.b16 %v1654
        %v1703 = vunpack.c.h.b16 %v1655
        %v1704 = vunpack.c.h.b16 %v1656
        %v1705 = vunpack.c.h.b16 %v1657
        %v1706 = vunpack.c.h.b16 %v1658
        %v1707 = vpack.c.b16 %v1676, %v1675
        %v1708 = vpack.c.b16 %v1678, %v1677
        %v1709 = vpack.c.b16 %v1680, %v1679
        %v1710 = vpack.c.b16 %v1682, %v1681
        %v1711 = vpack.c.b16 %v1684, %v1683
        %v1712 = vpack.c.b16 %v1686, %v1685
        %v1713 = vpack.c.b16 %v1688, %v1687
        %v1714 = vpack.c.b16 %v1690, %v1689
        %v1715 = vpack.c.b16 %v1692, %v1691
        %v1716 = vpack.c.b16 %v1694, %v1693
        %v1717 = vpack.c.b16 %v1696, %v1695
        %v1718 = vpack.c.b16 %v1698, %v1697
        %v1719 = vpack.c.b16 %v1700, %v1699
        %v1720 = vpack.c.b16 %v1702, %v1701
        %v1721 = vpack.c.b16 %v1704, %v1703
        %v1722 = vpack.c.b16 %v1706, %v1705
        %1739 = vst [vmem:[#allocation2 + $0x100] sm:$0xff] %v1707
        %1740 = vst [vmem:[#allocation2 + $0x108] sm:$0xff] %v1708
        %1741 = vst [vmem:[#allocation2 + $0x110] sm:$0xff] %v1709
        %1742 = vst [vmem:[#allocation2 + $0x118] sm:$0xff] %v1710
        %1743 = vst [vmem:[#allocation2 + $0x120] sm:$0xff] %v1711
        %1744 = vst [vmem:[#allocation2 + $0x128] sm:$0xff] %v1712
        %1745 = vst [vmem:[#allocation2 + $0x130] sm:$0xff] %v1713
        %1746 = vst [vmem:[#allocation2 + $0x138] sm:$0xff] %v1714
        %1747 = vst [vmem:[#allocation2 + $0x140] sm:$0xff] %v1715
        %1748 = vst [vmem:[#allocation2 + $0x148] sm:$0xff] %v1716
        %1749 = vst [vmem:[#allocation2 + $0x150] sm:$0xff] %v1717
        %1750 = vst [vmem:[#allocation2 + $0x158] sm:$0xff] %v1718
        %1751 = vst [vmem:[#allocation2 + $0x160] sm:$0xff] %v1719
        %1752 = vst [vmem:[#allocation2 + $0x168] sm:$0xff] %v1720
        %1753 = vst [vmem:[#allocation2 + $0x170] sm:$0xff] %v1721
        %1754 = vst [vmem:[#allocation2 + $0x178] sm:$0xff] %v1722
        %v1755 = vpack.c.bf16 %v634, %v630
        %v1756 = vpack.c.bf16 %v636, %v632
        %v1757 = vpack.c.bf16 %v687, %v683
        %v1758 = vpack.c.bf16 %v689, %v685
        %v1759 = vpack.c.bf16 %v740, %v736
        %v1760 = vpack.c.bf16 %v742, %v738
        %v1761 = vpack.c.bf16 %v793, %v789
        %v1762 = vpack.c.bf16 %v795, %v791
        %v1763 = vpack.c.bf16 %v644, %v640
        %v1764 = vpack.c.bf16 %v646, %v642
        %v1765 = vpack.c.bf16 %v697, %v693
        %v1766 = vpack.c.bf16 %v699, %v695
        %v1767 = vpack.c.bf16 %v750, %v746
        %v1768 = vpack.c.bf16 %v752, %v748
        %v1769 = vpack.c.bf16 %v803, %v799
        %v1770 = vpack.c.bf16 %v805, %v801
        %v1787 = vunpack.c.l.b16 %v1755
        %v1788 = vunpack.c.l.b16 %v1756
        %v1789 = vunpack.c.l.b16 %v1757
        %v1790 = vunpack.c.l.b16 %v1758
        %v1791 = vunpack.c.l.b16 %v1759
        %v1792 = vunpack.c.l.b16 %v1760
        %v1793 = vunpack.c.l.b16 %v1761
        %v1794 = vunpack.c.l.b16 %v1762
        %v1795 = vunpack.c.h.b16 %v1755
        %v1796 = vunpack.c.h.b16 %v1756
        %v1797 = vunpack.c.h.b16 %v1757
        %v1798 = vunpack.c.h.b16 %v1758
        %v1799 = vunpack.c.h.b16 %v1759
        %v1800 = vunpack.c.h.b16 %v1760
        %v1801 = vunpack.c.h.b16 %v1761
        %v1802 = vunpack.c.h.b16 %v1762
        %v1803 = vunpack.c.l.b16 %v1763
        %v1804 = vunpack.c.l.b16 %v1764
        %v1805 = vunpack.c.l.b16 %v1765
        %v1806 = vunpack.c.l.b16 %v1766
        %v1807 = vunpack.c.l.b16 %v1767
        %v1808 = vunpack.c.l.b16 %v1768
        %v1809 = vunpack.c.l.b16 %v1769
        %v1810 = vunpack.c.l.b16 %v1770
        %v1811 = vunpack.c.h.b16 %v1763
        %v1812 = vunpack.c.h.b16 %v1764
        %v1813 = vunpack.c.h.b16 %v1765
        %v1814 = vunpack.c.h.b16 %v1766
        %v1815 = vunpack.c.h.b16 %v1767
        %v1816 = vunpack.c.h.b16 %v1768
        %v1817 = vunpack.c.h.b16 %v1769
        %v1818 = vunpack.c.h.b16 %v1770
        %v1819 = vpack.c.b16 %v1788, %v1787
        %v1820 = vpack.c.b16 %v1790, %v1789
        %v1821 = vpack.c.b16 %v1792, %v1791
        %v1822 = vpack.c.b16 %v1794, %v1793
        %v1823 = vpack.c.b16 %v1796, %v1795
        %v1824 = vpack.c.b16 %v1798, %v1797
        %v1825 = vpack.c.b16 %v1800, %v1799
        %v1826 = vpack.c.b16 %v1802, %v1801
        %v1827 = vpack.c.b16 %v1804, %v1803
        %v1828 = vpack.c.b16 %v1806, %v1805
        %v1829 = vpack.c.b16 %v1808, %v1807
        %v1830 = vpack.c.b16 %v1810, %v1809
        %v1831 = vpack.c.b16 %v1812, %v1811
        %v1832 = vpack.c.b16 %v1814, %v1813
        %v1833 = vpack.c.b16 %v1816, %v1815
        %v1834 = vpack.c.b16 %v1818, %v1817
        %1851 = vst [vmem:[#allocation2 + $0x180] sm:$0xff] %v1819
        %1852 = vst [vmem:[#allocation2 + $0x188] sm:$0xff] %v1820
        %1853 = vst [vmem:[#allocation2 + $0x190] sm:$0xff] %v1821
        %1854 = vst [vmem:[#allocation2 + $0x198] sm:$0xff] %v1822
        %1855 = vst [vmem:[#allocation2 + $0x1a0] sm:$0xff] %v1823
        %1856 = vst [vmem:[#allocation2 + $0x1a8] sm:$0xff] %v1824
        %1857 = vst [vmem:[#allocation2 + $0x1b0] sm:$0xff] %v1825
        %1858 = vst [vmem:[#allocation2 + $0x1b8] sm:$0xff] %v1826
        %1859 = vst [vmem:[#allocation2 + $0x1c0] sm:$0xff] %v1827
        %1860 = vst [vmem:[#allocation2 + $0x1c8] sm:$0xff] %v1828
        %1861 = vst [vmem:[#allocation2 + $0x1d0] sm:$0xff] %v1829
        %1862 = vst [vmem:[#allocation2 + $0x1d8] sm:$0xff] %v1830
        %1863 = vst [vmem:[#allocation2 + $0x1e0] sm:$0xff] %v1831
        %1864 = vst [vmem:[#allocation2 + $0x1e8] sm:$0xff] %v1832
        %1865 = vst [vmem:[#allocation2 + $0x1f0] sm:$0xff] %v1833
        %1866 = vst [vmem:[#allocation2 + $0x1f8] sm:$0xff] %v1834
        %1867 = vrot.lane.b32.xlu0 %v630, 127
        %v1868 = vpop.permute.xlu0 %1867
        %1869 = vrot.lane.b32.xlu0 %v634, 127
        %v1870 = vpop.permute.xlu0 %1869
        %1871 = vrot.lane.b32.xlu0 %v640, 127
        %v1872 = vpop.permute.xlu0 %1871
        %1873 = vrot.lane.b32.xlu0 %v644, 127
        %v1874 = vpop.permute.xlu0 %1873
        %1875 = vrot.lane.b32.xlu0 %v632, 127
        %v1876 = vpop.permute.xlu0 %1875
        %1877 = vrot.lane.b32.xlu0 %v636, 127
        %v1878 = vpop.permute.xlu0 %1877
        %1879 = vrot.lane.b32.xlu0 %v642, 127
        %v1880 = vpop.permute.xlu0 %1879
        %1881 = vrot.lane.b32.xlu0 %v646, 127
        %v1882 = vpop.permute.xlu0 %1881
        %1883 = vrot.lane.b32.xlu0 %v683, 127
        %v1884 = vpop.permute.xlu0 %1883
        %1885 = vrot.lane.b32.xlu0 %v687, 127
        %v1886 = vpop.permute.xlu0 %1885
        %1887 = vrot.lane.b32.xlu0 %v693, 127
        %v1888 = vpop.permute.xlu0 %1887
        %1889 = vrot.lane.b32.xlu0 %v697, 127
        %v1890 = vpop.permute.xlu0 %1889
        %1891 = vrot.lane.b32.xlu0 %v685, 127
        %v1892 = vpop.permute.xlu0 %1891
        %1893 = vrot.lane.b32.xlu0 %v689, 127
        %v1894 = vpop.permute.xlu0 %1893
        %1895 = vrot.lane.b32.xlu0 %v695, 127
        %v1896 = vpop.permute.xlu0 %1895
        %1897 = vrot.lane.b32.xlu0 %v699, 127
        %v1898 = vpop.permute.xlu0 %1897
        %1899 = vrot.lane.b32.xlu0 %v736, 127
        %v1900 = vpop.permute.xlu0 %1899
        %1901 = vrot.lane.b32.xlu0 %v740, 127
        %v1902 = vpop.permute.xlu0 %1901
        %1903 = vrot.lane.b32.xlu0 %v746, 127
        %v1904 = vpop.permute.xlu0 %1903
        %1905 = vrot.lane.b32.xlu0 %v750, 127
        %v1906 = vpop.permute.xlu0 %1905
        %1907 = vrot.lane.b32.xlu0 %v738, 127
        %v1908 = vpop.permute.xlu0 %1907
        %1909 = vrot.lane.b32.xlu0 %v742, 127
        %v1910 = vpop.permute.xlu0 %1909
        %1911 = vrot.lane.b32.xlu0 %v748, 127
        %v1912 = vpop.permute.xlu0 %1911
        %1913 = vrot.lane.b32.xlu0 %v752, 127
        %v1914 = vpop.permute.xlu0 %1913
        %1915 = vrot.lane.b32.xlu0 %v789, 127
        %v1916 = vpop.permute.xlu0 %1915
        %1917 = vrot.lane.b32.xlu0 %v793, 127
        %v1918 = vpop.permute.xlu0 %1917
        %1919 = vrot.lane.b32.xlu0 %v799, 127
        %v1920 = vpop.permute.xlu0 %1919
        %1921 = vrot.lane.b32.xlu0 %v803, 127
        %v1922 = vpop.permute.xlu0 %1921
        %1923 = vrot.lane.b32.xlu0 %v791, 127
        %v1924 = vpop.permute.xlu0 %1923
        %1925 = vrot.lane.b32.xlu0 %v795, 127
        %v1926 = vpop.permute.xlu0 %1925
        %1927 = vrot.lane.b32.xlu0 %v801, 127
        %v1928 = vpop.permute.xlu0 %1927
        %1929 = vrot.lane.b32.xlu0 %v805, 127
        %v1930 = vpop.permute.xlu0 %1929
        %vm1931 = vcmp.lt.s32.totalorder %v808, 127
        %v1932 = vsel %vm1931, %v1916, %v1924
        %v1933 = vsel %vm1931, %v1918, %v1926
        %v1934 = vsel %vm1931, %v1920, %v1928
        %v1935 = vsel %vm1931, %v1922, %v1930
        %v1936 = vsel %vm1931, %v1908, %v1916
        %v1937 = vsel %vm1931, %v1910, %v1918
        %v1938 = vsel %vm1931, %v1912, %v1920
        %v1939 = vsel %vm1931, %v1914, %v1922
        %v1940 = vsel %vm1931, %v1900, %v1908
        %v1941 = vsel %vm1931, %v1902, %v1910
        %v1942 = vsel %vm1931, %v1904, %v1912
        %v1943 = vsel %vm1931, %v1906, %v1914
        %v1944 = vsel %vm1931, %v1892, %v1900
        %v1945 = vsel %vm1931, %v1894, %v1902
        %v1946 = vsel %vm1931, %v1896, %v1904
        %v1947 = vsel %vm1931, %v1898, %v1906
        %v1948 = vsel %vm1931, %v1884, %v1892
        %v1949 = vsel %vm1931, %v1886, %v1894
        %v1950 = vsel %vm1931, %v1888, %v1896
        %v1951 = vsel %vm1931, %v1890, %v1898
        %v1952 = vsel %vm1931, %v1876, %v1884
        %v1953 = vsel %vm1931, %v1878, %v1886
        %v1954 = vsel %vm1931, %v1880, %v1888
        %v1955 = vsel %vm1931, %v1882, %v1890
        %v1956 = vsel %vm1931, %v1868, %v1876
        %v1957 = vsel %vm1931, %v1870, %v1878
        %v1958 = vsel %vm1931, %v1872, %v1880
        %v1959 = vsel %vm1931, %v1874, %v1882
        %v1960 = vsel %vm1931, %v1924, %v1868
        %v1961 = vsel %vm1931, %v1926, %v1870
        %v1962 = vsel %vm1931, %v1928, %v1872
        %v1963 = vsel %vm1931, %v1930, %v1874
        %vm1964 = vcmp.ge.s32.totalorder %v904, 4294967295
        %vm1965 = vcmp.ge.s32.totalorder %v905, 4294967295
        %vm1966 = vcmp.ge.s32.totalorder %v906, 4294967295
        %vm1967 = vcmp.ge.s32.totalorder %v907, 4294967295
        %vm1968 = vcmp.ge.s32.totalorder %v908, 4294967295
        %vm1969 = vcmp.ge.s32.totalorder %v909, 4294967295
        %vm1970 = vcmp.ge.s32.totalorder %v910, 4294967295
        %vm1971 = vcmp.ge.s32.totalorder %v911, 4294967295
        %vm1972 = vcmp.lt.s32.totalorder %v904, 127
        %vm1973 = vcmp.lt.s32.totalorder %v905, 127
        %vm1974 = vcmp.lt.s32.totalorder %v906, 127
        %vm1975 = vcmp.lt.s32.totalorder %v907, 127
        %vm1976 = vcmp.lt.s32.totalorder %v908, 127
        %vm1977 = vcmp.lt.s32.totalorder %v909, 127
        %vm1978 = vcmp.lt.s32.totalorder %v910, 127
        %vm1979 = vcmp.lt.s32.totalorder %v911, 127
        %vm1980 = vmand %vm1964, %vm1972
        %vm1981 = vmand %vm1965, %vm1973
        %vm1982 = vmand %vm1966, %vm1974
        %vm1983 = vmand %vm1967, %vm1975
        %vm1984 = vmand %vm1968, %vm1976
        %vm1985 = vmand %vm1969, %vm1977
        %vm1986 = vmand %vm1970, %vm1978
        %vm1987 = vmand %vm1971, %vm1979
        %v1988 = vsel %vm1980, 1, 0
        %v1989 = vsel %vm1981, 1, 0
        %v1990 = vsel %vm1982, 1, 0
        %v1991 = vsel %vm1983, 1, 0
        %v1992 = vsel %vm1984, 1, 0
        %v1993 = vsel %vm1985, 1, 0
        %v1994 = vsel %vm1986, 1, 0
        %v1995 = vsel %vm1987, 1, 0
        %vm1996 = vcmp.eq.s32.totalorder %v1988, 1
        %vm1997 = vcmp.eq.s32.totalorder %v1989, 1
        %vm1998 = vcmp.eq.s32.totalorder %v1990, 1
        %vm1999 = vcmp.eq.s32.totalorder %v1991, 1
        %vm2000 = vcmp.eq.s32.totalorder %v1992, 1
        %vm2001 = vcmp.eq.s32.totalorder %v1993, 1
        %vm2002 = vcmp.eq.s32.totalorder %v1994, 1
        %vm2003 = vcmp.eq.s32.totalorder %v1995, 1
        %v2004 = vsel %vm1996, %v1956, 0.0
        %v2005 = vsel %vm1997, %v1952, 0.0
        %v2006 = vsel %vm1998, %v1948, 0.0
        %v2007 = vsel %vm1999, %v1944, 0.0
        %v2008 = vsel %vm2000, %v1940, 0.0
        %v2009 = vsel %vm2001, %v1936, 0.0
        %v2010 = vsel %vm2002, %v1932, 0.0
        %v2011 = vsel %vm2003, %v1960, 0.0
        %v2012 = vsel %vm1996, %v1957, 0.0
        %v2013 = vsel %vm1997, %v1953, 0.0
        %v2014 = vsel %vm1998, %v1949, 0.0
        %v2015 = vsel %vm1999, %v1945, 0.0
        %v2016 = vsel %vm2000, %v1941, 0.0
        %v2017 = vsel %vm2001, %v1937, 0.0
        %v2018 = vsel %vm2002, %v1933, 0.0
        %v2019 = vsel %vm2003, %v1961, 0.0
        %v2020 = vsel %vm1996, %v1958, 0.0
        %v2021 = vsel %vm1997, %v1954, 0.0
        %v2022 = vsel %vm1998, %v1950, 0.0
        %v2023 = vsel %vm1999, %v1946, 0.0
        %v2024 = vsel %vm2000, %v1942, 0.0
        %v2025 = vsel %vm2001, %v1938, 0.0
        %v2026 = vsel %vm2002, %v1934, 0.0
        %v2027 = vsel %vm2003, %v1962, 0.0
        %v2028 = vsel %vm1996, %v1959, 0.0
        %v2029 = vsel %vm1997, %v1955, 0.0
        %v2030 = vsel %vm1998, %v1951, 0.0
        %v2031 = vsel %vm1999, %v1947, 0.0
        %v2032 = vsel %vm2000, %v1943, 0.0
        %v2033 = vsel %vm2001, %v1939, 0.0
        %v2034 = vsel %vm2002, %v1935, 0.0
        %v2035 = vsel %vm2003, %v1963, 0.0
        %v2036 = vpack.c.bf16 %v2012, %v2004
        %v2037 = vpack.c.bf16 %v2013, %v2005
        %v2038 = vpack.c.bf16 %v2014, %v2006
        %v2039 = vpack.c.bf16 %v2015, %v2007
        %v2040 = vpack.c.bf16 %v2016, %v2008
        %v2041 = vpack.c.bf16 %v2017, %v2009
        %v2042 = vpack.c.bf16 %v2018, %v2010
        %v2043 = vpack.c.bf16 %v2019, %v2011
        %v2044 = vpack.c.bf16 %v2028, %v2020
        %v2045 = vpack.c.bf16 %v2029, %v2021
        %v2046 = vpack.c.bf16 %v2030, %v2022
        %v2047 = vpack.c.bf16 %v2031, %v2023
        %v2048 = vpack.c.bf16 %v2032, %v2024
        %v2049 = vpack.c.bf16 %v2033, %v2025
        %v2050 = vpack.c.bf16 %v2034, %v2026
        %v2051 = vpack.c.bf16 %v2035, %v2027
        %v2068 = vunpack.c.l.b16 %v2036
        %v2069 = vunpack.c.l.b16 %v2037
        %v2070 = vunpack.c.l.b16 %v2038
        %v2071 = vunpack.c.l.b16 %v2039
        %v2072 = vunpack.c.l.b16 %v2040
        %v2073 = vunpack.c.l.b16 %v2041
        %v2074 = vunpack.c.l.b16 %v2042
        %v2075 = vunpack.c.l.b16 %v2043
        %v2076 = vunpack.c.h.b16 %v2036
        %v2077 = vunpack.c.h.b16 %v2037
        %v2078 = vunpack.c.h.b16 %v2038
        %v2079 = vunpack.c.h.b16 %v2039
        %v2080 = vunpack.c.h.b16 %v2040
        %v2081 = vunpack.c.h.b16 %v2041
        %v2082 = vunpack.c.h.b16 %v2042
        %v2083 = vunpack.c.h.b16 %v2043
        %v2084 = vunpack.c.l.b16 %v2044
        %v2085 = vunpack.c.l.b16 %v2045
        %v2086 = vunpack.c.l.b16 %v2046
        %v2087 = vunpack.c.l.b16 %v2047
        %v2088 = vunpack.c.l.b16 %v2048
        %v2089 = vunpack.c.l.b16 %v2049
        %v2090 = vunpack.c.l.b16 %v2050
        %v2091 = vunpack.c.l.b16 %v2051
        %v2092 = vunpack.c.h.b16 %v2044
        %v2093 = vunpack.c.h.b16 %v2045
        %v2094 = vunpack.c.h.b16 %v2046
        %v2095 = vunpack.c.h.b16 %v2047
        %v2096 = vunpack.c.h.b16 %v2048
        %v2097 = vunpack.c.h.b16 %v2049
        %v2098 = vunpack.c.h.b16 %v2050
        %v2099 = vunpack.c.h.b16 %v2051
        %v2100 = vpack.c.b16 %v2069, %v2068
        %v2101 = vpack.c.b16 %v2071, %v2070
        %v2102 = vpack.c.b16 %v2073, %v2072
        %v2103 = vpack.c.b16 %v2075, %v2074
        %v2104 = vpack.c.b16 %v2077, %v2076
        %v2105 = vpack.c.b16 %v2079, %v2078
        %v2106 = vpack.c.b16 %v2081, %v2080
        %v2107 = vpack.c.b16 %v2083, %v2082
        %v2108 = vpack.c.b16 %v2085, %v2084
        %v2109 = vpack.c.b16 %v2087, %v2086
        %v2110 = vpack.c.b16 %v2089, %v2088
        %v2111 = vpack.c.b16 %v2091, %v2090
        %v2112 = vpack.c.b16 %v2093, %v2092
        %v2113 = vpack.c.b16 %v2095, %v2094
        %v2114 = vpack.c.b16 %v2097, %v2096
        %v2115 = vpack.c.b16 %v2099, %v2098
        %2132 = vst [vmem:[#allocation2 + $0x200] sm:$0xff] %v2100
        %2133 = vst [vmem:[#allocation2 + $0x208] sm:$0xff] %v2101
        %2134 = vst [vmem:[#allocation2 + $0x210] sm:$0xff] %v2102
        %2135 = vst [vmem:[#allocation2 + $0x218] sm:$0xff] %v2103
        %2136 = vst [vmem:[#allocation2 + $0x220] sm:$0xff] %v2104
        %2137 = vst [vmem:[#allocation2 + $0x228] sm:$0xff] %v2105
        %2138 = vst [vmem:[#allocation2 + $0x230] sm:$0xff] %v2106
        %2139 = vst [vmem:[#allocation2 + $0x238] sm:$0xff] %v2107
        %2140 = vst [vmem:[#allocation2 + $0x240] sm:$0xff] %v2108
        %2141 = vst [vmem:[#allocation2 + $0x248] sm:$0xff] %v2109
        %2142 = vst [vmem:[#allocation2 + $0x250] sm:$0xff] %v2110
        %2143 = vst [vmem:[#allocation2 + $0x258] sm:$0xff] %v2111
        %2144 = vst [vmem:[#allocation2 + $0x260] sm:$0xff] %v2112
        %2145 = vst [vmem:[#allocation2 + $0x268] sm:$0xff] %v2113
        %2146 = vst [vmem:[#allocation2 + $0x270] sm:$0xff] %v2114
        %2147 = vst [vmem:[#allocation2 + $0x278] sm:$0xff] %v2115
        %2148 = vrot.lane.b32.xlu0 %v630, 126
        %v2149 = vpop.permute.xlu0 %2148
        %2150 = vrot.lane.b32.xlu0 %v634, 126
        %v2151 = vpop.permute.xlu0 %2150
        %2152 = vrot.lane.b32.xlu0 %v640, 126
        %v2153 = vpop.permute.xlu0 %2152
        %2154 = vrot.lane.b32.xlu0 %v644, 126
        %v2155 = vpop.permute.xlu0 %2154
        %2156 = vrot.lane.b32.xlu0 %v632, 126
        %v2157 = vpop.permute.xlu0 %2156
        %2158 = vrot.lane.b32.xlu0 %v636, 126
        %v2159 = vpop.permute.xlu0 %2158
        %2160 = vrot.lane.b32.xlu0 %v642, 126
        %v2161 = vpop.permute.xlu0 %2160
        %2162 = vrot.lane.b32.xlu0 %v646, 126
        %v2163 = vpop.permute.xlu0 %2162
        %2164 = vrot.lane.b32.xlu0 %v683, 126
        %v2165 = vpop.permute.xlu0 %2164
        %2166 = vrot.lane.b32.xlu0 %v687, 126
        %v2167 = vpop.permute.xlu0 %2166
        %2168 = vrot.lane.b32.xlu0 %v693, 126
        %v2169 = vpop.permute.xlu0 %2168
        %2170 = vrot.lane.b32.xlu0 %v697, 126
        %v2171 = vpop.permute.xlu0 %2170
        %2172 = vrot.lane.b32.xlu0 %v685, 126
        %v2173 = vpop.permute.xlu0 %2172
        %2174 = vrot.lane.b32.xlu0 %v689, 126
        %v2175 = vpop.permute.xlu0 %2174
        %2176 = vrot.lane.b32.xlu0 %v695, 126
        %v2177 = vpop.permute.xlu0 %2176
        %2178 = vrot.lane.b32.xlu0 %v699, 126
        %v2179 = vpop.permute.xlu0 %2178
        %2180 = vrot.lane.b32.xlu0 %v736, 126
        %v2181 = vpop.permute.xlu0 %2180
        %2182 = vrot.lane.b32.xlu0 %v740, 126
        %v2183 = vpop.permute.xlu0 %2182
        %2184 = vrot.lane.b32.xlu0 %v746, 126
        %v2185 = vpop.permute.xlu0 %2184
        %2186 = vrot.lane.b32.xlu0 %v750, 126
        %v2187 = vpop.permute.xlu0 %2186
        %2188 = vrot.lane.b32.xlu0 %v738, 126
        %v2189 = vpop.permute.xlu0 %2188
        %2190 = vrot.lane.b32.xlu0 %v742, 126
        %v2191 = vpop.permute.xlu0 %2190
        %2192 = vrot.lane.b32.xlu0 %v748, 126
        %v2193 = vpop.permute.xlu0 %2192
        %2194 = vrot.lane.b32.xlu0 %v752, 126
        %v2195 = vpop.permute.xlu0 %2194
        %2196 = vrot.lane.b32.xlu0 %v789, 126
        %v2197 = vpop.permute.xlu0 %2196
        %2198 = vrot.lane.b32.xlu0 %v793, 126
        %v2199 = vpop.permute.xlu0 %2198
        %2200 = vrot.lane.b32.xlu0 %v799, 126
        %v2201 = vpop.permute.xlu0 %2200
        %2202 = vrot.lane.b32.xlu0 %v803, 126
        %v2203 = vpop.permute.xlu0 %2202
        %2204 = vrot.lane.b32.xlu0 %v791, 126
        %v2205 = vpop.permute.xlu0 %2204
        %2206 = vrot.lane.b32.xlu0 %v795, 126
        %v2207 = vpop.permute.xlu0 %2206
        %2208 = vrot.lane.b32.xlu0 %v801, 126
        %v2209 = vpop.permute.xlu0 %2208
        %2210 = vrot.lane.b32.xlu0 %v805, 126
        %v2211 = vpop.permute.xlu0 %2210
        %vm2212 = vcmp.lt.s32.totalorder %v808, 126
        %v2213 = vsel %vm2212, %v2197, %v2205
        %v2214 = vsel %vm2212, %v2199, %v2207
        %v2215 = vsel %vm2212, %v2201, %v2209
        %v2216 = vsel %vm2212, %v2203, %v2211
        %v2217 = vsel %vm2212, %v2189, %v2197
        %v2218 = vsel %vm2212, %v2191, %v2199
        %v2219 = vsel %vm2212, %v2193, %v2201
        %v2220 = vsel %vm2212, %v2195, %v2203
        %v2221 = vsel %vm2212, %v2181, %v2189
        %v2222 = vsel %vm2212, %v2183, %v2191
        %v2223 = vsel %vm2212, %v2185, %v2193
        %v2224 = vsel %vm2212, %v2187, %v2195
        %v2225 = vsel %vm2212, %v2173, %v2181
        %v2226 = vsel %vm2212, %v2175, %v2183
        %v2227 = vsel %vm2212, %v2177, %v2185
        %v2228 = vsel %vm2212, %v2179, %v2187
        %v2229 = vsel %vm2212, %v2165, %v2173
        %v2230 = vsel %vm2212, %v2167, %v2175
        %v2231 = vsel %vm2212, %v2169, %v2177
        %v2232 = vsel %vm2212, %v2171, %v2179
        %v2233 = vsel %vm2212, %v2157, %v2165
        %v2234 = vsel %vm2212, %v2159, %v2167
        %v2235 = vsel %vm2212, %v2161, %v2169
        %v2236 = vsel %vm2212, %v2163, %v2171
        %v2237 = vsel %vm2212, %v2149, %v2157
        %v2238 = vsel %vm2212, %v2151, %v2159
        %v2239 = vsel %vm2212, %v2153, %v2161
        %v2240 = vsel %vm2212, %v2155, %v2163
        %v2241 = vsel %vm2212, %v2205, %v2149
        %v2242 = vsel %vm2212, %v2207, %v2151
        %v2243 = vsel %vm2212, %v2209, %v2153
        %v2244 = vsel %vm2212, %v2211, %v2155
        %vm2245 = vcmp.ge.s32.totalorder %v904, 4294967294
        %vm2246 = vcmp.ge.s32.totalorder %v905, 4294967294
        %vm2247 = vcmp.ge.s32.totalorder %v906, 4294967294
        %vm2248 = vcmp.ge.s32.totalorder %v907, 4294967294
        %vm2249 = vcmp.ge.s32.totalorder %v908, 4294967294
        %vm2250 = vcmp.ge.s32.totalorder %v909, 4294967294
        %vm2251 = vcmp.ge.s32.totalorder %v910, 4294967294
        %vm2252 = vcmp.ge.s32.totalorder %v911, 4294967294
        %vm2253 = vcmp.lt.s32.totalorder %v904, 126
        %vm2254 = vcmp.lt.s32.totalorder %v905, 126
        %vm2255 = vcmp.lt.s32.totalorder %v906, 126
        %vm2256 = vcmp.lt.s32.totalorder %v907, 126
        %vm2257 = vcmp.lt.s32.totalorder %v908, 126
        %vm2258 = vcmp.lt.s32.totalorder %v909, 126
        %vm2259 = vcmp.lt.s32.totalorder %v910, 126
        %vm2260 = vcmp.lt.s32.totalorder %v911, 126
        %vm2261 = vmand %vm2245, %vm2253
        %vm2262 = vmand %vm2246, %vm2254
        %vm2263 = vmand %vm2247, %vm2255
        %vm2264 = vmand %vm2248, %vm2256
        %vm2265 = vmand %vm2249, %vm2257
        %vm2266 = vmand %vm2250, %vm2258
        %vm2267 = vmand %vm2251, %vm2259
        %vm2268 = vmand %vm2252, %vm2260
        %v2269 = vsel %vm2261, 1, 0
        %v2270 = vsel %vm2262, 1, 0
        %v2271 = vsel %vm2263, 1, 0
        %v2272 = vsel %vm2264, 1, 0
        %v2273 = vsel %vm2265, 1, 0
        %v2274 = vsel %vm2266, 1, 0
        %v2275 = vsel %vm2267, 1, 0
        %v2276 = vsel %vm2268, 1, 0
        %vm2277 = vcmp.eq.s32.totalorder %v2269, 1
        %vm2278 = vcmp.eq.s32.totalorder %v2270, 1
        %vm2279 = vcmp.eq.s32.totalorder %v2271, 1
        %vm2280 = vcmp.eq.s32.totalorder %v2272, 1
        %vm2281 = vcmp.eq.s32.totalorder %v2273, 1
        %vm2282 = vcmp.eq.s32.totalorder %v2274, 1
        %vm2283 = vcmp.eq.s32.totalorder %v2275, 1
        %vm2284 = vcmp.eq.s32.totalorder %v2276, 1
        %v2285 = vsel %vm2277, %v2237, 0.0
        %v2286 = vsel %vm2278, %v2233, 0.0
        %v2287 = vsel %vm2279, %v2229, 0.0
        %v2288 = vsel %vm2280, %v2225, 0.0
        %v2289 = vsel %vm2281, %v2221, 0.0
        %v2290 = vsel %vm2282, %v2217, 0.0
        %v2291 = vsel %vm2283, %v2213, 0.0
        %v2292 = vsel %vm2284, %v2241, 0.0
        %v2293 = vsel %vm2277, %v2238, 0.0
        %v2294 = vsel %vm2278, %v2234, 0.0
        %v2295 = vsel %vm2279, %v2230, 0.0
        %v2296 = vsel %vm2280, %v2226, 0.0
        %v2297 = vsel %vm2281, %v2222, 0.0
        %v2298 = vsel %vm2282, %v2218, 0.0
        %v2299 = vsel %vm2283, %v2214, 0.0
        %v2300 = vsel %vm2284, %v2242, 0.0
        %v2301 = vsel %vm2277, %v2239, 0.0
        %v2302 = vsel %vm2278, %v2235, 0.0
        %v2303 = vsel %vm2279, %v2231, 0.0
        %v2304 = vsel %vm2280, %v2227, 0.0
        %v2305 = vsel %vm2281, %v2223, 0.0
        %v2306 = vsel %vm2282, %v2219, 0.0
        %v2307 = vsel %vm2283, %v2215, 0.0
        %v2308 = vsel %vm2284, %v2243, 0.0
        %v2309 = vsel %vm2277, %v2240, 0.0
        %v2310 = vsel %vm2278, %v2236, 0.0
        %v2311 = vsel %vm2279, %v2232, 0.0
        %v2312 = vsel %vm2280, %v2228, 0.0
        %v2313 = vsel %vm2281, %v2224, 0.0
        %v2314 = vsel %vm2282, %v2220, 0.0
        %v2315 = vsel %vm2283, %v2216, 0.0
        %v2316 = vsel %vm2284, %v2244, 0.0
        %v2317 = vpack.c.bf16 %v2293, %v2285
        %v2318 = vpack.c.bf16 %v2294, %v2286
        %v2319 = vpack.c.bf16 %v2295, %v2287
        %v2320 = vpack.c.bf16 %v2296, %v2288
        %v2321 = vpack.c.bf16 %v2297, %v2289
        %v2322 = vpack.c.bf16 %v2298, %v2290
        %v2323 = vpack.c.bf16 %v2299, %v2291
        %v2324 = vpack.c.bf16 %v2300, %v2292
        %v2325 = vpack.c.bf16 %v2309, %v2301
        %v2326 = vpack.c.bf16 %v2310, %v2302
        %v2327 = vpack.c.bf16 %v2311, %v2303
        %v2328 = vpack.c.bf16 %v2312, %v2304
        %v2329 = vpack.c.bf16 %v2313, %v2305
        %v2330 = vpack.c.bf16 %v2314, %v2306
        %v2331 = vpack.c.bf16 %v2315, %v2307
        %v2332 = vpack.c.bf16 %v2316, %v2308
        %v2349 = vunpack.c.l.b16 %v2317
        %v2350 = vunpack.c.l.b16 %v2318
        %v2351 = vunpack.c.l.b16 %v2319
        %v2352 = vunpack.c.l.b16 %v2320
        %v2353 = vunpack.c.l.b16 %v2321
        %v2354 = vunpack.c.l.b16 %v2322
        %v2355 = vunpack.c.l.b16 %v2323
        %v2356 = vunpack.c.l.b16 %v2324
        %v2357 = vunpack.c.h.b16 %v2317
        %v2358 = vunpack.c.h.b16 %v2318
        %v2359 = vunpack.c.h.b16 %v2319
        %v2360 = vunpack.c.h.b16 %v2320
        %v2361 = vunpack.c.h.b16 %v2321
        %v2362 = vunpack.c.h.b16 %v2322
        %v2363 = vunpack.c.h.b16 %v2323
        %v2364 = vunpack.c.h.b16 %v2324
        %v2365 = vunpack.c.l.b16 %v2325
        %v2366 = vunpack.c.l.b16 %v2326
        %v2367 = vunpack.c.l.b16 %v2327
        %v2368 = vunpack.c.l.b16 %v2328
        %v2369 = vunpack.c.l.b16 %v2329
        %v2370 = vunpack.c.l.b16 %v2330
        %v2371 = vunpack.c.l.b16 %v2331
        %v2372 = vunpack.c.l.b16 %v2332
        %v2373 = vunpack.c.h.b16 %v2325
        %v2374 = vunpack.c.h.b16 %v2326
        %v2375 = vunpack.c.h.b16 %v2327
        %v2376 = vunpack.c.h.b16 %v2328
        %v2377 = vunpack.c.h.b16 %v2329
        %v2378 = vunpack.c.h.b16 %v2330
        %v2379 = vunpack.c.h.b16 %v2331
        %v2380 = vunpack.c.h.b16 %v2332
        %v2381 = vpack.c.b16 %v2350, %v2349
        %v2382 = vpack.c.b16 %v2352, %v2351
        %v2383 = vpack.c.b16 %v2354, %v2353
        %v2384 = vpack.c.b16 %v2356, %v2355
        %v2385 = vpack.c.b16 %v2358, %v2357
        %v2386 = vpack.c.b16 %v2360, %v2359
        %v2387 = vpack.c.b16 %v2362, %v2361
        %v2388 = vpack.c.b16 %v2364, %v2363
        %v2389 = vpack.c.b16 %v2366, %v2365
        %v2390 = vpack.c.b16 %v2368, %v2367
        %v2391 = vpack.c.b16 %v2370, %v2369
        %v2392 = vpack.c.b16 %v2372, %v2371
        %v2393 = vpack.c.b16 %v2374, %v2373
        %v2394 = vpack.c.b16 %v2376, %v2375
        %v2395 = vpack.c.b16 %v2378, %v2377
        %v2396 = vpack.c.b16 %v2380, %v2379
        %2413 = vst [vmem:[#allocation2 + $0x280] sm:$0xff] %v2381
        %2414 = vst [vmem:[#allocation2 + $0x288] sm:$0xff] %v2382
        %2415 = vst [vmem:[#allocation2 + $0x290] sm:$0xff] %v2383
        %2416 = vst [vmem:[#allocation2 + $0x298] sm:$0xff] %v2384
        %2417 = vst [vmem:[#allocation2 + $0x2a0] sm:$0xff] %v2385
        %2418 = vst [vmem:[#allocation2 + $0x2a8] sm:$0xff] %v2386
        %2419 = vst [vmem:[#allocation2 + $0x2b0] sm:$0xff] %v2387
        %2420 = vst [vmem:[#allocation2 + $0x2b8] sm:$0xff] %v2388
        %2421 = vst [vmem:[#allocation2 + $0x2c0] sm:$0xff] %v2389
        %2422 = vst [vmem:[#allocation2 + $0x2c8] sm:$0xff] %v2390
        %2423 = vst [vmem:[#allocation2 + $0x2d0] sm:$0xff] %v2391
        %2424 = vst [vmem:[#allocation2 + $0x2d8] sm:$0xff] %v2392
        %2425 = vst [vmem:[#allocation2 + $0x2e0] sm:$0xff] %v2393
        %2426 = vst [vmem:[#allocation2 + $0x2e8] sm:$0xff] %v2394
        %2427 = vst [vmem:[#allocation2 + $0x2f0] sm:$0xff] %v2395
        %2428 = vst [vmem:[#allocation2 + $0x2f8] sm:$0xff] %v2396
        %2429 = vrot.lane.b32.xlu0 %v630, 125
        %v2430 = vpop.permute.xlu0 %2429
        %2431 = vrot.lane.b32.xlu0 %v634, 125
        %v2432 = vpop.permute.xlu0 %2431
        %2433 = vrot.lane.b32.xlu0 %v640, 125
        %v2434 = vpop.permute.xlu0 %2433
        %2435 = vrot.lane.b32.xlu0 %v644, 125
        %v2436 = vpop.permute.xlu0 %2435
        %2437 = vrot.lane.b32.xlu0 %v632, 125
        %v2438 = vpop.permute.xlu0 %2437
        %2439 = vrot.lane.b32.xlu0 %v636, 125
        %v2440 = vpop.permute.xlu0 %2439
        %2441 = vrot.lane.b32.xlu0 %v642, 125
        %v2442 = vpop.permute.xlu0 %2441
        %2443 = vrot.lane.b32.xlu0 %v646, 125
        %v2444 = vpop.permute.xlu0 %2443
        %2445 = vrot.lane.b32.xlu0 %v683, 125
        %v2446 = vpop.permute.xlu0 %2445
        %2447 = vrot.lane.b32.xlu0 %v687, 125
        %v2448 = vpop.permute.xlu0 %2447
        %2449 = vrot.lane.b32.xlu0 %v693, 125
        %v2450 = vpop.permute.xlu0 %2449
        %2451 = vrot.lane.b32.xlu0 %v697, 125
        %v2452 = vpop.permute.xlu0 %2451
        %2453 = vrot.lane.b32.xlu0 %v685, 125
        %v2454 = vpop.permute.xlu0 %2453
        %2455 = vrot.lane.b32.xlu0 %v689, 125
        %v2456 = vpop.permute.xlu0 %2455
        %2457 = vrot.lane.b32.xlu0 %v695, 125
        %v2458 = vpop.permute.xlu0 %2457
        %2459 = vrot.lane.b32.xlu0 %v699, 125
        %v2460 = vpop.permute.xlu0 %2459
        %2461 = vrot.lane.b32.xlu0 %v736, 125
        %v2462 = vpop.permute.xlu0 %2461
        %2463 = vrot.lane.b32.xlu0 %v740, 125
        %v2464 = vpop.permute.xlu0 %2463
        %2465 = vrot.lane.b32.xlu0 %v746, 125
        %v2466 = vpop.permute.xlu0 %2465
        %2467 = vrot.lane.b32.xlu0 %v750, 125
        %v2468 = vpop.permute.xlu0 %2467
        %2469 = vrot.lane.b32.xlu0 %v738, 125
        %v2470 = vpop.permute.xlu0 %2469
        %2471 = vrot.lane.b32.xlu0 %v742, 125
        %v2472 = vpop.permute.xlu0 %2471
        %2473 = vrot.lane.b32.xlu0 %v748, 125
        %v2474 = vpop.permute.xlu0 %2473
        %2475 = vrot.lane.b32.xlu0 %v752, 125
        %v2476 = vpop.permute.xlu0 %2475
        %2477 = vrot.lane.b32.xlu0 %v789, 125
        %v2478 = vpop.permute.xlu0 %2477
        %2479 = vrot.lane.b32.xlu0 %v793, 125
        %v2480 = vpop.permute.xlu0 %2479
        %2481 = vrot.lane.b32.xlu0 %v799, 125
        %v2482 = vpop.permute.xlu0 %2481
        %2483 = vrot.lane.b32.xlu0 %v803, 125
        %v2484 = vpop.permute.xlu0 %2483
        %2485 = vrot.lane.b32.xlu0 %v791, 125
        %v2486 = vpop.permute.xlu0 %2485
        %2487 = vrot.lane.b32.xlu0 %v795, 125
        %v2488 = vpop.permute.xlu0 %2487
        %2489 = vrot.lane.b32.xlu0 %v801, 125
        %v2490 = vpop.permute.xlu0 %2489
        %2491 = vrot.lane.b32.xlu0 %v805, 125
        %v2492 = vpop.permute.xlu0 %2491
        %vm2493 = vcmp.lt.s32.totalorder %v808, 125
        %v2494 = vsel %vm2493, %v2478, %v2486
        %v2495 = vsel %vm2493, %v2480, %v2488
        %v2496 = vsel %vm2493, %v2482, %v2490
        %v2497 = vsel %vm2493, %v2484, %v2492
        %v2498 = vsel %vm2493, %v2470, %v2478
        %v2499 = vsel %vm2493, %v2472, %v2480
        %v2500 = vsel %vm2493, %v2474, %v2482
        %v2501 = vsel %vm2493, %v2476, %v2484
        %v2502 = vsel %vm2493, %v2462, %v2470
        %v2503 = vsel %vm2493, %v2464, %v2472
        %v2504 = vsel %vm2493, %v2466, %v2474
        %v2505 = vsel %vm2493, %v2468, %v2476
        %v2506 = vsel %vm2493, %v2454, %v2462
        %v2507 = vsel %vm2493, %v2456, %v2464
        %v2508 = vsel %vm2493, %v2458, %v2466
        %v2509 = vsel %vm2493, %v2460, %v2468
        %v2510 = vsel %vm2493, %v2446, %v2454
        %v2511 = vsel %vm2493, %v2448, %v2456
        %v2512 = vsel %vm2493, %v2450, %v2458
        %v2513 = vsel %vm2493, %v2452, %v2460
        %v2514 = vsel %vm2493, %v2438, %v2446
        %v2515 = vsel %vm2493, %v2440, %v2448
        %v2516 = vsel %vm2493, %v2442, %v2450
        %v2517 = vsel %vm2493, %v2444, %v2452
        %v2518 = vsel %vm2493, %v2430, %v2438
        %v2519 = vsel %vm2493, %v2432, %v2440
        %v2520 = vsel %vm2493, %v2434, %v2442
        %v2521 = vsel %vm2493, %v2436, %v2444
        %v2522 = vsel %vm2493, %v2486, %v2430
        %v2523 = vsel %vm2493, %v2488, %v2432
        %v2524 = vsel %vm2493, %v2490, %v2434
        %v2525 = vsel %vm2493, %v2492, %v2436
        %vm2526 = vcmp.ge.s32.totalorder %v904, 4294967293
        %vm2527 = vcmp.ge.s32.totalorder %v905, 4294967293
        %vm2528 = vcmp.ge.s32.totalorder %v906, 4294967293
        %vm2529 = vcmp.ge.s32.totalorder %v907, 4294967293
        %vm2530 = vcmp.ge.s32.totalorder %v908, 4294967293
        %vm2531 = vcmp.ge.s32.totalorder %v909, 4294967293
        %vm2532 = vcmp.ge.s32.totalorder %v910, 4294967293
        %vm2533 = vcmp.ge.s32.totalorder %v911, 4294967293
        %vm2534 = vcmp.lt.s32.totalorder %v904, 125
        %vm2535 = vcmp.lt.s32.totalorder %v905, 125
        %vm2536 = vcmp.lt.s32.totalorder %v906, 125
        %vm2537 = vcmp.lt.s32.totalorder %v907, 125
        %vm2538 = vcmp.lt.s32.totalorder %v908, 125
        %vm2539 = vcmp.lt.s32.totalorder %v909, 125
        %vm2540 = vcmp.lt.s32.totalorder %v910, 125
        %vm2541 = vcmp.lt.s32.totalorder %v911, 125
        %vm2542 = vmand %vm2526, %vm2534
        %vm2543 = vmand %vm2527, %vm2535
        %vm2544 = vmand %vm2528, %vm2536
        %vm2545 = vmand %vm2529, %vm2537
        %vm2546 = vmand %vm2530, %vm2538
        %vm2547 = vmand %vm2531, %vm2539
        %vm2548 = vmand %vm2532, %vm2540
        %vm2549 = vmand %vm2533, %vm2541
        %v2550 = vsel %vm2542, 1, 0
        %v2551 = vsel %vm2543, 1, 0
        %v2552 = vsel %vm2544, 1, 0
        %v2553 = vsel %vm2545, 1, 0
        %v2554 = vsel %vm2546, 1, 0
        %v2555 = vsel %vm2547, 1, 0
        %v2556 = vsel %vm2548, 1, 0
        %v2557 = vsel %vm2549, 1, 0
        %vm2558 = vcmp.eq.s32.totalorder %v2550, 1
        %vm2559 = vcmp.eq.s32.totalorder %v2551, 1
        %vm2560 = vcmp.eq.s32.totalorder %v2552, 1
        %vm2561 = vcmp.eq.s32.totalorder %v2553, 1
        %vm2562 = vcmp.eq.s32.totalorder %v2554, 1
        %vm2563 = vcmp.eq.s32.totalorder %v2555, 1
        %vm2564 = vcmp.eq.s32.totalorder %v2556, 1
        %vm2565 = vcmp.eq.s32.totalorder %v2557, 1
        %v2566 = vsel %vm2558, %v2518, 0.0
        %v2567 = vsel %vm2559, %v2514, 0.0
        %v2568 = vsel %vm2560, %v2510, 0.0
        %v2569 = vsel %vm2561, %v2506, 0.0
        %v2570 = vsel %vm2562, %v2502, 0.0
        %v2571 = vsel %vm2563, %v2498, 0.0
        %v2572 = vsel %vm2564, %v2494, 0.0
        %v2573 = vsel %vm2565, %v2522, 0.0
        %v2574 = vsel %vm2558, %v2519, 0.0
        %v2575 = vsel %vm2559, %v2515, 0.0
        %v2576 = vsel %vm2560, %v2511, 0.0
        %v2577 = vsel %vm2561, %v2507, 0.0
        %v2578 = vsel %vm2562, %v2503, 0.0
        %v2579 = vsel %vm2563, %v2499, 0.0
        %v2580 = vsel %vm2564, %v2495, 0.0
        %v2581 = vsel %vm2565, %v2523, 0.0
        %v2582 = vsel %vm2558, %v2520, 0.0
        %v2583 = vsel %vm2559, %v2516, 0.0
        %v2584 = vsel %vm2560, %v2512, 0.0
        %v2585 = vsel %vm2561, %v2508, 0.0
        %v2586 = vsel %vm2562, %v2504, 0.0
        %v2587 = vsel %vm2563, %v2500, 0.0
        %v2588 = vsel %vm2564, %v2496, 0.0
        %v2589 = vsel %vm2565, %v2524, 0.0
        %v2590 = vsel %vm2558, %v2521, 0.0
        %v2591 = vsel %vm2559, %v2517, 0.0
        %v2592 = vsel %vm2560, %v2513, 0.0
        %v2593 = vsel %vm2561, %v2509, 0.0
        %v2594 = vsel %vm2562, %v2505, 0.0
        %v2595 = vsel %vm2563, %v2501, 0.0
        %v2596 = vsel %vm2564, %v2497, 0.0
        %v2597 = vsel %vm2565, %v2525, 0.0
        %v2598 = vpack.c.bf16 %v2574, %v2566
        %v2599 = vpack.c.bf16 %v2575, %v2567
        %v2600 = vpack.c.bf16 %v2576, %v2568
        %v2601 = vpack.c.bf16 %v2577, %v2569
        %v2602 = vpack.c.bf16 %v2578, %v2570
        %v2603 = vpack.c.bf16 %v2579, %v2571
        %v2604 = vpack.c.bf16 %v2580, %v2572
        %v2605 = vpack.c.bf16 %v2581, %v2573
        %v2606 = vpack.c.bf16 %v2590, %v2582
        %v2607 = vpack.c.bf16 %v2591, %v2583
        %v2608 = vpack.c.bf16 %v2592, %v2584
        %v2609 = vpack.c.bf16 %v2593, %v2585
        %v2610 = vpack.c.bf16 %v2594, %v2586
        %v2611 = vpack.c.bf16 %v2595, %v2587
        %v2612 = vpack.c.bf16 %v2596, %v2588
        %v2613 = vpack.c.bf16 %v2597, %v2589
        %v2630 = vunpack.c.l.b16 %v2598
        %v2631 = vunpack.c.l.b16 %v2599
        %v2632 = vunpack.c.l.b16 %v2600
        %v2633 = vunpack.c.l.b16 %v2601
        %v2634 = vunpack.c.l.b16 %v2602
        %v2635 = vunpack.c.l.b16 %v2603
        %v2636 = vunpack.c.l.b16 %v2604
        %v2637 = vunpack.c.l.b16 %v2605
        %v2638 = vunpack.c.h.b16 %v2598
        %v2639 = vunpack.c.h.b16 %v2599
        %v2640 = vunpack.c.h.b16 %v2600
        %v2641 = vunpack.c.h.b16 %v2601
        %v2642 = vunpack.c.h.b16 %v2602
        %v2643 = vunpack.c.h.b16 %v2603
        %v2644 = vunpack.c.h.b16 %v2604
        %v2645 = vunpack.c.h.b16 %v2605
        %v2646 = vunpack.c.l.b16 %v2606
        %v2647 = vunpack.c.l.b16 %v2607
        %v2648 = vunpack.c.l.b16 %v2608
        %v2649 = vunpack.c.l.b16 %v2609
        %v2650 = vunpack.c.l.b16 %v2610
        %v2651 = vunpack.c.l.b16 %v2611
        %v2652 = vunpack.c.l.b16 %v2612
        %v2653 = vunpack.c.l.b16 %v2613
        %v2654 = vunpack.c.h.b16 %v2606
        %v2655 = vunpack.c.h.b16 %v2607
        %v2656 = vunpack.c.h.b16 %v2608
        %v2657 = vunpack.c.h.b16 %v2609
        %v2658 = vunpack.c.h.b16 %v2610
        %v2659 = vunpack.c.h.b16 %v2611
        %v2660 = vunpack.c.h.b16 %v2612
        %v2661 = vunpack.c.h.b16 %v2613
        %v2662 = vpack.c.b16 %v2631, %v2630
        %v2663 = vpack.c.b16 %v2633, %v2632
        %v2664 = vpack.c.b16 %v2635, %v2634
        %v2665 = vpack.c.b16 %v2637, %v2636
        %v2666 = vpack.c.b16 %v2639, %v2638
        %v2667 = vpack.c.b16 %v2641, %v2640
        %v2668 = vpack.c.b16 %v2643, %v2642
        %v2669 = vpack.c.b16 %v2645, %v2644
        %v2670 = vpack.c.b16 %v2647, %v2646
        %v2671 = vpack.c.b16 %v2649, %v2648
        %v2672 = vpack.c.b16 %v2651, %v2650
        %v2673 = vpack.c.b16 %v2653, %v2652
        %v2674 = vpack.c.b16 %v2655, %v2654
        %v2675 = vpack.c.b16 %v2657, %v2656
        %v2676 = vpack.c.b16 %v2659, %v2658
        %v2677 = vpack.c.b16 %v2661, %v2660
        %2694 = vst [vmem:[#allocation2 + $0x300] sm:$0xff] %v2662
        %2695 = vst [vmem:[#allocation2 + $0x308] sm:$0xff] %v2663
        %2696 = vst [vmem:[#allocation2 + $0x310] sm:$0xff] %v2664
        %2697 = vst [vmem:[#allocation2 + $0x318] sm:$0xff] %v2665
        %2698 = vst [vmem:[#allocation2 + $0x320] sm:$0xff] %v2666
        %2699 = vst [vmem:[#allocation2 + $0x328] sm:$0xff] %v2667
        %2700 = vst [vmem:[#allocation2 + $0x330] sm:$0xff] %v2668
        %2701 = vst [vmem:[#allocation2 + $0x338] sm:$0xff] %v2669
        %2702 = vst [vmem:[#allocation2 + $0x340] sm:$0xff] %v2670
        %2703 = vst [vmem:[#allocation2 + $0x348] sm:$0xff] %v2671
        %2704 = vst [vmem:[#allocation2 + $0x350] sm:$0xff] %v2672
        %2705 = vst [vmem:[#allocation2 + $0x358] sm:$0xff] %v2673
        %2706 = vst [vmem:[#allocation2 + $0x360] sm:$0xff] %v2674
        %2707 = vst [vmem:[#allocation2 + $0x368] sm:$0xff] %v2675
        %2708 = vst [vmem:[#allocation2 + $0x370] sm:$0xff] %v2676
        %2709 = vst [vmem:[#allocation2 + $0x378] sm:$0xff] %v2677
        %v2710 = vld [vmem:[%s3] sm:$0xff]
        %v2711 = vld [vmem:[%s3 + $0x8] sm:$0xff]
        %v2712 = vld [vmem:[%s3 + $0x10] sm:$0xff]
        %v2713 = vld [vmem:[%s3 + $0x18] sm:$0xff]
        %v2714 = vld [vmem:[#allocation2] sm:$0xff]
        %v2715 = vld [vmem:[#allocation2 + $0x8] sm:$0xff]
        %v2716 = vld [vmem:[#allocation2 + $0x10] sm:$0xff]
        %v2717 = vld [vmem:[#allocation2 + $0x18] sm:$0xff]
        %v2718 = vld [vmem:[#allocation2 + $0x20] sm:$0xff]
        %v2719 = vld [vmem:[#allocation2 + $0x28] sm:$0xff]
        %v2720 = vld [vmem:[#allocation2 + $0x30] sm:$0xff]
        %v2721 = vld [vmem:[#allocation2 + $0x38] sm:$0xff]
        %v2722 = vld [vmem:[#allocation2 + $0x40] sm:$0xff]
        %v2723 = vld [vmem:[#allocation2 + $0x48] sm:$0xff]
        %v2724 = vld [vmem:[#allocation2 + $0x50] sm:$0xff]
        %v2725 = vld [vmem:[#allocation2 + $0x58] sm:$0xff]
        %v2726 = vld [vmem:[#allocation2 + $0x60] sm:$0xff]
        %v2727 = vld [vmem:[#allocation2 + $0x68] sm:$0xff]
        %v2728 = vld [vmem:[#allocation2 + $0x70] sm:$0xff]
        %v2729 = vld [vmem:[#allocation2 + $0x78] sm:$0xff]
        %v2730 = vld [vmem:[#allocation2 + $0x80] sm:$0xff]
        %v2731 = vld [vmem:[#allocation2 + $0x88] sm:$0xff]
        %v2732 = vld [vmem:[#allocation2 + $0x90] sm:$0xff]
        %v2733 = vld [vmem:[#allocation2 + $0x98] sm:$0xff]
        %v2734 = vld [vmem:[#allocation2 + $0xa0] sm:$0xff]
        %v2735 = vld [vmem:[#allocation2 + $0xa8] sm:$0xff]
        %v2736 = vld [vmem:[#allocation2 + $0xb0] sm:$0xff]
        %v2737 = vld [vmem:[#allocation2 + $0xb8] sm:$0xff]
        %v2738 = vld [vmem:[#allocation2 + $0xc0] sm:$0xff]
        %v2739 = vld [vmem:[#allocation2 + $0xc8] sm:$0xff]
        %v2740 = vld [vmem:[#allocation2 + $0xd0] sm:$0xff]
        %v2741 = vld [vmem:[#allocation2 + $0xd8] sm:$0xff]
        %v2742 = vld [vmem:[#allocation2 + $0xe0] sm:$0xff]
        %v2743 = vld [vmem:[#allocation2 + $0xe8] sm:$0xff]
        %v2744 = vld [vmem:[#allocation2 + $0xf0] sm:$0xff]
        %v2745 = vld [vmem:[#allocation2 + $0xf8] sm:$0xff]
        %v2746 = vld [vmem:[#allocation2 + $0x100] sm:$0xff]
        %v2747 = vld [vmem:[#allocation2 + $0x108] sm:$0xff]
        %v2748 = vld [vmem:[#allocation2 + $0x110] sm:$0xff]
        %v2749 = vld [vmem:[#allocation2 + $0x118] sm:$0xff]
        %v2750 = vld [vmem:[#allocation2 + $0x120] sm:$0xff]
        %v2751 = vld [vmem:[#allocation2 + $0x128] sm:$0xff]
        %v2752 = vld [vmem:[#allocation2 + $0x130] sm:$0xff]
        %v2753 = vld [vmem:[#allocation2 + $0x138] sm:$0xff]
        %v2754 = vld [vmem:[#allocation2 + $0x140] sm:$0xff]
        %v2755 = vld [vmem:[#allocation2 + $0x148] sm:$0xff]
        %v2756 = vld [vmem:[#allocation2 + $0x150] sm:$0xff]
        %v2757 = vld [vmem:[#allocation2 + $0x158] sm:$0xff]
        %v2758 = vld [vmem:[#allocation2 + $0x160] sm:$0xff]
        %v2759 = vld [vmem:[#allocation2 + $0x168] sm:$0xff]
        %v2760 = vld [vmem:[#allocation2 + $0x170] sm:$0xff]
        %v2761 = vld [vmem:[#allocation2 + $0x178] sm:$0xff]
        %v2762 = vld [vmem:[#allocation2 + $0x180] sm:$0xff]
        %v2763 = vld [vmem:[#allocation2 + $0x188] sm:$0xff]
        %v2764 = vld [vmem:[#allocation2 + $0x190] sm:$0xff]
        %v2765 = vld [vmem:[#allocation2 + $0x198] sm:$0xff]
        %v2766 = vld [vmem:[#allocation2 + $0x1a0] sm:$0xff]
        %v2767 = vld [vmem:[#allocation2 + $0x1a8] sm:$0xff]
        %v2768 = vld [vmem:[#allocation2 + $0x1b0] sm:$0xff]
        %v2769 = vld [vmem:[#allocation2 + $0x1b8] sm:$0xff]
        %v2770 = vld [vmem:[#allocation2 + $0x1c0] sm:$0xff]
        %v2771 = vld [vmem:[#allocation2 + $0x1c8] sm:$0xff]
        %v2772 = vld [vmem:[#allocation2 + $0x1d0] sm:$0xff]
        %v2773 = vld [vmem:[#allocation2 + $0x1d8] sm:$0xff]
        %v2774 = vld [vmem:[#allocation2 + $0x1e0] sm:$0xff]
        %v2775 = vld [vmem:[#allocation2 + $0x1e8] sm:$0xff]
        %v2776 = vld [vmem:[#allocation2 + $0x1f0] sm:$0xff]
        %v2777 = vld [vmem:[#allocation2 + $0x1f8] sm:$0xff]
        %v2778 = vld [vmem:[#allocation2 + $0x200] sm:$0xff]
        %v2779 = vld [vmem:[#allocation2 + $0x208] sm:$0xff]
        %v2780 = vld [vmem:[#allocation2 + $0x210] sm:$0xff]
        %v2781 = vld [vmem:[#allocation2 + $0x218] sm:$0xff]
        %v2782 = vld [vmem:[#allocation2 + $0x220] sm:$0xff]
        %v2783 = vld [vmem:[#allocation2 + $0x228] sm:$0xff]
        %v2784 = vld [vmem:[#allocation2 + $0x230] sm:$0xff]
        %v2785 = vld [vmem:[#allocation2 + $0x238] sm:$0xff]
        %v2786 = vld [vmem:[#allocation2 + $0x240] sm:$0xff]
        %v2787 = vld [vmem:[#allocation2 + $0x248] sm:$0xff]
        %v2788 = vld [vmem:[#allocation2 + $0x250] sm:$0xff]
        %v2789 = vld [vmem:[#allocation2 + $0x258] sm:$0xff]
        %v2790 = vld [vmem:[#allocation2 + $0x260] sm:$0xff]
        %v2791 = vld [vmem:[#allocation2 + $0x268] sm:$0xff]
        %v2792 = vld [vmem:[#allocation2 + $0x270] sm:$0xff]
        %v2793 = vld [vmem:[#allocation2 + $0x278] sm:$0xff]
        %v2794 = vld [vmem:[#allocation2 + $0x280] sm:$0xff]
        %v2795 = vld [vmem:[#allocation2 + $0x288] sm:$0xff]
        %v2796 = vld [vmem:[#allocation2 + $0x290] sm:$0xff]
        %v2797 = vld [vmem:[#allocation2 + $0x298] sm:$0xff]
        %v2798 = vld [vmem:[#allocation2 + $0x2a0] sm:$0xff]
        %v2799 = vld [vmem:[#allocation2 + $0x2a8] sm:$0xff]
        %v2800 = vld [vmem:[#allocation2 + $0x2b0] sm:$0xff]
        %v2801 = vld [vmem:[#allocation2 + $0x2b8] sm:$0xff]
        %v2802 = vld [vmem:[#allocation2 + $0x2c0] sm:$0xff]
        %v2803 = vld [vmem:[#allocation2 + $0x2c8] sm:$0xff]
        %v2804 = vld [vmem:[#allocation2 + $0x2d0] sm:$0xff]
        %v2805 = vld [vmem:[#allocation2 + $0x2d8] sm:$0xff]
        %v2806 = vld [vmem:[#allocation2 + $0x2e0] sm:$0xff]
        %v2807 = vld [vmem:[#allocation2 + $0x2e8] sm:$0xff]
        %v2808 = vld [vmem:[#allocation2 + $0x2f0] sm:$0xff]
        %v2809 = vld [vmem:[#allocation2 + $0x2f8] sm:$0xff]
        %v2810 = vld [vmem:[#allocation2 + $0x300] sm:$0xff]
        %v2811 = vld [vmem:[#allocation2 + $0x308] sm:$0xff]
        %v2812 = vld [vmem:[#allocation2 + $0x310] sm:$0xff]
        %v2813 = vld [vmem:[#allocation2 + $0x318] sm:$0xff]
        %v2814 = vld [vmem:[#allocation2 + $0x320] sm:$0xff]
        %v2815 = vld [vmem:[#allocation2 + $0x328] sm:$0xff]
        %v2816 = vld [vmem:[#allocation2 + $0x330] sm:$0xff]
        %v2817 = vld [vmem:[#allocation2 + $0x338] sm:$0xff]
        %v2818 = vld [vmem:[#allocation2 + $0x340] sm:$0xff]
        %v2819 = vld [vmem:[#allocation2 + $0x348] sm:$0xff]
        %v2820 = vld [vmem:[#allocation2 + $0x350] sm:$0xff]
        %v2821 = vld [vmem:[#allocation2 + $0x358] sm:$0xff]
        %v2822 = vld [vmem:[#allocation2 + $0x360] sm:$0xff]
        %v2823 = vld [vmem:[#allocation2 + $0x368] sm:$0xff]
        %v2824 = vld [vmem:[#allocation2 + $0x370] sm:$0xff]
        %v2825 = vld [vmem:[#allocation2 + $0x378] sm:$0xff]
        %v2826 = vld [vmem:[%s4] sm:$0xff]
        %v2827 = vld [vmem:[%s4 + $0x8] sm:$0xff]
        %v2828 = vld [vmem:[%s4 + $0x10] sm:$0xff]
        %v2829 = vld [vmem:[%s4 + $0x18] sm:$0xff]
        %2831 = vset.pattern.permute.xlu0 0
        %2832 = vperm.xlu0 %2831, %v2826
        %v2833 = vpop.permute.xlu0 %2832
        %2836 = vset.pattern.permute.xlu0 0
        %2837 = vperm.xlu0 %2836, %v2827
        %v2838 = vpop.permute.xlu0 %2837
        %2841 = vset.pattern.permute.xlu0 0
        %2842 = vperm.xlu0 %2841, %v2828
        %v2843 = vpop.permute.xlu0 %2842
        %2846 = vset.pattern.permute.xlu0 0
        %2847 = vperm.xlu0 %2846, %v2829
        %v2848 = vpop.permute.xlu0 %2847
        %v2854 = vunpack.c.l.b16 %v2710
        %v2855 = vunpack.c.h.b16 %v2710
        %v2856 = vunpack.c.l.b16 %v2711
        %v2857 = vunpack.c.h.b16 %v2711
        %v2858 = vunpack.c.l.b16 %v2712
        %v2859 = vunpack.c.h.b16 %v2712
        %v2860 = vunpack.c.l.b16 %v2713
        %v2861 = vunpack.c.h.b16 %v2713
        %v2862 = vpack.c.b16 %v2856, %v2854
        %v2863 = vpack.c.b16 %v2857, %v2855
        %v2864 = vpack.c.b16 %v2860, %v2858
        %v2865 = vpack.c.b16 %v2861, %v2859
        %v2980 = vunpack.c.l.b16 %v2714
        %v2981 = vunpack.c.h.b16 %v2714
        %v2982 = vunpack.c.l.b16 %v2715
        %v2983 = vunpack.c.h.b16 %v2715
        %v2984 = vunpack.c.l.b16 %v2716
        %v2985 = vunpack.c.h.b16 %v2716
        %v2986 = vunpack.c.l.b16 %v2717
        %v2987 = vunpack.c.h.b16 %v2717
        %v2988 = vunpack.c.l.b16 %v2718
        %v2989 = vunpack.c.h.b16 %v2718
        %v2990 = vunpack.c.l.b16 %v2719
        %v2991 = vunpack.c.h.b16 %v2719
        %v2992 = vunpack.c.l.b16 %v2720
        %v2993 = vunpack.c.h.b16 %v2720
        %v2994 = vunpack.c.l.b16 %v2721
        %v2995 = vunpack.c.h.b16 %v2721
        %v2996 = vunpack.c.l.b16 %v2722
        %v2997 = vunpack.c.h.b16 %v2722
        %v2998 = vunpack.c.l.b16 %v2723
        %v2999 = vunpack.c.h.b16 %v2723
        %v3000 = vunpack.c.l.b16 %v2724
        %v3001 = vunpack.c.h.b16 %v2724
        %v3002 = vunpack.c.l.b16 %v2725
        %v3003 = vunpack.c.h.b16 %v2725
        %v3004 = vunpack.c.l.b16 %v2726
        %v3005 = vunpack.c.h.b16 %v2726
        %v3006 = vunpack.c.l.b16 %v2727
        %v3007 = vunpack.c.h.b16 %v2727
        %v3008 = vunpack.c.l.b16 %v2728
        %v3009 = vunpack.c.h.b16 %v2728
        %v3010 = vunpack.c.l.b16 %v2729
        %v3011 = vunpack.c.h.b16 %v2729
        %v3012 = vunpack.c.l.b16 %v2730
        %v3013 = vunpack.c.h.b16 %v2730
        %v3014 = vunpack.c.l.b16 %v2731
        %v3015 = vunpack.c.h.b16 %v2731
        %v3016 = vunpack.c.l.b16 %v2732
        %v3017 = vunpack.c.h.b16 %v2732
        %v3018 = vunpack.c.l.b16 %v2733
        %v3019 = vunpack.c.h.b16 %v2733
        %v3020 = vunpack.c.l.b16 %v2734
        %v3021 = vunpack.c.h.b16 %v2734
        %v3022 = vunpack.c.l.b16 %v2735
        %v3023 = vunpack.c.h.b16 %v2735
        %v3024 = vunpack.c.l.b16 %v2736
        %v3025 = vunpack.c.h.b16 %v2736
        %v3026 = vunpack.c.l.b16 %v2737
        %v3027 = vunpack.c.h.b16 %v2737
        %v3028 = vunpack.c.l.b16 %v2738
        %v3029 = vunpack.c.h.b16 %v2738
        %v3030 = vunpack.c.l.b16 %v2739
        %v3031 = vunpack.c.h.b16 %v2739
        %v3032 = vunpack.c.l.b16 %v2740
        %v3033 = vunpack.c.h.b16 %v2740
        %v3034 = vunpack.c.l.b16 %v2741
        %v3035 = vunpack.c.h.b16 %v2741
        %v3036 = vunpack.c.l.b16 %v2742
        %v3037 = vunpack.c.h.b16 %v2742
        %v3038 = vunpack.c.l.b16 %v2743
        %v3039 = vunpack.c.h.b16 %v2743
        %v3040 = vunpack.c.l.b16 %v2744
        %v3041 = vunpack.c.h.b16 %v2744
        %v3042 = vunpack.c.l.b16 %v2745
        %v3043 = vunpack.c.h.b16 %v2745
        %v3044 = vunpack.c.l.b16 %v2746
        %v3045 = vunpack.c.h.b16 %v2746
        %v3046 = vunpack.c.l.b16 %v2747
        %v3047 = vunpack.c.h.b16 %v2747
        %v3048 = vunpack.c.l.b16 %v2748
        %v3049 = vunpack.c.h.b16 %v2748
        %v3050 = vunpack.c.l.b16 %v2749
        %v3051 = vunpack.c.h.b16 %v2749
        %v3052 = vunpack.c.l.b16 %v2750
        %v3053 = vunpack.c.h.b16 %v2750
        %v3054 = vunpack.c.l.b16 %v2751
        %v3055 = vunpack.c.h.b16 %v2751
        %v3056 = vunpack.c.l.b16 %v2752
        %v3057 = vunpack.c.h.b16 %v2752
        %v3058 = vunpack.c.l.b16 %v2753
        %v3059 = vunpack.c.h.b16 %v2753
        %v3060 = vunpack.c.l.b16 %v2754
        %v3061 = vunpack.c.h.b16 %v2754
        %v3062 = vunpack.c.l.b16 %v2755
        %v3063 = vunpack.c.h.b16 %v2755
        %v3064 = vunpack.c.l.b16 %v2756
        %v3065 = vunpack.c.h.b16 %v2756
        %v3066 = vunpack.c.l.b16 %v2757
        %v3067 = vunpack.c.h.b16 %v2757
        %v3068 = vunpack.c.l.b16 %v2758
        %v3069 = vunpack.c.h.b16 %v2758
        %v3070 = vunpack.c.l.b16 %v2759
        %v3071 = vunpack.c.h.b16 %v2759
        %v3072 = vunpack.c.l.b16 %v2760
        %v3073 = vunpack.c.h.b16 %v2760
        %v3074 = vunpack.c.l.b16 %v2761
        %v3075 = vunpack.c.h.b16 %v2761
        %v3076 = vunpack.c.l.b16 %v2762
        %v3077 = vunpack.c.h.b16 %v2762
        %v3078 = vunpack.c.l.b16 %v2763
        %v3079 = vunpack.c.h.b16 %v2763
        %v3080 = vunpack.c.l.b16 %v2764
        %v3081 = vunpack.c.h.b16 %v2764
        %v3082 = vunpack.c.l.b16 %v2765
        %v3083 = vunpack.c.h.b16 %v2765
        %v3084 = vunpack.c.l.b16 %v2766
        %v3085 = vunpack.c.h.b16 %v2766
        %v3086 = vunpack.c.l.b16 %v2767
        %v3087 = vunpack.c.h.b16 %v2767
        %v3088 = vunpack.c.l.b16 %v2768
        %v3089 = vunpack.c.h.b16 %v2768
        %v3090 = vunpack.c.l.b16 %v2769
        %v3091 = vunpack.c.h.b16 %v2769
        %v3092 = vunpack.c.l.b16 %v2770
        %v3093 = vunpack.c.h.b16 %v2770
        %v3094 = vunpack.c.l.b16 %v2771
        %v3095 = vunpack.c.h.b16 %v2771
        %v3096 = vunpack.c.l.b16 %v2772
        %v3097 = vunpack.c.h.b16 %v2772
        %v3098 = vunpack.c.l.b16 %v2773
        %v3099 = vunpack.c.h.b16 %v2773
        %v3100 = vunpack.c.l.b16 %v2774
        %v3101 = vunpack.c.h.b16 %v2774
        %v3102 = vunpack.c.l.b16 %v2775
        %v3103 = vunpack.c.h.b16 %v2775
        %v3104 = vunpack.c.l.b16 %v2776
        %v3105 = vunpack.c.h.b16 %v2776
        %v3106 = vunpack.c.l.b16 %v2777
        %v3107 = vunpack.c.h.b16 %v2777
        %v3108 = vunpack.c.l.b16 %v2778
        %v3109 = vunpack.c.h.b16 %v2778
        %v3110 = vunpack.c.l.b16 %v2779
        %v3111 = vunpack.c.h.b16 %v2779
        %v3112 = vunpack.c.l.b16 %v2780
        %v3113 = vunpack.c.h.b16 %v2780
        %v3114 = vunpack.c.l.b16 %v2781
        %v3115 = vunpack.c.h.b16 %v2781
        %v3116 = vunpack.c.l.b16 %v2782
        %v3117 = vunpack.c.h.b16 %v2782
        %v3118 = vunpack.c.l.b16 %v2783
        %v3119 = vunpack.c.h.b16 %v2783
        %v3120 = vunpack.c.l.b16 %v2784
        %v3121 = vunpack.c.h.b16 %v2784
        %v3122 = vunpack.c.l.b16 %v2785
        %v3123 = vunpack.c.h.b16 %v2785
        %v3124 = vunpack.c.l.b16 %v2786
        %v3125 = vunpack.c.h.b16 %v2786
        %v3126 = vunpack.c.l.b16 %v2787
        %v3127 = vunpack.c.h.b16 %v2787
        %v3128 = vunpack.c.l.b16 %v2788
        %v3129 = vunpack.c.h.b16 %v2788
        %v3130 = vunpack.c.l.b16 %v2789
        %v3131 = vunpack.c.h.b16 %v2789
        %v3132 = vunpack.c.l.b16 %v2790
        %v3133 = vunpack.c.h.b16 %v2790
        %v3134 = vunpack.c.l.b16 %v2791
        %v3135 = vunpack.c.h.b16 %v2791
        %v3136 = vunpack.c.l.b16 %v2792
        %v3137 = vunpack.c.h.b16 %v2792
        %v3138 = vunpack.c.l.b16 %v2793
        %v3139 = vunpack.c.h.b16 %v2793
        %v3140 = vunpack.c.l.b16 %v2794
        %v3141 = vunpack.c.h.b16 %v2794
        %v3142 = vunpack.c.l.b16 %v2795
        %v3143 = vunpack.c.h.b16 %v2795
        %v3144 = vunpack.c.l.b16 %v2796
        %v3145 = vunpack.c.h.b16 %v2796
        %v3146 = vunpack.c.l.b16 %v2797
        %v3147 = vunpack.c.h.b16 %v2797
        %v3148 = vunpack.c.l.b16 %v2798
        %v3149 = vunpack.c.h.b16 %v2798
        %v3150 = vunpack.c.l.b16 %v2799
        %v3151 = vunpack.c.h.b16 %v2799
        %v3152 = vunpack.c.l.b16 %v2800
        %v3153 = vunpack.c.h.b16 %v2800
        %v3154 = vunpack.c.l.b16 %v2801
        %v3155 = vunpack.c.h.b16 %v2801
        %v3156 = vunpack.c.l.b16 %v2802
        %v3157 = vunpack.c.h.b16 %v2802
        %v3158 = vunpack.c.l.b16 %v2803
        %v3159 = vunpack.c.h.b16 %v2803
        %v3160 = vunpack.c.l.b16 %v2804
        %v3161 = vunpack.c.h.b16 %v2804
        %v3162 = vunpack.c.l.b16 %v2805
        %v3163 = vunpack.c.h.b16 %v2805
        %v3164 = vunpack.c.l.b16 %v2806
        %v3165 = vunpack.c.h.b16 %v2806
        %v3166 = vunpack.c.l.b16 %v2807
        %v3167 = vunpack.c.h.b16 %v2807
        %v3168 = vunpack.c.l.b16 %v2808
        %v3169 = vunpack.c.h.b16 %v2808
        %v3170 = vunpack.c.l.b16 %v2809
        %v3171 = vunpack.c.h.b16 %v2809
        %v3172 = vunpack.c.l.b16 %v2810
        %v3173 = vunpack.c.h.b16 %v2810
        %v3174 = vunpack.c.l.b16 %v2811
        %v3175 = vunpack.c.h.b16 %v2811
        %v3176 = vunpack.c.l.b16 %v2812
        %v3177 = vunpack.c.h.b16 %v2812
        %v3178 = vunpack.c.l.b16 %v2813
        %v3179 = vunpack.c.h.b16 %v2813
        %v3180 = vunpack.c.l.b16 %v2814
        %v3181 = vunpack.c.h.b16 %v2814
        %v3182 = vunpack.c.l.b16 %v2815
        %v3183 = vunpack.c.h.b16 %v2815
        %v3184 = vunpack.c.l.b16 %v2816
        %v3185 = vunpack.c.h.b16 %v2816
        %v3186 = vunpack.c.l.b16 %v2817
        %v3187 = vunpack.c.h.b16 %v2817
        %v3188 = vunpack.c.l.b16 %v2818
        %v3189 = vunpack.c.h.b16 %v2818
        %v3190 = vunpack.c.l.b16 %v2819
        %v3191 = vunpack.c.h.b16 %v2819
        %v3192 = vunpack.c.l.b16 %v2820
        %v3193 = vunpack.c.h.b16 %v2820
        %v3194 = vunpack.c.l.b16 %v2821
        %v3195 = vunpack.c.h.b16 %v2821
        %v3196 = vunpack.c.l.b16 %v2822
        %v3197 = vunpack.c.h.b16 %v2822
        %v3198 = vunpack.c.l.b16 %v2823
        %v3199 = vunpack.c.h.b16 %v2823
        %v3200 = vunpack.c.l.b16 %v2824
        %v3201 = vunpack.c.h.b16 %v2824
        %v3202 = vunpack.c.l.b16 %v2825
        %v3203 = vunpack.c.h.b16 %v2825
        %v3204 = vpack.c.b16 %v2988, %v2980
        %v3205 = vpack.c.b16 %v2989, %v2981
        %v3206 = vpack.c.b16 %v2990, %v2982
        %v3207 = vpack.c.b16 %v2991, %v2983
        %v3208 = vpack.c.b16 %v2992, %v2984
        %v3209 = vpack.c.b16 %v2993, %v2985
        %v3210 = vpack.c.b16 %v2994, %v2986
        %v3211 = vpack.c.b16 %v2995, %v2987
        %v3212 = vpack.c.b16 %v3004, %v2996
        %v3213 = vpack.c.b16 %v3005, %v2997
        %v3214 = vpack.c.b16 %v3006, %v2998
        %v3215 = vpack.c.b16 %v3007, %v2999
        %v3216 = vpack.c.b16 %v3008, %v3000
        %v3217 = vpack.c.b16 %v3009, %v3001
        %v3218 = vpack.c.b16 %v3010, %v3002
        %v3219 = vpack.c.b16 %v3011, %v3003
        %v3220 = vpack.c.b16 %v3020, %v3012
        %v3221 = vpack.c.b16 %v3021, %v3013
        %v3222 = vpack.c.b16 %v3022, %v3014
        %v3223 = vpack.c.b16 %v3023, %v3015
        %v3224 = vpack.c.b16 %v3024, %v3016
        %v3225 = vpack.c.b16 %v3025, %v3017
        %v3226 = vpack.c.b16 %v3026, %v3018
        %v3227 = vpack.c.b16 %v3027, %v3019
        %v3228 = vpack.c.b16 %v3036, %v3028
        %v3229 = vpack.c.b16 %v3037, %v3029
        %v3230 = vpack.c.b16 %v3038, %v3030
        %v3231 = vpack.c.b16 %v3039, %v3031
        %v3232 = vpack.c.b16 %v3040, %v3032
        %v3233 = vpack.c.b16 %v3041, %v3033
        %v3234 = vpack.c.b16 %v3042, %v3034
        %v3235 = vpack.c.b16 %v3043, %v3035
        %v3236 = vpack.c.b16 %v3052, %v3044
        %v3237 = vpack.c.b16 %v3053, %v3045
        %v3238 = vpack.c.b16 %v3054, %v3046
        %v3239 = vpack.c.b16 %v3055, %v3047
        %v3240 = vpack.c.b16 %v3056, %v3048
        %v3241 = vpack.c.b16 %v3057, %v3049
        %v3242 = vpack.c.b16 %v3058, %v3050
        %v3243 = vpack.c.b16 %v3059, %v3051
        %v3244 = vpack.c.b16 %v3068, %v3060
        %v3245 = vpack.c.b16 %v3069, %v3061
        %v3246 = vpack.c.b16 %v3070, %v3062
        %v3247 = vpack.c.b16 %v3071, %v3063
        %v3248 = vpack.c.b16 %v3072, %v3064
        %v3249 = vpack.c.b16 %v3073, %v3065
        %v3250 = vpack.c.b16 %v3074, %v3066
        %v3251 = vpack.c.b16 %v3075, %v3067
        %v3252 = vpack.c.b16 %v3084, %v3076
        %v3253 = vpack.c.b16 %v3085, %v3077
        %v3254 = vpack.c.b16 %v3086, %v3078
        %v3255 = vpack.c.b16 %v3087, %v3079
        %v3256 = vpack.c.b16 %v3088, %v3080
        %v3257 = vpack.c.b16 %v3089, %v3081
        %v3258 = vpack.c.b16 %v3090, %v3082
        %v3259 = vpack.c.b16 %v3091, %v3083
        %v3260 = vpack.c.b16 %v3100, %v3092
        %v3261 = vpack.c.b16 %v3101, %v3093
        %v3262 = vpack.c.b16 %v3102, %v3094
        %v3263 = vpack.c.b16 %v3103, %v3095
        %v3264 = vpack.c.b16 %v3104, %v3096
        %v3265 = vpack.c.b16 %v3105, %v3097
        %v3266 = vpack.c.b16 %v3106, %v3098
        %v3267 = vpack.c.b16 %v3107, %v3099
        %v3268 = vpack.c.b16 %v3116, %v3108
        %v3269 = vpack.c.b16 %v3117, %v3109
        %v3270 = vpack.c.b16 %v3118, %v3110
        %v3271 = vpack.c.b16 %v3119, %v3111
        %v3272 = vpack.c.b16 %v3120, %v3112
        %v3273 = vpack.c.b16 %v3121, %v3113
        %v3274 = vpack.c.b16 %v3122, %v3114
        %v3275 = vpack.c.b16 %v3123, %v3115
        %v3276 = vpack.c.b16 %v3132, %v3124
        %v3277 = vpack.c.b16 %v3133, %v3125
        %v3278 = vpack.c.b16 %v3134, %v3126
        %v3279 = vpack.c.b16 %v3135, %v3127
        %v3280 = vpack.c.b16 %v3136, %v3128
        %v3281 = vpack.c.b16 %v3137, %v3129
        %v3282 = vpack.c.b16 %v3138, %v3130
        %v3283 = vpack.c.b16 %v3139, %v3131
        %v3284 = vpack.c.b16 %v3148, %v3140
        %v3285 = vpack.c.b16 %v3149, %v3141
        %v3286 = vpack.c.b16 %v3150, %v3142
        %v3287 = vpack.c.b16 %v3151, %v3143
        %v3288 = vpack.c.b16 %v3152, %v3144
        %v3289 = vpack.c.b16 %v3153, %v3145
        %v3290 = vpack.c.b16 %v3154, %v3146
        %v3291 = vpack.c.b16 %v3155, %v3147
        %v3292 = vpack.c.b16 %v3164, %v3156
        %v3293 = vpack.c.b16 %v3165, %v3157
        %v3294 = vpack.c.b16 %v3166, %v3158
        %v3295 = vpack.c.b16 %v3167, %v3159
        %v3296 = vpack.c.b16 %v3168, %v3160
        %v3297 = vpack.c.b16 %v3169, %v3161
        %v3298 = vpack.c.b16 %v3170, %v3162
        %v3299 = vpack.c.b16 %v3171, %v3163
        %v3300 = vpack.c.b16 %v3180, %v3172
        %v3301 = vpack.c.b16 %v3181, %v3173
        %v3302 = vpack.c.b16 %v3182, %v3174
        %v3303 = vpack.c.b16 %v3183, %v3175
        %v3304 = vpack.c.b16 %v3184, %v3176
        %v3305 = vpack.c.b16 %v3185, %v3177
        %v3306 = vpack.c.b16 %v3186, %v3178
        %v3307 = vpack.c.b16 %v3187, %v3179
        %v3308 = vpack.c.b16 %v3196, %v3188
        %v3309 = vpack.c.b16 %v3197, %v3189
        %v3310 = vpack.c.b16 %v3198, %v3190
        %v3311 = vpack.c.b16 %v3199, %v3191
        %v3312 = vpack.c.b16 %v3200, %v3192
        %v3313 = vpack.c.b16 %v3201, %v3193
        %v3314 = vpack.c.b16 %v3202, %v3194
        %v3315 = vpack.c.b16 %v3203, %v3195
        %vm3428 = vcmask 785408
        %v3430 = vsel %vm3428, %v2863, 0
        %v3433 = vsel %vm3428, %v2865, 0
        %3435 = vmatprep.subr.bf16.mxu0 %v3261
        %3436 = vmatpush1.bf16.msra.mxu0 %v3260
        %3437 = vmatprep.subr.bf16.mxu0 %v3253
        %3438 = vmatpush1.bf16.msra.mxu0 %v3252
        %3439 = vmatprep.subr.bf16.mxu0 %v3245
        %3440 = vmatpush1.bf16.msra.mxu0 %v3244
        %3441 = vmatprep.subr.bf16.mxu0 %v3237
        %3442 = vmatpush1.bf16.msra.mxu0 %v3236
        %3443 = vmatprep.subr.bf16.mxu0 %v3229
        %3444 = vmatpush1.bf16.msra.mxu0 %v3228
        %3445 = vmatprep.subr.bf16.mxu0 %v3221
        %3446 = vmatpush1.bf16.msra.mxu0 %v3220
        %3447 = vmatprep.subr.bf16.mxu0 %v3213
        %3448 = vmatpush1.bf16.msra.mxu0 %v3212
        %3449 = vmatprep.subr.bf16.mxu0 %v3205
        %3450 = vmatpush1.bf16.msra.mxu0 %v3204
        %3451 = vmatprep.subr.bf16.mxu0 0
        %3452 = vmatpush2.bf16.msra.mxu0 0
        %3453 = vmatprep.subr.bf16.mxu0 0
        %3454 = vmatpush2.bf16.msra.mxu0 0
        %3455 = vmatprep.subr.bf16.mxu0 %v3309
        %3456 = vmatpush2.bf16.msra.mxu0 %v3308
        %3457 = vmatprep.subr.bf16.mxu0 %v3301
        %3458 = vmatpush2.bf16.msra.mxu0 %v3300
        %3459 = vmatprep.subr.bf16.mxu0 %v3293
        %3460 = vmatpush2.bf16.msra.mxu0 %v3292
        %3461 = vmatprep.subr.bf16.mxu0 %v3285
        %3462 = vmatpush2.bf16.msra.mxu0 %v3284
        %3463 = vmatprep.subr.bf16.mxu0 %v3277
        %3464 = vmatpush2.bf16.msra.mxu0 %v3276
        %3465 = vmatprep.subr.bf16.mxu0 %v3269
        %3466 = vmatpush2.bf16.msra.mxu0 %v3268
        %3467 = vmatprep.mubr.bf16.mxu0 %v3430
        %3468 = vmatmul.mubr.bf16.gmra.mxu0 %v2862
        %v3469 = vpop.f32.mrf.mxu0
        %v3470 = vadd.f32 %v2833, %v3469
        %v3471 = vpop.f32.mrf.mxu0
        %v3472 = vadd.f32 %v2833, %v3471
        %v3473 = vpop.f32.mrf.mxu0
        %v3474 = vadd.f32 %v2838, %v3473
        %v3475 = vpop.f32.mrf.mxu0
        %v3476 = vadd.f32 %v2838, %v3475
        %3477 = vmatprep.mubr.bf16.mxu0 %v3433
        %3478 = vmatmul.mubr.bf16.gmra.mxu0 %v2864
        %v3479 = vpop.f32.mrf.mxu0
        %v3480 = vadd.f32 %v2843, %v3479
        %v3481 = vpop.f32.mrf.mxu0
        %v3482 = vadd.f32 %v2843, %v3481
        %v3483 = vpop.f32.mrf.mxu0
        %v3484 = vadd.f32 %v2848, %v3483
        %v3485 = vpop.f32.mrf.mxu0
        %v3486 = vadd.f32 %v2848, %v3485
        %3487 = vdwg.mxu0
        %3488 = vmatprep.subr.bf16.mxu0 %v3263
        %3489 = vmatpush1.bf16.msra.mxu0 %v3262
        %3490 = vmatprep.subr.bf16.mxu0 %v3255
        %3491 = vmatpush1.bf16.msra.mxu0 %v3254
        %3492 = vmatprep.subr.bf16.mxu0 %v3247
        %3493 = vmatpush1.bf16.msra.mxu0 %v3246
        %3494 = vmatprep.subr.bf16.mxu0 %v3239
        %3495 = vmatpush1.bf16.msra.mxu0 %v3238
        %3496 = vmatprep.subr.bf16.mxu0 %v3231
        %3497 = vmatpush1.bf16.msra.mxu0 %v3230
        %3498 = vmatprep.subr.bf16.mxu0 %v3223
        %3499 = vmatpush1.bf16.msra.mxu0 %v3222
        %3500 = vmatprep.subr.bf16.mxu0 %v3215
        %3501 = vmatpush1.bf16.msra.mxu0 %v3214
        %3502 = vmatprep.subr.bf16.mxu0 %v3207
        %3503 = vmatpush1.bf16.msra.mxu0 %v3206
        %3504 = vmatprep.subr.bf16.mxu0 0
        %3505 = vmatpush2.bf16.msra.mxu0 0
        %3506 = vmatprep.subr.bf16.mxu0 0
        %3507 = vmatpush2.bf16.msra.mxu0 0
        %3508 = vmatprep.subr.bf16.mxu0 %v3311
        %3509 = vmatpush2.bf16.msra.mxu0 %v3310
        %3510 = vmatprep.subr.bf16.mxu0 %v3303
        %3511 = vmatpush2.bf16.msra.mxu0 %v3302
        %3512 = vmatprep.subr.bf16.mxu0 %v3295
        %3513 = vmatpush2.bf16.msra.mxu0 %v3294
        %3514 = vmatprep.subr.bf16.mxu0 %v3287
        %3515 = vmatpush2.bf16.msra.mxu0 %v3286
        %3516 = vmatprep.subr.bf16.mxu0 %v3279
        %3517 = vmatpush2.bf16.msra.mxu0 %v3278
        %3518 = vmatprep.subr.bf16.mxu0 %v3271
        %3519 = vmatpush2.bf16.msra.mxu0 %v3270
        %3520 = vmatprep.mubr.bf16.mxu0 %v3430
        %3521 = vmatmul.mubr.bf16.gmra.mxu0 %v2862
        %v3522 = vpop.f32.mrf.mxu0
        %v3523 = vadd.f32 %v2833, %v3522
        %v3524 = vpop.f32.mrf.mxu0
        %v3525 = vadd.f32 %v2833, %v3524
        %v3526 = vpop.f32.mrf.mxu0
        %v3527 = vadd.f32 %v2838, %v3526
        %v3528 = vpop.f32.mrf.mxu0
        %v3529 = vadd.f32 %v2838, %v3528
        %3530 = vmatprep.mubr.bf16.mxu0 %v3433
        %3531 = vmatmul.mubr.bf16.gmra.mxu0 %v2864
        %v3532 = vpop.f32.mrf.mxu0
        %v3533 = vadd.f32 %v2843, %v3532
        %v3534 = vpop.f32.mrf.mxu0
        %v3535 = vadd.f32 %v2843, %v3534
        %v3536 = vpop.f32.mrf.mxu0
        %v3537 = vadd.f32 %v2848, %v3536
        %v3538 = vpop.f32.mrf.mxu0
        %v3539 = vadd.f32 %v2848, %v3538
        %3540 = vdwg.mxu0
        %3541 = vmatprep.subr.bf16.mxu0 %v3265
        %3542 = vmatpush1.bf16.msra.mxu0 %v3264
        %3543 = vmatprep.subr.bf16.mxu0 %v3257
        %3544 = vmatpush1.bf16.msra.mxu0 %v3256
        %3545 = vmatprep.subr.bf16.mxu0 %v3249
        %3546 = vmatpush1.bf16.msra.mxu0 %v3248
        %3547 = vmatprep.subr.bf16.mxu0 %v3241
        %3548 = vmatpush1.bf16.msra.mxu0 %v3240
        %3549 = vmatprep.subr.bf16.mxu0 %v3233
        %3550 = vmatpush1.bf16.msra.mxu0 %v3232
        %3551 = vmatprep.subr.bf16.mxu0 %v3225
        %3552 = vmatpush1.bf16.msra.mxu0 %v3224
        %3553 = vmatprep.subr.bf16.mxu0 %v3217
        %3554 = vmatpush1.bf16.msra.mxu0 %v3216
        %3555 = vmatprep.subr.bf16.mxu0 %v3209
        %3556 = vmatpush1.bf16.msra.mxu0 %v3208
        %3557 = vmatprep.subr.bf16.mxu0 0
        %3558 = vmatpush2.bf16.msra.mxu0 0
        %3559 = vmatprep.subr.bf16.mxu0 0
        %3560 = vmatpush2.bf16.msra.mxu0 0
        %3561 = vmatprep.subr.bf16.mxu0 %v3313
        %3562 = vmatpush2.bf16.msra.mxu0 %v3312
        %3563 = vmatprep.subr.bf16.mxu0 %v3305
        %3564 = vmatpush2.bf16.msra.mxu0 %v3304
        %3565 = vmatprep.subr.bf16.mxu0 %v3297
        %3566 = vmatpush2.bf16.msra.mxu0 %v3296
        %3567 = vmatprep.subr.bf16.mxu0 %v3289
        %3568 = vmatpush2.bf16.msra.mxu0 %v3288
        %3569 = vmatprep.subr.bf16.mxu0 %v3281
        %3570 = vmatpush2.bf16.msra.mxu0 %v3280
        %3571 = vmatprep.subr.bf16.mxu0 %v3273
        %3572 = vmatpush2.bf16.msra.mxu0 %v3272
        %3573 = vmatprep.mubr.bf16.mxu0 %v3430
        %3574 = vmatmul.mubr.bf16.gmra.mxu0 %v2862
        %v3575 = vpop.f32.mrf.mxu0
        %v3576 = vadd.f32 %v2833, %v3575
        %v3577 = vpop.f32.mrf.mxu0
        %v3578 = vadd.f32 %v2833, %v3577
        %v3579 = vpop.f32.mrf.mxu0
        %v3580 = vadd.f32 %v2838, %v3579
        %v3581 = vpop.f32.mrf.mxu0
        %v3582 = vadd.f32 %v2838, %v3581
        %3583 = vmatprep.mubr.bf16.mxu0 %v3433
        %3584 = vmatmul.mubr.bf16.gmra.mxu0 %v2864
        %v3585 = vpop.f32.mrf.mxu0
        %v3586 = vadd.f32 %v2843, %v3585
        %v3587 = vpop.f32.mrf.mxu0
        %v3588 = vadd.f32 %v2843, %v3587
        %v3589 = vpop.f32.mrf.mxu0
        %v3590 = vadd.f32 %v2848, %v3589
        %v3591 = vpop.f32.mrf.mxu0
        %v3592 = vadd.f32 %v2848, %v3591
        %3593 = vdwg.mxu0
        %3594 = vmatprep.subr.bf16.mxu0 %v3267
        %3595 = vmatpush1.bf16.msra.mxu0 %v3266
        %3596 = vmatprep.subr.bf16.mxu0 %v3259
        %3597 = vmatpush1.bf16.msra.mxu0 %v3258
        %3598 = vmatprep.subr.bf16.mxu0 %v3251
        %3599 = vmatpush1.bf16.msra.mxu0 %v3250
        %3600 = vmatprep.subr.bf16.mxu0 %v3243
        %3601 = vmatpush1.bf16.msra.mxu0 %v3242
        %3602 = vmatprep.subr.bf16.mxu0 %v3235
        %3603 = vmatpush1.bf16.msra.mxu0 %v3234
        %3604 = vmatprep.subr.bf16.mxu0 %v3227
        %3605 = vmatpush1.bf16.msra.mxu0 %v3226
        %3606 = vmatprep.subr.bf16.mxu0 %v3219
        %3607 = vmatpush1.bf16.msra.mxu0 %v3218
        %3608 = vmatprep.subr.bf16.mxu0 %v3211
        %3609 = vmatpush1.bf16.msra.mxu0 %v3210
        %3610 = vmatprep.subr.bf16.mxu0 0
        %3611 = vmatpush2.bf16.msra.mxu0 0
        %3612 = vmatprep.subr.bf16.mxu0 0
        %3613 = vmatpush2.bf16.msra.mxu0 0
        %3614 = vmatprep.subr.bf16.mxu0 %v3315
        %3615 = vmatpush2.bf16.msra.mxu0 %v3314
        %3616 = vmatprep.subr.bf16.mxu0 %v3307
        %3617 = vmatpush2.bf16.msra.mxu0 %v3306
        %3618 = vmatprep.subr.bf16.mxu0 %v3299
        %3619 = vmatpush2.bf16.msra.mxu0 %v3298
        %3620 = vmatprep.subr.bf16.mxu0 %v3291
        %3621 = vmatpush2.bf16.msra.mxu0 %v3290
        %3622 = vmatprep.subr.bf16.mxu0 %v3283
        %3623 = vmatpush2.bf16.msra.mxu0 %v3282
        %3624 = vmatprep.subr.bf16.mxu0 %v3275
        %3625 = vmatpush2.bf16.msra.mxu0 %v3274
        %3626 = vmatprep.mubr.bf16.mxu0 %v3430
        %3627 = vmatmul.mubr.bf16.gmra.mxu0 %v2862
        %v3628 = vpop.f32.mrf.mxu0
        %v3629 = vadd.f32 %v2833, %v3628
        %v3630 = vpop.f32.mrf.mxu0
        %v3631 = vadd.f32 %v2833, %v3630
        %v3632 = vpop.f32.mrf.mxu0
        %v3633 = vadd.f32 %v2838, %v3632
        %v3634 = vpop.f32.mrf.mxu0
        %v3635 = vadd.f32 %v2838, %v3634
        %3636 = vmatprep.mubr.bf16.mxu0 %v3433
        %3637 = vmatmul.mubr.bf16.gmra.mxu0 %v2864
        %v3638 = vpop.f32.mrf.mxu0
        %v3639 = vadd.f32 %v2843, %v3638
        %v3640 = vpop.f32.mrf.mxu0
        %v3641 = vadd.f32 %v2843, %v3640
        %v3642 = vpop.f32.mrf.mxu0
        %v3643 = vadd.f32 %v2848, %v3642
        %v3644 = vpop.f32.mrf.mxu0
        %v3645 = vadd.f32 %v2848, %v3644
        %3646 = vdwg.mxu0
        %v3647 = vmax.f32 %v3470, 0.0
        %v3648 = vmax.f32 %v3472, 0.0
        %v3649 = vmax.f32 %v3523, 0.0
        %v3650 = vmax.f32 %v3525, 0.0
        %v3651 = vmax.f32 %v3576, 0.0
        %v3652 = vmax.f32 %v3578, 0.0
        %v3653 = vmax.f32 %v3629, 0.0
        %v3654 = vmax.f32 %v3631, 0.0
        %v3655 = vmax.f32 %v3474, 0.0
        %v3656 = vmax.f32 %v3476, 0.0
        %v3657 = vmax.f32 %v3527, 0.0
        %v3658 = vmax.f32 %v3529, 0.0
        %v3659 = vmax.f32 %v3580, 0.0
        %v3660 = vmax.f32 %v3582, 0.0
        %v3661 = vmax.f32 %v3633, 0.0
        %v3662 = vmax.f32 %v3635, 0.0
        %v3663 = vmax.f32 %v3480, 0.0
        %v3664 = vmax.f32 %v3482, 0.0
        %v3665 = vmax.f32 %v3533, 0.0
        %v3666 = vmax.f32 %v3535, 0.0
        %v3667 = vmax.f32 %v3586, 0.0
        %v3668 = vmax.f32 %v3588, 0.0
        %v3669 = vmax.f32 %v3639, 0.0
        %v3670 = vmax.f32 %v3641, 0.0
        %v3671 = vmax.f32 %v3484, 0.0
        %v3672 = vmax.f32 %v3486, 0.0
        %v3673 = vmax.f32 %v3537, 0.0
        %v3674 = vmax.f32 %v3539, 0.0
        %v3675 = vmax.f32 %v3590, 0.0
        %v3676 = vmax.f32 %v3592, 0.0
        %v3677 = vmax.f32 %v3643, 0.0
        %v3678 = vmax.f32 %v3645, 0.0
        %3679 = vrot.lane.b32.xlu0 %v3647, 2
        %v3680 = vpop.permute.xlu0 %3679
        %3681 = vrot.lane.b32.xlu0 %v3655, 2
        %v3682 = vpop.permute.xlu0 %3681
        %3683 = vrot.lane.b32.xlu0 %v3663, 2
        %v3684 = vpop.permute.xlu0 %3683
        %3685 = vrot.lane.b32.xlu0 %v3671, 2
        %v3686 = vpop.permute.xlu0 %3685
        %3687 = vrot.lane.b32.xlu0 %v3648, 2
        %v3688 = vpop.permute.xlu0 %3687
        %3689 = vrot.lane.b32.xlu0 %v3656, 2
        %v3690 = vpop.permute.xlu0 %3689
        %3691 = vrot.lane.b32.xlu0 %v3664, 2
        %v3692 = vpop.permute.xlu0 %3691
        %3693 = vrot.lane.b32.xlu0 %v3672, 2
        %v3694 = vpop.permute.xlu0 %3693
        %3695 = vrot.lane.b32.xlu0 %v3649, 2
        %v3696 = vpop.permute.xlu0 %3695
        %3697 = vrot.lane.b32.xlu0 %v3657, 2
        %v3698 = vpop.permute.xlu0 %3697
        %3699 = vrot.lane.b32.xlu0 %v3665, 2
        %v3700 = vpop.permute.xlu0 %3699
        %3701 = vrot.lane.b32.xlu0 %v3673, 2
        %v3702 = vpop.permute.xlu0 %3701
        %3703 = vrot.lane.b32.xlu0 %v3650, 2
        %v3704 = vpop.permute.xlu0 %3703
        %3705 = vrot.lane.b32.xlu0 %v3658, 2
        %v3706 = vpop.permute.xlu0 %3705
        %3707 = vrot.lane.b32.xlu0 %v3666, 2
        %v3708 = vpop.permute.xlu0 %3707
        %3709 = vrot.lane.b32.xlu0 %v3674, 2
        %v3710 = vpop.permute.xlu0 %3709
        %3711 = vrot.lane.b32.xlu0 %v3651, 2
        %v3712 = vpop.permute.xlu0 %3711
        %3713 = vrot.lane.b32.xlu0 %v3659, 2
        %v3714 = vpop.permute.xlu0 %3713
        %3715 = vrot.lane.b32.xlu0 %v3667, 2
        %v3716 = vpop.permute.xlu0 %3715
        %3717 = vrot.lane.b32.xlu0 %v3675, 2
        %v3718 = vpop.permute.xlu0 %3717
        %3719 = vrot.lane.b32.xlu0 %v3652, 2
        %v3720 = vpop.permute.xlu0 %3719
        %3721 = vrot.lane.b32.xlu0 %v3660, 2
        %v3722 = vpop.permute.xlu0 %3721
        %3723 = vrot.lane.b32.xlu0 %v3668, 2
        %v3724 = vpop.permute.xlu0 %3723
        %3725 = vrot.lane.b32.xlu0 %v3676, 2
        %v3726 = vpop.permute.xlu0 %3725
        %3727 = vrot.lane.b32.xlu0 %v3653, 2
        %v3728 = vpop.permute.xlu0 %3727
        %3729 = vrot.lane.b32.xlu0 %v3661, 2
        %v3730 = vpop.permute.xlu0 %3729
        %3731 = vrot.lane.b32.xlu0 %v3669, 2
        %v3732 = vpop.permute.xlu0 %3731
        %3733 = vrot.lane.b32.xlu0 %v3677, 2
        %v3734 = vpop.permute.xlu0 %3733
        %3735 = vrot.lane.b32.xlu0 %v3654, 2
        %v3736 = vpop.permute.xlu0 %3735
        %3737 = vrot.lane.b32.xlu0 %v3662, 2
        %v3738 = vpop.permute.xlu0 %3737
        %3739 = vrot.lane.b32.xlu0 %v3670, 2
        %v3740 = vpop.permute.xlu0 %3739
        %3741 = vrot.lane.b32.xlu0 %v3678, 2
        %v3742 = vpop.permute.xlu0 %3741
        %v3743 = vsel %vm1257, %v3728, %v3736
        %v3744 = vsel %vm1257, %v3730, %v3738
        %v3745 = vsel %vm1257, %v3732, %v3740
        %v3746 = vsel %vm1257, %v3734, %v3742
        %v3747 = vsel %vm1257, %v3720, %v3728
        %v3748 = vsel %vm1257, %v3722, %v3730
        %v3749 = vsel %vm1257, %v3724, %v3732
        %v3750 = vsel %vm1257, %v3726, %v3734
        %v3751 = vsel %vm1257, %v3712, %v3720
        %v3752 = vsel %vm1257, %v3714, %v3722
        %v3753 = vsel %vm1257, %v3716, %v3724
        %v3754 = vsel %vm1257, %v3718, %v3726
        %v3755 = vsel %vm1257, %v3704, %v3712
        %v3756 = vsel %vm1257, %v3706, %v3714
        %v3757 = vsel %vm1257, %v3708, %v3716
        %v3758 = vsel %vm1257, %v3710, %v3718
        %v3759 = vsel %vm1257, %v3696, %v3704
        %v3760 = vsel %vm1257, %v3698, %v3706
        %v3761 = vsel %vm1257, %v3700, %v3708
        %v3762 = vsel %vm1257, %v3702, %v3710
        %v3763 = vsel %vm1257, %v3688, %v3696
        %v3764 = vsel %vm1257, %v3690, %v3698
        %v3765 = vsel %vm1257, %v3692, %v3700
        %v3766 = vsel %vm1257, %v3694, %v3702
        %v3767 = vsel %vm1257, %v3680, %v3688
        %v3768 = vsel %vm1257, %v3682, %v3690
        %v3769 = vsel %vm1257, %v3684, %v3692
        %v3770 = vsel %vm1257, %v3686, %v3694
        %v3771 = vsel %vm1257, %v3736, %v3680
        %v3772 = vsel %vm1257, %v3738, %v3682
        %v3773 = vsel %vm1257, %v3740, %v3684
        %v3774 = vsel %vm1257, %v3742, %v3686
        %v3775 = vsel %vm1322, %v3771, 0.0
        %v3776 = vsel %vm1323, %v3767, 0.0
        %v3777 = vsel %vm1324, %v3763, 0.0
        %v3778 = vsel %vm1325, %v3759, 0.0
        %v3779 = vsel %vm1326, %v3755, 0.0
        %v3780 = vsel %vm1327, %v3751, 0.0
        %v3781 = vsel %vm1328, %v3747, 0.0
        %v3782 = vsel %vm1329, %v3743, 0.0
        %v3783 = vsel %vm1322, %v3772, 0.0
        %v3784 = vsel %vm1323, %v3768, 0.0
        %v3785 = vsel %vm1324, %v3764, 0.0
        %v3786 = vsel %vm1325, %v3760, 0.0
        %v3787 = vsel %vm1326, %v3756, 0.0
        %v3788 = vsel %vm1327, %v3752, 0.0
        %v3789 = vsel %vm1328, %v3748, 0.0
        %v3790 = vsel %vm1329, %v3744, 0.0
        %v3791 = vsel %vm1322, %v3773, 0.0
        %v3792 = vsel %vm1323, %v3769, 0.0
        %v3793 = vsel %vm1324, %v3765, 0.0
        %v3794 = vsel %vm1325, %v3761, 0.0
        %v3795 = vsel %vm1326, %v3757, 0.0
        %v3796 = vsel %vm1327, %v3753, 0.0
        %v3797 = vsel %vm1328, %v3749, 0.0
        %v3798 = vsel %vm1329, %v3745, 0.0
        %v3799 = vsel %vm1322, %v3774, 0.0
        %v3800 = vsel %vm1323, %v3770, 0.0
        %v3801 = vsel %vm1324, %v3766, 0.0
        %v3802 = vsel %vm1325, %v3762, 0.0
        %v3803 = vsel %vm1326, %v3758, 0.0
        %v3804 = vsel %vm1327, %v3754, 0.0
        %v3805 = vsel %vm1328, %v3750, 0.0
        %v3806 = vsel %vm1329, %v3746, 0.0
        %v3807 = vpack.c.bf16 %v3783, %v3775
        %v3808 = vpack.c.bf16 %v3784, %v3776
        %v3809 = vpack.c.bf16 %v3785, %v3777
        %v3810 = vpack.c.bf16 %v3786, %v3778
        %v3811 = vpack.c.bf16 %v3787, %v3779
        %v3812 = vpack.c.bf16 %v3788, %v3780
        %v3813 = vpack.c.bf16 %v3789, %v3781
        %v3814 = vpack.c.bf16 %v3790, %v3782
        %v3815 = vpack.c.bf16 %v3799, %v3791
        %v3816 = vpack.c.bf16 %v3800, %v3792
        %v3817 = vpack.c.bf16 %v3801, %v3793
        %v3818 = vpack.c.bf16 %v3802, %v3794
        %v3819 = vpack.c.bf16 %v3803, %v3795
        %v3820 = vpack.c.bf16 %v3804, %v3796
        %v3821 = vpack.c.bf16 %v3805, %v3797
        %v3822 = vpack.c.bf16 %v3806, %v3798
        %v3839 = vunpack.c.l.b16 %v3807
        %v3840 = vunpack.c.l.b16 %v3808
        %v3841 = vunpack.c.l.b16 %v3809
        %v3842 = vunpack.c.l.b16 %v3810
        %v3843 = vunpack.c.l.b16 %v3811
        %v3844 = vunpack.c.l.b16 %v3812
        %v3845 = vunpack.c.l.b16 %v3813
        %v3846 = vunpack.c.l.b16 %v3814
        %v3847 = vunpack.c.h.b16 %v3807
        %v3848 = vunpack.c.h.b16 %v3808
        %v3849 = vunpack.c.h.b16 %v3809
        %v3850 = vunpack.c.h.b16 %v3810
        %v3851 = vunpack.c.h.b16 %v3811
        %v3852 = vunpack.c.h.b16 %v3812
        %v3853 = vunpack.c.h.b16 %v3813
        %v3854 = vunpack.c.h.b16 %v3814
        %v3855 = vunpack.c.l.b16 %v3815
        %v3856 = vunpack.c.l.b16 %v3816
        %v3857 = vunpack.c.l.b16 %v3817
        %v3858 = vunpack.c.l.b16 %v3818
        %v3859 = vunpack.c.l.b16 %v3819
        %v3860 = vunpack.c.l.b16 %v3820
        %v3861 = vunpack.c.l.b16 %v3821
        %v3862 = vunpack.c.l.b16 %v3822
        %v3863 = vunpack.c.h.b16 %v3815
        %v3864 = vunpack.c.h.b16 %v3816
        %v3865 = vunpack.c.h.b16 %v3817
        %v3866 = vunpack.c.h.b16 %v3818
        %v3867 = vunpack.c.h.b16 %v3819
        %v3868 = vunpack.c.h.b16 %v3820
        %v3869 = vunpack.c.h.b16 %v3821
        %v3870 = vunpack.c.h.b16 %v3822
        %v3871 = vpack.c.b16 %v3840, %v3839
        %v3872 = vpack.c.b16 %v3842, %v3841
        %v3873 = vpack.c.b16 %v3844, %v3843
        %v3874 = vpack.c.b16 %v3846, %v3845
        %v3875 = vpack.c.b16 %v3848, %v3847
        %v3876 = vpack.c.b16 %v3850, %v3849
        %v3877 = vpack.c.b16 %v3852, %v3851
        %v3878 = vpack.c.b16 %v3854, %v3853
        %v3879 = vpack.c.b16 %v3856, %v3855
        %v3880 = vpack.c.b16 %v3858, %v3857
        %v3881 = vpack.c.b16 %v3860, %v3859
        %v3882 = vpack.c.b16 %v3862, %v3861
        %v3883 = vpack.c.b16 %v3864, %v3863
        %v3884 = vpack.c.b16 %v3866, %v3865
        %v3885 = vpack.c.b16 %v3868, %v3867
        %v3886 = vpack.c.b16 %v3870, %v3869
        %3903 = vst [vmem:[#allocation2] sm:$0xff] %v3871
        %3904 = vst [vmem:[#allocation2 + $0x8] sm:$0xff] %v3872
        %3905 = vst [vmem:[#allocation2 + $0x10] sm:$0xff] %v3873
        %3906 = vst [vmem:[#allocation2 + $0x18] sm:$0xff] %v3874
        %3907 = vst [vmem:[#allocation2 + $0x20] sm:$0xff] %v3875
        %3908 = vst [vmem:[#allocation2 + $0x28] sm:$0xff] %v3876
        %3909 = vst [vmem:[#allocation2 + $0x30] sm:$0xff] %v3877
        %3910 = vst [vmem:[#allocation2 + $0x38] sm:$0xff] %v3878
        %3911 = vst [vmem:[#allocation2 + $0x40] sm:$0xff] %v3879
        %3912 = vst [vmem:[#allocation2 + $0x48] sm:$0xff] %v3880
        %3913 = vst [vmem:[#allocation2 + $0x50] sm:$0xff] %v3881
        %3914 = vst [vmem:[#allocation2 + $0x58] sm:$0xff] %v3882
        %3915 = vst [vmem:[#allocation2 + $0x60] sm:$0xff] %v3883
        %3916 = vst [vmem:[#allocation2 + $0x68] sm:$0xff] %v3884
        %3917 = vst [vmem:[#allocation2 + $0x70] sm:$0xff] %v3885
        %3918 = vst [vmem:[#allocation2 + $0x78] sm:$0xff] %v3886
        %3919 = vrot.lane.b32.xlu0 %v3647, 1
        %v3920 = vpop.permute.xlu0 %3919
        %3921 = vrot.lane.b32.xlu0 %v3655, 1
        %v3922 = vpop.permute.xlu0 %3921
        %3923 = vrot.lane.b32.xlu0 %v3663, 1
        %v3924 = vpop.permute.xlu0 %3923
        %3925 = vrot.lane.b32.xlu0 %v3671, 1
        %v3926 = vpop.permute.xlu0 %3925
        %3927 = vrot.lane.b32.xlu0 %v3648, 1
        %v3928 = vpop.permute.xlu0 %3927
        %3929 = vrot.lane.b32.xlu0 %v3656, 1
        %v3930 = vpop.permute.xlu0 %3929
        %3931 = vrot.lane.b32.xlu0 %v3664, 1
        %v3932 = vpop.permute.xlu0 %3931
        %3933 = vrot.lane.b32.xlu0 %v3672, 1
        %v3934 = vpop.permute.xlu0 %3933
        %3935 = vrot.lane.b32.xlu0 %v3649, 1
        %v3936 = vpop.permute.xlu0 %3935
        %3937 = vrot.lane.b32.xlu0 %v3657, 1
        %v3938 = vpop.permute.xlu0 %3937
        %3939 = vrot.lane.b32.xlu0 %v3665, 1
        %v3940 = vpop.permute.xlu0 %3939
        %3941 = vrot.lane.b32.xlu0 %v3673, 1
        %v3942 = vpop.permute.xlu0 %3941
        %3943 = vrot.lane.b32.xlu0 %v3650, 1
        %v3944 = vpop.permute.xlu0 %3943
        %3945 = vrot.lane.b32.xlu0 %v3658, 1
        %v3946 = vpop.permute.xlu0 %3945
        %3947 = vrot.lane.b32.xlu0 %v3666, 1
        %v3948 = vpop.permute.xlu0 %3947
        %3949 = vrot.lane.b32.xlu0 %v3674, 1
        %v3950 = vpop.permute.xlu0 %3949
        %3951 = vrot.lane.b32.xlu0 %v3651, 1
        %v3952 = vpop.permute.xlu0 %3951
        %3953 = vrot.lane.b32.xlu0 %v3659, 1
        %v3954 = vpop.permute.xlu0 %3953
        %3955 = vrot.lane.b32.xlu0 %v3667, 1
        %v3956 = vpop.permute.xlu0 %3955
        %3957 = vrot.lane.b32.xlu0 %v3675, 1
        %v3958 = vpop.permute.xlu0 %3957
        %3959 = vrot.lane.b32.xlu0 %v3652, 1
        %v3960 = vpop.permute.xlu0 %3959
        %3961 = vrot.lane.b32.xlu0 %v3660, 1
        %v3962 = vpop.permute.xlu0 %3961
        %3963 = vrot.lane.b32.xlu0 %v3668, 1
        %v3964 = vpop.permute.xlu0 %3963
        %3965 = vrot.lane.b32.xlu0 %v3676, 1
        %v3966 = vpop.permute.xlu0 %3965
        %3967 = vrot.lane.b32.xlu0 %v3653, 1
        %v3968 = vpop.permute.xlu0 %3967
        %3969 = vrot.lane.b32.xlu0 %v3661, 1
        %v3970 = vpop.permute.xlu0 %3969
        %3971 = vrot.lane.b32.xlu0 %v3669, 1
        %v3972 = vpop.permute.xlu0 %3971
        %3973 = vrot.lane.b32.xlu0 %v3677, 1
        %v3974 = vpop.permute.xlu0 %3973
        %3975 = vrot.lane.b32.xlu0 %v3654, 1
        %v3976 = vpop.permute.xlu0 %3975
        %3977 = vrot.lane.b32.xlu0 %v3662, 1
        %v3978 = vpop.permute.xlu0 %3977
        %3979 = vrot.lane.b32.xlu0 %v3670, 1
        %v3980 = vpop.permute.xlu0 %3979
        %3981 = vrot.lane.b32.xlu0 %v3678, 1
        %v3982 = vpop.permute.xlu0 %3981
        %v3983 = vsel %vm1538, %v3968, %v3976
        %v3984 = vsel %vm1538, %v3970, %v3978
        %v3985 = vsel %vm1538, %v3972, %v3980
        %v3986 = vsel %vm1538, %v3974, %v3982
        %v3987 = vsel %vm1538, %v3960, %v3968
        %v3988 = vsel %vm1538, %v3962, %v3970
        %v3989 = vsel %vm1538, %v3964, %v3972
        %v3990 = vsel %vm1538, %v3966, %v3974
        %v3991 = vsel %vm1538, %v3952, %v3960
        %v3992 = vsel %vm1538, %v3954, %v3962
        %v3993 = vsel %vm1538, %v3956, %v3964
        %v3994 = vsel %vm1538, %v3958, %v3966
        %v3995 = vsel %vm1538, %v3944, %v3952
        %v3996 = vsel %vm1538, %v3946, %v3954
        %v3997 = vsel %vm1538, %v3948, %v3956
        %v3998 = vsel %vm1538, %v3950, %v3958
        %v3999 = vsel %vm1538, %v3936, %v3944
        %v4000 = vsel %vm1538, %v3938, %v3946
        %v4001 = vsel %vm1538, %v3940, %v3948
        %v4002 = vsel %vm1538, %v3942, %v3950
        %v4003 = vsel %vm1538, %v3928, %v3936
        %v4004 = vsel %vm1538, %v3930, %v3938
        %v4005 = vsel %vm1538, %v3932, %v3940
        %v4006 = vsel %vm1538, %v3934, %v3942
        %v4007 = vsel %vm1538, %v3920, %v3928
        %v4008 = vsel %vm1538, %v3922, %v3930
        %v4009 = vsel %vm1538, %v3924, %v3932
        %v4010 = vsel %vm1538, %v3926, %v3934
        %v4011 = vsel %vm1538, %v3976, %v3920
        %v4012 = vsel %vm1538, %v3978, %v3922
        %v4013 = vsel %vm1538, %v3980, %v3924
        %v4014 = vsel %vm1538, %v3982, %v3926
        %v4015 = vsel %vm1603, %v4011, 0.0
        %v4016 = vsel %vm1604, %v4007, 0.0
        %v4017 = vsel %vm1605, %v4003, 0.0
        %v4018 = vsel %vm1606, %v3999, 0.0
        %v4019 = vsel %vm1607, %v3995, 0.0
        %v4020 = vsel %vm1608, %v3991, 0.0
        %v4021 = vsel %vm1609, %v3987, 0.0
        %v4022 = vsel %vm1610, %v3983, 0.0
        %v4023 = vsel %vm1603, %v4012, 0.0
        %v4024 = vsel %vm1604, %v4008, 0.0
        %v4025 = vsel %vm1605, %v4004, 0.0
        %v4026 = vsel %vm1606, %v4000, 0.0
        %v4027 = vsel %vm1607, %v3996, 0.0
        %v4028 = vsel %vm1608, %v3992, 0.0
        %v4029 = vsel %vm1609, %v3988, 0.0
        %v4030 = vsel %vm1610, %v3984, 0.0
        %v4031 = vsel %vm1603, %v4013, 0.0
        %v4032 = vsel %vm1604, %v4009, 0.0
        %v4033 = vsel %vm1605, %v4005, 0.0
        %v4034 = vsel %vm1606, %v4001, 0.0
        %v4035 = vsel %vm1607, %v3997, 0.0
        %v4036 = vsel %vm1608, %v3993, 0.0
        %v4037 = vsel %vm1609, %v3989, 0.0
        %v4038 = vsel %vm1610, %v3985, 0.0
        %v4039 = vsel %vm1603, %v4014, 0.0
        %v4040 = vsel %vm1604, %v4010, 0.0
        %v4041 = vsel %vm1605, %v4006, 0.0
        %v4042 = vsel %vm1606, %v4002, 0.0
        %v4043 = vsel %vm1607, %v3998, 0.0
        %v4044 = vsel %vm1608, %v3994, 0.0
        %v4045 = vsel %vm1609, %v3990, 0.0
        %v4046 = vsel %vm1610, %v3986, 0.0
        %v4047 = vpack.c.bf16 %v4023, %v4015
        %v4048 = vpack.c.bf16 %v4024, %v4016
        %v4049 = vpack.c.bf16 %v4025, %v4017
        %v4050 = vpack.c.bf16 %v4026, %v4018
        %v4051 = vpack.c.bf16 %v4027, %v4019
        %v4052 = vpack.c.bf16 %v4028, %v4020
        %v4053 = vpack.c.bf16 %v4029, %v4021
        %v4054 = vpack.c.bf16 %v4030, %v4022
        %v4055 = vpack.c.bf16 %v4039, %v4031
        %v4056 = vpack.c.bf16 %v4040, %v4032
        %v4057 = vpack.c.bf16 %v4041, %v4033
        %v4058 = vpack.c.bf16 %v4042, %v4034
        %v4059 = vpack.c.bf16 %v4043, %v4035
        %v4060 = vpack.c.bf16 %v4044, %v4036
        %v4061 = vpack.c.bf16 %v4045, %v4037
        %v4062 = vpack.c.bf16 %v4046, %v4038
        %v4079 = vunpack.c.l.b16 %v4047
        %v4080 = vunpack.c.l.b16 %v4048
        %v4081 = vunpack.c.l.b16 %v4049
        %v4082 = vunpack.c.l.b16 %v4050
        %v4083 = vunpack.c.l.b16 %v4051
        %v4084 = vunpack.c.l.b16 %v4052
        %v4085 = vunpack.c.l.b16 %v4053
        %v4086 = vunpack.c.l.b16 %v4054
        %v4087 = vunpack.c.h.b16 %v4047
        %v4088 = vunpack.c.h.b16 %v4048
        %v4089 = vunpack.c.h.b16 %v4049
        %v4090 = vunpack.c.h.b16 %v4050
        %v4091 = vunpack.c.h.b16 %v4051
        %v4092 = vunpack.c.h.b16 %v4052
        %v4093 = vunpack.c.h.b16 %v4053
        %v4094 = vunpack.c.h.b16 %v4054
        %v4095 = vunpack.c.l.b16 %v4055
        %v4096 = vunpack.c.l.b16 %v4056
        %v4097 = vunpack.c.l.b16 %v4057
        %v4098 = vunpack.c.l.b16 %v4058
        %v4099 = vunpack.c.l.b16 %v4059
        %v4100 = vunpack.c.l.b16 %v4060
        %v4101 = vunpack.c.l.b16 %v4061
        %v4102 = vunpack.c.l.b16 %v4062
        %v4103 = vunpack.c.h.b16 %v4055
        %v4104 = vunpack.c.h.b16 %v4056
        %v4105 = vunpack.c.h.b16 %v4057
        %v4106 = vunpack.c.h.b16 %v4058
        %v4107 = vunpack.c.h.b16 %v4059
        %v4108 = vunpack.c.h.b16 %v4060
        %v4109 = vunpack.c.h.b16 %v4061
        %v4110 = vunpack.c.h.b16 %v4062
        %v4111 = vpack.c.b16 %v4080, %v4079
        %v4112 = vpack.c.b16 %v4082, %v4081
        %v4113 = vpack.c.b16 %v4084, %v4083
        %v4114 = vpack.c.b16 %v4086, %v4085
        %v4115 = vpack.c.b16 %v4088, %v4087
        %v4116 = vpack.c.b16 %v4090, %v4089
        %v4117 = vpack.c.b16 %v4092, %v4091
        %v4118 = vpack.c.b16 %v4094, %v4093
        %v4119 = vpack.c.b16 %v4096, %v4095
        %v4120 = vpack.c.b16 %v4098, %v4097
        %v4121 = vpack.c.b16 %v4100, %v4099
        %v4122 = vpack.c.b16 %v4102, %v4101
        %v4123 = vpack.c.b16 %v4104, %v4103
        %v4124 = vpack.c.b16 %v4106, %v4105
        %v4125 = vpack.c.b16 %v4108, %v4107
        %v4126 = vpack.c.b16 %v4110, %v4109
        %4143 = vst [vmem:[#allocation2 + $0x80] sm:$0xff] %v4111
        %4144 = vst [vmem:[#allocation2 + $0x88] sm:$0xff] %v4112
        %4145 = vst [vmem:[#allocation2 + $0x90] sm:$0xff] %v4113
        %4146 = vst [vmem:[#allocation2 + $0x98] sm:$0xff] %v4114
        %4147 = vst [vmem:[#allocation2 + $0xa0] sm:$0xff] %v4115
        %4148 = vst [vmem:[#allocation2 + $0xa8] sm:$0xff] %v4116
        %4149 = vst [vmem:[#allocation2 + $0xb0] sm:$0xff] %v4117
        %4150 = vst [vmem:[#allocation2 + $0xb8] sm:$0xff] %v4118
        %4151 = vst [vmem:[#allocation2 + $0xc0] sm:$0xff] %v4119
        %4152 = vst [vmem:[#allocation2 + $0xc8] sm:$0xff] %v4120
        %4153 = vst [vmem:[#allocation2 + $0xd0] sm:$0xff] %v4121
        %4154 = vst [vmem:[#allocation2 + $0xd8] sm:$0xff] %v4122
        %4155 = vst [vmem:[#allocation2 + $0xe0] sm:$0xff] %v4123
        %4156 = vst [vmem:[#allocation2 + $0xe8] sm:$0xff] %v4124
        %4157 = vst [vmem:[#allocation2 + $0xf0] sm:$0xff] %v4125
        %4158 = vst [vmem:[#allocation2 + $0xf8] sm:$0xff] %v4126
        %v4159 = vpack.c.bf16 %v3655, %v3647
        %v4160 = vpack.c.bf16 %v3656, %v3648
        %v4161 = vpack.c.bf16 %v3657, %v3649
        %v4162 = vpack.c.bf16 %v3658, %v3650
        %v4163 = vpack.c.bf16 %v3659, %v3651
        %v4164 = vpack.c.bf16 %v3660, %v3652
        %v4165 = vpack.c.bf16 %v3661, %v3653
        %v4166 = vpack.c.bf16 %v3662, %v3654
        %v4167 = vpack.c.bf16 %v3671, %v3663
        %v4168 = vpack.c.bf16 %v3672, %v3664
        %v4169 = vpack.c.bf16 %v3673, %v3665
        %v4170 = vpack.c.bf16 %v3674, %v3666
        %v4171 = vpack.c.bf16 %v3675, %v3667
        %v4172 = vpack.c.bf16 %v3676, %v3668
        %v4173 = vpack.c.bf16 %v3677, %v3669
        %v4174 = vpack.c.bf16 %v3678, %v3670
        %v4191 = vunpack.c.l.b16 %v4159
        %v4192 = vunpack.c.l.b16 %v4160
        %v4193 = vunpack.c.l.b16 %v4161
        %v4194 = vunpack.c.l.b16 %v4162
        %v4195 = vunpack.c.l.b16 %v4163
        %v4196 = vunpack.c.l.b16 %v4164
        %v4197 = vunpack.c.l.b16 %v4165
        %v4198 = vunpack.c.l.b16 %v4166
        %v4199 = vunpack.c.h.b16 %v4159
        %v4200 = vunpack.c.h.b16 %v4160
        %v4201 = vunpack.c.h.b16 %v4161
        %v4202 = vunpack.c.h.b16 %v4162
        %v4203 = vunpack.c.h.b16 %v4163
        %v4204 = vunpack.c.h.b16 %v4164
        %v4205 = vunpack.c.h.b16 %v4165
        %v4206 = vunpack.c.h.b16 %v4166
        %v4207 = vunpack.c.l.b16 %v4167
        %v4208 = vunpack.c.l.b16 %v4168
        %v4209 = vunpack.c.l.b16 %v4169
        %v4210 = vunpack.c.l.b16 %v4170
        %v4211 = vunpack.c.l.b16 %v4171
        %v4212 = vunpack.c.l.b16 %v4172
        %v4213 = vunpack.c.l.b16 %v4173
        %v4214 = vunpack.c.l.b16 %v4174
        %v4215 = vunpack.c.h.b16 %v4167
        %v4216 = vunpack.c.h.b16 %v4168
        %v4217 = vunpack.c.h.b16 %v4169
        %v4218 = vunpack.c.h.b16 %v4170
        %v4219 = vunpack.c.h.b16 %v4171
        %v4220 = vunpack.c.h.b16 %v4172
        %v4221 = vunpack.c.h.b16 %v4173
        %v4222 = vunpack.c.h.b16 %v4174
        %v4223 = vpack.c.b16 %v4192, %v4191
        %v4224 = vpack.c.b16 %v4194, %v4193
        %v4225 = vpack.c.b16 %v4196, %v4195
        %v4226 = vpack.c.b16 %v4198, %v4197
        %v4227 = vpack.c.b16 %v4200, %v4199
        %v4228 = vpack.c.b16 %v4202, %v4201
        %v4229 = vpack.c.b16 %v4204, %v4203
        %v4230 = vpack.c.b16 %v4206, %v4205
        %v4231 = vpack.c.b16 %v4208, %v4207
        %v4232 = vpack.c.b16 %v4210, %v4209
        %v4233 = vpack.c.b16 %v4212, %v4211
        %v4234 = vpack.c.b16 %v4214, %v4213
        %v4235 = vpack.c.b16 %v4216, %v4215
        %v4236 = vpack.c.b16 %v4218, %v4217
        %v4237 = vpack.c.b16 %v4220, %v4219
        %v4238 = vpack.c.b16 %v4222, %v4221
        %4255 = vst [vmem:[#allocation2 + $0x100] sm:$0xff] %v4223
        %4256 = vst [vmem:[#allocation2 + $0x108] sm:$0xff] %v4224
        %4257 = vst [vmem:[#allocation2 + $0x110] sm:$0xff] %v4225
        %4258 = vst [vmem:[#allocation2 + $0x118] sm:$0xff] %v4226
        %4259 = vst [vmem:[#allocation2 + $0x120] sm:$0xff] %v4227
        %4260 = vst [vmem:[#allocation2 + $0x128] sm:$0xff] %v4228
        %4261 = vst [vmem:[#allocation2 + $0x130] sm:$0xff] %v4229
        %4262 = vst [vmem:[#allocation2 + $0x138] sm:$0xff] %v4230
        %4263 = vst [vmem:[#allocation2 + $0x140] sm:$0xff] %v4231
        %4264 = vst [vmem:[#allocation2 + $0x148] sm:$0xff] %v4232
        %4265 = vst [vmem:[#allocation2 + $0x150] sm:$0xff] %v4233
        %4266 = vst [vmem:[#allocation2 + $0x158] sm:$0xff] %v4234
        %4267 = vst [vmem:[#allocation2 + $0x160] sm:$0xff] %v4235
        %4268 = vst [vmem:[#allocation2 + $0x168] sm:$0xff] %v4236
        %4269 = vst [vmem:[#allocation2 + $0x170] sm:$0xff] %v4237
        %4270 = vst [vmem:[#allocation2 + $0x178] sm:$0xff] %v4238
        %4271 = vrot.lane.b32.xlu0 %v3647, 127
        %v4272 = vpop.permute.xlu0 %4271
        %4273 = vrot.lane.b32.xlu0 %v3655, 127
        %v4274 = vpop.permute.xlu0 %4273
        %4275 = vrot.lane.b32.xlu0 %v3663, 127
        %v4276 = vpop.permute.xlu0 %4275
        %4277 = vrot.lane.b32.xlu0 %v3671, 127
        %v4278 = vpop.permute.xlu0 %4277
        %4279 = vrot.lane.b32.xlu0 %v3648, 127
        %v4280 = vpop.permute.xlu0 %4279
        %4281 = vrot.lane.b32.xlu0 %v3656, 127
        %v4282 = vpop.permute.xlu0 %4281
        %4283 = vrot.lane.b32.xlu0 %v3664, 127
        %v4284 = vpop.permute.xlu0 %4283
        %4285 = vrot.lane.b32.xlu0 %v3672, 127
        %v4286 = vpop.permute.xlu0 %4285
        %4287 = vrot.lane.b32.xlu0 %v3649, 127
        %v4288 = vpop.permute.xlu0 %4287
        %4289 = vrot.lane.b32.xlu0 %v3657, 127
        %v4290 = vpop.permute.xlu0 %4289
        %4291 = vrot.lane.b32.xlu0 %v3665, 127
        %v4292 = vpop.permute.xlu0 %4291
        %4293 = vrot.lane.b32.xlu0 %v3673, 127
        %v4294 = vpop.permute.xlu0 %4293
        %4295 = vrot.lane.b32.xlu0 %v3650, 127
        %v4296 = vpop.permute.xlu0 %4295
        %4297 = vrot.lane.b32.xlu0 %v3658, 127
        %v4298 = vpop.permute.xlu0 %4297
        %4299 = vrot.lane.b32.xlu0 %v3666, 127
        %v4300 = vpop.permute.xlu0 %4299
        %4301 = vrot.lane.b32.xlu0 %v3674, 127
        %v4302 = vpop.permute.xlu0 %4301
        %4303 = vrot.lane.b32.xlu0 %v3651, 127
        %v4304 = vpop.permute.xlu0 %4303
        %4305 = vrot.lane.b32.xlu0 %v3659, 127
        %v4306 = vpop.permute.xlu0 %4305
        %4307 = vrot.lane.b32.xlu0 %v3667, 127
        %v4308 = vpop.permute.xlu0 %4307
        %4309 = vrot.lane.b32.xlu0 %v3675, 127
        %v4310 = vpop.permute.xlu0 %4309
        %4311 = vrot.lane.b32.xlu0 %v3652, 127
        %v4312 = vpop.permute.xlu0 %4311
        %4313 = vrot.lane.b32.xlu0 %v3660, 127
        %v4314 = vpop.permute.xlu0 %4313
        %4315 = vrot.lane.b32.xlu0 %v3668, 127
        %v4316 = vpop.permute.xlu0 %4315
        %4317 = vrot.lane.b32.xlu0 %v3676, 127
        %v4318 = vpop.permute.xlu0 %4317
        %4319 = vrot.lane.b32.xlu0 %v3653, 127
        %v4320 = vpop.permute.xlu0 %4319
        %4321 = vrot.lane.b32.xlu0 %v3661, 127
        %v4322 = vpop.permute.xlu0 %4321
        %4323 = vrot.lane.b32.xlu0 %v3669, 127
        %v4324 = vpop.permute.xlu0 %4323
        %4325 = vrot.lane.b32.xlu0 %v3677, 127
        %v4326 = vpop.permute.xlu0 %4325
        %4327 = vrot.lane.b32.xlu0 %v3654, 127
        %v4328 = vpop.permute.xlu0 %4327
        %4329 = vrot.lane.b32.xlu0 %v3662, 127
        %v4330 = vpop.permute.xlu0 %4329
        %4331 = vrot.lane.b32.xlu0 %v3670, 127
        %v4332 = vpop.permute.xlu0 %4331
        %4333 = vrot.lane.b32.xlu0 %v3678, 127
        %v4334 = vpop.permute.xlu0 %4333
        %v4335 = vsel %vm1931, %v4320, %v4328
        %v4336 = vsel %vm1931, %v4322, %v4330
        %v4337 = vsel %vm1931, %v4324, %v4332
        %v4338 = vsel %vm1931, %v4326, %v4334
        %v4339 = vsel %vm1931, %v4312, %v4320
        %v4340 = vsel %vm1931, %v4314, %v4322
        %v4341 = vsel %vm1931, %v4316, %v4324
        %v4342 = vsel %vm1931, %v4318, %v4326
        %v4343 = vsel %vm1931, %v4304, %v4312
        %v4344 = vsel %vm1931, %v4306, %v4314
        %v4345 = vsel %vm1931, %v4308, %v4316
        %v4346 = vsel %vm1931, %v4310, %v4318
        %v4347 = vsel %vm1931, %v4296, %v4304
        %v4348 = vsel %vm1931, %v4298, %v4306
        %v4349 = vsel %vm1931, %v4300, %v4308
        %v4350 = vsel %vm1931, %v4302, %v4310
        %v4351 = vsel %vm1931, %v4288, %v4296
        %v4352 = vsel %vm1931, %v4290, %v4298
        %v4353 = vsel %vm1931, %v4292, %v4300
        %v4354 = vsel %vm1931, %v4294, %v4302
        %v4355 = vsel %vm1931, %v4280, %v4288
        %v4356 = vsel %vm1931, %v4282, %v4290
        %v4357 = vsel %vm1931, %v4284, %v4292
        %v4358 = vsel %vm1931, %v4286, %v4294
        %v4359 = vsel %vm1931, %v4272, %v4280
        %v4360 = vsel %vm1931, %v4274, %v4282
        %v4361 = vsel %vm1931, %v4276, %v4284
        %v4362 = vsel %vm1931, %v4278, %v4286
        %v4363 = vsel %vm1931, %v4328, %v4272
        %v4364 = vsel %vm1931, %v4330, %v4274
        %v4365 = vsel %vm1931, %v4332, %v4276
        %v4366 = vsel %vm1931, %v4334, %v4278
        %v4367 = vsel %vm1996, %v4359, 0.0
        %v4368 = vsel %vm1997, %v4355, 0.0
        %v4369 = vsel %vm1998, %v4351, 0.0
        %v4370 = vsel %vm1999, %v4347, 0.0
        %v4371 = vsel %vm2000, %v4343, 0.0
        %v4372 = vsel %vm2001, %v4339, 0.0
        %v4373 = vsel %vm2002, %v4335, 0.0
        %v4374 = vsel %vm2003, %v4363, 0.0
        %v4375 = vsel %vm1996, %v4360, 0.0
        %v4376 = vsel %vm1997, %v4356, 0.0
        %v4377 = vsel %vm1998, %v4352, 0.0
        %v4378 = vsel %vm1999, %v4348, 0.0
        %v4379 = vsel %vm2000, %v4344, 0.0
        %v4380 = vsel %vm2001, %v4340, 0.0
        %v4381 = vsel %vm2002, %v4336, 0.0
        %v4382 = vsel %vm2003, %v4364, 0.0
        %v4383 = vsel %vm1996, %v4361, 0.0
        %v4384 = vsel %vm1997, %v4357, 0.0
        %v4385 = vsel %vm1998, %v4353, 0.0
        %v4386 = vsel %vm1999, %v4349, 0.0
        %v4387 = vsel %vm2000, %v4345, 0.0
        %v4388 = vsel %vm2001, %v4341, 0.0
        %v4389 = vsel %vm2002, %v4337, 0.0
        %v4390 = vsel %vm2003, %v4365, 0.0
        %v4391 = vsel %vm1996, %v4362, 0.0
        %v4392 = vsel %vm1997, %v4358, 0.0
        %v4393 = vsel %vm1998, %v4354, 0.0
        %v4394 = vsel %vm1999, %v4350, 0.0
        %v4395 = vsel %vm2000, %v4346, 0.0
        %v4396 = vsel %vm2001, %v4342, 0.0
        %v4397 = vsel %vm2002, %v4338, 0.0
        %v4398 = vsel %vm2003, %v4366, 0.0
        %v4399 = vpack.c.bf16 %v4375, %v4367
        %v4400 = vpack.c.bf16 %v4376, %v4368
        %v4401 = vpack.c.bf16 %v4377, %v4369
        %v4402 = vpack.c.bf16 %v4378, %v4370
        %v4403 = vpack.c.bf16 %v4379, %v4371
        %v4404 = vpack.c.bf16 %v4380, %v4372
        %v4405 = vpack.c.bf16 %v4381, %v4373
        %v4406 = vpack.c.bf16 %v4382, %v4374
        %v4407 = vpack.c.bf16 %v4391, %v4383
        %v4408 = vpack.c.bf16 %v4392, %v4384
        %v4409 = vpack.c.bf16 %v4393, %v4385
        %v4410 = vpack.c.bf16 %v4394, %v4386
        %v4411 = vpack.c.bf16 %v4395, %v4387
        %v4412 = vpack.c.bf16 %v4396, %v4388
        %v4413 = vpack.c.bf16 %v4397, %v4389
        %v4414 = vpack.c.bf16 %v4398, %v4390
        %v4431 = vunpack.c.l.b16 %v4399
        %v4432 = vunpack.c.l.b16 %v4400
        %v4433 = vunpack.c.l.b16 %v4401
        %v4434 = vunpack.c.l.b16 %v4402
        %v4435 = vunpack.c.l.b16 %v4403
        %v4436 = vunpack.c.l.b16 %v4404
        %v4437 = vunpack.c.l.b16 %v4405
        %v4438 = vunpack.c.l.b16 %v4406
        %v4439 = vunpack.c.h.b16 %v4399
        %v4440 = vunpack.c.h.b16 %v4400
        %v4441 = vunpack.c.h.b16 %v4401
        %v4442 = vunpack.c.h.b16 %v4402
        %v4443 = vunpack.c.h.b16 %v4403
        %v4444 = vunpack.c.h.b16 %v4404
        %v4445 = vunpack.c.h.b16 %v4405
        %v4446 = vunpack.c.h.b16 %v4406
        %v4447 = vunpack.c.l.b16 %v4407
        %v4448 = vunpack.c.l.b16 %v4408
        %v4449 = vunpack.c.l.b16 %v4409
        %v4450 = vunpack.c.l.b16 %v4410
        %v4451 = vunpack.c.l.b16 %v4411
        %v4452 = vunpack.c.l.b16 %v4412
        %v4453 = vunpack.c.l.b16 %v4413
        %v4454 = vunpack.c.l.b16 %v4414
        %v4455 = vunpack.c.h.b16 %v4407
        %v4456 = vunpack.c.h.b16 %v4408
        %v4457 = vunpack.c.h.b16 %v4409
        %v4458 = vunpack.c.h.b16 %v4410
        %v4459 = vunpack.c.h.b16 %v4411
        %v4460 = vunpack.c.h.b16 %v4412
        %v4461 = vunpack.c.h.b16 %v4413
        %v4462 = vunpack.c.h.b16 %v4414
        %v4463 = vpack.c.b16 %v4432, %v4431
        %v4464 = vpack.c.b16 %v4434, %v4433
        %v4465 = vpack.c.b16 %v4436, %v4435
        %v4466 = vpack.c.b16 %v4438, %v4437
        %v4467 = vpack.c.b16 %v4440, %v4439
        %v4468 = vpack.c.b16 %v4442, %v4441
        %v4469 = vpack.c.b16 %v4444, %v4443
        %v4470 = vpack.c.b16 %v4446, %v4445
        %v4471 = vpack.c.b16 %v4448, %v4447
        %v4472 = vpack.c.b16 %v4450, %v4449
        %v4473 = vpack.c.b16 %v4452, %v4451
        %v4474 = vpack.c.b16 %v4454, %v4453
        %v4475 = vpack.c.b16 %v4456, %v4455
        %v4476 = vpack.c.b16 %v4458, %v4457
        %v4477 = vpack.c.b16 %v4460, %v4459
        %v4478 = vpack.c.b16 %v4462, %v4461
        %4495 = vst [vmem:[#allocation2 + $0x180] sm:$0xff] %v4463
        %4496 = vst [vmem:[#allocation2 + $0x188] sm:$0xff] %v4464
        %4497 = vst [vmem:[#allocation2 + $0x190] sm:$0xff] %v4465
        %4498 = vst [vmem:[#allocation2 + $0x198] sm:$0xff] %v4466
        %4499 = vst [vmem:[#allocation2 + $0x1a0] sm:$0xff] %v4467
        %4500 = vst [vmem:[#allocation2 + $0x1a8] sm:$0xff] %v4468
        %4501 = vst [vmem:[#allocation2 + $0x1b0] sm:$0xff] %v4469
        %4502 = vst [vmem:[#allocation2 + $0x1b8] sm:$0xff] %v4470
        %4503 = vst [vmem:[#allocation2 + $0x1c0] sm:$0xff] %v4471
        %4504 = vst [vmem:[#allocation2 + $0x1c8] sm:$0xff] %v4472
        %4505 = vst [vmem:[#allocation2 + $0x1d0] sm:$0xff] %v4473
        %4506 = vst [vmem:[#allocation2 + $0x1d8] sm:$0xff] %v4474
        %4507 = vst [vmem:[#allocation2 + $0x1e0] sm:$0xff] %v4475
        %4508 = vst [vmem:[#allocation2 + $0x1e8] sm:$0xff] %v4476
        %4509 = vst [vmem:[#allocation2 + $0x1f0] sm:$0xff] %v4477
        %4510 = vst [vmem:[#allocation2 + $0x1f8] sm:$0xff] %v4478
        %4511 = vrot.lane.b32.xlu0 %v3647, 126
        %v4512 = vpop.permute.xlu0 %4511
        %4513 = vrot.lane.b32.xlu0 %v3655, 126
        %v4514 = vpop.permute.xlu0 %4513
        %4515 = vrot.lane.b32.xlu0 %v3663, 126
        %v4516 = vpop.permute.xlu0 %4515
        %4517 = vrot.lane.b32.xlu0 %v3671, 126
        %v4518 = vpop.permute.xlu0 %4517
        %4519 = vrot.lane.b32.xlu0 %v3648, 126
        %v4520 = vpop.permute.xlu0 %4519
        %4521 = vrot.lane.b32.xlu0 %v3656, 126
        %v4522 = vpop.permute.xlu0 %4521
        %4523 = vrot.lane.b32.xlu0 %v3664, 126
        %v4524 = vpop.permute.xlu0 %4523
        %4525 = vrot.lane.b32.xlu0 %v3672, 126
        %v4526 = vpop.permute.xlu0 %4525
        %4527 = vrot.lane.b32.xlu0 %v3649, 126
        %v4528 = vpop.permute.xlu0 %4527
        %4529 = vrot.lane.b32.xlu0 %v3657, 126
        %v4530 = vpop.permute.xlu0 %4529
        %4531 = vrot.lane.b32.xlu0 %v3665, 126
        %v4532 = vpop.permute.xlu0 %4531
        %4533 = vrot.lane.b32.xlu0 %v3673, 126
        %v4534 = vpop.permute.xlu0 %4533
        %4535 = vrot.lane.b32.xlu0 %v3650, 126
        %v4536 = vpop.permute.xlu0 %4535
        %4537 = vrot.lane.b32.xlu0 %v3658, 126
        %v4538 = vpop.permute.xlu0 %4537
        %4539 = vrot.lane.b32.xlu0 %v3666, 126
        %v4540 = vpop.permute.xlu0 %4539
        %4541 = vrot.lane.b32.xlu0 %v3674, 126
        %v4542 = vpop.permute.xlu0 %4541
        %4543 = vrot.lane.b32.xlu0 %v3651, 126
        %v4544 = vpop.permute.xlu0 %4543
        %4545 = vrot.lane.b32.xlu0 %v3659, 126
        %v4546 = vpop.permute.xlu0 %4545
        %4547 = vrot.lane.b32.xlu0 %v3667, 126
        %v4548 = vpop.permute.xlu0 %4547
        %4549 = vrot.lane.b32.xlu0 %v3675, 126
        %v4550 = vpop.permute.xlu0 %4549
        %4551 = vrot.lane.b32.xlu0 %v3652, 126
        %v4552 = vpop.permute.xlu0 %4551
        %4553 = vrot.lane.b32.xlu0 %v3660, 126
        %v4554 = vpop.permute.xlu0 %4553
        %4555 = vrot.lane.b32.xlu0 %v3668, 126
        %v4556 = vpop.permute.xlu0 %4555
        %4557 = vrot.lane.b32.xlu0 %v3676, 126
        %v4558 = vpop.permute.xlu0 %4557
        %4559 = vrot.lane.b32.xlu0 %v3653, 126
        %v4560 = vpop.permute.xlu0 %4559
        %4561 = vrot.lane.b32.xlu0 %v3661, 126
        %v4562 = vpop.permute.xlu0 %4561
        %4563 = vrot.lane.b32.xlu0 %v3669, 126
        %v4564 = vpop.permute.xlu0 %4563
        %4565 = vrot.lane.b32.xlu0 %v3677, 126
        %v4566 = vpop.permute.xlu0 %4565
        %4567 = vrot.lane.b32.xlu0 %v3654, 126
        %v4568 = vpop.permute.xlu0 %4567
        %4569 = vrot.lane.b32.xlu0 %v3662, 126
        %v4570 = vpop.permute.xlu0 %4569
        %4571 = vrot.lane.b32.xlu0 %v3670, 126
        %v4572 = vpop.permute.xlu0 %4571
        %4573 = vrot.lane.b32.xlu0 %v3678, 126
        %v4574 = vpop.permute.xlu0 %4573
        %v4575 = vsel %vm2212, %v4560, %v4568
        %v4576 = vsel %vm2212, %v4562, %v4570
        %v4577 = vsel %vm2212, %v4564, %v4572
        %v4578 = vsel %vm2212, %v4566, %v4574
        %v4579 = vsel %vm2212, %v4552, %v4560
        %v4580 = vsel %vm2212, %v4554, %v4562
        %v4581 = vsel %vm2212, %v4556, %v4564
        %v4582 = vsel %vm2212, %v4558, %v4566
        %v4583 = vsel %vm2212, %v4544, %v4552
        %v4584 = vsel %vm2212, %v4546, %v4554
        %v4585 = vsel %vm2212, %v4548, %v4556
        %v4586 = vsel %vm2212, %v4550, %v4558
        %v4587 = vsel %vm2212, %v4536, %v4544
        %v4588 = vsel %vm2212, %v4538, %v4546
        %v4589 = vsel %vm2212, %v4540, %v4548
        %v4590 = vsel %vm2212, %v4542, %v4550
        %v4591 = vsel %vm2212, %v4528, %v4536
        %v4592 = vsel %vm2212, %v4530, %v4538
        %v4593 = vsel %vm2212, %v4532, %v4540
        %v4594 = vsel %vm2212, %v4534, %v4542
        %v4595 = vsel %vm2212, %v4520, %v4528
        %v4596 = vsel %vm2212, %v4522, %v4530
        %v4597 = vsel %vm2212, %v4524, %v4532
        %v4598 = vsel %vm2212, %v4526, %v4534
        %v4599 = vsel %vm2212, %v4512, %v4520
        %v4600 = vsel %vm2212, %v4514, %v4522
        %v4601 = vsel %vm2212, %v4516, %v4524
        %v4602 = vsel %vm2212, %v4518, %v4526
        %v4603 = vsel %vm2212, %v4568, %v4512
        %v4604 = vsel %vm2212, %v4570, %v4514
        %v4605 = vsel %vm2212, %v4572, %v4516
        %v4606 = vsel %vm2212, %v4574, %v4518
        %v4607 = vsel %vm2277, %v4599, 0.0
        %v4608 = vsel %vm2278, %v4595, 0.0
        %v4609 = vsel %vm2279, %v4591, 0.0
        %v4610 = vsel %vm2280, %v4587, 0.0
        %v4611 = vsel %vm2281, %v4583, 0.0
        %v4612 = vsel %vm2282, %v4579, 0.0
        %v4613 = vsel %vm2283, %v4575, 0.0
        %v4614 = vsel %vm2284, %v4603, 0.0
        %v4615 = vsel %vm2277, %v4600, 0.0
        %v4616 = vsel %vm2278, %v4596, 0.0
        %v4617 = vsel %vm2279, %v4592, 0.0
        %v4618 = vsel %vm2280, %v4588, 0.0
        %v4619 = vsel %vm2281, %v4584, 0.0
        %v4620 = vsel %vm2282, %v4580, 0.0
        %v4621 = vsel %vm2283, %v4576, 0.0
        %v4622 = vsel %vm2284, %v4604, 0.0
        %v4623 = vsel %vm2277, %v4601, 0.0
        %v4624 = vsel %vm2278, %v4597, 0.0
        %v4625 = vsel %vm2279, %v4593, 0.0
        %v4626 = vsel %vm2280, %v4589, 0.0
        %v4627 = vsel %vm2281, %v4585, 0.0
        %v4628 = vsel %vm2282, %v4581, 0.0
        %v4629 = vsel %vm2283, %v4577, 0.0
        %v4630 = vsel %vm2284, %v4605, 0.0
        %v4631 = vsel %vm2277, %v4602, 0.0
        %v4632 = vsel %vm2278, %v4598, 0.0
        %v4633 = vsel %vm2279, %v4594, 0.0
        %v4634 = vsel %vm2280, %v4590, 0.0
        %v4635 = vsel %vm2281, %v4586, 0.0
        %v4636 = vsel %vm2282, %v4582, 0.0
        %v4637 = vsel %vm2283, %v4578, 0.0
        %v4638 = vsel %vm2284, %v4606, 0.0
        %v4639 = vpack.c.bf16 %v4615, %v4607
        %v4640 = vpack.c.bf16 %v4616, %v4608
        %v4641 = vpack.c.bf16 %v4617, %v4609
        %v4642 = vpack.c.bf16 %v4618, %v4610
        %v4643 = vpack.c.bf16 %v4619, %v4611
        %v4644 = vpack.c.bf16 %v4620, %v4612
        %v4645 = vpack.c.bf16 %v4621, %v4613
        %v4646 = vpack.c.bf16 %v4622, %v4614
        %v4647 = vpack.c.bf16 %v4631, %v4623
        %v4648 = vpack.c.bf16 %v4632, %v4624
        %v4649 = vpack.c.bf16 %v4633, %v4625
        %v4650 = vpack.c.bf16 %v4634, %v4626
        %v4651 = vpack.c.bf16 %v4635, %v4627
        %v4652 = vpack.c.bf16 %v4636, %v4628
        %v4653 = vpack.c.bf16 %v4637, %v4629
        %v4654 = vpack.c.bf16 %v4638, %v4630
        %v4671 = vunpack.c.l.b16 %v4639
        %v4672 = vunpack.c.l.b16 %v4640
        %v4673 = vunpack.c.l.b16 %v4641
        %v4674 = vunpack.c.l.b16 %v4642
        %v4675 = vunpack.c.l.b16 %v4643
        %v4676 = vunpack.c.l.b16 %v4644
        %v4677 = vunpack.c.l.b16 %v4645
        %v4678 = vunpack.c.l.b16 %v4646
        %v4679 = vunpack.c.h.b16 %v4639
        %v4680 = vunpack.c.h.b16 %v4640
        %v4681 = vunpack.c.h.b16 %v4641
        %v4682 = vunpack.c.h.b16 %v4642
        %v4683 = vunpack.c.h.b16 %v4643
        %v4684 = vunpack.c.h.b16 %v4644
        %v4685 = vunpack.c.h.b16 %v4645
        %v4686 = vunpack.c.h.b16 %v4646
        %v4687 = vunpack.c.l.b16 %v4647
        %v4688 = vunpack.c.l.b16 %v4648
        %v4689 = vunpack.c.l.b16 %v4649
        %v4690 = vunpack.c.l.b16 %v4650
        %v4691 = vunpack.c.l.b16 %v4651
        %v4692 = vunpack.c.l.b16 %v4652
        %v4693 = vunpack.c.l.b16 %v4653
        %v4694 = vunpack.c.l.b16 %v4654
        %v4695 = vunpack.c.h.b16 %v4647
        %v4696 = vunpack.c.h.b16 %v4648
        %v4697 = vunpack.c.h.b16 %v4649
        %v4698 = vunpack.c.h.b16 %v4650
        %v4699 = vunpack.c.h.b16 %v4651
        %v4700 = vunpack.c.h.b16 %v4652
        %v4701 = vunpack.c.h.b16 %v4653
        %v4702 = vunpack.c.h.b16 %v4654
        %v4703 = vpack.c.b16 %v4672, %v4671
        %v4704 = vpack.c.b16 %v4674, %v4673
        %v4705 = vpack.c.b16 %v4676, %v4675
        %v4706 = vpack.c.b16 %v4678, %v4677
        %v4707 = vpack.c.b16 %v4680, %v4679
        %v4708 = vpack.c.b16 %v4682, %v4681
        %v4709 = vpack.c.b16 %v4684, %v4683
        %v4710 = vpack.c.b16 %v4686, %v4685
        %v4711 = vpack.c.b16 %v4688, %v4687
        %v4712 = vpack.c.b16 %v4690, %v4689
        %v4713 = vpack.c.b16 %v4692, %v4691
        %v4714 = vpack.c.b16 %v4694, %v4693
        %v4715 = vpack.c.b16 %v4696, %v4695
        %v4716 = vpack.c.b16 %v4698, %v4697
        %v4717 = vpack.c.b16 %v4700, %v4699
        %v4718 = vpack.c.b16 %v4702, %v4701
        %4735 = vst [vmem:[#allocation2 + $0x200] sm:$0xff] %v4703
        %4736 = vst [vmem:[#allocation2 + $0x208] sm:$0xff] %v4704
        %4737 = vst [vmem:[#allocation2 + $0x210] sm:$0xff] %v4705
        %4738 = vst [vmem:[#allocation2 + $0x218] sm:$0xff] %v4706
        %4739 = vst [vmem:[#allocation2 + $0x220] sm:$0xff] %v4707
        %4740 = vst [vmem:[#allocation2 + $0x228] sm:$0xff] %v4708
        %4741 = vst [vmem:[#allocation2 + $0x230] sm:$0xff] %v4709
        %4742 = vst [vmem:[#allocation2 + $0x238] sm:$0xff] %v4710
        %4743 = vst [vmem:[#allocation2 + $0x240] sm:$0xff] %v4711
        %4744 = vst [vmem:[#allocation2 + $0x248] sm:$0xff] %v4712
        %4745 = vst [vmem:[#allocation2 + $0x250] sm:$0xff] %v4713
        %4746 = vst [vmem:[#allocation2 + $0x258] sm:$0xff] %v4714
        %4747 = vst [vmem:[#allocation2 + $0x260] sm:$0xff] %v4715
        %4748 = vst [vmem:[#allocation2 + $0x268] sm:$0xff] %v4716
        %4749 = vst [vmem:[#allocation2 + $0x270] sm:$0xff] %v4717
        %4750 = vst [vmem:[#allocation2 + $0x278] sm:$0xff] %v4718
        %v4751 = vld [vmem:[%s5] sm:$0xff]
        %v4752 = vld [vmem:[%s5 + $0x8] sm:$0xff]
        %v4753 = vld [vmem:[%s5 + $0x10] sm:$0xff]
        %v4754 = vld [vmem:[%s5 + $0x18] sm:$0xff]
        %v4755 = vld [vmem:[#allocation2] sm:$0xff]
        %v4756 = vld [vmem:[#allocation2 + $0x8] sm:$0xff]
        %v4757 = vld [vmem:[#allocation2 + $0x10] sm:$0xff]
        %v4758 = vld [vmem:[#allocation2 + $0x18] sm:$0xff]
        %v4759 = vld [vmem:[#allocation2 + $0x20] sm:$0xff]
        %v4760 = vld [vmem:[#allocation2 + $0x28] sm:$0xff]
        %v4761 = vld [vmem:[#allocation2 + $0x30] sm:$0xff]
        %v4762 = vld [vmem:[#allocation2 + $0x38] sm:$0xff]
        %v4763 = vld [vmem:[#allocation2 + $0x40] sm:$0xff]
        %v4764 = vld [vmem:[#allocation2 + $0x48] sm:$0xff]
        %v4765 = vld [vmem:[#allocation2 + $0x50] sm:$0xff]
        %v4766 = vld [vmem:[#allocation2 + $0x58] sm:$0xff]
        %v4767 = vld [vmem:[#allocation2 + $0x60] sm:$0xff]
        %v4768 = vld [vmem:[#allocation2 + $0x68] sm:$0xff]
        %v4769 = vld [vmem:[#allocation2 + $0x70] sm:$0xff]
        %v4770 = vld [vmem:[#allocation2 + $0x78] sm:$0xff]
        %v4771 = vld [vmem:[#allocation2 + $0x80] sm:$0xff]
        %v4772 = vld [vmem:[#allocation2 + $0x88] sm:$0xff]
        %v4773 = vld [vmem:[#allocation2 + $0x90] sm:$0xff]
        %v4774 = vld [vmem:[#allocation2 + $0x98] sm:$0xff]
        %v4775 = vld [vmem:[#allocation2 + $0xa0] sm:$0xff]
        %v4776 = vld [vmem:[#allocation2 + $0xa8] sm:$0xff]
        %v4777 = vld [vmem:[#allocation2 + $0xb0] sm:$0xff]
        %v4778 = vld [vmem:[#allocation2 + $0xb8] sm:$0xff]
        %v4779 = vld [vmem:[#allocation2 + $0xc0] sm:$0xff]
        %v4780 = vld [vmem:[#allocation2 + $0xc8] sm:$0xff]
        %v4781 = vld [vmem:[#allocation2 + $0xd0] sm:$0xff]
        %v4782 = vld [vmem:[#allocation2 + $0xd8] sm:$0xff]
        %v4783 = vld [vmem:[#allocation2 + $0xe0] sm:$0xff]
        %v4784 = vld [vmem:[#allocation2 + $0xe8] sm:$0xff]
        %v4785 = vld [vmem:[#allocation2 + $0xf0] sm:$0xff]
        %v4786 = vld [vmem:[#allocation2 + $0xf8] sm:$0xff]
        %v4787 = vld [vmem:[#allocation2 + $0x100] sm:$0xff]
        %v4788 = vld [vmem:[#allocation2 + $0x108] sm:$0xff]
        %v4789 = vld [vmem:[#allocation2 + $0x110] sm:$0xff]
        %v4790 = vld [vmem:[#allocation2 + $0x118] sm:$0xff]
        %v4791 = vld [vmem:[#allocation2 + $0x120] sm:$0xff]
        %v4792 = vld [vmem:[#allocation2 + $0x128] sm:$0xff]
        %v4793 = vld [vmem:[#allocation2 + $0x130] sm:$0xff]
        %v4794 = vld [vmem:[#allocation2 + $0x138] sm:$0xff]
        %v4795 = vld [vmem:[#allocation2 + $0x140] sm:$0xff]
        %v4796 = vld [vmem:[#allocation2 + $0x148] sm:$0xff]
        %v4797 = vld [vmem:[#allocation2 + $0x150] sm:$0xff]
        %v4798 = vld [vmem:[#allocation2 + $0x158] sm:$0xff]
        %v4799 = vld [vmem:[#allocation2 + $0x160] sm:$0xff]
        %v4800 = vld [vmem:[#allocation2 + $0x168] sm:$0xff]
        %v4801 = vld [vmem:[#allocation2 + $0x170] sm:$0xff]
        %v4802 = vld [vmem:[#allocation2 + $0x178] sm:$0xff]
        %v4803 = vld [vmem:[#allocation2 + $0x180] sm:$0xff]
        %v4804 = vld [vmem:[#allocation2 + $0x188] sm:$0xff]
        %v4805 = vld [vmem:[#allocation2 + $0x190] sm:$0xff]
        %v4806 = vld [vmem:[#allocation2 + $0x198] sm:$0xff]
        %v4807 = vld [vmem:[#allocation2 + $0x1a0] sm:$0xff]
        %v4808 = vld [vmem:[#allocation2 + $0x1a8] sm:$0xff]
        %v4809 = vld [vmem:[#allocation2 + $0x1b0] sm:$0xff]
        %v4810 = vld [vmem:[#allocation2 + $0x1b8] sm:$0xff]
        %v4811 = vld [vmem:[#allocation2 + $0x1c0] sm:$0xff]
        %v4812 = vld [vmem:[#allocation2 + $0x1c8] sm:$0xff]
        %v4813 = vld [vmem:[#allocation2 + $0x1d0] sm:$0xff]
        %v4814 = vld [vmem:[#allocation2 + $0x1d8] sm:$0xff]
        %v4815 = vld [vmem:[#allocation2 + $0x1e0] sm:$0xff]
        %v4816 = vld [vmem:[#allocation2 + $0x1e8] sm:$0xff]
        %v4817 = vld [vmem:[#allocation2 + $0x1f0] sm:$0xff]
        %v4818 = vld [vmem:[#allocation2 + $0x1f8] sm:$0xff]
        %v4819 = vld [vmem:[#allocation2 + $0x200] sm:$0xff]
        %v4820 = vld [vmem:[#allocation2 + $0x208] sm:$0xff]
        %v4821 = vld [vmem:[#allocation2 + $0x210] sm:$0xff]
        %v4822 = vld [vmem:[#allocation2 + $0x218] sm:$0xff]
        %v4823 = vld [vmem:[#allocation2 + $0x220] sm:$0xff]
        %v4824 = vld [vmem:[#allocation2 + $0x228] sm:$0xff]
        %v4825 = vld [vmem:[#allocation2 + $0x230] sm:$0xff]
        %v4826 = vld [vmem:[#allocation2 + $0x238] sm:$0xff]
        %v4827 = vld [vmem:[#allocation2 + $0x240] sm:$0xff]
        %v4828 = vld [vmem:[#allocation2 + $0x248] sm:$0xff]
        %v4829 = vld [vmem:[#allocation2 + $0x250] sm:$0xff]
        %v4830 = vld [vmem:[#allocation2 + $0x258] sm:$0xff]
        %v4831 = vld [vmem:[#allocation2 + $0x260] sm:$0xff]
        %v4832 = vld [vmem:[#allocation2 + $0x268] sm:$0xff]
        %v4833 = vld [vmem:[#allocation2 + $0x270] sm:$0xff]
        %v4834 = vld [vmem:[#allocation2 + $0x278] sm:$0xff]
        %v4835 = vld [vmem:[%s6] sm:$0xff]
        %v4836 = vld [vmem:[%s6 + $0x8] sm:$0xff]
        %v4837 = vld [vmem:[%s6 + $0x10] sm:$0xff]
        %v4838 = vld [vmem:[%s6 + $0x18] sm:$0xff]
        %4840 = vset.pattern.permute.xlu0 0
        %4841 = vperm.xlu0 %4840, %v4835
        %v4842 = vpop.permute.xlu0 %4841
        %4845 = vset.pattern.permute.xlu0 0
        %4846 = vperm.xlu0 %4845, %v4836
        %v4847 = vpop.permute.xlu0 %4846
        %4850 = vset.pattern.permute.xlu0 0
        %4851 = vperm.xlu0 %4850, %v4837
        %v4852 = vpop.permute.xlu0 %4851
        %4855 = vset.pattern.permute.xlu0 0
        %4856 = vperm.xlu0 %4855, %v4838
        %v4857 = vpop.permute.xlu0 %4856
        %v4863 = vunpack.c.l.b16 %v4751
        %v4864 = vunpack.c.h.b16 %v4751
        %v4865 = vunpack.c.l.b16 %v4752
        %v4866 = vunpack.c.h.b16 %v4752
        %v4867 = vunpack.c.l.b16 %v4753
        %v4868 = vunpack.c.h.b16 %v4753
        %v4869 = vunpack.c.l.b16 %v4754
        %v4870 = vunpack.c.h.b16 %v4754
        %v4871 = vpack.c.b16 %v4865, %v4863
        %v4872 = vpack.c.b16 %v4866, %v4864
        %v4873 = vpack.c.b16 %v4869, %v4867
        %v4874 = vpack.c.b16 %v4870, %v4868
        %v4957 = vunpack.c.l.b16 %v4755
        %v4958 = vunpack.c.h.b16 %v4755
        %v4959 = vunpack.c.l.b16 %v4756
        %v4960 = vunpack.c.h.b16 %v4756
        %v4961 = vunpack.c.l.b16 %v4757
        %v4962 = vunpack.c.h.b16 %v4757
        %v4963 = vunpack.c.l.b16 %v4758
        %v4964 = vunpack.c.h.b16 %v4758
        %v4965 = vunpack.c.l.b16 %v4759
        %v4966 = vunpack.c.h.b16 %v4759
        %v4967 = vunpack.c.l.b16 %v4760
        %v4968 = vunpack.c.h.b16 %v4760
        %v4969 = vunpack.c.l.b16 %v4761
        %v4970 = vunpack.c.h.b16 %v4761
        %v4971 = vunpack.c.l.b16 %v4762
        %v4972 = vunpack.c.h.b16 %v4762
        %v4973 = vunpack.c.l.b16 %v4763
        %v4974 = vunpack.c.h.b16 %v4763
        %v4975 = vunpack.c.l.b16 %v4764
        %v4976 = vunpack.c.h.b16 %v4764
        %v4977 = vunpack.c.l.b16 %v4765
        %v4978 = vunpack.c.h.b16 %v4765
        %v4979 = vunpack.c.l.b16 %v4766
        %v4980 = vunpack.c.h.b16 %v4766
        %v4981 = vunpack.c.l.b16 %v4767
        %v4982 = vunpack.c.h.b16 %v4767
        %v4983 = vunpack.c.l.b16 %v4768
        %v4984 = vunpack.c.h.b16 %v4768
        %v4985 = vunpack.c.l.b16 %v4769
        %v4986 = vunpack.c.h.b16 %v4769
        %v4987 = vunpack.c.l.b16 %v4770
        %v4988 = vunpack.c.h.b16 %v4770
        %v4989 = vunpack.c.l.b16 %v4771
        %v4990 = vunpack.c.h.b16 %v4771
        %v4991 = vunpack.c.l.b16 %v4772
        %v4992 = vunpack.c.h.b16 %v4772
        %v4993 = vunpack.c.l.b16 %v4773
        %v4994 = vunpack.c.h.b16 %v4773
        %v4995 = vunpack.c.l.b16 %v4774
        %v4996 = vunpack.c.h.b16 %v4774
        %v4997 = vunpack.c.l.b16 %v4775
        %v4998 = vunpack.c.h.b16 %v4775
        %v4999 = vunpack.c.l.b16 %v4776
        %v5000 = vunpack.c.h.b16 %v4776
        %v5001 = vunpack.c.l.b16 %v4777
        %v5002 = vunpack.c.h.b16 %v4777
        %v5003 = vunpack.c.l.b16 %v4778
        %v5004 = vunpack.c.h.b16 %v4778
        %v5005 = vunpack.c.l.b16 %v4779
        %v5006 = vunpack.c.h.b16 %v4779
        %v5007 = vunpack.c.l.b16 %v4780
        %v5008 = vunpack.c.h.b16 %v4780
        %v5009 = vunpack.c.l.b16 %v4781
        %v5010 = vunpack.c.h.b16 %v4781
        %v5011 = vunpack.c.l.b16 %v4782
        %v5012 = vunpack.c.h.b16 %v4782
        %v5013 = vunpack.c.l.b16 %v4783
        %v5014 = vunpack.c.h.b16 %v4783
        %v5015 = vunpack.c.l.b16 %v4784
        %v5016 = vunpack.c.h.b16 %v4784
        %v5017 = vunpack.c.l.b16 %v4785
        %v5018 = vunpack.c.h.b16 %v4785
        %v5019 = vunpack.c.l.b16 %v4786
        %v5020 = vunpack.c.h.b16 %v4786
        %v5021 = vunpack.c.l.b16 %v4787
        %v5022 = vunpack.c.h.b16 %v4787
        %v5023 = vunpack.c.l.b16 %v4788
        %v5024 = vunpack.c.h.b16 %v4788
        %v5025 = vunpack.c.l.b16 %v4789
        %v5026 = vunpack.c.h.b16 %v4789
        %v5027 = vunpack.c.l.b16 %v4790
        %v5028 = vunpack.c.h.b16 %v4790
        %v5029 = vunpack.c.l.b16 %v4791
        %v5030 = vunpack.c.h.b16 %v4791
        %v5031 = vunpack.c.l.b16 %v4792
        %v5032 = vunpack.c.h.b16 %v4792
        %v5033 = vunpack.c.l.b16 %v4793
        %v5034 = vunpack.c.h.b16 %v4793
        %v5035 = vunpack.c.l.b16 %v4794
        %v5036 = vunpack.c.h.b16 %v4794
        %v5037 = vunpack.c.l.b16 %v4795
        %v5038 = vunpack.c.h.b16 %v4795
        %v5039 = vunpack.c.l.b16 %v4796
        %v5040 = vunpack.c.h.b16 %v4796
        %v5041 = vunpack.c.l.b16 %v4797
        %v5042 = vunpack.c.h.b16 %v4797
        %v5043 = vunpack.c.l.b16 %v4798
        %v5044 = vunpack.c.h.b16 %v4798
        %v5045 = vunpack.c.l.b16 %v4799
        %v5046 = vunpack.c.h.b16 %v4799
        %v5047 = vunpack.c.l.b16 %v4800
        %v5048 = vunpack.c.h.b16 %v4800
        %v5049 = vunpack.c.l.b16 %v4801
        %v5050 = vunpack.c.h.b16 %v4801
        %v5051 = vunpack.c.l.b16 %v4802
        %v5052 = vunpack.c.h.b16 %v4802
        %v5053 = vunpack.c.l.b16 %v4803
        %v5054 = vunpack.c.h.b16 %v4803
        %v5055 = vunpack.c.l.b16 %v4804
        %v5056 = vunpack.c.h.b16 %v4804
        %v5057 = vunpack.c.l.b16 %v4805
        %v5058 = vunpack.c.h.b16 %v4805
        %v5059 = vunpack.c.l.b16 %v4806
        %v5060 = vunpack.c.h.b16 %v4806
        %v5061 = vunpack.c.l.b16 %v4807
        %v5062 = vunpack.c.h.b16 %v4807
        %v5063 = vunpack.c.l.b16 %v4808
        %v5064 = vunpack.c.h.b16 %v4808
        %v5065 = vunpack.c.l.b16 %v4809
        %v5066 = vunpack.c.h.b16 %v4809
        %v5067 = vunpack.c.l.b16 %v4810
        %v5068 = vunpack.c.h.b16 %v4810
        %v5069 = vunpack.c.l.b16 %v4811
        %v5070 = vunpack.c.h.b16 %v4811
        %v5071 = vunpack.c.l.b16 %v4812
        %v5072 = vunpack.c.h.b16 %v4812
        %v5073 = vunpack.c.l.b16 %v4813
        %v5074 = vunpack.c.h.b16 %v4813
        %v5075 = vunpack.c.l.b16 %v4814
        %v5076 = vunpack.c.h.b16 %v4814
        %v5077 = vunpack.c.l.b16 %v4815
        %v5078 = vunpack.c.h.b16 %v4815
        %v5079 = vunpack.c.l.b16 %v4816
        %v5080 = vunpack.c.h.b16 %v4816
        %v5081 = vunpack.c.l.b16 %v4817
        %v5082 = vunpack.c.h.b16 %v4817
        %v5083 = vunpack.c.l.b16 %v4818
        %v5084 = vunpack.c.h.b16 %v4818
        %v5085 = vunpack.c.l.b16 %v4819
        %v5086 = vunpack.c.h.b16 %v4819
        %v5087 = vunpack.c.l.b16 %v4820
        %v5088 = vunpack.c.h.b16 %v4820
        %v5089 = vunpack.c.l.b16 %v4821
        %v5090 = vunpack.c.h.b16 %v4821
        %v5091 = vunpack.c.l.b16 %v4822
        %v5092 = vunpack.c.h.b16 %v4822
        %v5093 = vunpack.c.l.b16 %v4823
        %v5094 = vunpack.c.h.b16 %v4823
        %v5095 = vunpack.c.l.b16 %v4824
        %v5096 = vunpack.c.h.b16 %v4824
        %v5097 = vunpack.c.l.b16 %v4825
        %v5098 = vunpack.c.h.b16 %v4825
        %v5099 = vunpack.c.l.b16 %v4826
        %v5100 = vunpack.c.h.b16 %v4826
        %v5101 = vunpack.c.l.b16 %v4827
        %v5102 = vunpack.c.h.b16 %v4827
        %v5103 = vunpack.c.l.b16 %v4828
        %v5104 = vunpack.c.h.b16 %v4828
        %v5105 = vunpack.c.l.b16 %v4829
        %v5106 = vunpack.c.h.b16 %v4829
        %v5107 = vunpack.c.l.b16 %v4830
        %v5108 = vunpack.c.h.b16 %v4830
        %v5109 = vunpack.c.l.b16 %v4831
        %v5110 = vunpack.c.h.b16 %v4831
        %v5111 = vunpack.c.l.b16 %v4832
        %v5112 = vunpack.c.h.b16 %v4832
        %v5113 = vunpack.c.l.b16 %v4833
        %v5114 = vunpack.c.h.b16 %v4833
        %v5115 = vunpack.c.l.b16 %v4834
        %v5116 = vunpack.c.h.b16 %v4834
        %v5117 = vpack.c.b16 %v4965, %v4957
        %v5118 = vpack.c.b16 %v4966, %v4958
        %v5119 = vpack.c.b16 %v4967, %v4959
        %v5120 = vpack.c.b16 %v4968, %v4960
        %v5121 = vpack.c.b16 %v4969, %v4961
        %v5122 = vpack.c.b16 %v4970, %v4962
        %v5123 = vpack.c.b16 %v4971, %v4963
        %v5124 = vpack.c.b16 %v4972, %v4964
        %v5125 = vpack.c.b16 %v4981, %v4973
        %v5126 = vpack.c.b16 %v4982, %v4974
        %v5127 = vpack.c.b16 %v4983, %v4975
        %v5128 = vpack.c.b16 %v4984, %v4976
        %v5129 = vpack.c.b16 %v4985, %v4977
        %v5130 = vpack.c.b16 %v4986, %v4978
        %v5131 = vpack.c.b16 %v4987, %v4979
        %v5132 = vpack.c.b16 %v4988, %v4980
        %v5133 = vpack.c.b16 %v4997, %v4989
        %v5134 = vpack.c.b16 %v4998, %v4990
        %v5135 = vpack.c.b16 %v4999, %v4991
        %v5136 = vpack.c.b16 %v5000, %v4992
        %v5137 = vpack.c.b16 %v5001, %v4993
        %v5138 = vpack.c.b16 %v5002, %v4994
        %v5139 = vpack.c.b16 %v5003, %v4995
        %v5140 = vpack.c.b16 %v5004, %v4996
        %v5141 = vpack.c.b16 %v5013, %v5005
        %v5142 = vpack.c.b16 %v5014, %v5006
        %v5143 = vpack.c.b16 %v5015, %v5007
        %v5144 = vpack.c.b16 %v5016, %v5008
        %v5145 = vpack.c.b16 %v5017, %v5009
        %v5146 = vpack.c.b16 %v5018, %v5010
        %v5147 = vpack.c.b16 %v5019, %v5011
        %v5148 = vpack.c.b16 %v5020, %v5012
        %v5149 = vpack.c.b16 %v5029, %v5021
        %v5150 = vpack.c.b16 %v5030, %v5022
        %v5151 = vpack.c.b16 %v5031, %v5023
        %v5152 = vpack.c.b16 %v5032, %v5024
        %v5153 = vpack.c.b16 %v5033, %v5025
        %v5154 = vpack.c.b16 %v5034, %v5026
        %v5155 = vpack.c.b16 %v5035, %v5027
        %v5156 = vpack.c.b16 %v5036, %v5028
        %v5157 = vpack.c.b16 %v5045, %v5037
        %v5158 = vpack.c.b16 %v5046, %v5038
        %v5159 = vpack.c.b16 %v5047, %v5039
        %v5160 = vpack.c.b16 %v5048, %v5040
        %v5161 = vpack.c.b16 %v5049, %v5041
        %v5162 = vpack.c.b16 %v5050, %v5042
        %v5163 = vpack.c.b16 %v5051, %v5043
        %v5164 = vpack.c.b16 %v5052, %v5044
        %v5165 = vpack.c.b16 %v5061, %v5053
        %v5166 = vpack.c.b16 %v5062, %v5054
        %v5167 = vpack.c.b16 %v5063, %v5055
        %v5168 = vpack.c.b16 %v5064, %v5056
        %v5169 = vpack.c.b16 %v5065, %v5057
        %v5170 = vpack.c.b16 %v5066, %v5058
        %v5171 = vpack.c.b16 %v5067, %v5059
        %v5172 = vpack.c.b16 %v5068, %v5060
        %v5173 = vpack.c.b16 %v5077, %v5069
        %v5174 = vpack.c.b16 %v5078, %v5070
        %v5175 = vpack.c.b16 %v5079, %v5071
        %v5176 = vpack.c.b16 %v5080, %v5072
        %v5177 = vpack.c.b16 %v5081, %v5073
        %v5178 = vpack.c.b16 %v5082, %v5074
        %v5179 = vpack.c.b16 %v5083, %v5075
        %v5180 = vpack.c.b16 %v5084, %v5076
        %v5181 = vpack.c.b16 %v5093, %v5085
        %v5182 = vpack.c.b16 %v5094, %v5086
        %v5183 = vpack.c.b16 %v5095, %v5087
        %v5184 = vpack.c.b16 %v5096, %v5088
        %v5185 = vpack.c.b16 %v5097, %v5089
        %v5186 = vpack.c.b16 %v5098, %v5090
        %v5187 = vpack.c.b16 %v5099, %v5091
        %v5188 = vpack.c.b16 %v5100, %v5092
        %v5189 = vpack.c.b16 %v5109, %v5101
        %v5190 = vpack.c.b16 %v5110, %v5102
        %v5191 = vpack.c.b16 %v5111, %v5103
        %v5192 = vpack.c.b16 %v5112, %v5104
        %v5193 = vpack.c.b16 %v5113, %v5105
        %v5194 = vpack.c.b16 %v5114, %v5106
        %v5195 = vpack.c.b16 %v5115, %v5107
        %v5196 = vpack.c.b16 %v5116, %v5108
        %vm5277 = vcmask 261120
        %v5279 = vsel %vm5277, %v4872, 0
        %v5282 = vsel %vm5277, %v4874, 0
        %5284 = vmatprep.subr.bf16.mxu0 %v5174
        %5285 = vmatpush1.bf16.msra.mxu0 %v5173
        %5286 = vmatprep.subr.bf16.mxu0 %v5166
        %5287 = vmatpush1.bf16.msra.mxu0 %v5165
        %5288 = vmatprep.subr.bf16.mxu0 %v5158
        %5289 = vmatpush1.bf16.msra.mxu0 %v5157
        %5290 = vmatprep.subr.bf16.mxu0 %v5150
        %5291 = vmatpush1.bf16.msra.mxu0 %v5149
        %5292 = vmatprep.subr.bf16.mxu0 %v5142
        %5293 = vmatpush1.bf16.msra.mxu0 %v5141
        %5294 = vmatprep.subr.bf16.mxu0 %v5134
        %5295 = vmatpush1.bf16.msra.mxu0 %v5133
        %5296 = vmatprep.subr.bf16.mxu0 %v5126
        %5297 = vmatpush1.bf16.msra.mxu0 %v5125
        %5298 = vmatprep.subr.bf16.mxu0 %v5118
        %5299 = vmatpush1.bf16.msra.mxu0 %v5117
        %5300 = vmatprep.subr.bf16.mxu0 0
        %5301 = vmatpush2.bf16.msra.mxu0 0
        %5302 = vmatprep.subr.bf16.mxu0 0
        %5303 = vmatpush2.bf16.msra.mxu0 0
        %5304 = vmatprep.subr.bf16.mxu0 0
        %5305 = vmatpush2.bf16.msra.mxu0 0
        %5306 = vmatprep.subr.bf16.mxu0 0
        %5307 = vmatpush2.bf16.msra.mxu0 0
        %5308 = vmatprep.subr.bf16.mxu0 0
        %5309 = vmatpush2.bf16.msra.mxu0 0
        %5310 = vmatprep.subr.bf16.mxu0 0
        %5311 = vmatpush2.bf16.msra.mxu0 0
        %5312 = vmatprep.subr.bf16.mxu0 %v5190
        %5313 = vmatpush2.bf16.msra.mxu0 %v5189
        %5314 = vmatprep.subr.bf16.mxu0 %v5182
        %5315 = vmatpush2.bf16.msra.mxu0 %v5181
        %5316 = vmatprep.mubr.bf16.mxu0 %v5279
        %5317 = vmatmul.mubr.bf16.gmra.mxu0 %v4871
        %v5318 = vpop.f32.mrf.mxu0
        %v5319 = vadd.f32 %v4842, %v5318
        %v5320 = vpop.f32.mrf.mxu0
        %v5321 = vadd.f32 %v4842, %v5320
        %v5322 = vpop.f32.mrf.mxu0
        %v5323 = vadd.f32 %v4847, %v5322
        %v5324 = vpop.f32.mrf.mxu0
        %v5325 = vadd.f32 %v4847, %v5324
        %5326 = vmatprep.mubr.bf16.mxu0 %v5282
        %5327 = vmatmul.mubr.bf16.gmra.mxu0 %v4873
        %v5328 = vpop.f32.mrf.mxu0
        %v5329 = vadd.f32 %v4852, %v5328
        %v5330 = vpop.f32.mrf.mxu0
        %v5331 = vadd.f32 %v4852, %v5330
        %v5332 = vpop.f32.mrf.mxu0
        %v5333 = vadd.f32 %v4857, %v5332
        %v5334 = vpop.f32.mrf.mxu0
        %v5335 = vadd.f32 %v4857, %v5334
        %5336 = vdwg.mxu0
        %5337 = vmatprep.subr.bf16.mxu0 %v5176
        %5338 = vmatpush1.bf16.msra.mxu0 %v5175
        %5339 = vmatprep.subr.bf16.mxu0 %v5168
        %5340 = vmatpush1.bf16.msra.mxu0 %v5167
        %5341 = vmatprep.subr.bf16.mxu0 %v5160
        %5342 = vmatpush1.bf16.msra.mxu0 %v5159
        %5343 = vmatprep.subr.bf16.mxu0 %v5152
        %5344 = vmatpush1.bf16.msra.mxu0 %v5151
        %5345 = vmatprep.subr.bf16.mxu0 %v5144
        %5346 = vmatpush1.bf16.msra.mxu0 %v5143
        %5347 = vmatprep.subr.bf16.mxu0 %v5136
        %5348 = vmatpush1.bf16.msra.mxu0 %v5135
        %5349 = vmatprep.subr.bf16.mxu0 %v5128
        %5350 = vmatpush1.bf16.msra.mxu0 %v5127
        %5351 = vmatprep.subr.bf16.mxu0 %v5120
        %5352 = vmatpush1.bf16.msra.mxu0 %v5119
        %5353 = vmatprep.subr.bf16.mxu0 0
        %5354 = vmatpush2.bf16.msra.mxu0 0
        %5355 = vmatprep.subr.bf16.mxu0 0
        %5356 = vmatpush2.bf16.msra.mxu0 0
        %5357 = vmatprep.subr.bf16.mxu0 0
        %5358 = vmatpush2.bf16.msra.mxu0 0
        %5359 = vmatprep.subr.bf16.mxu0 0
        %5360 = vmatpush2.bf16.msra.mxu0 0
        %5361 = vmatprep.subr.bf16.mxu0 0
        %5362 = vmatpush2.bf16.msra.mxu0 0
        %5363 = vmatprep.subr.bf16.mxu0 0
        %5364 = vmatpush2.bf16.msra.mxu0 0
        %5365 = vmatprep.subr.bf16.mxu0 %v5192
        %5366 = vmatpush2.bf16.msra.mxu0 %v5191
        %5367 = vmatprep.subr.bf16.mxu0 %v5184
        %5368 = vmatpush2.bf16.msra.mxu0 %v5183
        %5369 = vmatprep.mubr.bf16.mxu0 %v5279
        %5370 = vmatmul.mubr.bf16.gmra.mxu0 %v4871
        %v5371 = vpop.f32.mrf.mxu0
        %v5372 = vadd.f32 %v4842, %v5371
        %v5373 = vpop.f32.mrf.mxu0
        %v5374 = vadd.f32 %v4842, %v5373
        %v5375 = vpop.f32.mrf.mxu0
        %v5376 = vadd.f32 %v4847, %v5375
        %v5377 = vpop.f32.mrf.mxu0
        %v5378 = vadd.f32 %v4847, %v5377
        %5379 = vmatprep.mubr.bf16.mxu0 %v5282
        %5380 = vmatmul.mubr.bf16.gmra.mxu0 %v4873
        %v5381 = vpop.f32.mrf.mxu0
        %v5382 = vadd.f32 %v4852, %v5381
        %v5383 = vpop.f32.mrf.mxu0
        %v5384 = vadd.f32 %v4852, %v5383
        %v5385 = vpop.f32.mrf.mxu0
        %v5386 = vadd.f32 %v4857, %v5385
        %v5387 = vpop.f32.mrf.mxu0
        %v5388 = vadd.f32 %v4857, %v5387
        %5389 = vdwg.mxu0
        %5390 = vmatprep.subr.bf16.mxu0 %v5178
        %5391 = vmatpush1.bf16.msra.mxu0 %v5177
        %5392 = vmatprep.subr.bf16.mxu0 %v5170
        %5393 = vmatpush1.bf16.msra.mxu0 %v5169
        %5394 = vmatprep.subr.bf16.mxu0 %v5162
        %5395 = vmatpush1.bf16.msra.mxu0 %v5161
        %5396 = vmatprep.subr.bf16.mxu0 %v5154
        %5397 = vmatpush1.bf16.msra.mxu0 %v5153
        %5398 = vmatprep.subr.bf16.mxu0 %v5146
        %5399 = vmatpush1.bf16.msra.mxu0 %v5145
        %5400 = vmatprep.subr.bf16.mxu0 %v5138
        %5401 = vmatpush1.bf16.msra.mxu0 %v5137
        %5402 = vmatprep.subr.bf16.mxu0 %v5130
        %5403 = vmatpush1.bf16.msra.mxu0 %v5129
        %5404 = vmatprep.subr.bf16.mxu0 %v5122
        %5405 = vmatpush1.bf16.msra.mxu0 %v5121
        %5406 = vmatprep.subr.bf16.mxu0 0
        %5407 = vmatpush2.bf16.msra.mxu0 0
        %5408 = vmatprep.subr.bf16.mxu0 0
        %5409 = vmatpush2.bf16.msra.mxu0 0
        %5410 = vmatprep.subr.bf16.mxu0 0
        %5411 = vmatpush2.bf16.msra.mxu0 0
        %5412 = vmatprep.subr.bf16.mxu0 0
        %5413 = vmatpush2.bf16.msra.mxu0 0
        %5414 = vmatprep.subr.bf16.mxu0 0
        %5415 = vmatpush2.bf16.msra.mxu0 0
        %5416 = vmatprep.subr.bf16.mxu0 0
        %5417 = vmatpush2.bf16.msra.mxu0 0
        %5418 = vmatprep.subr.bf16.mxu0 %v5194
        %5419 = vmatpush2.bf16.msra.mxu0 %v5193
        %5420 = vmatprep.subr.bf16.mxu0 %v5186
        %5421 = vmatpush2.bf16.msra.mxu0 %v5185
        %5422 = vmatprep.mubr.bf16.mxu0 %v5279
        %5423 = vmatmul.mubr.bf16.gmra.mxu0 %v4871
        %v5424 = vpop.f32.mrf.mxu0
        %v5425 = vadd.f32 %v4842, %v5424
        %v5426 = vpop.f32.mrf.mxu0
        %v5427 = vadd.f32 %v4842, %v5426
        %v5428 = vpop.f32.mrf.mxu0
        %v5429 = vadd.f32 %v4847, %v5428
        %v5430 = vpop.f32.mrf.mxu0
        %v5431 = vadd.f32 %v4847, %v5430
        %5432 = vmatprep.mubr.bf16.mxu0 %v5282
        %5433 = vmatmul.mubr.bf16.gmra.mxu0 %v4873
        %v5434 = vpop.f32.mrf.mxu0
        %v5435 = vadd.f32 %v4852, %v5434
        %v5436 = vpop.f32.mrf.mxu0
        %v5437 = vadd.f32 %v4852, %v5436
        %v5438 = vpop.f32.mrf.mxu0
        %v5439 = vadd.f32 %v4857, %v5438
        %v5440 = vpop.f32.mrf.mxu0
        %v5441 = vadd.f32 %v4857, %v5440
        %5442 = vdwg.mxu0
        %5443 = vmatprep.subr.bf16.mxu0 %v5180
        %5444 = vmatpush1.bf16.msra.mxu0 %v5179
        %5445 = vmatprep.subr.bf16.mxu0 %v5172
        %5446 = vmatpush1.bf16.msra.mxu0 %v5171
        %5447 = vmatprep.subr.bf16.mxu0 %v5164
        %5448 = vmatpush1.bf16.msra.mxu0 %v5163
        %5449 = vmatprep.subr.bf16.mxu0 %v5156
        %5450 = vmatpush1.bf16.msra.mxu0 %v5155
        %5451 = vmatprep.subr.bf16.mxu0 %v5148
        %5452 = vmatpush1.bf16.msra.mxu0 %v5147
        %5453 = vmatprep.subr.bf16.mxu0 %v5140
        %5454 = vmatpush1.bf16.msra.mxu0 %v5139
        %5455 = vmatprep.subr.bf16.mxu0 %v5132
        %5456 = vmatpush1.bf16.msra.mxu0 %v5131
        %5457 = vmatprep.subr.bf16.mxu0 %v5124
        %5458 = vmatpush1.bf16.msra.mxu0 %v5123
        %5459 = vmatprep.subr.bf16.mxu0 0
        %5460 = vmatpush2.bf16.msra.mxu0 0
        %5461 = vmatprep.subr.bf16.mxu0 0
        %5462 = vmatpush2.bf16.msra.mxu0 0
        %5463 = vmatprep.subr.bf16.mxu0 0
        %5464 = vmatpush2.bf16.msra.mxu0 0
        %5465 = vmatprep.subr.bf16.mxu0 0
        %5466 = vmatpush2.bf16.msra.mxu0 0
        %5467 = vmatprep.subr.bf16.mxu0 0
        %5468 = vmatpush2.bf16.msra.mxu0 0
        %5469 = vmatprep.subr.bf16.mxu0 0
        %5470 = vmatpush2.bf16.msra.mxu0 0
        %5471 = vmatprep.subr.bf16.mxu0 %v5196
        %5472 = vmatpush2.bf16.msra.mxu0 %v5195
        %5473 = vmatprep.subr.bf16.mxu0 %v5188
        %5474 = vmatpush2.bf16.msra.mxu0 %v5187
        %5475 = vmatprep.mubr.bf16.mxu0 %v5279
        %5476 = vmatmul.mubr.bf16.gmra.mxu0 %v4871
        %v5477 = vpop.f32.mrf.mxu0
        %v5478 = vadd.f32 %v4842, %v5477
        %v5479 = vpop.f32.mrf.mxu0
        %v5480 = vadd.f32 %v4842, %v5479
        %v5481 = vpop.f32.mrf.mxu0
        %v5482 = vadd.f32 %v4847, %v5481
        %v5483 = vpop.f32.mrf.mxu0
        %v5484 = vadd.f32 %v4847, %v5483
        %5485 = vmatprep.mubr.bf16.mxu0 %v5282
        %5486 = vmatmul.mubr.bf16.gmra.mxu0 %v4873
        %v5487 = vpop.f32.mrf.mxu0
        %v5488 = vadd.f32 %v4852, %v5487
        %v5489 = vpop.f32.mrf.mxu0
        %v5490 = vadd.f32 %v4852, %v5489
        %v5491 = vpop.f32.mrf.mxu0
        %v5492 = vadd.f32 %v4857, %v5491
        %v5493 = vpop.f32.mrf.mxu0
        %v5494 = vadd.f32 %v4857, %v5493
        %5495 = vdwg.mxu0
        %v5496 = vmax.f32 %v5319, 0.0
        %v5497 = vmax.f32 %v5321, 0.0
        %v5498 = vmax.f32 %v5372, 0.0
        %v5499 = vmax.f32 %v5374, 0.0
        %v5500 = vmax.f32 %v5425, 0.0
        %v5501 = vmax.f32 %v5427, 0.0
        %v5502 = vmax.f32 %v5478, 0.0
        %v5503 = vmax.f32 %v5480, 0.0
        %v5504 = vmax.f32 %v5323, 0.0
        %v5505 = vmax.f32 %v5325, 0.0
        %v5506 = vmax.f32 %v5376, 0.0
        %v5507 = vmax.f32 %v5378, 0.0
        %v5508 = vmax.f32 %v5429, 0.0
        %v5509 = vmax.f32 %v5431, 0.0
        %v5510 = vmax.f32 %v5482, 0.0
        %v5511 = vmax.f32 %v5484, 0.0
        %v5512 = vmax.f32 %v5329, 0.0
        %v5513 = vmax.f32 %v5331, 0.0
        %v5514 = vmax.f32 %v5382, 0.0
        %v5515 = vmax.f32 %v5384, 0.0
        %v5516 = vmax.f32 %v5435, 0.0
        %v5517 = vmax.f32 %v5437, 0.0
        %v5518 = vmax.f32 %v5488, 0.0
        %v5519 = vmax.f32 %v5490, 0.0
        %v5520 = vmax.f32 %v5333, 0.0
        %v5521 = vmax.f32 %v5335, 0.0
        %v5522 = vmax.f32 %v5386, 0.0
        %v5523 = vmax.f32 %v5388, 0.0
        %v5524 = vmax.f32 %v5439, 0.0
        %v5525 = vmax.f32 %v5441, 0.0
        %v5526 = vmax.f32 %v5492, 0.0
        %v5527 = vmax.f32 %v5494, 0.0
        %5528 = vrot.lane.b32.xlu0 %v5496, 1
        %v5529 = vpop.permute.xlu0 %5528
        %5530 = vrot.lane.b32.xlu0 %v5504, 1
        %v5531 = vpop.permute.xlu0 %5530
        %5532 = vrot.lane.b32.xlu0 %v5512, 1
        %v5533 = vpop.permute.xlu0 %5532
        %5534 = vrot.lane.b32.xlu0 %v5520, 1
        %v5535 = vpop.permute.xlu0 %5534
        %5536 = vrot.lane.b32.xlu0 %v5497, 1
        %v5537 = vpop.permute.xlu0 %5536
        %5538 = vrot.lane.b32.xlu0 %v5505, 1
        %v5539 = vpop.permute.xlu0 %5538
        %5540 = vrot.lane.b32.xlu0 %v5513, 1
        %v5541 = vpop.permute.xlu0 %5540
        %5542 = vrot.lane.b32.xlu0 %v5521, 1
        %v5543 = vpop.permute.xlu0 %5542
        %5544 = vrot.lane.b32.xlu0 %v5498, 1
        %v5545 = vpop.permute.xlu0 %5544
        %5546 = vrot.lane.b32.xlu0 %v5506, 1
        %v5547 = vpop.permute.xlu0 %5546
        %5548 = vrot.lane.b32.xlu0 %v5514, 1
        %v5549 = vpop.permute.xlu0 %5548
        %5550 = vrot.lane.b32.xlu0 %v5522, 1
        %v5551 = vpop.permute.xlu0 %5550
        %5552 = vrot.lane.b32.xlu0 %v5499, 1
        %v5553 = vpop.permute.xlu0 %5552
        %5554 = vrot.lane.b32.xlu0 %v5507, 1
        %v5555 = vpop.permute.xlu0 %5554
        %5556 = vrot.lane.b32.xlu0 %v5515, 1
        %v5557 = vpop.permute.xlu0 %5556
        %5558 = vrot.lane.b32.xlu0 %v5523, 1
        %v5559 = vpop.permute.xlu0 %5558
        %5560 = vrot.lane.b32.xlu0 %v5500, 1
        %v5561 = vpop.permute.xlu0 %5560
        %5562 = vrot.lane.b32.xlu0 %v5508, 1
        %v5563 = vpop.permute.xlu0 %5562
        %5564 = vrot.lane.b32.xlu0 %v5516, 1
        %v5565 = vpop.permute.xlu0 %5564
        %5566 = vrot.lane.b32.xlu0 %v5524, 1
        %v5567 = vpop.permute.xlu0 %5566
        %5568 = vrot.lane.b32.xlu0 %v5501, 1
        %v5569 = vpop.permute.xlu0 %5568
        %5570 = vrot.lane.b32.xlu0 %v5509, 1
        %v5571 = vpop.permute.xlu0 %5570
        %5572 = vrot.lane.b32.xlu0 %v5517, 1
        %v5573 = vpop.permute.xlu0 %5572
        %5574 = vrot.lane.b32.xlu0 %v5525, 1
        %v5575 = vpop.permute.xlu0 %5574
        %5576 = vrot.lane.b32.xlu0 %v5502, 1
        %v5577 = vpop.permute.xlu0 %5576
        %5578 = vrot.lane.b32.xlu0 %v5510, 1
        %v5579 = vpop.permute.xlu0 %5578
        %5580 = vrot.lane.b32.xlu0 %v5518, 1
        %v5581 = vpop.permute.xlu0 %5580
        %5582 = vrot.lane.b32.xlu0 %v5526, 1
        %v5583 = vpop.permute.xlu0 %5582
        %5584 = vrot.lane.b32.xlu0 %v5503, 1
        %v5585 = vpop.permute.xlu0 %5584
        %5586 = vrot.lane.b32.xlu0 %v5511, 1
        %v5587 = vpop.permute.xlu0 %5586
        %5588 = vrot.lane.b32.xlu0 %v5519, 1
        %v5589 = vpop.permute.xlu0 %5588
        %5590 = vrot.lane.b32.xlu0 %v5527, 1
        %v5591 = vpop.permute.xlu0 %5590
        %v5592 = vsel %vm1538, %v5577, %v5585
        %v5593 = vsel %vm1538, %v5579, %v5587
        %v5594 = vsel %vm1538, %v5581, %v5589
        %v5595 = vsel %vm1538, %v5583, %v5591
        %v5596 = vsel %vm1538, %v5569, %v5577
        %v5597 = vsel %vm1538, %v5571, %v5579
        %v5598 = vsel %vm1538, %v5573, %v5581
        %v5599 = vsel %vm1538, %v5575, %v5583
        %v5600 = vsel %vm1538, %v5561, %v5569
        %v5601 = vsel %vm1538, %v5563, %v5571
        %v5602 = vsel %vm1538, %v5565, %v5573
        %v5603 = vsel %vm1538, %v5567, %v5575
        %v5604 = vsel %vm1538, %v5553, %v5561
        %v5605 = vsel %vm1538, %v5555, %v5563
        %v5606 = vsel %vm1538, %v5557, %v5565
        %v5607 = vsel %vm1538, %v5559, %v5567
        %v5608 = vsel %vm1538, %v5545, %v5553
        %v5609 = vsel %vm1538, %v5547, %v5555
        %v5610 = vsel %vm1538, %v5549, %v5557
        %v5611 = vsel %vm1538, %v5551, %v5559
        %v5612 = vsel %vm1538, %v5537, %v5545
        %v5613 = vsel %vm1538, %v5539, %v5547
        %v5614 = vsel %vm1538, %v5541, %v5549
        %v5615 = vsel %vm1538, %v5543, %v5551
        %v5616 = vsel %vm1538, %v5529, %v5537
        %v5617 = vsel %vm1538, %v5531, %v5539
        %v5618 = vsel %vm1538, %v5533, %v5541
        %v5619 = vsel %vm1538, %v5535, %v5543
        %v5620 = vsel %vm1538, %v5585, %v5529
        %v5621 = vsel %vm1538, %v5587, %v5531
        %v5622 = vsel %vm1538, %v5589, %v5533
        %v5623 = vsel %vm1538, %v5591, %v5535
        %v5624 = vsel %vm1603, %v5620, 0.0
        %v5625 = vsel %vm1604, %v5616, 0.0
        %v5626 = vsel %vm1605, %v5612, 0.0
        %v5627 = vsel %vm1606, %v5608, 0.0
        %v5628 = vsel %vm1607, %v5604, 0.0
        %v5629 = vsel %vm1608, %v5600, 0.0
        %v5630 = vsel %vm1609, %v5596, 0.0
        %v5631 = vsel %vm1610, %v5592, 0.0
        %v5632 = vsel %vm1603, %v5621, 0.0
        %v5633 = vsel %vm1604, %v5617, 0.0
        %v5634 = vsel %vm1605, %v5613, 0.0
        %v5635 = vsel %vm1606, %v5609, 0.0
        %v5636 = vsel %vm1607, %v5605, 0.0
        %v5637 = vsel %vm1608, %v5601, 0.0
        %v5638 = vsel %vm1609, %v5597, 0.0
        %v5639 = vsel %vm1610, %v5593, 0.0
        %v5640 = vsel %vm1603, %v5622, 0.0
        %v5641 = vsel %vm1604, %v5618, 0.0
        %v5642 = vsel %vm1605, %v5614, 0.0
        %v5643 = vsel %vm1606, %v5610, 0.0
        %v5644 = vsel %vm1607, %v5606, 0.0
        %v5645 = vsel %vm1608, %v5602, 0.0
        %v5646 = vsel %vm1609, %v5598, 0.0
        %v5647 = vsel %vm1610, %v5594, 0.0
        %v5648 = vsel %vm1603, %v5623, 0.0
        %v5649 = vsel %vm1604, %v5619, 0.0
        %v5650 = vsel %vm1605, %v5615, 0.0
        %v5651 = vsel %vm1606, %v5611, 0.0
        %v5652 = vsel %vm1607, %v5607, 0.0
        %v5653 = vsel %vm1608, %v5603, 0.0
        %v5654 = vsel %vm1609, %v5599, 0.0
        %v5655 = vsel %vm1610, %v5595, 0.0
        %v5656 = vpack.c.bf16 %v5632, %v5624
        %v5657 = vpack.c.bf16 %v5633, %v5625
        %v5658 = vpack.c.bf16 %v5634, %v5626
        %v5659 = vpack.c.bf16 %v5635, %v5627
        %v5660 = vpack.c.bf16 %v5636, %v5628
        %v5661 = vpack.c.bf16 %v5637, %v5629
        %v5662 = vpack.c.bf16 %v5638, %v5630
        %v5663 = vpack.c.bf16 %v5639, %v5631
        %v5664 = vpack.c.bf16 %v5648, %v5640
        %v5665 = vpack.c.bf16 %v5649, %v5641
        %v5666 = vpack.c.bf16 %v5650, %v5642
        %v5667 = vpack.c.bf16 %v5651, %v5643
        %v5668 = vpack.c.bf16 %v5652, %v5644
        %v5669 = vpack.c.bf16 %v5653, %v5645
        %v5670 = vpack.c.bf16 %v5654, %v5646
        %v5671 = vpack.c.bf16 %v5655, %v5647
        %v5688 = vunpack.c.l.b16 %v5656
        %v5689 = vunpack.c.l.b16 %v5657
        %v5690 = vunpack.c.l.b16 %v5658
        %v5691 = vunpack.c.l.b16 %v5659
        %v5692 = vunpack.c.l.b16 %v5660
        %v5693 = vunpack.c.l.b16 %v5661
        %v5694 = vunpack.c.l.b16 %v5662
        %v5695 = vunpack.c.l.b16 %v5663
        %v5696 = vunpack.c.h.b16 %v5656
        %v5697 = vunpack.c.h.b16 %v5657
        %v5698 = vunpack.c.h.b16 %v5658
        %v5699 = vunpack.c.h.b16 %v5659
        %v5700 = vunpack.c.h.b16 %v5660
        %v5701 = vunpack.c.h.b16 %v5661
        %v5702 = vunpack.c.h.b16 %v5662
        %v5703 = vunpack.c.h.b16 %v5663
        %v5704 = vunpack.c.l.b16 %v5664
        %v5705 = vunpack.c.l.b16 %v5665
        %v5706 = vunpack.c.l.b16 %v5666
        %v5707 = vunpack.c.l.b16 %v5667
        %v5708 = vunpack.c.l.b16 %v5668
        %v5709 = vunpack.c.l.b16 %v5669
        %v5710 = vunpack.c.l.b16 %v5670
        %v5711 = vunpack.c.l.b16 %v5671
        %v5712 = vunpack.c.h.b16 %v5664
        %v5713 = vunpack.c.h.b16 %v5665
        %v5714 = vunpack.c.h.b16 %v5666
        %v5715 = vunpack.c.h.b16 %v5667
        %v5716 = vunpack.c.h.b16 %v5668
        %v5717 = vunpack.c.h.b16 %v5669
        %v5718 = vunpack.c.h.b16 %v5670
        %v5719 = vunpack.c.h.b16 %v5671
        %v5720 = vpack.c.b16 %v5689, %v5688
        %v5721 = vpack.c.b16 %v5691, %v5690
        %v5722 = vpack.c.b16 %v5693, %v5692
        %v5723 = vpack.c.b16 %v5695, %v5694
        %v5724 = vpack.c.b16 %v5697, %v5696
        %v5725 = vpack.c.b16 %v5699, %v5698
        %v5726 = vpack.c.b16 %v5701, %v5700
        %v5727 = vpack.c.b16 %v5703, %v5702
        %v5728 = vpack.c.b16 %v5705, %v5704
        %v5729 = vpack.c.b16 %v5707, %v5706
        %v5730 = vpack.c.b16 %v5709, %v5708
        %v5731 = vpack.c.b16 %v5711, %v5710
        %v5732 = vpack.c.b16 %v5713, %v5712
        %v5733 = vpack.c.b16 %v5715, %v5714
        %v5734 = vpack.c.b16 %v5717, %v5716
        %v5735 = vpack.c.b16 %v5719, %v5718
        %5752 = vst [vmem:[#allocation2] sm:$0xff] %v5720
        %5753 = vst [vmem:[#allocation2 + $0x8] sm:$0xff] %v5721
        %5754 = vst [vmem:[#allocation2 + $0x10] sm:$0xff] %v5722
        %5755 = vst [vmem:[#allocation2 + $0x18] sm:$0xff] %v5723
        %5756 = vst [vmem:[#allocation2 + $0x20] sm:$0xff] %v5724
        %5757 = vst [vmem:[#allocation2 + $0x28] sm:$0xff] %v5725
        %5758 = vst [vmem:[#allocation2 + $0x30] sm:$0xff] %v5726
        %5759 = vst [vmem:[#allocation2 + $0x38] sm:$0xff] %v5727
        %5760 = vst [vmem:[#allocation2 + $0x40] sm:$0xff] %v5728
        %5761 = vst [vmem:[#allocation2 + $0x48] sm:$0xff] %v5729
        %5762 = vst [vmem:[#allocation2 + $0x50] sm:$0xff] %v5730
        %5763 = vst [vmem:[#allocation2 + $0x58] sm:$0xff] %v5731
        %5764 = vst [vmem:[#allocation2 + $0x60] sm:$0xff] %v5732
        %5765 = vst [vmem:[#allocation2 + $0x68] sm:$0xff] %v5733
        %5766 = vst [vmem:[#allocation2 + $0x70] sm:$0xff] %v5734
        %5767 = vst [vmem:[#allocation2 + $0x78] sm:$0xff] %v5735
        %v5768 = vpack.c.bf16 %v5504, %v5496
        %v5769 = vpack.c.bf16 %v5505, %v5497
        %v5770 = vpack.c.bf16 %v5506, %v5498
        %v5771 = vpack.c.bf16 %v5507, %v5499
        %v5772 = vpack.c.bf16 %v5508, %v5500
        %v5773 = vpack.c.bf16 %v5509, %v5501
        %v5774 = vpack.c.bf16 %v5510, %v5502
        %v5775 = vpack.c.bf16 %v5511, %v5503
        %v5776 = vpack.c.bf16 %v5520, %v5512
        %v5777 = vpack.c.bf16 %v5521, %v5513
        %v5778 = vpack.c.bf16 %v5522, %v5514
        %v5779 = vpack.c.bf16 %v5523, %v5515
        %v5780 = vpack.c.bf16 %v5524, %v5516
        %v5781 = vpack.c.bf16 %v5525, %v5517
        %v5782 = vpack.c.bf16 %v5526, %v5518
        %v5783 = vpack.c.bf16 %v5527, %v5519
        %v5800 = vunpack.c.l.b16 %v5768
        %v5801 = vunpack.c.l.b16 %v5769
        %v5802 = vunpack.c.l.b16 %v5770
        %v5803 = vunpack.c.l.b16 %v5771
        %v5804 = vunpack.c.l.b16 %v5772
        %v5805 = vunpack.c.l.b16 %v5773
        %v5806 = vunpack.c.l.b16 %v5774
        %v5807 = vunpack.c.l.b16 %v5775
        %v5808 = vunpack.c.h.b16 %v5768
        %v5809 = vunpack.c.h.b16 %v5769
        %v5810 = vunpack.c.h.b16 %v5770
        %v5811 = vunpack.c.h.b16 %v5771
        %v5812 = vunpack.c.h.b16 %v5772
        %v5813 = vunpack.c.h.b16 %v5773
        %v5814 = vunpack.c.h.b16 %v5774
        %v5815 = vunpack.c.h.b16 %v5775
        %v5816 = vunpack.c.l.b16 %v5776
        %v5817 = vunpack.c.l.b16 %v5777
        %v5818 = vunpack.c.l.b16 %v5778
        %v5819 = vunpack.c.l.b16 %v5779
        %v5820 = vunpack.c.l.b16 %v5780
        %v5821 = vunpack.c.l.b16 %v5781
        %v5822 = vunpack.c.l.b16 %v5782
        %v5823 = vunpack.c.l.b16 %v5783
        %v5824 = vunpack.c.h.b16 %v5776
        %v5825 = vunpack.c.h.b16 %v5777
        %v5826 = vunpack.c.h.b16 %v5778
        %v5827 = vunpack.c.h.b16 %v5779
        %v5828 = vunpack.c.h.b16 %v5780
        %v5829 = vunpack.c.h.b16 %v5781
        %v5830 = vunpack.c.h.b16 %v5782
        %v5831 = vunpack.c.h.b16 %v5783
        %v5832 = vpack.c.b16 %v5801, %v5800
        %v5833 = vpack.c.b16 %v5803, %v5802
        %v5834 = vpack.c.b16 %v5805, %v5804
        %v5835 = vpack.c.b16 %v5807, %v5806
        %v5836 = vpack.c.b16 %v5809, %v5808
        %v5837 = vpack.c.b16 %v5811, %v5810
        %v5838 = vpack.c.b16 %v5813, %v5812
        %v5839 = vpack.c.b16 %v5815, %v5814
        %v5840 = vpack.c.b16 %v5817, %v5816
        %v5841 = vpack.c.b16 %v5819, %v5818
        %v5842 = vpack.c.b16 %v5821, %v5820
        %v5843 = vpack.c.b16 %v5823, %v5822
        %v5844 = vpack.c.b16 %v5825, %v5824
        %v5845 = vpack.c.b16 %v5827, %v5826
        %v5846 = vpack.c.b16 %v5829, %v5828
        %v5847 = vpack.c.b16 %v5831, %v5830
        %5864 = vst [vmem:[#allocation2 + $0x80] sm:$0xff] %v5832
        %5865 = vst [vmem:[#allocation2 + $0x88] sm:$0xff] %v5833
        %5866 = vst [vmem:[#allocation2 + $0x90] sm:$0xff] %v5834
        %5867 = vst [vmem:[#allocation2 + $0x98] sm:$0xff] %v5835
        %5868 = vst [vmem:[#allocation2 + $0xa0] sm:$0xff] %v5836
        %5869 = vst [vmem:[#allocation2 + $0xa8] sm:$0xff] %v5837
        %5870 = vst [vmem:[#allocation2 + $0xb0] sm:$0xff] %v5838
        %5871 = vst [vmem:[#allocation2 + $0xb8] sm:$0xff] %v5839
        %5872 = vst [vmem:[#allocation2 + $0xc0] sm:$0xff] %v5840
        %5873 = vst [vmem:[#allocation2 + $0xc8] sm:$0xff] %v5841
        %5874 = vst [vmem:[#allocation2 + $0xd0] sm:$0xff] %v5842
        %5875 = vst [vmem:[#allocation2 + $0xd8] sm:$0xff] %v5843
        %5876 = vst [vmem:[#allocation2 + $0xe0] sm:$0xff] %v5844
        %5877 = vst [vmem:[#allocation2 + $0xe8] sm:$0xff] %v5845
        %5878 = vst [vmem:[#allocation2 + $0xf0] sm:$0xff] %v5846
        %5879 = vst [vmem:[#allocation2 + $0xf8] sm:$0xff] %v5847
        %5880 = vrot.lane.b32.xlu0 %v5496, 127
        %v5881 = vpop.permute.xlu0 %5880
        %5882 = vrot.lane.b32.xlu0 %v5504, 127
        %v5883 = vpop.permute.xlu0 %5882
        %5884 = vrot.lane.b32.xlu0 %v5512, 127
        %v5885 = vpop.permute.xlu0 %5884
        %5886 = vrot.lane.b32.xlu0 %v5520, 127
        %v5887 = vpop.permute.xlu0 %5886
        %5888 = vrot.lane.b32.xlu0 %v5497, 127
        %v5889 = vpop.permute.xlu0 %5888
        %5890 = vrot.lane.b32.xlu0 %v5505, 127
        %v5891 = vpop.permute.xlu0 %5890
        %5892 = vrot.lane.b32.xlu0 %v5513, 127
        %v5893 = vpop.permute.xlu0 %5892
        %5894 = vrot.lane.b32.xlu0 %v5521, 127
        %v5895 = vpop.permute.xlu0 %5894
        %5896 = vrot.lane.b32.xlu0 %v5498, 127
        %v5897 = vpop.permute.xlu0 %5896
        %5898 = vrot.lane.b32.xlu0 %v5506, 127
        %v5899 = vpop.permute.xlu0 %5898
        %5900 = vrot.lane.b32.xlu0 %v5514, 127
        %v5901 = vpop.permute.xlu0 %5900
        %5902 = vrot.lane.b32.xlu0 %v5522, 127
        %v5903 = vpop.permute.xlu0 %5902
        %5904 = vrot.lane.b32.xlu0 %v5499, 127
        %v5905 = vpop.permute.xlu0 %5904
        %5906 = vrot.lane.b32.xlu0 %v5507, 127
        %v5907 = vpop.permute.xlu0 %5906
        %5908 = vrot.lane.b32.xlu0 %v5515, 127
        %v5909 = vpop.permute.xlu0 %5908
        %5910 = vrot.lane.b32.xlu0 %v5523, 127
        %v5911 = vpop.permute.xlu0 %5910
        %5912 = vrot.lane.b32.xlu0 %v5500, 127
        %v5913 = vpop.permute.xlu0 %5912
        %5914 = vrot.lane.b32.xlu0 %v5508, 127
        %v5915 = vpop.permute.xlu0 %5914
        %5916 = vrot.lane.b32.xlu0 %v5516, 127
        %v5917 = vpop.permute.xlu0 %5916
        %5918 = vrot.lane.b32.xlu0 %v5524, 127
        %v5919 = vpop.permute.xlu0 %5918
        %5920 = vrot.lane.b32.xlu0 %v5501, 127
        %v5921 = vpop.permute.xlu0 %5920
        %5922 = vrot.lane.b32.xlu0 %v5509, 127
        %v5923 = vpop.permute.xlu0 %5922
        %5924 = vrot.lane.b32.xlu0 %v5517, 127
        %v5925 = vpop.permute.xlu0 %5924
        %5926 = vrot.lane.b32.xlu0 %v5525, 127
        %v5927 = vpop.permute.xlu0 %5926
        %5928 = vrot.lane.b32.xlu0 %v5502, 127
        %v5929 = vpop.permute.xlu0 %5928
        %5930 = vrot.lane.b32.xlu0 %v5510, 127
        %v5931 = vpop.permute.xlu0 %5930
        %5932 = vrot.lane.b32.xlu0 %v5518, 127
        %v5933 = vpop.permute.xlu0 %5932
        %5934 = vrot.lane.b32.xlu0 %v5526, 127
        %v5935 = vpop.permute.xlu0 %5934
        %5936 = vrot.lane.b32.xlu0 %v5503, 127
        %v5937 = vpop.permute.xlu0 %5936
        %5938 = vrot.lane.b32.xlu0 %v5511, 127
        %v5939 = vpop.permute.xlu0 %5938
        %5940 = vrot.lane.b32.xlu0 %v5519, 127
        %v5941 = vpop.permute.xlu0 %5940
        %5942 = vrot.lane.b32.xlu0 %v5527, 127
        %v5943 = vpop.permute.xlu0 %5942
        %v5944 = vsel %vm1931, %v5929, %v5937
        %v5945 = vsel %vm1931, %v5931, %v5939
        %v5946 = vsel %vm1931, %v5933, %v5941
        %v5947 = vsel %vm1931, %v5935, %v5943
        %v5948 = vsel %vm1931, %v5921, %v5929
        %v5949 = vsel %vm1931, %v5923, %v5931
        %v5950 = vsel %vm1931, %v5925, %v5933
        %v5951 = vsel %vm1931, %v5927, %v5935
        %v5952 = vsel %vm1931, %v5913, %v5921
        %v5953 = vsel %vm1931, %v5915, %v5923
        %v5954 = vsel %vm1931, %v5917, %v5925
        %v5955 = vsel %vm1931, %v5919, %v5927
        %v5956 = vsel %vm1931, %v5905, %v5913
        %v5957 = vsel %vm1931, %v5907, %v5915
        %v5958 = vsel %vm1931, %v5909, %v5917
        %v5959 = vsel %vm1931, %v5911, %v5919
        %v5960 = vsel %vm1931, %v5897, %v5905
        %v5961 = vsel %vm1931, %v5899, %v5907
        %v5962 = vsel %vm1931, %v5901, %v5909
        %v5963 = vsel %vm1931, %v5903, %v5911
        %v5964 = vsel %vm1931, %v5889, %v5897
        %v5965 = vsel %vm1931, %v5891, %v5899
        %v5966 = vsel %vm1931, %v5893, %v5901
        %v5967 = vsel %vm1931, %v5895, %v5903
        %v5968 = vsel %vm1931, %v5881, %v5889
        %v5969 = vsel %vm1931, %v5883, %v5891
        %v5970 = vsel %vm1931, %v5885, %v5893
        %v5971 = vsel %vm1931, %v5887, %v5895
        %v5972 = vsel %vm1931, %v5937, %v5881
        %v5973 = vsel %vm1931, %v5939, %v5883
        %v5974 = vsel %vm1931, %v5941, %v5885
        %v5975 = vsel %vm1931, %v5943, %v5887
        %v5976 = vsel %vm1996, %v5968, 0.0
        %v5977 = vsel %vm1997, %v5964, 0.0
        %v5978 = vsel %vm1998, %v5960, 0.0
        %v5979 = vsel %vm1999, %v5956, 0.0
        %v5980 = vsel %vm2000, %v5952, 0.0
        %v5981 = vsel %vm2001, %v5948, 0.0
        %v5982 = vsel %vm2002, %v5944, 0.0
        %v5983 = vsel %vm2003, %v5972, 0.0
        %v5984 = vsel %vm1996, %v5969, 0.0
        %v5985 = vsel %vm1997, %v5965, 0.0
        %v5986 = vsel %vm1998, %v5961, 0.0
        %v5987 = vsel %vm1999, %v5957, 0.0
        %v5988 = vsel %vm2000, %v5953, 0.0
        %v5989 = vsel %vm2001, %v5949, 0.0
        %v5990 = vsel %vm2002, %v5945, 0.0
        %v5991 = vsel %vm2003, %v5973, 0.0
        %v5992 = vsel %vm1996, %v5970, 0.0
        %v5993 = vsel %vm1997, %v5966, 0.0
        %v5994 = vsel %vm1998, %v5962, 0.0
        %v5995 = vsel %vm1999, %v5958, 0.0
        %v5996 = vsel %vm2000, %v5954, 0.0
        %v5997 = vsel %vm2001, %v5950, 0.0
        %v5998 = vsel %vm2002, %v5946, 0.0
        %v5999 = vsel %vm2003, %v5974, 0.0
        %v6000 = vsel %vm1996, %v5971, 0.0
        %v6001 = vsel %vm1997, %v5967, 0.0
        %v6002 = vsel %vm1998, %v5963, 0.0
        %v6003 = vsel %vm1999, %v5959, 0.0
        %v6004 = vsel %vm2000, %v5955, 0.0
        %v6005 = vsel %vm2001, %v5951, 0.0
        %v6006 = vsel %vm2002, %v5947, 0.0
        %v6007 = vsel %vm2003, %v5975, 0.0
        %v6008 = vpack.c.bf16 %v5984, %v5976
        %v6009 = vpack.c.bf16 %v5985, %v5977
        %v6010 = vpack.c.bf16 %v5986, %v5978
        %v6011 = vpack.c.bf16 %v5987, %v5979
        %v6012 = vpack.c.bf16 %v5988, %v5980
        %v6013 = vpack.c.bf16 %v5989, %v5981
        %v6014 = vpack.c.bf16 %v5990, %v5982
        %v6015 = vpack.c.bf16 %v5991, %v5983
        %v6016 = vpack.c.bf16 %v6000, %v5992
        %v6017 = vpack.c.bf16 %v6001, %v5993
        %v6018 = vpack.c.bf16 %v6002, %v5994
        %v6019 = vpack.c.bf16 %v6003, %v5995
        %v6020 = vpack.c.bf16 %v6004, %v5996
        %v6021 = vpack.c.bf16 %v6005, %v5997
        %v6022 = vpack.c.bf16 %v6006, %v5998
        %v6023 = vpack.c.bf16 %v6007, %v5999
        %v6040 = vunpack.c.l.b16 %v6008
        %v6041 = vunpack.c.l.b16 %v6009
        %v6042 = vunpack.c.l.b16 %v6010
        %v6043 = vunpack.c.l.b16 %v6011
        %v6044 = vunpack.c.l.b16 %v6012
        %v6045 = vunpack.c.l.b16 %v6013
        %v6046 = vunpack.c.l.b16 %v6014
        %v6047 = vunpack.c.l.b16 %v6015
        %v6048 = vunpack.c.h.b16 %v6008
        %v6049 = vunpack.c.h.b16 %v6009
        %v6050 = vunpack.c.h.b16 %v6010
        %v6051 = vunpack.c.h.b16 %v6011
        %v6052 = vunpack.c.h.b16 %v6012
        %v6053 = vunpack.c.h.b16 %v6013
        %v6054 = vunpack.c.h.b16 %v6014
        %v6055 = vunpack.c.h.b16 %v6015
        %v6056 = vunpack.c.l.b16 %v6016
        %v6057 = vunpack.c.l.b16 %v6017
        %v6058 = vunpack.c.l.b16 %v6018
        %v6059 = vunpack.c.l.b16 %v6019
        %v6060 = vunpack.c.l.b16 %v6020
        %v6061 = vunpack.c.l.b16 %v6021
        %v6062 = vunpack.c.l.b16 %v6022
        %v6063 = vunpack.c.l.b16 %v6023
        %v6064 = vunpack.c.h.b16 %v6016
        %v6065 = vunpack.c.h.b16 %v6017
        %v6066 = vunpack.c.h.b16 %v6018
        %v6067 = vunpack.c.h.b16 %v6019
        %v6068 = vunpack.c.h.b16 %v6020
        %v6069 = vunpack.c.h.b16 %v6021
        %v6070 = vunpack.c.h.b16 %v6022
        %v6071 = vunpack.c.h.b16 %v6023
        %v6072 = vpack.c.b16 %v6041, %v6040
        %v6073 = vpack.c.b16 %v6043, %v6042
        %v6074 = vpack.c.b16 %v6045, %v6044
        %v6075 = vpack.c.b16 %v6047, %v6046
        %v6076 = vpack.c.b16 %v6049, %v6048
        %v6077 = vpack.c.b16 %v6051, %v6050
        %v6078 = vpack.c.b16 %v6053, %v6052
        %v6079 = vpack.c.b16 %v6055, %v6054
        %v6080 = vpack.c.b16 %v6057, %v6056
        %v6081 = vpack.c.b16 %v6059, %v6058
        %v6082 = vpack.c.b16 %v6061, %v6060
        %v6083 = vpack.c.b16 %v6063, %v6062
        %v6084 = vpack.c.b16 %v6065, %v6064
        %v6085 = vpack.c.b16 %v6067, %v6066
        %v6086 = vpack.c.b16 %v6069, %v6068
        %v6087 = vpack.c.b16 %v6071, %v6070
        %6104 = vst [vmem:[#allocation2 + $0x100] sm:$0xff] %v6072
        %6105 = vst [vmem:[#allocation2 + $0x108] sm:$0xff] %v6073
        %6106 = vst [vmem:[#allocation2 + $0x110] sm:$0xff] %v6074
        %6107 = vst [vmem:[#allocation2 + $0x118] sm:$0xff] %v6075
        %6108 = vst [vmem:[#allocation2 + $0x120] sm:$0xff] %v6076
        %6109 = vst [vmem:[#allocation2 + $0x128] sm:$0xff] %v6077
        %6110 = vst [vmem:[#allocation2 + $0x130] sm:$0xff] %v6078
        %6111 = vst [vmem:[#allocation2 + $0x138] sm:$0xff] %v6079
        %6112 = vst [vmem:[#allocation2 + $0x140] sm:$0xff] %v6080
        %6113 = vst [vmem:[#allocation2 + $0x148] sm:$0xff] %v6081
        %6114 = vst [vmem:[#allocation2 + $0x150] sm:$0xff] %v6082
        %6115 = vst [vmem:[#allocation2 + $0x158] sm:$0xff] %v6083
        %6116 = vst [vmem:[#allocation2 + $0x160] sm:$0xff] %v6084
        %6117 = vst [vmem:[#allocation2 + $0x168] sm:$0xff] %v6085
        %6118 = vst [vmem:[#allocation2 + $0x170] sm:$0xff] %v6086
        %6119 = vst [vmem:[#allocation2 + $0x178] sm:$0xff] %v6087
        %v6120 = vld [vmem:[%s7] sm:$0xf]
        %v6121 = vld [vmem:[%s7 + $0x4] sm:$0xf]
        %v6122 = vld [vmem:[%s7 + $0x8] sm:$0xf]
        %v6123 = vld [vmem:[%s7 + $0xc] sm:$0xf]
        %v6124 = vld [vmem:[#allocation2] sm:$0xff]
        %v6125 = vld [vmem:[#allocation2 + $0x8] sm:$0xff]
        %v6126 = vld [vmem:[#allocation2 + $0x10] sm:$0xff]
        %v6127 = vld [vmem:[#allocation2 + $0x18] sm:$0xff]
        %v6128 = vld [vmem:[#allocation2 + $0x20] sm:$0xff]
        %v6129 = vld [vmem:[#allocation2 + $0x28] sm:$0xff]
        %v6130 = vld [vmem:[#allocation2 + $0x30] sm:$0xff]
        %v6131 = vld [vmem:[#allocation2 + $0x38] sm:$0xff]
        %v6132 = vld [vmem:[#allocation2 + $0x40] sm:$0xff]
        %v6133 = vld [vmem:[#allocation2 + $0x48] sm:$0xff]
        %v6134 = vld [vmem:[#allocation2 + $0x50] sm:$0xff]
        %v6135 = vld [vmem:[#allocation2 + $0x58] sm:$0xff]
        %v6136 = vld [vmem:[#allocation2 + $0x60] sm:$0xff]
        %v6137 = vld [vmem:[#allocation2 + $0x68] sm:$0xff]
        %v6138 = vld [vmem:[#allocation2 + $0x70] sm:$0xff]
        %v6139 = vld [vmem:[#allocation2 + $0x78] sm:$0xff]
        %v6140 = vld [vmem:[#allocation2 + $0x80] sm:$0xff]
        %v6141 = vld [vmem:[#allocation2 + $0x88] sm:$0xff]
        %v6142 = vld [vmem:[#allocation2 + $0x90] sm:$0xff]
        %v6143 = vld [vmem:[#allocation2 + $0x98] sm:$0xff]
        %v6144 = vld [vmem:[#allocation2 + $0xa0] sm:$0xff]
        %v6145 = vld [vmem:[#allocation2 + $0xa8] sm:$0xff]
        %v6146 = vld [vmem:[#allocation2 + $0xb0] sm:$0xff]
        %v6147 = vld [vmem:[#allocation2 + $0xb8] sm:$0xff]
        %v6148 = vld [vmem:[#allocation2 + $0xc0] sm:$0xff]
        %v6149 = vld [vmem:[#allocation2 + $0xc8] sm:$0xff]
        %v6150 = vld [vmem:[#allocation2 + $0xd0] sm:$0xff]
        %v6151 = vld [vmem:[#allocation2 + $0xd8] sm:$0xff]
        %v6152 = vld [vmem:[#allocation2 + $0xe0] sm:$0xff]
        %v6153 = vld [vmem:[#allocation2 + $0xe8] sm:$0xff]
        %v6154 = vld [vmem:[#allocation2 + $0xf0] sm:$0xff]
        %v6155 = vld [vmem:[#allocation2 + $0xf8] sm:$0xff]
        %v6156 = vld [vmem:[#allocation2 + $0x100] sm:$0xff]
        %v6157 = vld [vmem:[#allocation2 + $0x108] sm:$0xff]
        %v6158 = vld [vmem:[#allocation2 + $0x110] sm:$0xff]
        %v6159 = vld [vmem:[#allocation2 + $0x118] sm:$0xff]
        %v6160 = vld [vmem:[#allocation2 + $0x120] sm:$0xff]
        %v6161 = vld [vmem:[#allocation2 + $0x128] sm:$0xff]
        %v6162 = vld [vmem:[#allocation2 + $0x130] sm:$0xff]
        %v6163 = vld [vmem:[#allocation2 + $0x138] sm:$0xff]
        %v6164 = vld [vmem:[#allocation2 + $0x140] sm:$0xff]
        %v6165 = vld [vmem:[#allocation2 + $0x148] sm:$0xff]
        %v6166 = vld [vmem:[#allocation2 + $0x150] sm:$0xff]
        %v6167 = vld [vmem:[#allocation2 + $0x158] sm:$0xff]
        %v6168 = vld [vmem:[#allocation2 + $0x160] sm:$0xff]
        %v6169 = vld [vmem:[#allocation2 + $0x168] sm:$0xff]
        %v6170 = vld [vmem:[#allocation2 + $0x170] sm:$0xff]
        %v6171 = vld [vmem:[#allocation2 + $0x178] sm:$0xff]
        %v6172 = vld [vmem:[%s8] sm:$0xff]
        %v6173 = vld [vmem:[%s8 + $0x8] sm:$0xff]
        %v6174 = vld [vmem:[%s8 + $0x10] sm:$0xff]
        %v6175 = vld [vmem:[%s8 + $0x18] sm:$0xff]
        %6177 = vset.pattern.permute.xlu0 0
        %6178 = vperm.xlu0 %6177, %v6172
        %v6179 = vpop.permute.xlu0 %6178
        %6182 = vset.pattern.permute.xlu0 0
        %6183 = vperm.xlu0 %6182, %v6173
        %v6184 = vpop.permute.xlu0 %6183
        %6187 = vset.pattern.permute.xlu0 0
        %6188 = vperm.xlu0 %6187, %v6174
        %v6189 = vpop.permute.xlu0 %6188
        %6192 = vset.pattern.permute.xlu0 0
        %6193 = vperm.xlu0 %6192, %v6175
        %v6194 = vpop.permute.xlu0 %6193
        %v6200 = vunpack.c.l.b16 %v6120
        %v6201 = vunpack.c.l.b16 %v6121
        %v6202 = vunpack.c.l.b16 %v6122
        %v6203 = vunpack.c.l.b16 %v6123
        %v6204 = vpack.c.b16 %v6201, %v6200
        %v6205 = vpack.c.b16 %v6203, %v6202
        %v6254 = vunpack.c.l.b16 %v6124
        %v6255 = vunpack.c.h.b16 %v6124
        %v6256 = vunpack.c.l.b16 %v6125
        %v6257 = vunpack.c.h.b16 %v6125
        %v6258 = vunpack.c.l.b16 %v6126
        %v6259 = vunpack.c.h.b16 %v6126
        %v6260 = vunpack.c.l.b16 %v6127
        %v6261 = vunpack.c.h.b16 %v6127
        %v6262 = vunpack.c.l.b16 %v6128
        %v6263 = vunpack.c.h.b16 %v6128
        %v6264 = vunpack.c.l.b16 %v6129
        %v6265 = vunpack.c.h.b16 %v6129
        %v6266 = vunpack.c.l.b16 %v6130
        %v6267 = vunpack.c.h.b16 %v6130
        %v6268 = vunpack.c.l.b16 %v6131
        %v6269 = vunpack.c.h.b16 %v6131
        %v6270 = vunpack.c.l.b16 %v6132
        %v6271 = vunpack.c.h.b16 %v6132
        %v6272 = vunpack.c.l.b16 %v6133
        %v6273 = vunpack.c.h.b16 %v6133
        %v6274 = vunpack.c.l.b16 %v6134
        %v6275 = vunpack.c.h.b16 %v6134
        %v6276 = vunpack.c.l.b16 %v6135
        %v6277 = vunpack.c.h.b16 %v6135
        %v6278 = vunpack.c.l.b16 %v6136
        %v6279 = vunpack.c.h.b16 %v6136
        %v6280 = vunpack.c.l.b16 %v6137
        %v6281 = vunpack.c.h.b16 %v6137
        %v6282 = vunpack.c.l.b16 %v6138
        %v6283 = vunpack.c.h.b16 %v6138
        %v6284 = vunpack.c.l.b16 %v6139
        %v6285 = vunpack.c.h.b16 %v6139
        %v6286 = vunpack.c.l.b16 %v6140
        %v6287 = vunpack.c.h.b16 %v6140
        %v6288 = vunpack.c.l.b16 %v6141
        %v6289 = vunpack.c.h.b16 %v6141
        %v6290 = vunpack.c.l.b16 %v6142
        %v6291 = vunpack.c.h.b16 %v6142
        %v6292 = vunpack.c.l.b16 %v6143
        %v6293 = vunpack.c.h.b16 %v6143
        %v6294 = vunpack.c.l.b16 %v6144
        %v6295 = vunpack.c.h.b16 %v6144
        %v6296 = vunpack.c.l.b16 %v6145
        %v6297 = vunpack.c.h.b16 %v6145
        %v6298 = vunpack.c.l.b16 %v6146
        %v6299 = vunpack.c.h.b16 %v6146
        %v6300 = vunpack.c.l.b16 %v6147
        %v6301 = vunpack.c.h.b16 %v6147
        %v6302 = vunpack.c.l.b16 %v6148
        %v6303 = vunpack.c.h.b16 %v6148
        %v6304 = vunpack.c.l.b16 %v6149
        %v6305 = vunpack.c.h.b16 %v6149
        %v6306 = vunpack.c.l.b16 %v6150
        %v6307 = vunpack.c.h.b16 %v6150
        %v6308 = vunpack.c.l.b16 %v6151
        %v6309 = vunpack.c.h.b16 %v6151
        %v6310 = vunpack.c.l.b16 %v6152
        %v6311 = vunpack.c.h.b16 %v6152
        %v6312 = vunpack.c.l.b16 %v6153
        %v6313 = vunpack.c.h.b16 %v6153
        %v6314 = vunpack.c.l.b16 %v6154
        %v6315 = vunpack.c.h.b16 %v6154
        %v6316 = vunpack.c.l.b16 %v6155
        %v6317 = vunpack.c.h.b16 %v6155
        %v6318 = vunpack.c.l.b16 %v6156
        %v6319 = vunpack.c.h.b16 %v6156
        %v6320 = vunpack.c.l.b16 %v6157
        %v6321 = vunpack.c.h.b16 %v6157
        %v6322 = vunpack.c.l.b16 %v6158
        %v6323 = vunpack.c.h.b16 %v6158
        %v6324 = vunpack.c.l.b16 %v6159
        %v6325 = vunpack.c.h.b16 %v6159
        %v6326 = vunpack.c.l.b16 %v6160
        %v6327 = vunpack.c.h.b16 %v6160
        %v6328 = vunpack.c.l.b16 %v6161
        %v6329 = vunpack.c.h.b16 %v6161
        %v6330 = vunpack.c.l.b16 %v6162
        %v6331 = vunpack.c.h.b16 %v6162
        %v6332 = vunpack.c.l.b16 %v6163
        %v6333 = vunpack.c.h.b16 %v6163
        %v6334 = vunpack.c.l.b16 %v6164
        %v6335 = vunpack.c.h.b16 %v6164
        %v6336 = vunpack.c.l.b16 %v6165
        %v6337 = vunpack.c.h.b16 %v6165
        %v6338 = vunpack.c.l.b16 %v6166
        %v6339 = vunpack.c.h.b16 %v6166
        %v6340 = vunpack.c.l.b16 %v6167
        %v6341 = vunpack.c.h.b16 %v6167
        %v6342 = vunpack.c.l.b16 %v6168
        %v6343 = vunpack.c.h.b16 %v6168
        %v6344 = vunpack.c.l.b16 %v6169
        %v6345 = vunpack.c.h.b16 %v6169
        %v6346 = vunpack.c.l.b16 %v6170
        %v6347 = vunpack.c.h.b16 %v6170
        %v6348 = vunpack.c.l.b16 %v6171
        %v6349 = vunpack.c.h.b16 %v6171
        %v6350 = vpack.c.b16 %v6262, %v6254
        %v6351 = vpack.c.b16 %v6263, %v6255
        %v6352 = vpack.c.b16 %v6264, %v6256
        %v6353 = vpack.c.b16 %v6265, %v6257
        %v6354 = vpack.c.b16 %v6266, %v6258
        %v6355 = vpack.c.b16 %v6267, %v6259
        %v6356 = vpack.c.b16 %v6268, %v6260
        %v6357 = vpack.c.b16 %v6269, %v6261
        %v6358 = vpack.c.b16 %v6278, %v6270
        %v6359 = vpack.c.b16 %v6279, %v6271
        %v6360 = vpack.c.b16 %v6280, %v6272
        %v6361 = vpack.c.b16 %v6281, %v6273
        %v6362 = vpack.c.b16 %v6282, %v6274
        %v6363 = vpack.c.b16 %v6283, %v6275
        %v6364 = vpack.c.b16 %v6284, %v6276
        %v6365 = vpack.c.b16 %v6285, %v6277
        %v6366 = vpack.c.b16 %v6294, %v6286
        %v6367 = vpack.c.b16 %v6295, %v6287
        %v6368 = vpack.c.b16 %v6296, %v6288
        %v6369 = vpack.c.b16 %v6297, %v6289
        %v6370 = vpack.c.b16 %v6298, %v6290
        %v6371 = vpack.c.b16 %v6299, %v6291
        %v6372 = vpack.c.b16 %v6300, %v6292
        %v6373 = vpack.c.b16 %v6301, %v6293
        %v6374 = vpack.c.b16 %v6310, %v6302
        %v6375 = vpack.c.b16 %v6311, %v6303
        %v6376 = vpack.c.b16 %v6312, %v6304
        %v6377 = vpack.c.b16 %v6313, %v6305
        %v6378 = vpack.c.b16 %v6314, %v6306
        %v6379 = vpack.c.b16 %v6315, %v6307
        %v6380 = vpack.c.b16 %v6316, %v6308
        %v6381 = vpack.c.b16 %v6317, %v6309
        %v6382 = vpack.c.b16 %v6326, %v6318
        %v6383 = vpack.c.b16 %v6327, %v6319
        %v6384 = vpack.c.b16 %v6328, %v6320
        %v6385 = vpack.c.b16 %v6329, %v6321
        %v6386 = vpack.c.b16 %v6330, %v6322
        %v6387 = vpack.c.b16 %v6331, %v6323
        %v6388 = vpack.c.b16 %v6332, %v6324
        %v6389 = vpack.c.b16 %v6333, %v6325
        %v6390 = vpack.c.b16 %v6342, %v6334
        %v6391 = vpack.c.b16 %v6343, %v6335
        %v6392 = vpack.c.b16 %v6344, %v6336
        %v6393 = vpack.c.b16 %v6345, %v6337
        %v6394 = vpack.c.b16 %v6346, %v6338
        %v6395 = vpack.c.b16 %v6347, %v6339
        %v6396 = vpack.c.b16 %v6348, %v6340
        %v6397 = vpack.c.b16 %v6349, %v6341
        %v6447 = vsel %vm3428, %v6204, 0
        %v6450 = vsel %vm3428, %v6205, 0
        %6452 = vmatprep.subr.bf16.mxu0 0
        %6453 = vmatpush1.bf16.msra.mxu0 0
        %6454 = vmatprep.subr.bf16.mxu0 0
        %6455 = vmatpush1.bf16.msra.mxu0 0
        %6456 = vmatprep.subr.bf16.mxu0 %v6391
        %6457 = vmatpush1.bf16.msra.mxu0 %v6390
        %6458 = vmatprep.subr.bf16.mxu0 %v6383
        %6459 = vmatpush1.bf16.msra.mxu0 %v6382
        %6460 = vmatprep.subr.bf16.mxu0 %v6375
        %6461 = vmatpush1.bf16.msra.mxu0 %v6374
        %6462 = vmatprep.subr.bf16.mxu0 %v6367
        %6463 = vmatpush1.bf16.msra.mxu0 %v6366
        %6464 = vmatprep.subr.bf16.mxu0 %v6359
        %6465 = vmatpush1.bf16.msra.mxu0 %v6358
        %6466 = vmatprep.subr.bf16.mxu0 %v6351
        %6467 = vmatpush1.bf16.msra.mxu0 %v6350
        %6468 = vmatprep.subr.bf16.mxu0 0
        %6469 = vmatpush2.bf16.msra.mxu0 0
        %6470 = vmatprep.subr.bf16.mxu0 0
        %6471 = vmatpush2.bf16.msra.mxu0 0
        %6472 = vmatprep.subr.bf16.mxu0 0
        %6473 = vmatpush2.bf16.msra.mxu0 0
        %6474 = vmatprep.subr.bf16.mxu0 0
        %6475 = vmatpush2.bf16.msra.mxu0 0
        %6476 = vmatprep.subr.bf16.mxu0 0
        %6477 = vmatpush2.bf16.msra.mxu0 0
        %6478 = vmatprep.subr.bf16.mxu0 0
        %6479 = vmatpush2.bf16.msra.mxu0 0
        %6480 = vmatprep.subr.bf16.mxu0 0
        %6481 = vmatpush2.bf16.msra.mxu0 0
        %6482 = vmatprep.subr.bf16.mxu0 0
        %6483 = vmatpush2.bf16.msra.mxu0 0
        %6484 = vmatprep.mubr.bf16.mxu0 0
        %6485 = vmatmul.mubr.bf16.gmra.mxu0 %v6447
        %v6486 = vpop.f32.mrf.mxu0
        %v6487 = vadd.f32 %v6179, %v6486
        %v6488 = vpop.f32.mrf.mxu0
        %v6489 = vadd.f32 %v6179, %v6488
        %v6490 = vpop.f32.mrf.mxu0
        %v6491 = vadd.f32 %v6184, %v6490
        %v6492 = vpop.f32.mrf.mxu0
        %v6493 = vadd.f32 %v6184, %v6492
        %6494 = vmatprep.mubr.bf16.mxu0 0
        %6495 = vmatmul.mubr.bf16.gmra.mxu0 %v6450
        %v6496 = vpop.f32.mrf.mxu0
        %v6497 = vadd.f32 %v6189, %v6496
        %v6498 = vpop.f32.mrf.mxu0
        %v6499 = vadd.f32 %v6189, %v6498
        %v6500 = vpop.f32.mrf.mxu0
        %v6501 = vadd.f32 %v6194, %v6500
        %v6502 = vpop.f32.mrf.mxu0
        %v6503 = vadd.f32 %v6194, %v6502
        %6504 = vdwg.mxu0
        %6505 = vmatprep.subr.bf16.mxu0 0
        %6506 = vmatpush1.bf16.msra.mxu0 0
        %6507 = vmatprep.subr.bf16.mxu0 0
        %6508 = vmatpush1.bf16.msra.mxu0 0
        %6509 = vmatprep.subr.bf16.mxu0 %v6393
        %6510 = vmatpush1.bf16.msra.mxu0 %v6392
        %6511 = vmatprep.subr.bf16.mxu0 %v6385
        %6512 = vmatpush1.bf16.msra.mxu0 %v6384
        %6513 = vmatprep.subr.bf16.mxu0 %v6377
        %6514 = vmatpush1.bf16.msra.mxu0 %v6376
        %6515 = vmatprep.subr.bf16.mxu0 %v6369
        %6516 = vmatpush1.bf16.msra.mxu0 %v6368
        %6517 = vmatprep.subr.bf16.mxu0 %v6361
        %6518 = vmatpush1.bf16.msra.mxu0 %v6360
        %6519 = vmatprep.subr.bf16.mxu0 %v6353
        %6520 = vmatpush1.bf16.msra.mxu0 %v6352
        %6521 = vmatprep.subr.bf16.mxu0 0
        %6522 = vmatpush2.bf16.msra.mxu0 0
        %6523 = vmatprep.subr.bf16.mxu0 0
        %6524 = vmatpush2.bf16.msra.mxu0 0
        %6525 = vmatprep.subr.bf16.mxu0 0
        %6526 = vmatpush2.bf16.msra.mxu0 0
        %6527 = vmatprep.subr.bf16.mxu0 0
        %6528 = vmatpush2.bf16.msra.mxu0 0
        %6529 = vmatprep.subr.bf16.mxu0 0
        %6530 = vmatpush2.bf16.msra.mxu0 0
        %6531 = vmatprep.subr.bf16.mxu0 0
        %6532 = vmatpush2.bf16.msra.mxu0 0
        %6533 = vmatprep.subr.bf16.mxu0 0
        %6534 = vmatpush2.bf16.msra.mxu0 0
        %6535 = vmatprep.subr.bf16.mxu0 0
        %6536 = vmatpush2.bf16.msra.mxu0 0
        %6537 = vmatprep.mubr.bf16.mxu0 0
        %6538 = vmatmul.mubr.bf16.gmra.mxu0 %v6447
        %v6539 = vpop.f32.mrf.mxu0
        %v6540 = vadd.f32 %v6179, %v6539
        %v6541 = vpop.f32.mrf.mxu0
        %v6542 = vadd.f32 %v6179, %v6541
        %v6543 = vpop.f32.mrf.mxu0
        %v6544 = vadd.f32 %v6184, %v6543
        %v6545 = vpop.f32.mrf.mxu0
        %v6546 = vadd.f32 %v6184, %v6545
        %6547 = vmatprep.mubr.bf16.mxu0 0
        %6548 = vmatmul.mubr.bf16.gmra.mxu0 %v6450
        %v6549 = vpop.f32.mrf.mxu0
        %v6550 = vadd.f32 %v6189, %v6549
        %v6551 = vpop.f32.mrf.mxu0
        %v6552 = vadd.f32 %v6189, %v6551
        %v6553 = vpop.f32.mrf.mxu0
        %v6554 = vadd.f32 %v6194, %v6553
        %v6555 = vpop.f32.mrf.mxu0
        %v6556 = vadd.f32 %v6194, %v6555
        %6557 = vdwg.mxu0
        %6558 = vmatprep.subr.bf16.mxu0 0
        %6559 = vmatpush1.bf16.msra.mxu0 0
        %6560 = vmatprep.subr.bf16.mxu0 0
        %6561 = vmatpush1.bf16.msra.mxu0 0
        %6562 = vmatprep.subr.bf16.mxu0 %v6395
        %6563 = vmatpush1.bf16.msra.mxu0 %v6394
        %6564 = vmatprep.subr.bf16.mxu0 %v6387
        %6565 = vmatpush1.bf16.msra.mxu0 %v6386
        %6566 = vmatprep.subr.bf16.mxu0 %v6379
        %6567 = vmatpush1.bf16.msra.mxu0 %v6378
        %6568 = vmatprep.subr.bf16.mxu0 %v6371
        %6569 = vmatpush1.bf16.msra.mxu0 %v6370
        %6570 = vmatprep.subr.bf16.mxu0 %v6363
        %6571 = vmatpush1.bf16.msra.mxu0 %v6362
        %6572 = vmatprep.subr.bf16.mxu0 %v6355
        %6573 = vmatpush1.bf16.msra.mxu0 %v6354
        %6574 = vmatprep.subr.bf16.mxu0 0
        %6575 = vmatpush2.bf16.msra.mxu0 0
        %6576 = vmatprep.subr.bf16.mxu0 0
        %6577 = vmatpush2.bf16.msra.mxu0 0
        %6578 = vmatprep.subr.bf16.mxu0 0
        %6579 = vmatpush2.bf16.msra.mxu0 0
        %6580 = vmatprep.subr.bf16.mxu0 0
        %6581 = vmatpush2.bf16.msra.mxu0 0
        %6582 = vmatprep.subr.bf16.mxu0 0
        %6583 = vmatpush2.bf16.msra.mxu0 0
        %6584 = vmatprep.subr.bf16.mxu0 0
        %6585 = vmatpush2.bf16.msra.mxu0 0
        %6586 = vmatprep.subr.bf16.mxu0 0
        %6587 = vmatpush2.bf16.msra.mxu0 0
        %6588 = vmatprep.subr.bf16.mxu0 0
        %6589 = vmatpush2.bf16.msra.mxu0 0
        %6590 = vmatprep.mubr.bf16.mxu0 0
        %6591 = vmatmul.mubr.bf16.gmra.mxu0 %v6447
        %v6592 = vpop.f32.mrf.mxu0
        %v6593 = vadd.f32 %v6179, %v6592
        %v6594 = vpop.f32.mrf.mxu0
        %v6595 = vadd.f32 %v6179, %v6594
        %v6596 = vpop.f32.mrf.mxu0
        %v6597 = vadd.f32 %v6184, %v6596
        %v6598 = vpop.f32.mrf.mxu0
        %v6599 = vadd.f32 %v6184, %v6598
        %6600 = vmatprep.mubr.bf16.mxu0 0
        %6601 = vmatmul.mubr.bf16.gmra.mxu0 %v6450
        %v6602 = vpop.f32.mrf.mxu0
        %v6603 = vadd.f32 %v6189, %v6602
        %v6604 = vpop.f32.mrf.mxu0
        %v6605 = vadd.f32 %v6189, %v6604
        %v6606 = vpop.f32.mrf.mxu0
        %v6607 = vadd.f32 %v6194, %v6606
        %v6608 = vpop.f32.mrf.mxu0
        %v6609 = vadd.f32 %v6194, %v6608
        %6610 = vdwg.mxu0
        %6611 = vmatprep.subr.bf16.mxu0 0
        %6612 = vmatpush1.bf16.msra.mxu0 0
        %6613 = vmatprep.subr.bf16.mxu0 0
        %6614 = vmatpush1.bf16.msra.mxu0 0
        %6615 = vmatprep.subr.bf16.mxu0 %v6397
        %6616 = vmatpush1.bf16.msra.mxu0 %v6396
        %6617 = vmatprep.subr.bf16.mxu0 %v6389
        %6618 = vmatpush1.bf16.msra.mxu0 %v6388
        %6619 = vmatprep.subr.bf16.mxu0 %v6381
        %6620 = vmatpush1.bf16.msra.mxu0 %v6380
        %6621 = vmatprep.subr.bf16.mxu0 %v6373
        %6622 = vmatpush1.bf16.msra.mxu0 %v6372
        %6623 = vmatprep.subr.bf16.mxu0 %v6365
        %6624 = vmatpush1.bf16.msra.mxu0 %v6364
        %6625 = vmatprep.subr.bf16.mxu0 %v6357
        %6626 = vmatpush1.bf16.msra.mxu0 %v6356
        %6627 = vmatprep.subr.bf16.mxu0 0
        %6628 = vmatpush2.bf16.msra.mxu0 0
        %6629 = vmatprep.subr.bf16.mxu0 0
        %6630 = vmatpush2.bf16.msra.mxu0 0
        %6631 = vmatprep.subr.bf16.mxu0 0
        %6632 = vmatpush2.bf16.msra.mxu0 0
        %6633 = vmatprep.subr.bf16.mxu0 0
        %6634 = vmatpush2.bf16.msra.mxu0 0
        %6635 = vmatprep.subr.bf16.mxu0 0
        %6636 = vmatpush2.bf16.msra.mxu0 0
        %6637 = vmatprep.subr.bf16.mxu0 0
        %6638 = vmatpush2.bf16.msra.mxu0 0
        %6639 = vmatprep.subr.bf16.mxu0 0
        %6640 = vmatpush2.bf16.msra.mxu0 0
        %6641 = vmatprep.subr.bf16.mxu0 0
        %6642 = vmatpush2.bf16.msra.mxu0 0
        %6643 = vmatprep.mubr.bf16.mxu0 0
        %6644 = vmatmul.mubr.bf16.gmra.mxu0 %v6447
        %v6645 = vpop.f32.mrf.mxu0
        %v6646 = vadd.f32 %v6179, %v6645
        %v6647 = vpop.f32.mrf.mxu0
        %v6648 = vadd.f32 %v6179, %v6647
        %v6649 = vpop.f32.mrf.mxu0
        %v6650 = vadd.f32 %v6184, %v6649
        %v6651 = vpop.f32.mrf.mxu0
        %v6652 = vadd.f32 %v6184, %v6651
        %6653 = vmatprep.mubr.bf16.mxu0 0
        %6654 = vmatmul.mubr.bf16.gmra.mxu0 %v6450
        %v6655 = vpop.f32.mrf.mxu0
        %v6656 = vadd.f32 %v6189, %v6655
        %v6657 = vpop.f32.mrf.mxu0
        %v6658 = vadd.f32 %v6189, %v6657
        %v6659 = vpop.f32.mrf.mxu0
        %v6660 = vadd.f32 %v6194, %v6659
        %v6661 = vpop.f32.mrf.mxu0
        %v6662 = vadd.f32 %v6194, %v6661
        %6663 = vdwg.mxu0
        %v6664 = vmax.f32 %v6487, 0.0
        %v6665 = vmax.f32 %v6489, 0.0
        %v6666 = vmax.f32 %v6540, 0.0
        %v6667 = vmax.f32 %v6542, 0.0
        %v6668 = vmax.f32 %v6593, 0.0
        %v6669 = vmax.f32 %v6595, 0.0
        %v6670 = vmax.f32 %v6646, 0.0
        %v6671 = vmax.f32 %v6648, 0.0
        %v6672 = vmax.f32 %v6491, 0.0
        %v6673 = vmax.f32 %v6493, 0.0
        %v6674 = vmax.f32 %v6544, 0.0
        %v6675 = vmax.f32 %v6546, 0.0
        %v6676 = vmax.f32 %v6597, 0.0
        %v6677 = vmax.f32 %v6599, 0.0
        %v6678 = vmax.f32 %v6650, 0.0
        %v6679 = vmax.f32 %v6652, 0.0
        %v6680 = vmax.f32 %v6497, 0.0
        %v6681 = vmax.f32 %v6499, 0.0
        %v6682 = vmax.f32 %v6550, 0.0
        %v6683 = vmax.f32 %v6552, 0.0
        %v6684 = vmax.f32 %v6603, 0.0
        %v6685 = vmax.f32 %v6605, 0.0
        %v6686 = vmax.f32 %v6656, 0.0
        %v6687 = vmax.f32 %v6658, 0.0
        %v6688 = vmax.f32 %v6501, 0.0
        %v6689 = vmax.f32 %v6503, 0.0
        %v6690 = vmax.f32 %v6554, 0.0
        %v6691 = vmax.f32 %v6556, 0.0
        %v6692 = vmax.f32 %v6607, 0.0
        %v6693 = vmax.f32 %v6609, 0.0
        %v6694 = vmax.f32 %v6660, 0.0
        %v6695 = vmax.f32 %v6662, 0.0
        %v6696 = vpack.c.bf16 %v6672, %v6664
        %v6697 = vpack.c.bf16 %v6673, %v6665
        %v6698 = vpack.c.bf16 %v6674, %v6666
        %v6699 = vpack.c.bf16 %v6675, %v6667
        %v6700 = vpack.c.bf16 %v6676, %v6668
        %v6701 = vpack.c.bf16 %v6677, %v6669
        %v6702 = vpack.c.bf16 %v6678, %v6670
        %v6703 = vpack.c.bf16 %v6679, %v6671
        %v6704 = vpack.c.bf16 %v6688, %v6680
        %v6705 = vpack.c.bf16 %v6689, %v6681
        %v6706 = vpack.c.bf16 %v6690, %v6682
        %v6707 = vpack.c.bf16 %v6691, %v6683
        %v6708 = vpack.c.bf16 %v6692, %v6684
        %v6709 = vpack.c.bf16 %v6693, %v6685
        %v6710 = vpack.c.bf16 %v6694, %v6686
        %v6711 = vpack.c.bf16 %v6695, %v6687
        %v6712 = vld [vmem:[%s9] sm:$0xf]
        %v6713 = vld [vmem:[%s9 + $0x4] sm:$0xf]
        %v6714 = vld [vmem:[%s9 + $0x8] sm:$0xf]
        %v6715 = vld [vmem:[%s9 + $0xc] sm:$0xf]
        %v6716 = vld [vmem:[%s9 + $0x10] sm:$0xf]
        %v6717 = vld [vmem:[%s9 + $0x14] sm:$0xf]
        %v6718 = vld [vmem:[%s9 + $0x18] sm:$0xf]
        %v6719 = vld [vmem:[%s9 + $0x1c] sm:$0xf]
        %v6720 = vld [vmem:[%s9 + $0x20] sm:$0xf]
        %v6721 = vld [vmem:[%s9 + $0x24] sm:$0xf]
        %v6722 = vld [vmem:[%s9 + $0x28] sm:$0xf]
        %v6723 = vld [vmem:[%s9 + $0x2c] sm:$0xf]
        %v6724 = vld [vmem:[%s9 + $0x30] sm:$0xf]
        %v6725 = vld [vmem:[%s9 + $0x34] sm:$0xf]
        %v6726 = vld [vmem:[%s9 + $0x38] sm:$0xf]
        %v6727 = vld [vmem:[%s9 + $0x3c] sm:$0xf]
        %v6728 = vld [vmem:[%s9 + $0x40] sm:$0xf]
        %v6729 = vld [vmem:[%s9 + $0x44] sm:$0xf]
        %v6730 = vld [vmem:[%s9 + $0x48] sm:$0xf]
        %v6731 = vld [vmem:[%s9 + $0x4c] sm:$0xf]
        %v6732 = vld [vmem:[%s9 + $0x50] sm:$0xf]
        %v6733 = vld [vmem:[%s9 + $0x54] sm:$0xf]
        %v6734 = vld [vmem:[%s9 + $0x58] sm:$0xf]
        %v6735 = vld [vmem:[%s9 + $0x5c] sm:$0xf]
        %v6736 = vld [vmem:[%s9 + $0x60] sm:$0xf]
        %v6737 = vld [vmem:[%s9 + $0x64] sm:$0xf]
        %v6738 = vld [vmem:[%s9 + $0x68] sm:$0xf]
        %v6739 = vld [vmem:[%s9 + $0x6c] sm:$0xf]
        %v6740 = vld [vmem:[%s9 + $0x70] sm:$0xf]
        %v6741 = vld [vmem:[%s9 + $0x74] sm:$0xf]
        %v6742 = vld [vmem:[%s9 + $0x78] sm:$0xf]
        %v6743 = vld [vmem:[%s9 + $0x7c] sm:$0xf]
        %v6744 = vld [vmem:[%s9 + $0x80] sm:$0xf]
        %v6745 = vld [vmem:[%s9 + $0x84] sm:$0xf]
        %v6746 = vld [vmem:[%s9 + $0x88] sm:$0xf]
        %v6747 = vld [vmem:[%s9 + $0x8c] sm:$0xf]
        %v6748 = vld [vmem:[%s9 + $0x90] sm:$0xf]
        %v6749 = vld [vmem:[%s9 + $0x94] sm:$0xf]
        %v6750 = vld [vmem:[%s9 + $0x98] sm:$0xf]
        %v6751 = vld [vmem:[%s9 + $0x9c] sm:$0xf]
        %v6752 = vld [vmem:[%s9 + $0xa0] sm:$0xf]
        %v6753 = vld [vmem:[%s9 + $0xa4] sm:$0xf]
        %v6754 = vld [vmem:[%s9 + $0xa8] sm:$0xf]
        %v6755 = vld [vmem:[%s9 + $0xac] sm:$0xf]
        %v6756 = vld [vmem:[%s9 + $0xb0] sm:$0xf]
        %v6757 = vld [vmem:[%s9 + $0xb4] sm:$0xf]
        %v6758 = vld [vmem:[%s9 + $0xb8] sm:$0xf]
        %v6759 = vld [vmem:[%s9 + $0xbc] sm:$0xf]
        %v6760 = vld [vmem:[%s9 + $0xc0] sm:$0xf]
        %v6761 = vld [vmem:[%s9 + $0xc4] sm:$0xf]
        %v6762 = vld [vmem:[%s9 + $0xc8] sm:$0xf]
        %v6763 = vld [vmem:[%s9 + $0xcc] sm:$0xf]
        %v6764 = vld [vmem:[%s9 + $0xd0] sm:$0xf]
        %v6765 = vld [vmem:[%s9 + $0xd4] sm:$0xf]
        %v6766 = vld [vmem:[%s9 + $0xd8] sm:$0xf]
        %v6767 = vld [vmem:[%s9 + $0xdc] sm:$0xf]
        %v6768 = vld [vmem:[%s9 + $0xe0] sm:$0xf]
        %v6769 = vld [vmem:[%s9 + $0xe4] sm:$0xf]
        %v6770 = vld [vmem:[%s9 + $0xe8] sm:$0xf]
        %v6771 = vld [vmem:[%s9 + $0xec] sm:$0xf]
        %v6772 = vld [vmem:[%s9 + $0xf0] sm:$0xf]
        %v6773 = vld [vmem:[%s9 + $0xf4] sm:$0xf]
        %v6774 = vld [vmem:[%s9 + $0xf8] sm:$0xf]
        %v6775 = vld [vmem:[%s9 + $0xfc] sm:$0xf]
        %v6776 = vld [vmem:[%s9 + $0x100] sm:$0xf]
        %v6777 = vld [vmem:[%s9 + $0x104] sm:$0xf]
        %v6778 = vld [vmem:[%s9 + $0x108] sm:$0xf]
        %v6779 = vld [vmem:[%s9 + $0x10c] sm:$0xf]
        %v6780 = vld [vmem:[%s9 + $0x110] sm:$0xf]
        %v6781 = vld [vmem:[%s9 + $0x114] sm:$0xf]
        %v6782 = vld [vmem:[%s9 + $0x118] sm:$0xf]
        %v6783 = vld [vmem:[%s9 + $0x11c] sm:$0xf]
        %v6784 = vld [vmem:[%s9 + $0x120] sm:$0xf]
        %v6785 = vld [vmem:[%s9 + $0x124] sm:$0xf]
        %v6786 = vld [vmem:[%s9 + $0x128] sm:$0xf]
        %v6787 = vld [vmem:[%s9 + $0x12c] sm:$0xf]
        %v6788 = vld [vmem:[%s9 + $0x130] sm:$0xf]
        %v6789 = vld [vmem:[%s9 + $0x134] sm:$0xf]
        %v6790 = vld [vmem:[%s9 + $0x138] sm:$0xf]
        %v6791 = vld [vmem:[%s9 + $0x13c] sm:$0xf]
        %v6792 = vld [vmem:[%s9 + $0x140] sm:$0xf]
        %v6793 = vld [vmem:[%s9 + $0x144] sm:$0xf]
        %v6794 = vld [vmem:[%s9 + $0x148] sm:$0xf]
        %v6795 = vld [vmem:[%s9 + $0x14c] sm:$0xf]
        %v6796 = vld [vmem:[%s9 + $0x150] sm:$0xf]
        %v6797 = vld [vmem:[%s9 + $0x154] sm:$0xf]
        %v6798 = vld [vmem:[%s9 + $0x158] sm:$0xf]
        %v6799 = vld [vmem:[%s9 + $0x15c] sm:$0xf]
        %v6800 = vld [vmem:[%s9 + $0x160] sm:$0xf]
        %v6801 = vld [vmem:[%s9 + $0x164] sm:$0xf]
        %v6802 = vld [vmem:[%s9 + $0x168] sm:$0xf]
        %v6803 = vld [vmem:[%s9 + $0x16c] sm:$0xf]
        %v6804 = vld [vmem:[%s9 + $0x170] sm:$0xf]
        %v6805 = vld [vmem:[%s9 + $0x174] sm:$0xf]
        %v6806 = vld [vmem:[%s9 + $0x178] sm:$0xf]
        %v6807 = vld [vmem:[%s9 + $0x17c] sm:$0xf]
        %v6808 = vld [vmem:[%s9 + $0x180] sm:$0xf]
        %v6809 = vld [vmem:[%s9 + $0x184] sm:$0xf]
        %v6810 = vld [vmem:[%s9 + $0x188] sm:$0xf]
        %v6811 = vld [vmem:[%s9 + $0x18c] sm:$0xf]
        %v6812 = vld [vmem:[%s9 + $0x190] sm:$0xf]
        %v6813 = vld [vmem:[%s9 + $0x194] sm:$0xf]
        %v6814 = vld [vmem:[%s9 + $0x198] sm:$0xf]
        %v6815 = vld [vmem:[%s9 + $0x19c] sm:$0xf]
        %v6816 = vld [vmem:[%s9 + $0x1a0] sm:$0xf]
        %v6817 = vld [vmem:[%s9 + $0x1a4] sm:$0xf]
        %v6818 = vld [vmem:[%s9 + $0x1a8] sm:$0xf]
        %v6819 = vld [vmem:[%s9 + $0x1ac] sm:$0xf]
        %v6820 = vld [vmem:[%s9 + $0x1b0] sm:$0xf]
        %v6821 = vld [vmem:[%s9 + $0x1b4] sm:$0xf]
        %v6822 = vld [vmem:[%s9 + $0x1b8] sm:$0xf]
        %v6823 = vld [vmem:[%s9 + $0x1bc] sm:$0xf]
        %v6824 = vld [vmem:[%s9 + $0x1c0] sm:$0xf]
        %v6825 = vld [vmem:[%s9 + $0x1c4] sm:$0xf]
        %v6826 = vld [vmem:[%s9 + $0x1c8] sm:$0xf]
        %v6827 = vld [vmem:[%s9 + $0x1cc] sm:$0xf]
        %v6828 = vld [vmem:[%s9 + $0x1d0] sm:$0xf]
        %v6829 = vld [vmem:[%s9 + $0x1d4] sm:$0xf]
        %v6830 = vld [vmem:[%s9 + $0x1d8] sm:$0xf]
        %v6831 = vld [vmem:[%s9 + $0x1dc] sm:$0xf]
        %v6832 = vld [vmem:[%s9 + $0x1e0] sm:$0xf]
        %v6833 = vld [vmem:[%s9 + $0x1e4] sm:$0xf]
        %v6834 = vld [vmem:[%s9 + $0x1e8] sm:$0xf]
        %v6835 = vld [vmem:[%s9 + $0x1ec] sm:$0xf]
        %v6836 = vld [vmem:[%s9 + $0x1f0] sm:$0xf]
        %v6837 = vld [vmem:[%s9 + $0x1f4] sm:$0xf]
        %v6838 = vld [vmem:[%s9 + $0x1f8] sm:$0xf]
        %v6839 = vld [vmem:[%s9 + $0x1fc] sm:$0xf]
        %v6968 = vunpack.c.l.b16 %v6712
        %v6969 = vunpack.c.l.b16 %v6713
        %v6970 = vunpack.c.l.b16 %v6714
        %v6971 = vunpack.c.l.b16 %v6715
        %v6972 = vunpack.c.l.b16 %v6716
        %v6973 = vunpack.c.l.b16 %v6717
        %v6974 = vunpack.c.l.b16 %v6718
        %v6975 = vunpack.c.l.b16 %v6719
        %v6976 = vunpack.c.l.b16 %v6720
        %v6977 = vunpack.c.l.b16 %v6721
        %v6978 = vunpack.c.l.b16 %v6722
        %v6979 = vunpack.c.l.b16 %v6723
        %v6980 = vunpack.c.l.b16 %v6724
        %v6981 = vunpack.c.l.b16 %v6725
        %v6982 = vunpack.c.l.b16 %v6726
        %v6983 = vunpack.c.l.b16 %v6727
        %v6984 = vunpack.c.l.b16 %v6728
        %v6985 = vunpack.c.l.b16 %v6729
        %v6986 = vunpack.c.l.b16 %v6730
        %v6987 = vunpack.c.l.b16 %v6731
        %v6988 = vunpack.c.l.b16 %v6732
        %v6989 = vunpack.c.l.b16 %v6733
        %v6990 = vunpack.c.l.b16 %v6734
        %v6991 = vunpack.c.l.b16 %v6735
        %v6992 = vunpack.c.l.b16 %v6736
        %v6993 = vunpack.c.l.b16 %v6737
        %v6994 = vunpack.c.l.b16 %v6738
        %v6995 = vunpack.c.l.b16 %v6739
        %v6996 = vunpack.c.l.b16 %v6740
        %v6997 = vunpack.c.l.b16 %v6741
        %v6998 = vunpack.c.l.b16 %v6742
        %v6999 = vunpack.c.l.b16 %v6743
        %v7000 = vunpack.c.l.b16 %v6744
        %v7001 = vunpack.c.l.b16 %v6745
        %v7002 = vunpack.c.l.b16 %v6746
        %v7003 = vunpack.c.l.b16 %v6747
        %v7004 = vunpack.c.l.b16 %v6748
        %v7005 = vunpack.c.l.b16 %v6749
        %v7006 = vunpack.c.l.b16 %v6750
        %v7007 = vunpack.c.l.b16 %v6751
        %v7008 = vunpack.c.l.b16 %v6752
        %v7009 = vunpack.c.l.b16 %v6753
        %v7010 = vunpack.c.l.b16 %v6754
        %v7011 = vunpack.c.l.b16 %v6755
        %v7012 = vunpack.c.l.b16 %v6756
        %v7013 = vunpack.c.l.b16 %v6757
        %v7014 = vunpack.c.l.b16 %v6758
        %v7015 = vunpack.c.l.b16 %v6759
        %v7016 = vunpack.c.l.b16 %v6760
        %v7017 = vunpack.c.l.b16 %v6761
        %v7018 = vunpack.c.l.b16 %v6762
        %v7019 = vunpack.c.l.b16 %v6763
        %v7020 = vunpack.c.l.b16 %v6764
        %v7021 = vunpack.c.l.b16 %v6765
        %v7022 = vunpack.c.l.b16 %v6766
        %v7023 = vunpack.c.l.b16 %v6767
        %v7024 = vunpack.c.l.b16 %v6768
        %v7025 = vunpack.c.l.b16 %v6769
        %v7026 = vunpack.c.l.b16 %v6770
        %v7027 = vunpack.c.l.b16 %v6771
        %v7028 = vunpack.c.l.b16 %v6772
        %v7029 = vunpack.c.l.b16 %v6773
        %v7030 = vunpack.c.l.b16 %v6774
        %v7031 = vunpack.c.l.b16 %v6775
        %v7032 = vunpack.c.l.b16 %v6776
        %v7033 = vunpack.c.l.b16 %v6777
        %v7034 = vunpack.c.l.b16 %v6778
        %v7035 = vunpack.c.l.b16 %v6779
        %v7036 = vunpack.c.l.b16 %v6780
        %v7037 = vunpack.c.l.b16 %v6781
        %v7038 = vunpack.c.l.b16 %v6782
        %v7039 = vunpack.c.l.b16 %v6783
        %v7040 = vunpack.c.l.b16 %v6784
        %v7041 = vunpack.c.l.b16 %v6785
        %v7042 = vunpack.c.l.b16 %v6786
        %v7043 = vunpack.c.l.b16 %v6787
        %v7044 = vunpack.c.l.b16 %v6788
        %v7045 = vunpack.c.l.b16 %v6789
        %v7046 = vunpack.c.l.b16 %v6790
        %v7047 = vunpack.c.l.b16 %v6791
        %v7048 = vunpack.c.l.b16 %v6792
        %v7049 = vunpack.c.l.b16 %v6793
        %v7050 = vunpack.c.l.b16 %v6794
        %v7051 = vunpack.c.l.b16 %v6795
        %v7052 = vunpack.c.l.b16 %v6796
        %v7053 = vunpack.c.l.b16 %v6797
        %v7054 = vunpack.c.l.b16 %v6798
        %v7055 = vunpack.c.l.b16 %v6799
        %v7056 = vunpack.c.l.b16 %v6800
        %v7057 = vunpack.c.l.b16 %v6801
        %v7058 = vunpack.c.l.b16 %v6802
        %v7059 = vunpack.c.l.b16 %v6803
        %v7060 = vunpack.c.l.b16 %v6804
        %v7061 = vunpack.c.l.b16 %v6805
        %v7062 = vunpack.c.l.b16 %v6806
        %v7063 = vunpack.c.l.b16 %v6807
        %v7064 = vunpack.c.l.b16 %v6808
        %v7065 = vunpack.c.l.b16 %v6809
        %v7066 = vunpack.c.l.b16 %v6810
        %v7067 = vunpack.c.l.b16 %v6811
        %v7068 = vunpack.c.l.b16 %v6812
        %v7069 = vunpack.c.l.b16 %v6813
        %v7070 = vunpack.c.l.b16 %v6814
        %v7071 = vunpack.c.l.b16 %v6815
        %v7072 = vunpack.c.l.b16 %v6816
        %v7073 = vunpack.c.l.b16 %v6817
        %v7074 = vunpack.c.l.b16 %v6818
        %v7075 = vunpack.c.l.b16 %v6819
        %v7076 = vunpack.c.l.b16 %v6820
        %v7077 = vunpack.c.l.b16 %v6821
        %v7078 = vunpack.c.l.b16 %v6822
        %v7079 = vunpack.c.l.b16 %v6823
        %v7080 = vunpack.c.l.b16 %v6824
        %v7081 = vunpack.c.l.b16 %v6825
        %v7082 = vunpack.c.l.b16 %v6826
        %v7083 = vunpack.c.l.b16 %v6827
        %v7084 = vunpack.c.l.b16 %v6828
        %v7085 = vunpack.c.l.b16 %v6829
        %v7086 = vunpack.c.l.b16 %v6830
        %v7087 = vunpack.c.l.b16 %v6831
        %v7088 = vunpack.c.l.b16 %v6832
        %v7089 = vunpack.c.l.b16 %v6833
        %v7090 = vunpack.c.l.b16 %v6834
        %v7091 = vunpack.c.l.b16 %v6835
        %v7092 = vunpack.c.l.b16 %v6836
        %v7093 = vunpack.c.l.b16 %v6837
        %v7094 = vunpack.c.l.b16 %v6838
        %v7095 = vunpack.c.l.b16 %v6839
        %v7096 = vpack.c.b16 %v6969, %v6968
        %v7097 = vpack.c.b16 %v6971, %v6970
        %v7098 = vpack.c.b16 %v6973, %v6972
        %v7099 = vpack.c.b16 %v6975, %v6974
        %v7100 = vpack.c.b16 %v6977, %v6976
        %v7101 = vpack.c.b16 %v6979, %v6978
        %v7102 = vpack.c.b16 %v6981, %v6980
        %v7103 = vpack.c.b16 %v6983, %v6982
        %v7104 = vpack.c.b16 %v6985, %v6984
        %v7105 = vpack.c.b16 %v6987, %v6986
        %v7106 = vpack.c.b16 %v6989, %v6988
        %v7107 = vpack.c.b16 %v6991, %v6990
        %v7108 = vpack.c.b16 %v6993, %v6992
        %v7109 = vpack.c.b16 %v6995, %v6994
        %v7110 = vpack.c.b16 %v6997, %v6996
        %v7111 = vpack.c.b16 %v6999, %v6998
        %v7112 = vpack.c.b16 %v7001, %v7000
        %v7113 = vpack.c.b16 %v7003, %v7002
        %v7114 = vpack.c.b16 %v7005, %v7004
        %v7115 = vpack.c.b16 %v7007, %v7006
        %v7116 = vpack.c.b16 %v7009, %v7008
        %v7117 = vpack.c.b16 %v7011, %v7010
        %v7118 = vpack.c.b16 %v7013, %v7012
        %v7119 = vpack.c.b16 %v7015, %v7014
        %v7120 = vpack.c.b16 %v7017, %v7016
        %v7121 = vpack.c.b16 %v7019, %v7018
        %v7122 = vpack.c.b16 %v7021, %v7020
        %v7123 = vpack.c.b16 %v7023, %v7022
        %v7124 = vpack.c.b16 %v7025, %v7024
        %v7125 = vpack.c.b16 %v7027, %v7026
        %v7126 = vpack.c.b16 %v7029, %v7028
        %v7127 = vpack.c.b16 %v7031, %v7030
        %v7128 = vpack.c.b16 %v7033, %v7032
        %v7129 = vpack.c.b16 %v7035, %v7034
        %v7130 = vpack.c.b16 %v7037, %v7036
        %v7131 = vpack.c.b16 %v7039, %v7038
        %v7132 = vpack.c.b16 %v7041, %v7040
        %v7133 = vpack.c.b16 %v7043, %v7042
        %v7134 = vpack.c.b16 %v7045, %v7044
        %v7135 = vpack.c.b16 %v7047, %v7046
        %v7136 = vpack.c.b16 %v7049, %v7048
        %v7137 = vpack.c.b16 %v7051, %v7050
        %v7138 = vpack.c.b16 %v7053, %v7052
        %v7139 = vpack.c.b16 %v7055, %v7054
        %v7140 = vpack.c.b16 %v7057, %v7056
        %v7141 = vpack.c.b16 %v7059, %v7058
        %v7142 = vpack.c.b16 %v7061, %v7060
        %v7143 = vpack.c.b16 %v7063, %v7062
        %v7144 = vpack.c.b16 %v7065, %v7064
        %v7145 = vpack.c.b16 %v7067, %v7066
        %v7146 = vpack.c.b16 %v7069, %v7068
        %v7147 = vpack.c.b16 %v7071, %v7070
        %v7148 = vpack.c.b16 %v7073, %v7072
        %v7149 = vpack.c.b16 %v7075, %v7074
        %v7150 = vpack.c.b16 %v7077, %v7076
        %v7151 = vpack.c.b16 %v7079, %v7078
        %v7152 = vpack.c.b16 %v7081, %v7080
        %v7153 = vpack.c.b16 %v7083, %v7082
        %v7154 = vpack.c.b16 %v7085, %v7084
        %v7155 = vpack.c.b16 %v7087, %v7086
        %v7156 = vpack.c.b16 %v7089, %v7088
        %v7157 = vpack.c.b16 %v7091, %v7090
        %v7158 = vpack.c.b16 %v7093, %v7092
        %v7159 = vpack.c.b16 %v7095, %v7094
        %7224 = vmatprep.subr.bf16.mxu0 0
        %7225 = vmatpush1.bf16.msra.mxu0 %v7103
        %7226 = vmatprep.subr.bf16.mxu0 0
        %7227 = vmatpush1.bf16.msra.mxu0 %v7102
        %7228 = vmatprep.subr.bf16.mxu0 0
        %7229 = vmatpush1.bf16.msra.mxu0 %v7101
        %7230 = vmatprep.subr.bf16.mxu0 0
        %7231 = vmatpush1.bf16.msra.mxu0 %v7100
        %7232 = vmatprep.subr.bf16.mxu0 0
        %7233 = vmatpush1.bf16.msra.mxu0 %v7099
        %7234 = vmatprep.subr.bf16.mxu0 0
        %7235 = vmatpush1.bf16.msra.mxu0 %v7098
        %7236 = vmatprep.subr.bf16.mxu0 0
        %7237 = vmatpush1.bf16.msra.mxu0 %v7097
        %7238 = vmatprep.subr.bf16.mxu0 0
        %7239 = vmatpush1.bf16.msra.mxu0 %v7096
        %7240 = vmatprep.subr.bf16.mxu0 0
        %7241 = vmatpush2.bf16.msra.mxu0 %v7111
        %7242 = vmatprep.subr.bf16.mxu0 0
        %7243 = vmatpush2.bf16.msra.mxu0 %v7110
        %7244 = vmatprep.subr.bf16.mxu0 0
        %7245 = vmatpush2.bf16.msra.mxu0 %v7109
        %7246 = vmatprep.subr.bf16.mxu0 0
        %7247 = vmatpush2.bf16.msra.mxu0 %v7108
        %7248 = vmatprep.subr.bf16.mxu0 0
        %7249 = vmatpush2.bf16.msra.mxu0 %v7107
        %7250 = vmatprep.subr.bf16.mxu0 0
        %7251 = vmatpush2.bf16.msra.mxu0 %v7106
        %7252 = vmatprep.subr.bf16.mxu0 0
        %7253 = vmatpush2.bf16.msra.mxu0 %v7105
        %7254 = vmatprep.subr.bf16.mxu0 0
        %7255 = vmatpush2.bf16.msra.mxu0 %v7104
        %7256 = vmatprep.mubr.bf16.mxu0 %v6697
        %7257 = vmatmul.mubr.bf16.gmra.mxu0 %v6696
        %v7258 = vpop.f32.mrf.mxu0
        %v7259 = vadd.f32 0.0, %v7258
        %v7260 = vpop.f32.mrf.mxu0
        %v7261 = vpop.f32.mrf.mxu0
        %v7262 = vadd.f32 0.0, %v7261
        %v7263 = vpop.f32.mrf.mxu0
        %7264 = vmatprep.mubr.bf16.mxu0 %v6705
        %7265 = vmatmul.mubr.bf16.gmra.mxu0 %v6704
        %v7266 = vpop.f32.mrf.mxu0
        %v7267 = vadd.f32 0.0, %v7266
        %v7268 = vpop.f32.mrf.mxu0
        %v7269 = vpop.f32.mrf.mxu0
        %v7270 = vadd.f32 0.0, %v7269
        %v7271 = vpop.f32.mrf.mxu0
        %7272 = vdwg.mxu0
        %7273 = vmatprep.subr.bf16.mxu0 0
        %7274 = vmatpush1.bf16.msra.mxu0 %v7119
        %7275 = vmatprep.subr.bf16.mxu0 0
        %7276 = vmatpush1.bf16.msra.mxu0 %v7118
        %7277 = vmatprep.subr.bf16.mxu0 0
        %7278 = vmatpush1.bf16.msra.mxu0 %v7117
        %7279 = vmatprep.subr.bf16.mxu0 0
        %7280 = vmatpush1.bf16.msra.mxu0 %v7116
        %7281 = vmatprep.subr.bf16.mxu0 0
        %7282 = vmatpush1.bf16.msra.mxu0 %v7115
        %7283 = vmatprep.subr.bf16.mxu0 0
        %7284 = vmatpush1.bf16.msra.mxu0 %v7114
        %7285 = vmatprep.subr.bf16.mxu0 0
        %7286 = vmatpush1.bf16.msra.mxu0 %v7113
        %7287 = vmatprep.subr.bf16.mxu0 0
        %7288 = vmatpush1.bf16.msra.mxu0 %v7112
        %7289 = vmatprep.subr.bf16.mxu0 0
        %7290 = vmatpush2.bf16.msra.mxu0 %v7127
        %7291 = vmatprep.subr.bf16.mxu0 0
        %7292 = vmatpush2.bf16.msra.mxu0 %v7126
        %7293 = vmatprep.subr.bf16.mxu0 0
        %7294 = vmatpush2.bf16.msra.mxu0 %v7125
        %7295 = vmatprep.subr.bf16.mxu0 0
        %7296 = vmatpush2.bf16.msra.mxu0 %v7124
        %7297 = vmatprep.subr.bf16.mxu0 0
        %7298 = vmatpush2.bf16.msra.mxu0 %v7123
        %7299 = vmatprep.subr.bf16.mxu0 0
        %7300 = vmatpush2.bf16.msra.mxu0 %v7122
        %7301 = vmatprep.subr.bf16.mxu0 0
        %7302 = vmatpush2.bf16.msra.mxu0 %v7121
        %7303 = vmatprep.subr.bf16.mxu0 0
        %7304 = vmatpush2.bf16.msra.mxu0 %v7120
        %7305 = vmatprep.mubr.bf16.mxu0 %v6699
        %7306 = vmatmul.mubr.bf16.gmra.mxu0 %v6698
        %v7307 = vpop.f32.mrf.mxu0
        %v7308 = vadd.f32 %v7259, %v7307
        %v7309 = vpop.f32.mrf.mxu0
        %v7310 = vpop.f32.mrf.mxu0
        %v7311 = vadd.f32 %v7262, %v7310
        %v7312 = vpop.f32.mrf.mxu0
        %7313 = vmatprep.mubr.bf16.mxu0 %v6707
        %7314 = vmatmul.mubr.bf16.gmra.mxu0 %v6706
        %v7315 = vpop.f32.mrf.mxu0
        %v7316 = vadd.f32 %v7267, %v7315
        %v7317 = vpop.f32.mrf.mxu0
        %v7318 = vpop.f32.mrf.mxu0
        %v7319 = vadd.f32 %v7270, %v7318
        %v7320 = vpop.f32.mrf.mxu0
        %7321 = vdwg.mxu0
        %7322 = vmatprep.subr.bf16.mxu0 0
        %7323 = vmatpush1.bf16.msra.mxu0 %v7135
        %7324 = vmatprep.subr.bf16.mxu0 0
        %7325 = vmatpush1.bf16.msra.mxu0 %v7134
        %7326 = vmatprep.subr.bf16.mxu0 0
        %7327 = vmatpush1.bf16.msra.mxu0 %v7133
        %7328 = vmatprep.subr.bf16.mxu0 0
        %7329 = vmatpush1.bf16.msra.mxu0 %v7132
        %7330 = vmatprep.subr.bf16.mxu0 0
        %7331 = vmatpush1.bf16.msra.mxu0 %v7131
        %7332 = vmatprep.subr.bf16.mxu0 0
        %7333 = vmatpush1.bf16.msra.mxu0 %v7130
        %7334 = vmatprep.subr.bf16.mxu0 0
        %7335 = vmatpush1.bf16.msra.mxu0 %v7129
        %7336 = vmatprep.subr.bf16.mxu0 0
        %7337 = vmatpush1.bf16.msra.mxu0 %v7128
        %7338 = vmatprep.subr.bf16.mxu0 0
        %7339 = vmatpush2.bf16.msra.mxu0 %v7143
        %7340 = vmatprep.subr.bf16.mxu0 0
        %7341 = vmatpush2.bf16.msra.mxu0 %v7142
        %7342 = vmatprep.subr.bf16.mxu0 0
        %7343 = vmatpush2.bf16.msra.mxu0 %v7141
        %7344 = vmatprep.subr.bf16.mxu0 0
        %7345 = vmatpush2.bf16.msra.mxu0 %v7140
        %7346 = vmatprep.subr.bf16.mxu0 0
        %7347 = vmatpush2.bf16.msra.mxu0 %v7139
        %7348 = vmatprep.subr.bf16.mxu0 0
        %7349 = vmatpush2.bf16.msra.mxu0 %v7138
        %7350 = vmatprep.subr.bf16.mxu0 0
        %7351 = vmatpush2.bf16.msra.mxu0 %v7137
        %7352 = vmatprep.subr.bf16.mxu0 0
        %7353 = vmatpush2.bf16.msra.mxu0 %v7136
        %7354 = vmatprep.mubr.bf16.mxu0 %v6701
        %7355 = vmatmul.mubr.bf16.gmra.mxu0 %v6700
        %v7356 = vpop.f32.mrf.mxu0
        %v7357 = vadd.f32 %v7308, %v7356
        %v7358 = vpop.f32.mrf.mxu0
        %v7359 = vpop.f32.mrf.mxu0
        %v7360 = vadd.f32 %v7311, %v7359
        %v7361 = vpop.f32.mrf.mxu0
        %7362 = vmatprep.mubr.bf16.mxu0 %v6709
        %7363 = vmatmul.mubr.bf16.gmra.mxu0 %v6708
        %v7364 = vpop.f32.mrf.mxu0
        %v7365 = vadd.f32 %v7316, %v7364
        %v7366 = vpop.f32.mrf.mxu0
        %v7367 = vpop.f32.mrf.mxu0
        %v7368 = vadd.f32 %v7319, %v7367
        %v7369 = vpop.f32.mrf.mxu0
        %7370 = vdwg.mxu0
        %7371 = vmatprep.subr.bf16.mxu0 0
        %7372 = vmatpush1.bf16.msra.mxu0 %v7151
        %7373 = vmatprep.subr.bf16.mxu0 0
        %7374 = vmatpush1.bf16.msra.mxu0 %v7150
        %7375 = vmatprep.subr.bf16.mxu0 0
        %7376 = vmatpush1.bf16.msra.mxu0 %v7149
        %7377 = vmatprep.subr.bf16.mxu0 0
        %7378 = vmatpush1.bf16.msra.mxu0 %v7148
        %7379 = vmatprep.subr.bf16.mxu0 0
        %7380 = vmatpush1.bf16.msra.mxu0 %v7147
        %7381 = vmatprep.subr.bf16.mxu0 0
        %7382 = vmatpush1.bf16.msra.mxu0 %v7146
        %7383 = vmatprep.subr.bf16.mxu0 0
        %7384 = vmatpush1.bf16.msra.mxu0 %v7145
        %7385 = vmatprep.subr.bf16.mxu0 0
        %7386 = vmatpush1.bf16.msra.mxu0 %v7144
        %7387 = vmatprep.subr.bf16.mxu0 0
        %7388 = vmatpush2.bf16.msra.mxu0 %v7159
        %7389 = vmatprep.subr.bf16.mxu0 0
        %7390 = vmatpush2.bf16.msra.mxu0 %v7158
        %7391 = vmatprep.subr.bf16.mxu0 0
        %7392 = vmatpush2.bf16.msra.mxu0 %v7157
        %7393 = vmatprep.subr.bf16.mxu0 0
        %7394 = vmatpush2.bf16.msra.mxu0 %v7156
        %7395 = vmatprep.subr.bf16.mxu0 0
        %7396 = vmatpush2.bf16.msra.mxu0 %v7155
        %7397 = vmatprep.subr.bf16.mxu0 0
        %7398 = vmatpush2.bf16.msra.mxu0 %v7154
        %7399 = vmatprep.subr.bf16.mxu0 0
        %7400 = vmatpush2.bf16.msra.mxu0 %v7153
        %7401 = vmatprep.subr.bf16.mxu0 0
        %7402 = vmatpush2.bf16.msra.mxu0 %v7152
        %7403 = vmatprep.mubr.bf16.mxu0 %v6703
        %7404 = vmatmul.mubr.bf16.gmra.mxu0 %v6702
        %v7405 = vpop.f32.mrf.mxu0
        %v7406 = vadd.f32 %v7357, %v7405
        %v7407 = vpop.f32.mrf.mxu0
        %v7408 = vpop.f32.mrf.mxu0
        %v7409 = vadd.f32 %v7360, %v7408
        %v7410 = vpop.f32.mrf.mxu0
        %7411 = vmatprep.mubr.bf16.mxu0 %v6711
        %7412 = vmatmul.mubr.bf16.gmra.mxu0 %v6710
        %v7413 = vpop.f32.mrf.mxu0
        %v7414 = vadd.f32 %v7365, %v7413
        %v7415 = vpop.f32.mrf.mxu0
        %v7416 = vpop.f32.mrf.mxu0
        %v7417 = vadd.f32 %v7368, %v7416
        %v7418 = vpop.f32.mrf.mxu0
        %7419 = vdwg.mxu0
        %v7420 = vld [vmem:[%s10] sm:$0xf]
        %v7421 = vld [vmem:[%s10 + $0x4] sm:$0xf]
        %v7422 = vld [vmem:[%s10 + $0x8] sm:$0xf]
        %v7423 = vld [vmem:[%s10 + $0xc] sm:$0xf]
        %v7424 = vld [vmem:[%s10 + $0x10] sm:$0xf]
        %v7425 = vld [vmem:[%s10 + $0x14] sm:$0xf]
        %v7426 = vld [vmem:[%s10 + $0x18] sm:$0xf]
        %v7427 = vld [vmem:[%s10 + $0x1c] sm:$0xf]
        %v7428 = vpack.c.bf16 %v7409, %v7406
        %v7429 = vpack.c.bf16 %v7417, %v7414
        %v7430 = vld [vmem:[%s11] sm:$0xff]
        %v7431 = vld [vmem:[%s11 + $0x8] sm:$0xff]
        %v7432 = vld [vmem:[%s11 + $0x10] sm:$0xff]
        %v7433 = vld [vmem:[%s11 + $0x18] sm:$0xff]
        %v7434 = vld [vmem:[%s11 + $0x20] sm:$0xff]
        %v7435 = vld [vmem:[%s11 + $0x28] sm:$0xff]
        %v7436 = vld [vmem:[%s11 + $0x30] sm:$0xff]
        %v7437 = vld [vmem:[%s11 + $0x38] sm:$0xff]
        %7439 = vset.pattern.permute.xlu0 0
        %7440 = vperm.xlu0 %7439, %v7430
        %v7441 = vpop.permute.xlu0 %7440
        %7444 = vset.pattern.permute.xlu0 0
        %7445 = vperm.xlu0 %7444, %v7431
        %v7446 = vpop.permute.xlu0 %7445
        %7449 = vset.pattern.permute.xlu0 0
        %7450 = vperm.xlu0 %7449, %v7432
        %v7451 = vpop.permute.xlu0 %7450
        %7454 = vset.pattern.permute.xlu0 0
        %7455 = vperm.xlu0 %7454, %v7433
        %v7456 = vpop.permute.xlu0 %7455
        %7459 = vset.pattern.permute.xlu0 0
        %7460 = vperm.xlu0 %7459, %v7434
        %v7461 = vpop.permute.xlu0 %7460
        %7464 = vset.pattern.permute.xlu0 0
        %7465 = vperm.xlu0 %7464, %v7435
        %v7466 = vpop.permute.xlu0 %7465
        %7469 = vset.pattern.permute.xlu0 0
        %7470 = vperm.xlu0 %7469, %v7436
        %v7471 = vpop.permute.xlu0 %7470
        %7474 = vset.pattern.permute.xlu0 0
        %7475 = vperm.xlu0 %7474, %v7437
        %v7476 = vpop.permute.xlu0 %7475
        %v7486 = vunpack.c.l.b16 %v7420
        %v7487 = vunpack.c.l.b16 %v7421
        %v7488 = vunpack.c.l.b16 %v7422
        %v7489 = vunpack.c.l.b16 %v7423
        %v7490 = vunpack.c.l.b16 %v7424
        %v7491 = vunpack.c.l.b16 %v7425
        %v7492 = vunpack.c.l.b16 %v7426
        %v7493 = vunpack.c.l.b16 %v7427
        %v7494 = vpack.c.b16 %v7487, %v7486
        %v7495 = vpack.c.b16 %v7489, %v7488
        %v7496 = vpack.c.b16 %v7491, %v7490
        %v7497 = vpack.c.b16 %v7493, %v7492
        %v7499 = vsel %vm5277, %v7494, 0
        %v7502 = vsel %vm5277, %v7495, 0
        %v7505 = vsel %vm5277, %v7496, 0
        %v7508 = vsel %vm5277, %v7497, 0
        %7510 = vmatprep.subr.bf16.mxu0 0
        %7511 = vmatpush1.bf16.msra.mxu0 0
        %7512 = vmatprep.subr.bf16.mxu0 0
        %7513 = vmatpush1.bf16.msra.mxu0 0
        %7514 = vmatprep.subr.bf16.mxu0 0
        %7515 = vmatpush1.bf16.msra.mxu0 0
        %7516 = vmatprep.subr.bf16.mxu0 0
        %7517 = vmatpush1.bf16.msra.mxu0 0
        %7518 = vmatprep.subr.bf16.mxu0 0
        %7519 = vmatpush1.bf16.msra.mxu0 0
        %7520 = vmatprep.subr.bf16.mxu0 0
        %7521 = vmatpush1.bf16.msra.mxu0 0
        %7522 = vmatprep.subr.bf16.mxu0 0
        %7523 = vmatpush1.bf16.msra.mxu0 %v7429
        %7524 = vmatprep.subr.bf16.mxu0 0
        %7525 = vmatpush1.bf16.msra.mxu0 %v7428
        %7526 = vmatprep.subr.bf16.mxu0 0
        %7527 = vmatpush2.bf16.msra.mxu0 0
        %7528 = vmatprep.subr.bf16.mxu0 0
        %7529 = vmatpush2.bf16.msra.mxu0 0
        %7530 = vmatprep.subr.bf16.mxu0 0
        %7531 = vmatpush2.bf16.msra.mxu0 0
        %7532 = vmatprep.subr.bf16.mxu0 0
        %7533 = vmatpush2.bf16.msra.mxu0 0
        %7534 = vmatprep.subr.bf16.mxu0 0
        %7535 = vmatpush2.bf16.msra.mxu0 0
        %7536 = vmatprep.subr.bf16.mxu0 0
        %7537 = vmatpush2.bf16.msra.mxu0 0
        %7538 = vmatprep.subr.bf16.mxu0 0
        %7539 = vmatpush2.bf16.msra.mxu0 0
        %7540 = vmatprep.subr.bf16.mxu0 0
        %7541 = vmatpush2.bf16.msra.mxu0 0
        %7542 = vmatprep.mubr.bf16.mxu0 0
        %7543 = vmatmul.mubr.bf16.gmra.mxu0 %v7499
        %v7544 = vpop.f32.mrf.mxu0
        %v7545 = vadd.f32 %v7441, %v7544
        %v7546 = vpop.f32.mrf.mxu0
        %v7547 = vpop.f32.mrf.mxu0
        %v7548 = vadd.f32 %v7446, %v7547
        %v7549 = vpop.f32.mrf.mxu0
        %7550 = vmatprep.mubr.bf16.mxu0 0
        %7551 = vmatmul.mubr.bf16.gmra.mxu0 %v7502
        %v7552 = vpop.f32.mrf.mxu0
        %v7553 = vadd.f32 %v7451, %v7552
        %v7554 = vpop.f32.mrf.mxu0
        %v7555 = vpop.f32.mrf.mxu0
        %v7556 = vadd.f32 %v7456, %v7555
        %v7557 = vpop.f32.mrf.mxu0
        %7558 = vmatprep.mubr.bf16.mxu0 0
        %7559 = vmatmul.mubr.bf16.gmra.mxu0 %v7505
        %v7560 = vpop.f32.mrf.mxu0
        %v7561 = vadd.f32 %v7461, %v7560
        %v7562 = vpop.f32.mrf.mxu0
        %v7563 = vpop.f32.mrf.mxu0
        %v7564 = vadd.f32 %v7466, %v7563
        %v7565 = vpop.f32.mrf.mxu0
        %7566 = vmatprep.mubr.bf16.mxu0 0
        %7567 = vmatmul.mubr.bf16.gmra.mxu0 %v7508
        %v7568 = vpop.f32.mrf.mxu0
        %v7569 = vadd.f32 %v7471, %v7568
        %v7570 = vpop.f32.mrf.mxu0
        %v7571 = vpop.f32.mrf.mxu0
        %v7572 = vadd.f32 %v7476, %v7571
        %v7573 = vpop.f32.mrf.mxu0
        %7574 = vdwg.mxu0
        %v7575 = vmax.f32 %v7545, 0.0
        %v7576 = vmax.f32 %v7548, 0.0
        %v7577 = vmax.f32 %v7553, 0.0
        %v7578 = vmax.f32 %v7556, 0.0
        %v7579 = vmax.f32 %v7561, 0.0
        %v7580 = vmax.f32 %v7564, 0.0
        %v7581 = vmax.f32 %v7569, 0.0
        %v7582 = vmax.f32 %v7572, 0.0
        %v7583 = vld [vmem:[%s12] sm:$0x7]
        %v7584 = vpack.c.bf16 %v7576, %v7575
        %v7585 = vpack.c.bf16 %v7578, %v7577
        %v7586 = vpack.c.bf16 %v7580, %v7579
        %v7587 = vpack.c.bf16 %v7582, %v7581
        %v7588 = vld [vmem:[%s13] sm:$0x1f]
        %7590 = vset.pattern.permute.xlu0 0
        %7591 = vperm.xlu0 %7590, %v7588
        %v7592 = vpop.permute.xlu0 %7591
        %vm7594 = vcmask 523264
        %v7596 = vsel %vm7594, %v7583, 0
        %7598 = vmatprep.subr.bf16.mxu0 0
        %7599 = vmatpush1.bf16.msra.mxu0 0
        %7600 = vmatprep.subr.bf16.mxu0 0
        %7601 = vmatpush1.bf16.msra.mxu0 0
        %7602 = vmatprep.subr.bf16.mxu0 0
        %7603 = vmatpush1.bf16.msra.mxu0 0
        %7604 = vmatprep.subr.bf16.mxu0 0
        %7605 = vmatpush1.bf16.msra.mxu0 0
        %7606 = vmatprep.subr.bf16.mxu0 0
        %7607 = vmatpush1.bf16.msra.mxu0 %v7587
        %7608 = vmatprep.subr.bf16.mxu0 0
        %7609 = vmatpush1.bf16.msra.mxu0 %v7586
        %7610 = vmatprep.subr.bf16.mxu0 0
        %7611 = vmatpush1.bf16.msra.mxu0 %v7585
        %7612 = vmatprep.subr.bf16.mxu0 0
        %7613 = vmatpush1.bf16.msra.mxu0 %v7584
        %7614 = vmatprep.subr.bf16.mxu0 0
        %7615 = vmatpush2.bf16.msra.mxu0 0
        %7616 = vmatprep.subr.bf16.mxu0 0
        %7617 = vmatpush2.bf16.msra.mxu0 0
        %7618 = vmatprep.subr.bf16.mxu0 0
        %7619 = vmatpush2.bf16.msra.mxu0 0
        %7620 = vmatprep.subr.bf16.mxu0 0
        %7621 = vmatpush2.bf16.msra.mxu0 0
        %7622 = vmatprep.subr.bf16.mxu0 0
        %7623 = vmatpush2.bf16.msra.mxu0 0
        %7624 = vmatprep.subr.bf16.mxu0 0
        %7625 = vmatpush2.bf16.msra.mxu0 0
        %7626 = vmatprep.subr.bf16.mxu0 0
        %7627 = vmatpush2.bf16.msra.mxu0 0
        %7628 = vmatprep.subr.bf16.mxu0 0
        %7629 = vmatpush2.bf16.msra.mxu0 0
        %7630 = vmatprep.mubr.bf16.mxu0 0
        %7631 = vmatmul.mubr.bf16.gmra.mxu0 %v7596
        %v7632 = vpop.f32.mrf.mxu0
        %v7633 = vadd.f32 %v7592, %v7632
        %v7634 = vpop.f32.mrf.mxu0
        %v7635 = vpop.f32.mrf.mxu0
        %v7636 = vpop.f32.mrf.mxu0
        %7637 = vdwg.mxu0
        %vm7638 = vcmask 61440
        %7639 = vst.msk [vmem:[%s500] sm:$0x1f] %vm7638, %v7633
        %p7640 = scmp.lt.s32.totalorder %s25, 7
        %s7641 = scalar_select %p7640, %s25, 7
        %s7642 = smul.addr %s7641, 8
        %s7643 = scalar_lea.vmem %s14, %s7642
        // Predicated region
        $region100: #{tpu_custom_call.1} parent=94 // pred_check
          %p7644 = pneg %p342
        $region101: #{tpu_custom_call.1} parent=94 // pred_check_branch
          %7646 = sbr.rel (%p7644) target = $region103
        $region102: #{tpu_custom_call.1} parent=94 // pred_region
          _
        $region103: #{tpu_custom_call.1} parent=94 // pred_fallthru
          _
      $region95: #{tpu_custom_call.1} parent=5 // pred_fallthru
        _
      %p7647 = scmp.le.s32.totalorder 2, %s20
      // Predicated region
      $region104: #{tpu_custom_call.1} parent=5 // pred_check
        %p7648 = pneg %p7647
      $region105: #{tpu_custom_call.1} parent=5 // pred_check_branch
        %7650 = sbr.rel (%p7648) target = $region107
      $region106: #{tpu_custom_call.1} parent=5 // pred_region
        %s7651 = ssub.s32 %s20, 2
        // Predicated region
        $region108: #{tpu_custom_call.1} parent=106 // pred_check
          %p7652 = pneg %p348
        $region109: #{tpu_custom_call.1} parent=106 // pred_check_branch
          %7654 = sbr.rel (%p7652) target = $region111
        $region110: #{tpu_custom_call.1} parent=106 // pred_region
          %p7655 = scmp.lt.s32.totalorder %s26, 7
          %s7656 = scalar_select %p7655, %s26, 7
          %s7657 = smul.addr %s7656, 8
          %s7658 = scalar_lea.vmem %s14, %s7657
        $region111: #{tpu_custom_call.1} parent=106 // pred_fallthru
          _
      $region107: #{tpu_custom_call.1} parent=5 // pred_fallthru
        _
    $region6: #{tpu_custom_call.1} parent=1 // loop_footer
      %s24 = sadd.s32 1, %s20
    $region7: #{tpu_custom_call.1} parent=1 // loop_footer_branch
      %19 = sbr.rel target = $region3
    $region8: #{tpu_custom_call.1} parent=1 // loop_exit
      _

</llo_original>
